<compile_context>
chip_gen: v7x
topology: tpu7x:2x2x1
jax: 0.10.0
libtpu: 0.0.40
codegen_flags: <defaults>
</compile_context>

<pallas_src>
import functools

import jax
import jax.numpy as jnp
import numpy as np
from jax import lax
from jax.experimental import pallas as pl
from jax.experimental.pallas import tpu as pltpu


def _leaky_relu(x, slope=0.01):
    # nn.LeakyReLU() default negative_slope = 0.01
    return jnp.where(x >= 0, x, slope * x)


def _round_up(x, m):
    return (x + m - 1) // m * m


def _cdiv(a, b):
    return -(-a // b)


def _sigmoid(x):
    # 0.5*(tanh(x/2)+1): tanh runs on the EUP slot (overlaps the MXU push); avoids the
    # exact divide in jax.nn.sigmoid while remaining f32-accurate.
    return 0.5 * (jnp.tanh(0.5 * x) + 1.0)


def alstm_recurrence_kernel(xg_ref, h0_ref, c0_ref, w_hh_ref, w_out_ref, b_out_ref,
                            y_ref, hn_ref, cn_ref, h_sc, c_sc, hs_sc,
                            *, seq_len, needs_time_mask):
    """Fused LSTM recurrence for one (batch_tile, time_tile); fc_out amortized per tile."""
    t_idx = pl.program_id(1)
    t_tile, b_tile, _ = xg_ref.shape
    H = h_sc.shape[-1]

    # h/c live in VMEM scratch across the (inner, "arbitrary") time axis.
    @pl.when(t_idx == 0)
    def _():
        h_sc[...] = h0_ref[...]
        c_sc[...] = c0_ref[...]

    cd = w_hh_ref.dtype  # MXU operand dtype (bf16 by default, f32 for strict checks)

    def step(lt, carry):
        del carry
        h = h_sc[...]
        c = c_sc[...]
        # Recurrent contribution: weights streamed from VMEM inside the loop (no vreg
        # hoist -> no spills at b_tile=128); f32 accumulation.
        rec = jnp.dot(h.astype(cd), w_hh_ref[...], preferred_element_type=jnp.float32)
        gates = xg_ref[lt].astype(jnp.float32) + rec
        # PyTorch gate order: i, f, g, o (lane-aligned slices when H % 128 == 0).
        i = _sigmoid(gates[:, 0 * H:1 * H])
        f = _sigmoid(gates[:, 1 * H:2 * H])
        g = jnp.tanh(gates[:, 2 * H:3 * H])
        o = _sigmoid(gates[:, 3 * H:4 * H])
        c_new = f * c + i * g
        h_new = o * jnp.tanh(c_new)
        # Only the hidden state is written per step; fc_out happens after the loop.
        hs_sc[lt] = h_new
        if needs_time_mask:
            # Padded time steps (global t >= seq_len) must not advance the carry.
            keep = ((t_idx * t_tile + lt) < seq_len).astype(jnp.float32)
            h_sc[...] = h + keep * (h_new - h)
            c_sc[...] = c + keep * (c_new - c)
        else:
            h_sc[...] = h_new
            c_sc[...] = c_new
        return 0

    # Unroll only when the per-step working set is small (LLO visibility without spills).
    unroll = bool(t_tile <= 16 and b_tile <= 32)
    lax.fori_loop(0, t_tile, step, 0, unroll=unroll)

    # LeakyReLU + fc_out once per tile: one MXU-efficient matmul, off the serial chain.
    hs = _leaky_relu(hs_sc[...]).reshape(t_tile * b_tile, H)
    y = jnp.dot(hs.astype(cd), w_out_ref[...], preferred_element_type=jnp.float32)
    y_ref[...] = (y + b_out_ref[...]).reshape(t_tile, b_tile, y_ref.shape[-1])

    # hn/cn are resident accumulators; write them only once, on the last time tile.
    @pl.when(t_idx == pl.num_programs(1) - 1)
    def _():
        hn_ref[...] = h_sc[...]
        cn_ref[...] = c_sc[...]


def alstm_discrete_forward(params, x, hx=None, *, t_tile=32, b_tile=128,
                           compute_dtype=jnp.bfloat16):
    """x: (B, T, observation_space), batch_first like the PyTorch module.

    Returns (y, (hn, cn)) with y: (B, T, action), hn/cn: (1, B, hidden).
    Eval-mode forward (Dropout = identity).  compute_dtype controls MXU operand dtype
    (bf16 default, f32 accumulation); pass jnp.float32 for bit-tighter accuracy.
    """
    B, T, D = x.shape
    H = params["w_in"].shape[0]
    A = params["w_out"].shape[0]
    assert params["w_ih"].shape[0] == 4 * H

    cd = compute_dtype

    if hx is None:
        h0 = jnp.zeros((B, H), jnp.float32)
        c0 = jnp.zeros((B, H), jnp.float32)
    else:
        h0 = hx[0][0].astype(jnp.float32)
        c0 = hx[1][0].astype(jnp.float32)

    # ---- tiling: balanced batch/time tiles, batch sublane-padded, time padded to a
    # multiple of t_tile (padded steps masked off the h/c carry in-kernel).
    B8 = _round_up(B, 8)
    n_b = max(1, _cdiv(B8, max(8, min(int(b_tile), 128))))
    b_tile = _round_up(_cdiv(B8, n_b), 8)
    B_pad = b_tile * n_b

    n_t = max(1, _cdiv(T, max(1, int(t_tile))))
    t_tile = _cdiv(T, n_t)
    T_pad = t_tile * n_t

    # Lane-dense y stores (full-width vst). If the kernel is output-stream-bound at huge
    # T*B, this pad can be dropped (block last dim = A is legal) at the cost of masked
    # stores; kept here for the compute/latency-bound regime.
    A_pad = _round_up(A, 128)

    # ---- fc_in + LeakyReLU (+ Dropout=identity) and the x-contribution to the LSTM
    # gates: batch-parallel matmuls in XLA, produced directly in time-major padded layout
    # (transpose/pad the *small* x instead of the big (B,T,4H) xg).
    x_tm = jnp.transpose(x.astype(jnp.float32), (1, 0, 2))            # (T, B, D)
    x_tm = jnp.pad(x_tm, ((0, T_pad - T), (0, B_pad - B), (0, 0)))    # (T_pad, B_pad, D)
    z = _leaky_relu(jnp.dot(x_tm.astype(cd), params["w_in"].T.astype(cd),
                            preferred_element_type=jnp.float32) + params["b_in"])
    # TODO(synk): nn.Dropout(p=0.1) omitted (eval/inference mode -> identity).
    xg = jnp.dot(z.astype(cd), params["w_ih"].T.astype(cd),
                 preferred_element_type=jnp.float32)
    xg = (xg + (params["b_ih"] + params["b_hh"])).astype(cd)          # (T_pad, B_pad, 4H)

    h0_p = jnp.pad(h0, ((0, B_pad - B), (0, 0)))                      # (B_pad, H)
    c0_p = jnp.pad(c0, ((0, B_pad - B), (0, 0)))

    # Pre-transposed weights (no in-kernel transposes), MXU-operand dtype.
    w_hh_t = params["w_hh"].T.astype(cd)                              # (H, 4H)
    w_out_t = jnp.pad(params["w_out"].T.astype(jnp.float32),
                      ((0, 0), (0, A_pad - A))).astype(cd)            # (H, A_pad)
    b_out_p = jnp.pad(params["b_out"].astype(jnp.float32),
                      (0, A_pad - A)).reshape(1, A_pad)               # (1, A_pad)

    grid = (B_pad // b_tile, T_pad // t_tile)

    # ---- VMEM budget from the actual tile footprint; cap at 64 MiB (v7x physical).
    isz = jnp.dtype(cd).itemsize
    vmem_need = (2 * t_tile * b_tile * 4 * H * isz        # xg double-buffer
                 + 2 * t_tile * b_tile * A_pad * 4        # y double-buffer
                 + t_tile * b_tile * H * 4                # hs scratch
                 + 8 * b_tile * H * 4                     # h0/c0/hn/cn blocks (2 bufs)
                 + 2 * (H * 4 * H + H * A_pad) * isz      # weights
                 + 2 * b_tile * H * 4                     # h/c carry scratch
                 + 2 * A_pad * 4)
    vmem_limit = int(min(max(vmem_need * 5 // 4 + (2 << 20), 24 << 20), 64 << 20))

    # Advisory cost estimate for XLA scheduling around the custom call.
    flops = int(2 * T_pad * B_pad * H * 4 * H + 2 * T_pad * B_pad * H * A_pad
                + 12 * T_pad * B_pad * H)
    transcendentals = int(5 * T_pad * B_pad * H)
    bytes_accessed = int(xg.size * isz + T_pad * B_pad * A_pad * 4
                         + 4 * 4 * B_pad * H
                         + (w_hh_t.size + w_out_t.size) * isz + A_pad * 4)

    kernel = functools.partial(alstm_recurrence_kernel,
                               seq_len=T, needs_time_mask=(T_pad != T))

    y_tm, hn_p, cn_p = pl.pallas_call(
        kernel,
        out_shape=(
            jax.ShapeDtypeStruct((T_pad, B_pad, A_pad), jnp.float32),
            jax.ShapeDtypeStruct((B_pad, H), jnp.float32),
            jax.ShapeDtypeStruct((B_pad, H), jnp.float32),
        ),
        grid_spec=pltpu.PrefetchScalarGridSpec(
            num_scalar_prefetch=0,
            grid=grid,
            in_specs=[
                pl.BlockSpec((t_tile, b_tile, 4 * H), lambda bi, ti: (ti, bi, 0)),
                pl.BlockSpec((b_tile, H), lambda bi, ti: (bi, 0)),
                pl.BlockSpec((b_tile, H), lambda bi, ti: (bi, 0)),
                # Weights: constant block index -> fetched once, resident in VMEM.
                pl.BlockSpec((H, 4 * H), lambda bi, ti: (0, 0)),
                pl.BlockSpec((H, A_pad), lambda bi, ti: (0, 0)),
                pl.BlockSpec((1, A_pad), lambda bi, ti: (0, 0)),
            ],
            out_specs=[
                pl.BlockSpec((t_tile, b_tile, A_pad), lambda bi, ti: (ti, bi, 0)),
                pl.BlockSpec((b_tile, H), lambda bi, ti: (bi, 0)),
                pl.BlockSpec((b_tile, H), lambda bi, ti: (bi, 0)),
            ],
            scratch_shapes=[
                pltpu.VMEM((b_tile, H), jnp.float32),           # h carry
                pltpu.VMEM((b_tile, H), jnp.float32),           # c carry
                pltpu.VMEM((t_tile, b_tile, H), jnp.float32),   # per-tile hidden sequence
            ],
        ),
        compiler_params=pltpu.CompilerParams(
            dimension_semantics=("parallel", "arbitrary"),
            vmem_limit_bytes=vmem_limit,
        ),
        cost_estimate=pl.CostEstimate(
            flops=flops, transcendentals=transcendentals, bytes_accessed=bytes_accessed),
    )(xg, h0_p, c0_p, w_hh_t, w_out_t, b_out_p)

    y = jnp.transpose(y_tm[:T, :B, :A], (1, 0, 2))   # back to batch_first (B, T, A)
    hn = hn_p[:B][None]                              # (1, B, H), like PyTorch LSTM
    cn = cn_p[:B][None]
    return y, (hn, cn)


def reference_forward(params, x, hx=None):
    """Pure-JAX reference matching nn.Module semantics (eval mode)."""
    B, T, D = x.shape
    H = params["w_in"].shape[0]
    z = _leaky_relu(x @ params["w_in"].T + params["b_in"])
    if hx is None:
        h = jnp.zeros((B, H), jnp.float32)
        c = jnp.zeros((B, H), jnp.float32)
    else:
        h, c = hx[0][0], hx[1][0]

    def step(carry, xt):
        h, c = carry
        gates = (xt @ params["w_ih"].T + params["b_ih"]
                 + h @ params["w_hh"].T + params["b_hh"])
        i, f, g, o = jnp.split(gates, 4, axis=-1)
        i, f, o = jax.nn.sigmoid(i), jax.nn.sigmoid(f), jax.nn.sigmoid(o)
        g = jnp.tanh(g)
        c = f * c + i * g
        h = o * jnp.tanh(c)
        return (h, c), h

    (h, c), hs = lax.scan(step, (h, c), jnp.transpose(z, (1, 0, 2)))
    hs = jnp.transpose(hs, (1, 0, 2))
    y = _leaky_relu(hs) @ params["w_out"].T + params["b_out"]
    return y, (h[None], c[None])


def init_params(key, obs, hidden, action):
    ks = jax.random.split(key, 8)

    def u(k, shape, bound):
        return jax.random.uniform(k, shape, jnp.float32, -bound, bound)

    b_lin = 1.0 / np.sqrt(obs)
    b_lstm = 1.0 / np.sqrt(hidden)
    return {
        "w_in": u(ks[0], (hidden, obs), b_lin),
        "b_in": u(ks[1], (hidden,), b_lin),
        "w_ih": u(ks[2], (4 * hidden, hidden), b_lstm),
        "w_hh": u(ks[3], (4 * hidden, hidden), b_lstm),
        "b_ih": u(ks[4], (4 * hidden,), b_lstm),
        "b_hh": u(ks[5], (4 * hidden,), b_lstm),
        "w_out": u(ks[6], (action, hidden), b_lstm),
        "b_out": u(ks[7], (action,), b_lstm),
    }


if __name__ == "__main__":
    OBS, HIDDEN, ACTION = 8, 128, 3          # module defaults: hidden_size=128
    B, T = 2, 16

    key = jax.random.PRNGKey(0)
    pkey, xkey, hkey, ckey = jax.random.split(key, 4)
    params = init_params(pkey, OBS, HIDDEN, ACTION)
    x = jax.random.normal(xkey, (B, T, OBS), jnp.float32)

    # --- hx = None path, f32 MXU operands (strict accuracy) ---
    y, (hn, cn) = alstm_discrete_forward(params, x, compute_dtype=jnp.float32)
    jax.block_until_ready((y, hn, cn))
    y_ref, (hn_ref_, cn_ref_) = reference_forward(params, x)
    np.testing.assert_allclose(np.asarray(y), np.asarray(y_ref), atol=2e-3, rtol=2e-3)
    np.testing.assert_allclose(np.asarray(hn), np.asarray(hn_ref_), atol=2e-3, rtol=2e-3)
    np.testing.assert_allclose(np.asarray(cn), np.asarray(cn_ref_), atol=2e-3, rtol=2e-3)

    # --- provided hx path + time-padding/mask path (T=13, t_tile request 8 -> T_pad=14) ---
    h0 = 0.1 * jax.random.normal(hkey, (1, B, HIDDEN), jnp.float32)
    c0 = 0.1 * jax.random.normal(ckey, (1, B, HIDDEN), jnp.float32)
    x13 = x[:, :13]
    y2, (hn2, cn2) = alstm_discrete_forward(params, x13, hx=(h0, c0),
                                            t_tile=8, compute_dtype=jnp.float32)
    jax.block_until_ready((y2, hn2, cn2))
    y2_ref, (hn2_ref, cn2_ref) = reference_forward(params, x13, hx=(h0, c0))
    np.testing.assert_allclose(np.asarray(y2), np.asarray(y2_ref), atol=2e-3, rtol=2e-3)
    np.testing.assert_allclose(np.asarray(hn2), np.asarray(hn2_ref), atol=2e-3, rtol=2e-3)
    np.testing.assert_allclose(np.asarray(cn2), np.asarray(cn2_ref), atol=2e-3, rtol=2e-3)

    # --- default bf16-operand MXU path (native on v7x), looser tolerance ---
    y3, (hn3, cn3) = alstm_discrete_forward(params, x)
    jax.block_until_ready((y3, hn3, cn3))
    np.testing.assert_allclose(np.asarray(y3), np.asarray(y_ref), atol=3e-2, rtol=3e-2)
    np.testing.assert_allclose(np.asarray(hn3), np.asarray(hn_ref_), atol=3e-2, rtol=3e-2)
    np.testing.assert_allclose(np.asarray(cn3), np.asarray(cn_ref_), atol=3e-2, rtol=3e-2)

    print("KERNEL_OK")
</pallas_src>

<mosaic_0001>
module attributes {stable_mosaic.version = 11 : i64} {
  func.func @alstm_recurrence_kernel(%arg0: i32, %arg1: i32, %arg2: memref<16x8x512xf32, #tpu.memory_space<vmem>>, %arg3: memref<8x128xf32, #tpu.memory_space<vmem>>, %arg4: memref<8x128xf32, #tpu.memory_space<vmem>>, %arg5: memref<128x512xf32, #tpu.memory_space<vmem>>, %arg6: memref<128x128xf32, #tpu.memory_space<vmem>>, %arg7: memref<1x128xf32, #tpu.memory_space<vmem>>, %arg8: memref<16x8x128xf32, #tpu.memory_space<vmem>>, %arg9: memref<8x128xf32, #tpu.memory_space<vmem>>, %arg10: memref<8x128xf32, #tpu.memory_space<vmem>>, %arg11: memref<8x128xf32, #tpu.memory_space<vmem>>, %arg12: memref<8x128xf32, #tpu.memory_space<vmem>>, %arg13: memref<16x8x128xf32, #tpu.memory_space<vmem>>) attributes {dimension_semantics = [#tpu.dimension_semantics<parallel>, #tpu.dimension_semantics<arbitrary>], iteration_bounds = array<i64: 1, 1>, scalar_prefetch = 0 : i64, scratch_operands = 3 : i64, tpu.core_type = #tpu.core_type<tc>, window_params = [{transform_indices = @transform_0, window_bounds = array<i64: 16, 8, 512>}, {transform_indices = @transform_1, window_bounds = array<i64: 8, 128>}, {transform_indices = @transform_2, window_bounds = array<i64: 8, 128>}, {pipeline_mode = #tpu.pipeline_mode<synchronous>, transform_indices = @transform_3, window_bounds = array<i64: 128, 512>}, {pipeline_mode = #tpu.pipeline_mode<synchronous>, transform_indices = @transform_4, window_bounds = array<i64: 128, 128>}, {pipeline_mode = #tpu.pipeline_mode<synchronous>, transform_indices = @transform_5, window_bounds = array<i64: 1, 128>}, {transform_indices = @transform_6, window_bounds = array<i64: 16, 8, 128>}, {transform_indices = @transform_7, window_bounds = array<i64: 8, 128>}, {transform_indices = @transform_8, window_bounds = array<i64: 8, 128>}]} {
    %c0_i32 = arith.constant 0 : i32
    %0 = arith.cmpi eq, %arg1, %c0_i32 : i32
    %1 = arith.extui %0 : i1 to i32
    %c0_i32_0 = arith.constant 0 : i32
    %2 = arith.cmpi ne, %1, %c0_i32_0 : i32
    scf.if %2 {
      %c0_399 = arith.constant 0 : index
      %c0_400 = arith.constant 0 : index
      %740 = vector.load %arg3[%c0_399, %c0_400] : memref<8x128xf32, #tpu.memory_space<vmem>>, vector<8x128xf32>
      %c0_401 = arith.constant 0 : index
      %c0_402 = arith.constant 0 : index
      %741 = vector.load %arg11[%c0_401, %c0_402] : memref<8x128xf32, #tpu.memory_space<vmem>>, vector<8x128xf32>
      tpu.vector_store %arg11[%c0_401, %c0_402], %740 {strides = array<i32>} : memref<8x128xf32, #tpu.memory_space<vmem>>, vector<8x128xf32>,
      %c0_403 = arith.constant 0 : index
      %c0_404 = arith.constant 0 : index
      %742 = vector.load %arg4[%c0_403, %c0_404] : memref<8x128xf32, #tpu.memory_space<vmem>>, vector<8x128xf32>
      %c0_405 = arith.constant 0 : index
      %c0_406 = arith.constant 0 : index
      %743 = vector.load %arg12[%c0_405, %c0_406] : memref<8x128xf32, #tpu.memory_space<vmem>>, vector<8x128xf32>
      tpu.vector_store %arg12[%c0_405, %c0_406], %742 {strides = array<i32>} : memref<8x128xf32, #tpu.memory_space<vmem>>, vector<8x128xf32>,
    } else {
    }
    %c0_i32_1 = arith.constant 0 : i32
    %c0 = arith.constant 0 : index
    %c0_2 = arith.constant 0 : index
    %3 = vector.load %arg11[%c0, %c0_2] : memref<8x128xf32, #tpu.memory_space<vmem>>, vector<8x128xf32>
    %c0_3 = arith.constant 0 : index
    %c0_4 = arith.constant 0 : index
    %4 = vector.load %arg12[%c0_3, %c0_4] : memref<8x128xf32, #tpu.memory_space<vmem>>, vector<8x128xf32>
    %c0_5 = arith.constant 0 : index
    %c0_6 = arith.constant 0 : index
    %5 = vector.load %arg5[%c0_5, %c0_6] : memref<128x512xf32, #tpu.memory_space<vmem>>, vector<128x512xf32>
    %cst = arith.constant dense<0.000000e+00> : vector<8x512xf32>
    %6 = tpu.matmul %3, %5, %cst {dimension_numbers = #tpu.dot_dimension_numbers<[1], [0], [0], [1], [0, 0, 1, 1], [], []>} : vector<8x128xf32>, vector<128x512xf32>, vector<8x512xf32> -> vector<8x512xf32>
    %7 = arith.index_cast %c0_i32_1 : i32 to index
    %c0_7 = arith.constant 0 : index
    %c0_8 = arith.constant 0 : index
    %8 = vector.load %arg2[%7, %c0_7, %c0_8] : memref<16x8x512xf32, #tpu.memory_space<vmem>>, vector<1x8x512xf32>
    %9 = vector.shape_cast %8 : vector<1x8x512xf32> to vector<8x512xf32>
    %10 = arith.addf %9, %6 : vector<8x512xf32>
    %11 = vector.extract_strided_slice %10 {offsets = [0, 0], sizes = [8, 128], strides = [1, 1]} : vector<8x512xf32> to vector<8x128xf32>
    %cst_9 = arith.constant 5.000000e-01 : f32
    %12 = vector.broadcast %cst_9 : f32 to vector<8x128xf32>
    %13 = arith.mulf %12, %11 : vector<8x128xf32>
    %14 = math.tanh %13 : vector<8x128xf32>
    %cst_10 = arith.constant 1.000000e+00 : f32
    %15 = vector.broadcast %cst_10 : f32 to vector<8x128xf32>
    %16 = arith.addf %14, %15 : vector<8x128xf32>
    %cst_11 = arith.constant 5.000000e-01 : f32
    %17 = vector.broadcast %cst_11 : f32 to vector<8x128xf32>
    %18 = arith.mulf %17, %16 : vector<8x128xf32>
    %19 = vector.extract_strided_slice %10 {offsets = [0, 128], sizes = [8, 128], strides = [1, 1]} : vector<8x512xf32> to vector<8x128xf32>
    %cst_12 = arith.constant 5.000000e-01 : f32
    %20 = vector.broadcast %cst_12 : f32 to vector<8x128xf32>
    %21 = arith.mulf %20, %19 : vector<8x128xf32>
    %22 = math.tanh %21 : vector<8x128xf32>
    %cst_13 = arith.constant 1.000000e+00 : f32
    %23 = vector.broadcast %cst_13 : f32 to vector<8x128xf32>
    %24 = arith.addf %22, %23 : vector<8x128xf32>
    %cst_14 = arith.constant 5.000000e-01 : f32
    %25 = vector.broadcast %cst_14 : f32 to vector<8x128xf32>
    %26 = arith.mulf %25, %24 : vector<8x128xf32>
    %27 = vector.extract_strided_slice %10 {offsets = [0, 256], sizes = [8, 128], strides = [1, 1]} : vector<8x512xf32> to vector<8x128xf32>
    %28 = math.tanh %27 : vector<8x128xf32>
    %29 = vector.extract_strided_slice %10 {offsets = [0, 384], sizes = [8, 128], strides = [1, 1]} : vector<8x512xf32> to vector<8x128xf32>
    %cst_15 = arith.constant 5.000000e-01 : f32
    %30 = vector.broadcast %cst_15 : f32 to vector<8x128xf32>
    %31 = arith.mulf %30, %29 : vector<8x128xf32>
    %32 = math.tanh %31 : vector<8x128xf32>
    %cst_16 = arith.constant 1.000000e+00 : f32
    %33 = vector.broadcast %cst_16 : f32 to vector<8x128xf32>
    %34 = arith.addf %32, %33 : vector<8x128xf32>
    %cst_17 = arith.constant 5.000000e-01 : f32
    %35 = vector.broadcast %cst_17 : f32 to vector<8x128xf32>
    %36 = arith.mulf %35, %34 : vector<8x128xf32>
    %37 = arith.mulf %26, %4 : vector<8x128xf32>
    %38 = arith.mulf %18, %28 : vector<8x128xf32>
    %39 = arith.addf %37, %38 : vector<8x128xf32>
    %40 = math.tanh %39 : vector<8x128xf32>
    %41 = arith.mulf %36, %40 : vector<8x128xf32>
    %42 = arith.index_cast %c0_i32_1 : i32 to index
    %c0_18 = arith.constant 0 : index
    %c0_19 = arith.constant 0 : index
    %43 = vector.load %arg13[%42, %c0_18, %c0_19] : memref<16x8x128xf32, #tpu.memory_space<vmem>>, vector<1x8x128xf32>
    %44 = vector.shape_cast %43 : vector<1x8x128xf32> to vector<8x128xf32>
    %45 = vector.shape_cast %41 : vector<8x128xf32> to vector<1x8x128xf32>
    tpu.vector_store %arg13[%42, %c0_18, %c0_19], %45 {strides = array<i32>} : memref<16x8x128xf32, #tpu.memory_space<vmem>>, vector<1x8x128xf32>,
    %c0_20 = arith.constant 0 : index
    %c0_21 = arith.constant 0 : index
    %46 = vector.load %arg11[%c0_20, %c0_21] : memref<8x128xf32, #tpu.memory_space<vmem>>, vector<8x128xf32>
    tpu.vector_store %arg11[%c0_20, %c0_21], %41 {strides = array<i32>} : memref<8x128xf32, #tpu.memory_space<vmem>>, vector<8x128xf32>,
    %c0_22 = arith.constant 0 : index
    %c0_23 = arith.constant 0 : index
    %47 = vector.load %arg12[%c0_22, %c0_23] : memref<8x128xf32, #tpu.memory_space<vmem>>, vector<8x128xf32>
    tpu.vector_store %arg12[%c0_22, %c0_23], %39 {strides = array<i32>} : memref<8x128xf32, #tpu.memory_space<vmem>>, vector<8x128xf32>,
    %c1_i32 = arith.constant 1 : i32
    %c0_24 = arith.constant 0 : index
    %c0_25 = arith.constant 0 : index
    %48 = vector.load %arg11[%c0_24, %c0_25] : memref<8x128xf32, #tpu.memory_space<vmem>>, vector<8x128xf32>
    %c0_26 = arith.constant 0 : index
    %c0_27 = arith.constant 0 : index
    %49 = vector.load %arg12[%c0_26, %c0_27] : memref<8x128xf32, #tpu.memory_space<vmem>>, vector<8x128xf32>
    %c0_28 = arith.constant 0 : index
    %c0_29 = arith.constant 0 : index
    %50 = vector.load %arg5[%c0_28, %c0_29] : memref<128x512xf32, #tpu.memory_space<vmem>>, vector<128x512xf32>
    %cst_30 = arith.constant dense<0.000000e+00> : vector<8x512xf32>
    %51 = tpu.matmul %48, %50, %cst_30 {dimension_numbers = #tpu.dot_dimension_numbers<[1], [0], [0], [1], [0, 0, 1, 1], [], []>} : vector<8x128xf32>, vector<128x512xf32>, vector<8x512xf32> -> vector<8x512xf32>
    %52 = arith.index_cast %c1_i32 : i32 to index
    %c0_31 = arith.constant 0 : index
    %c0_32 = arith.constant 0 : index
    %53 = vector.load %arg2[%52, %c0_31, %c0_32] : memref<16x8x512xf32, #tpu.memory_space<vmem>>, vector<1x8x512xf32>
    %54 = vector.shape_cast %53 : vector<1x8x512xf32> to vector<8x512xf32>
    %55 = arith.addf %54, %51 : vector<8x512xf32>
    %56 = vector.extract_strided_slice %55 {offsets = [0, 0], sizes = [8, 128], strides = [1, 1]} : vector<8x512xf32> to vector<8x128xf32>
    %cst_33 = arith.constant 5.000000e-01 : f32
    %57 = vector.broadcast %cst_33 : f32 to vector<8x128xf32>
    %58 = arith.mulf %57, %56 : vector<8x128xf32>
    %59 = math.tanh %58 : vector<8x128xf32>
    %cst_34 = arith.constant 1.000000e+00 : f32
    %60 = vector.broadcast %cst_34 : f32 to vector<8x128xf32>
    %61 = arith.addf %59, %60 : vector<8x128xf32>
    %cst_35 = arith.constant 5.000000e-01 : f32
    %62 = vector.broadcast %cst_35 : f32 to vector<8x128xf32>
    %63 = arith.mulf %62, %61 : vector<8x128xf32>
    %64 = vector.extract_strided_slice %55 {offsets = [0, 128], sizes = [8, 128], strides = [1, 1]} : vector<8x512xf32> to vector<8x128xf32>
    %cst_36 = arith.constant 5.000000e-01 : f32
    %65 = vector.broadcast %cst_36 : f32 to vector<8x128xf32>
    %66 = arith.mulf %65, %64 : vector<8x128xf32>
    %67 = math.tanh %66 : vector<8x128xf32>
    %cst_37 = arith.constant 1.000000e+00 : f32
    %68 = vector.broadcast %cst_37 : f32 to vector<8x128xf32>
    %69 = arith.addf %67, %68 : vector<8x128xf32>
    %cst_38 = arith.constant 5.000000e-01 : f32
    %70 = vector.broadcast %cst_38 : f32 to vector<8x128xf32>
    %71 = arith.mulf %70, %69 : vector<8x128xf32>
    %72 = vector.extract_strided_slice %55 {offsets = [0, 256], sizes = [8, 128], strides = [1, 1]} : vector<8x512xf32> to vector<8x128xf32>
    %73 = math.tanh %72 : vector<8x128xf32>
    %74 = vector.extract_strided_slice %55 {offsets = [0, 384], sizes = [8, 128], strides = [1, 1]} : vector<8x512xf32> to vector<8x128xf32>
    %cst_39 = arith.constant 5.000000e-01 : f32
    %75 = vector.broadcast %cst_39 : f32 to vector<8x128xf32>
    %76 = arith.mulf %75, %74 : vector<8x128xf32>
    %77 = math.tanh %76 : vector<8x128xf32>
    %cst_40 = arith.constant 1.000000e+00 : f32
    %78 = vector.broadcast %cst_40 : f32 to vector<8x128xf32>
    %79 = arith.addf %77, %78 : vector<8x128xf32>
    %cst_41 = arith.constant 5.000000e-01 : f32
    %80 = vector.broadcast %cst_41 : f32 to vector<8x128xf32>
    %81 = arith.mulf %80, %79 : vector<8x128xf32>
    %82 = arith.mulf %71, %49 : vector<8x128xf32>
    %83 = arith.mulf %63, %73 : vector<8x128xf32>
    %84 = arith.addf %82, %83 : vector<8x128xf32>
    %85 = math.tanh %84 : vector<8x128xf32>
    %86 = arith.mulf %81, %85 : vector<8x128xf32>
    %87 = arith.index_cast %c1_i32 : i32 to index
    %c0_42 = arith.constant 0 : index
    %c0_43 = arith.constant 0 : index
    %88 = vector.load %arg13[%87, %c0_42, %c0_43] : memref<16x8x128xf32, #tpu.memory_space<vmem>>, vector<1x8x128xf32>
    %89 = vector.shape_cast %88 : vector<1x8x128xf32> to vector<8x128xf32>
    %90 = vector.shape_cast %86 : vector<8x128xf32> to vector<1x8x128xf32>
    tpu.vector_store %arg13[%87, %c0_42, %c0_43], %90 {strides = array<i32>} : memref<16x8x128xf32, #tpu.memory_space<vmem>>, vector<1x8x128xf32>,
    %c0_44 = arith.constant 0 : index
    %c0_45 = arith.constant 0 : index
    %91 = vector.load %arg11[%c0_44, %c0_45] : memref<8x128xf32, #tpu.memory_space<vmem>>, vector<8x128xf32>
    tpu.vector_store %arg11[%c0_44, %c0_45], %86 {strides = array<i32>} : memref<8x128xf32, #tpu.memory_space<vmem>>, vector<8x128xf32>,
    %c0_46 = arith.constant 0 : index
    %c0_47 = arith.constant 0 : index
    %92 = vector.load %arg12[%c0_46, %c0_47] : memref<8x128xf32, #tpu.memory_space<vmem>>, vector<8x128xf32>
    tpu.vector_store %arg12[%c0_46, %c0_47], %84 {strides = array<i32>} : memref<8x128xf32, #tpu.memory_space<vmem>>, vector<8x128xf32>,
    %c2_i32 = arith.constant 2 : i32
    %c0_48 = arith.constant 0 : index
    %c0_49 = arith.constant 0 : index
    %93 = vector.load %arg11[%c0_48, %c0_49] : memref<8x128xf32, #tpu.memory_space<vmem>>, vector<8x128xf32>
    %c0_50 = arith.constant 0 : index
    %c0_51 = arith.constant 0 : index
    %94 = vector.load %arg12[%c0_50, %c0_51] : memref<8x128xf32, #tpu.memory_space<vmem>>, vector<8x128xf32>
    %c0_52 = arith.constant 0 : index
    %c0_53 = arith.constant 0 : index
    %95 = vector.load %arg5[%c0_52, %c0_53] : memref<128x512xf32, #tpu.memory_space<vmem>>, vector<128x512xf32>
    %cst_54 = arith.constant dense<0.000000e+00> : vector<8x512xf32>
    %96 = tpu.matmul %93, %95, %cst_54 {dimension_numbers = #tpu.dot_dimension_numbers<[1], [0], [0], [1], [0, 0, 1, 1], [], []>} : vector<8x128xf32>, vector<128x512xf32>, vector<8x512xf32> -> vector<8x512xf32>
    %97 = arith.index_cast %c2_i32 : i32 to index
    %c0_55 = arith.constant 0 : index
    %c0_56 = arith.constant 0 : index
    %98 = vector.load %arg2[%97, %c0_55, %c0_56] : memref<16x8x512xf32, #tpu.memory_space<vmem>>, vector<1x8x512xf32>
    %99 = vector.shape_cast %98 : vector<1x8x512xf32> to vector<8x512xf32>
    %100 = arith.addf %99, %96 : vector<8x512xf32>
    %101 = vector.extract_strided_slice %100 {offsets = [0, 0], sizes = [8, 128], strides = [1, 1]} : vector<8x512xf32> to vector<8x128xf32>
    %cst_57 = arith.constant 5.000000e-01 : f32
    %102 = vector.broadcast %cst_57 : f32 to vector<8x128xf32>
    %103 = arith.mulf %102, %101 : vector<8x128xf32>
    %104 = math.tanh %103 : vector<8x128xf32>
    %cst_58 = arith.constant 1.000000e+00 : f32
    %105 = vector.broadcast %cst_58 : f32 to vector<8x128xf32>
    %106 = arith.addf %104, %105 : vector<8x128xf32>
    %cst_59 = arith.constant 5.000000e-01 : f32
    %107 = vector.broadcast %cst_59 : f32 to vector<8x128xf32>
    %108 = arith.mulf %107, %106 : vector<8x128xf32>
    %109 = vector.extract_strided_slice %100 {offsets = [0, 128], sizes = [8, 128], strides = [1, 1]} : vector<8x512xf32> to vector<8x128xf32>
    %cst_60 = arith.constant 5.000000e-01 : f32
    %110 = vector.broadcast %cst_60 : f32 to vector<8x128xf32>
    %111 = arith.mulf %110, %109 : vector<8x128xf32>
    %112 = math.tanh %111 : vector<8x128xf32>
    %cst_61 = arith.constant 1.000000e+00 : f32
    %113 = vector.broadcast %cst_61 : f32 to vector<8x128xf32>
    %114 = arith.addf %112, %113 : vector<8x128xf32>
    %cst_62 = arith.constant 5.000000e-01 : f32
    %115 = vector.broadcast %cst_62 : f32 to vector<8x128xf32>
    %116 = arith.mulf %115, %114 : vector<8x128xf32>
    %117 = vector.extract_strided_slice %100 {offsets = [0, 256], sizes = [8, 128], strides = [1, 1]} : vector<8x512xf32> to vector<8x128xf32>
    %118 = math.tanh %117 : vector<8x128xf32>
    %119 = vector.extract_strided_slice %100 {offsets = [0, 384], sizes = [8, 128], strides = [1, 1]} : vector<8x512xf32> to vector<8x128xf32>
    %cst_63 = arith.constant 5.000000e-01 : f32
    %120 = vector.broadcast %cst_63 : f32 to vector<8x128xf32>
    %121 = arith.mulf %120, %119 : vector<8x128xf32>
    %122 = math.tanh %121 : vector<8x128xf32>
    %cst_64 = arith.constant 1.000000e+00 : f32
    %123 = vector.broadcast %cst_64 : f32 to vector<8x128xf32>
    %124 = arith.addf %122, %123 : vector<8x128xf32>
    %cst_65 = arith.constant 5.000000e-01 : f32
    %125 = vector.broadcast %cst_65 : f32 to vector<8x128xf32>
    %126 = arith.mulf %125, %124 : vector<8x128xf32>
    %127 = arith.mulf %116, %94 : vector<8x128xf32>
    %128 = arith.mulf %108, %118 : vector<8x128xf32>
    %129 = arith.addf %127, %128 : vector<8x128xf32>
    %130 = math.tanh %129 : vector<8x128xf32>
    %131 = arith.mulf %126, %130 : vector<8x128xf32>
    %132 = arith.index_cast %c2_i32 : i32 to index
    %c0_66 = arith.constant 0 : index
    %c0_67 = arith.constant 0 : index
    %133 = vector.load %arg13[%132, %c0_66, %c0_67] : memref<16x8x128xf32, #tpu.memory_space<vmem>>, vector<1x8x128xf32>
    %134 = vector.shape_cast %133 : vector<1x8x128xf32> to vector<8x128xf32>
    %135 = vector.shape_cast %131 : vector<8x128xf32> to vector<1x8x128xf32>
    tpu.vector_store %arg13[%132, %c0_66, %c0_67], %135 {strides = array<i32>} : memref<16x8x128xf32, #tpu.memory_space<vmem>>, vector<1x8x128xf32>,
    %c0_68 = arith.constant 0 : index
    %c0_69 = arith.constant 0 : index
    %136 = vector.load %arg11[%c0_68, %c0_69] : memref<8x128xf32, #tpu.memory_space<vmem>>, vector<8x128xf32>
    tpu.vector_store %arg11[%c0_68, %c0_69], %131 {strides = array<i32>} : memref<8x128xf32, #tpu.memory_space<vmem>>, vector<8x128xf32>,
    %c0_70 = arith.constant 0 : index
    %c0_71 = arith.constant 0 : index
    %137 = vector.load %arg12[%c0_70, %c0_71] : memref<8x128xf32, #tpu.memory_space<vmem>>, vector<8x128xf32>
    tpu.vector_store %arg12[%c0_70, %c0_71], %129 {strides = array<i32>} : memref<8x128xf32, #tpu.memory_space<vmem>>, vector<8x128xf32>,
    %c3_i32 = arith.constant 3 : i32
    %c0_72 = arith.constant 0 : index
    %c0_73 = arith.constant 0 : index
    %138 = vector.load %arg11[%c0_72, %c0_73] : memref<8x128xf32, #tpu.memory_space<vmem>>, vector<8x128xf32>
    %c0_74 = arith.constant 0 : index
    %c0_75 = arith.constant 0 : index
    %139 = vector.load %arg12[%c0_74, %c0_75] : memref<8x128xf32, #tpu.memory_space<vmem>>, vector<8x128xf32>
    %c0_76 = arith.constant 0 : index
    %c0_77 = arith.constant 0 : index
    %140 = vector.load %arg5[%c0_76, %c0_77] : memref<128x512xf32, #tpu.memory_space<vmem>>, vector<128x512xf32>
    %cst_78 = arith.constant dense<0.000000e+00> : vector<8x512xf32>
    %141 = tpu.matmul %138, %140, %cst_78 {dimension_numbers = #tpu.dot_dimension_numbers<[1], [0], [0], [1], [0, 0, 1, 1], [], []>} : vector<8x128xf32>, vector<128x512xf32>, vector<8x512xf32> -> vector<8x512xf32>
    %142 = arith.index_cast %c3_i32 : i32 to index
    %c0_79 = arith.constant 0 : index
    %c0_80 = arith.constant 0 : index
    %143 = vector.load %arg2[%142, %c0_79, %c0_80] : memref<16x8x512xf32, #tpu.memory_space<vmem>>, vector<1x8x512xf32>
    %144 = vector.shape_cast %143 : vector<1x8x512xf32> to vector<8x512xf32>
    %145 = arith.addf %144, %141 : vector<8x512xf32>
    %146 = vector.extract_strided_slice %145 {offsets = [0, 0], sizes = [8, 128], strides = [1, 1]} : vector<8x512xf32> to vector<8x128xf32>
    %cst_81 = arith.constant 5.000000e-01 : f32
    %147 = vector.broadcast %cst_81 : f32 to vector<8x128xf32>
    %148 = arith.mulf %147, %146 : vector<8x128xf32>
    %149 = math.tanh %148 : vector<8x128xf32>
    %cst_82 = arith.constant 1.000000e+00 : f32
    %150 = vector.broadcast %cst_82 : f32 to vector<8x128xf32>
    %151 = arith.addf %149, %150 : vector<8x128xf32>
    %cst_83 = arith.constant 5.000000e-01 : f32
    %152 = vector.broadcast %cst_83 : f32 to vector<8x128xf32>
    %153 = arith.mulf %152, %151 : vector<8x128xf32>
    %154 = vector.extract_strided_slice %145 {offsets = [0, 128], sizes = [8, 128], strides = [1, 1]} : vector<8x512xf32> to vector<8x128xf32>
    %cst_84 = arith.constant 5.000000e-01 : f32
    %155 = vector.broadcast %cst_84 : f32 to vector<8x128xf32>
    %156 = arith.mulf %155, %154 : vector<8x128xf32>
    %157 = math.tanh %156 : vector<8x128xf32>
    %cst_85 = arith.constant 1.000000e+00 : f32
    %158 = vector.broadcast %cst_85 : f32 to vector<8x128xf32>
    %159 = arith.addf %157, %158 : vector<8x128xf32>
    %cst_86 = arith.constant 5.000000e-01 : f32
    %160 = vector.broadcast %cst_86 : f32 to vector<8x128xf32>
    %161 = arith.mulf %160, %159 : vector<8x128xf32>
    %162 = vector.extract_strided_slice %145 {offsets = [0, 256], sizes = [8, 128], strides = [1, 1]} : vector<8x512xf32> to vector<8x128xf32>
    %163 = math.tanh %162 : vector<8x128xf32>
    %164 = vector.extract_strided_slice %145 {offsets = [0, 384], sizes = [8, 128], strides = [1, 1]} : vector<8x512xf32> to vector<8x128xf32>
    %cst_87 = arith.constant 5.000000e-01 : f32
    %165 = vector.broadcast %cst_87 : f32 to vector<8x128xf32>
    %166 = arith.mulf %165, %164 : vector<8x128xf32>
    %167 = math.tanh %166 : vector<8x128xf32>
    %cst_88 = arith.constant 1.000000e+00 : f32
    %168 = vector.broadcast %cst_88 : f32 to vector<8x128xf32>
    %169 = arith.addf %167, %168 : vector<8x128xf32>
    %cst_89 = arith.constant 5.000000e-01 : f32
    %170 = vector.broadcast %cst_89 : f32 to vector<8x128xf32>
    %171 = arith.mulf %170, %169 : vector<8x128xf32>
    %172 = arith.mulf %161, %139 : vector<8x128xf32>
    %173 = arith.mulf %153, %163 : vector<8x128xf32>
    %174 = arith.addf %172, %173 : vector<8x128xf32>
    %175 = math.tanh %174 : vector<8x128xf32>
    %176 = arith.mulf %171, %175 : vector<8x128xf32>
    %177 = arith.index_cast %c3_i32 : i32 to index
    %c0_90 = arith.constant 0 : index
    %c0_91 = arith.constant 0 : index
    %178 = vector.load %arg13[%177, %c0_90, %c0_91] : memref<16x8x128xf32, #tpu.memory_space<vmem>>, vector<1x8x128xf32>
    %179 = vector.shape_cast %178 : vector<1x8x128xf32> to vector<8x128xf32>
    %180 = vector.shape_cast %176 : vector<8x128xf32> to vector<1x8x128xf32>
    tpu.vector_store %arg13[%177, %c0_90, %c0_91], %180 {strides = array<i32>} : memref<16x8x128xf32, #tpu.memory_space<vmem>>, vector<1x8x128xf32>,
    %c0_92 = arith.constant 0 : index
    %c0_93 = arith.constant 0 : index
    %181 = vector.load %arg11[%c0_92, %c0_93] : memref<8x128xf32, #tpu.memory_space<vmem>>, vector<8x128xf32>
    tpu.vector_store %arg11[%c0_92, %c0_93], %176 {strides = array<i32>} : memref<8x128xf32, #tpu.memory_space<vmem>>, vector<8x128xf32>,
    %c0_94 = arith.constant 0 : index
    %c0_95 = arith.constant 0 : index
    %182 = vector.load %arg12[%c0_94, %c0_95] : memref<8x128xf32, #tpu.memory_space<vmem>>, vector<8x128xf32>
    tpu.vector_store %arg12[%c0_94, %c0_95], %174 {strides = array<i32>} : memref<8x128xf32, #tpu.memory_space<vmem>>, vector<8x128xf32>,
    %c4_i32 = arith.constant 4 : i32
    %c0_96 = arith.constant 0 : index
    %c0_97 = arith.constant 0 : index
    %183 = vector.load %arg11[%c0_96, %c0_97] : memref<8x128xf32, #tpu.memory_space<vmem>>, vector<8x128xf32>
    %c0_98 = arith.constant 0 : index
    %c0_99 = arith.constant 0 : index
    %184 = vector.load %arg12[%c0_98, %c0_99] : memref<8x128xf32, #tpu.memory_space<vmem>>, vector<8x128xf32>
    %c0_100 = arith.constant 0 : index
    %c0_101 = arith.constant 0 : index
    %185 = vector.load %arg5[%c0_100, %c0_101] : memref<128x512xf32, #tpu.memory_space<vmem>>, vector<128x512xf32>
    %cst_102 = arith.constant dense<0.000000e+00> : vector<8x512xf32>
    %186 = tpu.matmul %183, %185, %cst_102 {dimension_numbers = #tpu.dot_dimension_numbers<[1], [0], [0], [1], [0, 0, 1, 1], [], []>} : vector<8x128xf32>, vector<128x512xf32>, vector<8x512xf32> -> vector<8x512xf32>
    %187 = arith.index_cast %c4_i32 : i32 to index
    %c0_103 = arith.constant 0 : index
    %c0_104 = arith.constant 0 : index
    %188 = vector.load %arg2[%187, %c0_103, %c0_104] : memref<16x8x512xf32, #tpu.memory_space<vmem>>, vector<1x8x512xf32>
    %189 = vector.shape_cast %188 : vector<1x8x512xf32> to vector<8x512xf32>
    %190 = arith.addf %189, %186 : vector<8x512xf32>
    %191 = vector.extract_strided_slice %190 {offsets = [0, 0], sizes = [8, 128], strides = [1, 1]} : vector<8x512xf32> to vector<8x128xf32>
    %cst_105 = arith.constant 5.000000e-01 : f32
    %192 = vector.broadcast %cst_105 : f32 to vector<8x128xf32>
    %193 = arith.mulf %192, %191 : vector<8x128xf32>
    %194 = math.tanh %193 : vector<8x128xf32>
    %cst_106 = arith.constant 1.000000e+00 : f32
    %195 = vector.broadcast %cst_106 : f32 to vector<8x128xf32>
    %196 = arith.addf %194, %195 : vector<8x128xf32>
    %cst_107 = arith.constant 5.000000e-01 : f32
    %197 = vector.broadcast %cst_107 : f32 to vector<8x128xf32>
    %198 = arith.mulf %197, %196 : vector<8x128xf32>
    %199 = vector.extract_strided_slice %190 {offsets = [0, 128], sizes = [8, 128], strides = [1, 1]} : vector<8x512xf32> to vector<8x128xf32>
    %cst_108 = arith.constant 5.000000e-01 : f32
    %200 = vector.broadcast %cst_108 : f32 to vector<8x128xf32>
    %201 = arith.mulf %200, %199 : vector<8x128xf32>
    %202 = math.tanh %201 : vector<8x128xf32>
    %cst_109 = arith.constant 1.000000e+00 : f32
    %203 = vector.broadcast %cst_109 : f32 to vector<8x128xf32>
    %204 = arith.addf %202, %203 : vector<8x128xf32>
    %cst_110 = arith.constant 5.000000e-01 : f32
    %205 = vector.broadcast %cst_110 : f32 to vector<8x128xf32>
    %206 = arith.mulf %205, %204 : vector<8x128xf32>
    %207 = vector.extract_strided_slice %190 {offsets = [0, 256], sizes = [8, 128], strides = [1, 1]} : vector<8x512xf32> to vector<8x128xf32>
    %208 = math.tanh %207 : vector<8x128xf32>
    %209 = vector.extract_strided_slice %190 {offsets = [0, 384], sizes = [8, 128], strides = [1, 1]} : vector<8x512xf32> to vector<8x128xf32>
    %cst_111 = arith.constant 5.000000e-01 : f32
    %210 = vector.broadcast %cst_111 : f32 to vector<8x128xf32>
    %211 = arith.mulf %210, %209 : vector<8x128xf32>
    %212 = math.tanh %211 : vector<8x128xf32>
    %cst_112 = arith.constant 1.000000e+00 : f32
    %213 = vector.broadcast %cst_112 : f32 to vector<8x128xf32>
    %214 = arith.addf %212, %213 : vector<8x128xf32>
    %cst_113 = arith.constant 5.000000e-01 : f32
    %215 = vector.broadcast %cst_113 : f32 to vector<8x128xf32>
    %216 = arith.mulf %215, %214 : vector<8x128xf32>
    %217 = arith.mulf %206, %184 : vector<8x128xf32>
    %218 = arith.mulf %198, %208 : vector<8x128xf32>
    %219 = arith.addf %217, %218 : vector<8x128xf32>
    %220 = math.tanh %219 : vector<8x128xf32>
    %221 = arith.mulf %216, %220 : vector<8x128xf32>
    %222 = arith.index_cast %c4_i32 : i32 to index
    %c0_114 = arith.constant 0 : index
    %c0_115 = arith.constant 0 : index
    %223 = vector.load %arg13[%222, %c0_114, %c0_115] : memref<16x8x128xf32, #tpu.memory_space<vmem>>, vector<1x8x128xf32>
    %224 = vector.shape_cast %223 : vector<1x8x128xf32> to vector<8x128xf32>
    %225 = vector.shape_cast %221 : vector<8x128xf32> to vector<1x8x128xf32>
    tpu.vector_store %arg13[%222, %c0_114, %c0_115], %225 {strides = array<i32>} : memref<16x8x128xf32, #tpu.memory_space<vmem>>, vector<1x8x128xf32>,
    %c0_116 = arith.constant 0 : index
    %c0_117 = arith.constant 0 : index
    %226 = vector.load %arg11[%c0_116, %c0_117] : memref<8x128xf32, #tpu.memory_space<vmem>>, vector<8x128xf32>
    tpu.vector_store %arg11[%c0_116, %c0_117], %221 {strides = array<i32>} : memref<8x128xf32, #tpu.memory_space<vmem>>, vector<8x128xf32>,
    %c0_118 = arith.constant 0 : index
    %c0_119 = arith.constant 0 : index
    %227 = vector.load %arg12[%c0_118, %c0_119] : memref<8x128xf32, #tpu.memory_space<vmem>>, vector<8x128xf32>
    tpu.vector_store %arg12[%c0_118, %c0_119], %219 {strides = array<i32>} : memref<8x128xf32, #tpu.memory_space<vmem>>, vector<8x128xf32>,
    %c5_i32 = arith.constant 5 : i32
    %c0_120 = arith.constant 0 : index
    %c0_121 = arith.constant 0 : index
    %228 = vector.load %arg11[%c0_120, %c0_121] : memref<8x128xf32, #tpu.memory_space<vmem>>, vector<8x128xf32>
    %c0_122 = arith.constant 0 : index
    %c0_123 = arith.constant 0 : index
    %229 = vector.load %arg12[%c0_122, %c0_123] : memref<8x128xf32, #tpu.memory_space<vmem>>, vector<8x128xf32>
    %c0_124 = arith.constant 0 : index
    %c0_125 = arith.constant 0 : index
    %230 = vector.load %arg5[%c0_124, %c0_125] : memref<128x512xf32, #tpu.memory_space<vmem>>, vector<128x512xf32>
    %cst_126 = arith.constant dense<0.000000e+00> : vector<8x512xf32>
    %231 = tpu.matmul %228, %230, %cst_126 {dimension_numbers = #tpu.dot_dimension_numbers<[1], [0], [0], [1], [0, 0, 1, 1], [], []>} : vector<8x128xf32>, vector<128x512xf32>, vector<8x512xf32> -> vector<8x512xf32>
    %232 = arith.index_cast %c5_i32 : i32 to index
    %c0_127 = arith.constant 0 : index
    %c0_128 = arith.constant 0 : index
    %233 = vector.load %arg2[%232, %c0_127, %c0_128] : memref<16x8x512xf32, #tpu.memory_space<vmem>>, vector<1x8x512xf32>
    %234 = vector.shape_cast %233 : vector<1x8x512xf32> to vector<8x512xf32>
    %235 = arith.addf %234, %231 : vector<8x512xf32>
    %236 = vector.extract_strided_slice %235 {offsets = [0, 0], sizes = [8, 128], strides = [1, 1]} : vector<8x512xf32> to vector<8x128xf32>
    %cst_129 = arith.constant 5.000000e-01 : f32
    %237 = vector.broadcast %cst_129 : f32 to vector<8x128xf32>
    %238 = arith.mulf %237, %236 : vector<8x128xf32>
    %239 = math.tanh %238 : vector<8x128xf32>
    %cst_130 = arith.constant 1.000000e+00 : f32
    %240 = vector.broadcast %cst_130 : f32 to vector<8x128xf32>
    %241 = arith.addf %239, %240 : vector<8x128xf32>
    %cst_131 = arith.constant 5.000000e-01 : f32
    %242 = vector.broadcast %cst_131 : f32 to vector<8x128xf32>
    %243 = arith.mulf %242, %241 : vector<8x128xf32>
    %244 = vector.extract_strided_slice %235 {offsets = [0, 128], sizes = [8, 128], strides = [1, 1]} : vector<8x512xf32> to vector<8x128xf32>
    %cst_132 = arith.constant 5.000000e-01 : f32
    %245 = vector.broadcast %cst_132 : f32 to vector<8x128xf32>
    %246 = arith.mulf %245, %244 : vector<8x128xf32>
    %247 = math.tanh %246 : vector<8x128xf32>
    %cst_133 = arith.constant 1.000000e+00 : f32
    %248 = vector.broadcast %cst_133 : f32 to vector<8x128xf32>
    %249 = arith.addf %247, %248 : vector<8x128xf32>
    %cst_134 = arith.constant 5.000000e-01 : f32
    %250 = vector.broadcast %cst_134 : f32 to vector<8x128xf32>
    %251 = arith.mulf %250, %249 : vector<8x128xf32>
    %252 = vector.extract_strided_slice %235 {offsets = [0, 256], sizes = [8, 128], strides = [1, 1]} : vector<8x512xf32> to vector<8x128xf32>
    %253 = math.tanh %252 : vector<8x128xf32>
    %254 = vector.extract_strided_slice %235 {offsets = [0, 384], sizes = [8, 128], strides = [1, 1]} : vector<8x512xf32> to vector<8x128xf32>
    %cst_135 = arith.constant 5.000000e-01 : f32
    %255 = vector.broadcast %cst_135 : f32 to vector<8x128xf32>
    %256 = arith.mulf %255, %254 : vector<8x128xf32>
    %257 = math.tanh %256 : vector<8x128xf32>
    %cst_136 = arith.constant 1.000000e+00 : f32
    %258 = vector.broadcast %cst_136 : f32 to vector<8x128xf32>
    %259 = arith.addf %257, %258 : vector<8x128xf32>
    %cst_137 = arith.constant 5.000000e-01 : f32
    %260 = vector.broadcast %cst_137 : f32 to vector<8x128xf32>
    %261 = arith.mulf %260, %259 : vector<8x128xf32>
    %262 = arith.mulf %251, %229 : vector<8x128xf32>
    %263 = arith.mulf %243, %253 : vector<8x128xf32>
    %264 = arith.addf %262, %263 : vector<8x128xf32>
    %265 = math.tanh %264 : vector<8x128xf32>
    %266 = arith.mulf %261, %265 : vector<8x128xf32>
    %267 = arith.index_cast %c5_i32 : i32 to index
    %c0_138 = arith.constant 0 : index
    %c0_139 = arith.constant 0 : index
    %268 = vector.load %arg13[%267, %c0_138, %c0_139] : memref<16x8x128xf32, #tpu.memory_space<vmem>>, vector<1x8x128xf32>
    %269 = vector.shape_cast %268 : vector<1x8x128xf32> to vector<8x128xf32>
    %270 = vector.shape_cast %266 : vector<8x128xf32> to vector<1x8x128xf32>
    tpu.vector_store %arg13[%267, %c0_138, %c0_139], %270 {strides = array<i32>} : memref<16x8x128xf32, #tpu.memory_space<vmem>>, vector<1x8x128xf32>,
    %c0_140 = arith.constant 0 : index
    %c0_141 = arith.constant 0 : index
    %271 = vector.load %arg11[%c0_140, %c0_141] : memref<8x128xf32, #tpu.memory_space<vmem>>, vector<8x128xf32>
    tpu.vector_store %arg11[%c0_140, %c0_141], %266 {strides = array<i32>} : memref<8x128xf32, #tpu.memory_space<vmem>>, vector<8x128xf32>,
    %c0_142 = arith.constant 0 : index
    %c0_143 = arith.constant 0 : index
    %272 = vector.load %arg12[%c0_142, %c0_143] : memref<8x128xf32, #tpu.memory_space<vmem>>, vector<8x128xf32>
    tpu.vector_store %arg12[%c0_142, %c0_143], %264 {strides = array<i32>} : memref<8x128xf32, #tpu.memory_space<vmem>>, vector<8x128xf32>,
    %c6_i32 = arith.constant 6 : i32
    %c0_144 = arith.constant 0 : index
    %c0_145 = arith.constant 0 : index
    %273 = vector.load %arg11[%c0_144, %c0_145] : memref<8x128xf32, #tpu.memory_space<vmem>>, vector<8x128xf32>
    %c0_146 = arith.constant 0 : index
    %c0_147 = arith.constant 0 : index
    %274 = vector.load %arg12[%c0_146, %c0_147] : memref<8x128xf32, #tpu.memory_space<vmem>>, vector<8x128xf32>
    %c0_148 = arith.constant 0 : index
    %c0_149 = arith.constant 0 : index
    %275 = vector.load %arg5[%c0_148, %c0_149] : memref<128x512xf32, #tpu.memory_space<vmem>>, vector<128x512xf32>
    %cst_150 = arith.constant dense<0.000000e+00> : vector<8x512xf32>
    %276 = tpu.matmul %273, %275, %cst_150 {dimension_numbers = #tpu.dot_dimension_numbers<[1], [0], [0], [1], [0, 0, 1, 1], [], []>} : vector<8x128xf32>, vector<128x512xf32>, vector<8x512xf32> -> vector<8x512xf32>
    %277 = arith.index_cast %c6_i32 : i32 to index
    %c0_151 = arith.constant 0 : index
    %c0_152 = arith.constant 0 : index
    %278 = vector.load %arg2[%277, %c0_151, %c0_152] : memref<16x8x512xf32, #tpu.memory_space<vmem>>, vector<1x8x512xf32>
    %279 = vector.shape_cast %278 : vector<1x8x512xf32> to vector<8x512xf32>
    %280 = arith.addf %279, %276 : vector<8x512xf32>
    %281 = vector.extract_strided_slice %280 {offsets = [0, 0], sizes = [8, 128], strides = [1, 1]} : vector<8x512xf32> to vector<8x128xf32>
    %cst_153 = arith.constant 5.000000e-01 : f32
    %282 = vector.broadcast %cst_153 : f32 to vector<8x128xf32>
    %283 = arith.mulf %282, %281 : vector<8x128xf32>
    %284 = math.tanh %283 : vector<8x128xf32>
    %cst_154 = arith.constant 1.000000e+00 : f32
    %285 = vector.broadcast %cst_154 : f32 to vector<8x128xf32>
    %286 = arith.addf %284, %285 : vector<8x128xf32>
    %cst_155 = arith.constant 5.000000e-01 : f32
    %287 = vector.broadcast %cst_155 : f32 to vector<8x128xf32>
    %288 = arith.mulf %287, %286 : vector<8x128xf32>
    %289 = vector.extract_strided_slice %280 {offsets = [0, 128], sizes = [8, 128], strides = [1, 1]} : vector<8x512xf32> to vector<8x128xf32>
    %cst_156 = arith.constant 5.000000e-01 : f32
    %290 = vector.broadcast %cst_156 : f32 to vector<8x128xf32>
    %291 = arith.mulf %290, %289 : vector<8x128xf32>
    %292 = math.tanh %291 : vector<8x128xf32>
    %cst_157 = arith.constant 1.000000e+00 : f32
    %293 = vector.broadcast %cst_157 : f32 to vector<8x128xf32>
    %294 = arith.addf %292, %293 : vector<8x128xf32>
    %cst_158 = arith.constant 5.000000e-01 : f32
    %295 = vector.broadcast %cst_158 : f32 to vector<8x128xf32>
    %296 = arith.mulf %295, %294 : vector<8x128xf32>
    %297 = vector.extract_strided_slice %280 {offsets = [0, 256], sizes = [8, 128], strides = [1, 1]} : vector<8x512xf32> to vector<8x128xf32>
    %298 = math.tanh %297 : vector<8x128xf32>
    %299 = vector.extract_strided_slice %280 {offsets = [0, 384], sizes = [8, 128], strides = [1, 1]} : vector<8x512xf32> to vector<8x128xf32>
    %cst_159 = arith.constant 5.000000e-01 : f32
    %300 = vector.broadcast %cst_159 : f32 to vector<8x128xf32>
    %301 = arith.mulf %300, %299 : vector<8x128xf32>
    %302 = math.tanh %301 : vector<8x128xf32>
    %cst_160 = arith.constant 1.000000e+00 : f32
    %303 = vector.broadcast %cst_160 : f32 to vector<8x128xf32>
    %304 = arith.addf %302, %303 : vector<8x128xf32>
    %cst_161 = arith.constant 5.000000e-01 : f32
    %305 = vector.broadcast %cst_161 : f32 to vector<8x128xf32>
    %306 = arith.mulf %305, %304 : vector<8x128xf32>
    %307 = arith.mulf %296, %274 : vector<8x128xf32>
    %308 = arith.mulf %288, %298 : vector<8x128xf32>
    %309 = arith.addf %307, %308 : vector<8x128xf32>
    %310 = math.tanh %309 : vector<8x128xf32>
    %311 = arith.mulf %306, %310 : vector<8x128xf32>
    %312 = arith.index_cast %c6_i32 : i32 to index
    %c0_162 = arith.constant 0 : index
    %c0_163 = arith.constant 0 : index
    %313 = vector.load %arg13[%312, %c0_162, %c0_163] : memref<16x8x128xf32, #tpu.memory_space<vmem>>, vector<1x8x128xf32>
    %314 = vector.shape_cast %313 : vector<1x8x128xf32> to vector<8x128xf32>
    %315 = vector.shape_cast %311 : vector<8x128xf32> to vector<1x8x128xf32>
    tpu.vector_store %arg13[%312, %c0_162, %c0_163], %315 {strides = array<i32>} : memref<16x8x128xf32, #tpu.memory_space<vmem>>, vector<1x8x128xf32>,
    %c0_164 = arith.constant 0 : index
    %c0_165 = arith.constant 0 : index
    %316 = vector.load %arg11[%c0_164, %c0_165] : memref<8x128xf32, #tpu.memory_space<vmem>>, vector<8x128xf32>
    tpu.vector_store %arg11[%c0_164, %c0_165], %311 {strides = array<i32>} : memref<8x128xf32, #tpu.memory_space<vmem>>, vector<8x128xf32>,
    %c0_166 = arith.constant 0 : index
    %c0_167 = arith.constant 0 : index
    %317 = vector.load %arg12[%c0_166, %c0_167] : memref<8x128xf32, #tpu.memory_space<vmem>>, vector<8x128xf32>
    tpu.vector_store %arg12[%c0_166, %c0_167], %309 {strides = array<i32>} : memref<8x128xf32, #tpu.memory_space<vmem>>, vector<8x128xf32>,
    %c7_i32 = arith.constant 7 : i32
    %c0_168 = arith.constant 0 : index
    %c0_169 = arith.constant 0 : index
    %318 = vector.load %arg11[%c0_168, %c0_169] : memref<8x128xf32, #tpu.memory_space<vmem>>, vector<8x128xf32>
    %c0_170 = arith.constant 0 : index
    %c0_171 = arith.constant 0 : index
    %319 = vector.load %arg12[%c0_170, %c0_171] : memref<8x128xf32, #tpu.memory_space<vmem>>, vector<8x128xf32>
    %c0_172 = arith.constant 0 : index
    %c0_173 = arith.constant 0 : index
    %320 = vector.load %arg5[%c0_172, %c0_173] : memref<128x512xf32, #tpu.memory_space<vmem>>, vector<128x512xf32>
    %cst_174 = arith.constant dense<0.000000e+00> : vector<8x512xf32>
    %321 = tpu.matmul %318, %320, %cst_174 {dimension_numbers = #tpu.dot_dimension_numbers<[1], [0], [0], [1], [0, 0, 1, 1], [], []>} : vector<8x128xf32>, vector<128x512xf32>, vector<8x512xf32> -> vector<8x512xf32>
    %322 = arith.index_cast %c7_i32 : i32 to index
    %c0_175 = arith.constant 0 : index
    %c0_176 = arith.constant 0 : index
    %323 = vector.load %arg2[%322, %c0_175, %c0_176] : memref<16x8x512xf32, #tpu.memory_space<vmem>>, vector<1x8x512xf32>
    %324 = vector.shape_cast %323 : vector<1x8x512xf32> to vector<8x512xf32>
    %325 = arith.addf %324, %321 : vector<8x512xf32>
    %326 = vector.extract_strided_slice %325 {offsets = [0, 0], sizes = [8, 128], strides = [1, 1]} : vector<8x512xf32> to vector<8x128xf32>
    %cst_177 = arith.constant 5.000000e-01 : f32
    %327 = vector.broadcast %cst_177 : f32 to vector<8x128xf32>
    %328 = arith.mulf %327, %326 : vector<8x128xf32>
    %329 = math.tanh %328 : vector<8x128xf32>
    %cst_178 = arith.constant 1.000000e+00 : f32
    %330 = vector.broadcast %cst_178 : f32 to vector<8x128xf32>
    %331 = arith.addf %329, %330 : vector<8x128xf32>
    %cst_179 = arith.constant 5.000000e-01 : f32
    %332 = vector.broadcast %cst_179 : f32 to vector<8x128xf32>
    %333 = arith.mulf %332, %331 : vector<8x128xf32>
    %334 = vector.extract_strided_slice %325 {offsets = [0, 128], sizes = [8, 128], strides = [1, 1]} : vector<8x512xf32> to vector<8x128xf32>
    %cst_180 = arith.constant 5.000000e-01 : f32
    %335 = vector.broadcast %cst_180 : f32 to vector<8x128xf32>
    %336 = arith.mulf %335, %334 : vector<8x128xf32>
    %337 = math.tanh %336 : vector<8x128xf32>
    %cst_181 = arith.constant 1.000000e+00 : f32
    %338 = vector.broadcast %cst_181 : f32 to vector<8x128xf32>
    %339 = arith.addf %337, %338 : vector<8x128xf32>
    %cst_182 = arith.constant 5.000000e-01 : f32
    %340 = vector.broadcast %cst_182 : f32 to vector<8x128xf32>
    %341 = arith.mulf %340, %339 : vector<8x128xf32>
    %342 = vector.extract_strided_slice %325 {offsets = [0, 256], sizes = [8, 128], strides = [1, 1]} : vector<8x512xf32> to vector<8x128xf32>
    %343 = math.tanh %342 : vector<8x128xf32>
    %344 = vector.extract_strided_slice %325 {offsets = [0, 384], sizes = [8, 128], strides = [1, 1]} : vector<8x512xf32> to vector<8x128xf32>
    %cst_183 = arith.constant 5.000000e-01 : f32
    %345 = vector.broadcast %cst_183 : f32 to vector<8x128xf32>
    %346 = arith.mulf %345, %344 : vector<8x128xf32>
    %347 = math.tanh %346 : vector<8x128xf32>
    %cst_184 = arith.constant 1.000000e+00 : f32
    %348 = vector.broadcast %cst_184 : f32 to vector<8x128xf32>
    %349 = arith.addf %347, %348 : vector<8x128xf32>
    %cst_185 = arith.constant 5.000000e-01 : f32
    %350 = vector.broadcast %cst_185 : f32 to vector<8x128xf32>
    %351 = arith.mulf %350, %349 : vector<8x128xf32>
    %352 = arith.mulf %341, %319 : vector<8x128xf32>
    %353 = arith.mulf %333, %343 : vector<8x128xf32>
    %354 = arith.addf %352, %353 : vector<8x128xf32>
    %355 = math.tanh %354 : vector<8x128xf32>
    %356 = arith.mulf %351, %355 : vector<8x128xf32>
    %357 = arith.index_cast %c7_i32 : i32 to index
    %c0_186 = arith.constant 0 : index
    %c0_187 = arith.constant 0 : index
    %358 = vector.load %arg13[%357, %c0_186, %c0_187] : memref<16x8x128xf32, #tpu.memory_space<vmem>>, vector<1x8x128xf32>
    %359 = vector.shape_cast %358 : vector<1x8x128xf32> to vector<8x128xf32>
    %360 = vector.shape_cast %356 : vector<8x128xf32> to vector<1x8x128xf32>
    tpu.vector_store %arg13[%357, %c0_186, %c0_187], %360 {strides = array<i32>} : memref<16x8x128xf32, #tpu.memory_space<vmem>>, vector<1x8x128xf32>,
    %c0_188 = arith.constant 0 : index
    %c0_189 = arith.constant 0 : index
    %361 = vector.load %arg11[%c0_188, %c0_189] : memref<8x128xf32, #tpu.memory_space<vmem>>, vector<8x128xf32>
    tpu.vector_store %arg11[%c0_188, %c0_189], %356 {strides = array<i32>} : memref<8x128xf32, #tpu.memory_space<vmem>>, vector<8x128xf32>,
    %c0_190 = arith.constant 0 : index
    %c0_191 = arith.constant 0 : index
    %362 = vector.load %arg12[%c0_190, %c0_191] : memref<8x128xf32, #tpu.memory_space<vmem>>, vector<8x128xf32>
    tpu.vector_store %arg12[%c0_190, %c0_191], %354 {strides = array<i32>} : memref<8x128xf32, #tpu.memory_space<vmem>>, vector<8x128xf32>,
    %c8_i32 = arith.constant 8 : i32
    %c0_192 = arith.constant 0 : index
    %c0_193 = arith.constant 0 : index
    %363 = vector.load %arg11[%c0_192, %c0_193] : memref<8x128xf32, #tpu.memory_space<vmem>>, vector<8x128xf32>
    %c0_194 = arith.constant 0 : index
    %c0_195 = arith.constant 0 : index
    %364 = vector.load %arg12[%c0_194, %c0_195] : memref<8x128xf32, #tpu.memory_space<vmem>>, vector<8x128xf32>
    %c0_196 = arith.constant 0 : index
    %c0_197 = arith.constant 0 : index
    %365 = vector.load %arg5[%c0_196, %c0_197] : memref<128x512xf32, #tpu.memory_space<vmem>>, vector<128x512xf32>
    %cst_198 = arith.constant dense<0.000000e+00> : vector<8x512xf32>
    %366 = tpu.matmul %363, %365, %cst_198 {dimension_numbers = #tpu.dot_dimension_numbers<[1], [0], [0], [1], [0, 0, 1, 1], [], []>} : vector<8x128xf32>, vector<128x512xf32>, vector<8x512xf32> -> vector<8x512xf32>
    %367 = arith.index_cast %c8_i32 : i32 to index
    %c0_199 = arith.constant 0 : index
    %c0_200 = arith.constant 0 : index
    %368 = vector.load %arg2[%367, %c0_199, %c0_200] : memref<16x8x512xf32, #tpu.memory_space<vmem>>, vector<1x8x512xf32>
    %369 = vector.shape_cast %368 : vector<1x8x512xf32> to vector<8x512xf32>
    %370 = arith.addf %369, %366 : vector<8x512xf32>
    %371 = vector.extract_strided_slice %370 {offsets = [0, 0], sizes = [8, 128], strides = [1, 1]} : vector<8x512xf32> to vector<8x128xf32>
    %cst_201 = arith.constant 5.000000e-01 : f32
    %372 = vector.broadcast %cst_201 : f32 to vector<8x128xf32>
    %373 = arith.mulf %372, %371 : vector<8x128xf32>
    %374 = math.tanh %373 : vector<8x128xf32>
    %cst_202 = arith.constant 1.000000e+00 : f32
    %375 = vector.broadcast %cst_202 : f32 to vector<8x128xf32>
    %376 = arith.addf %374, %375 : vector<8x128xf32>
    %cst_203 = arith.constant 5.000000e-01 : f32
    %377 = vector.broadcast %cst_203 : f32 to vector<8x128xf32>
    %378 = arith.mulf %377, %376 : vector<8x128xf32>
    %379 = vector.extract_strided_slice %370 {offsets = [0, 128], sizes = [8, 128], strides = [1, 1]} : vector<8x512xf32> to vector<8x128xf32>
    %cst_204 = arith.constant 5.000000e-01 : f32
    %380 = vector.broadcast %cst_204 : f32 to vector<8x128xf32>
    %381 = arith.mulf %380, %379 : vector<8x128xf32>
    %382 = math.tanh %381 : vector<8x128xf32>
    %cst_205 = arith.constant 1.000000e+00 : f32
    %383 = vector.broadcast %cst_205 : f32 to vector<8x128xf32>
    %384 = arith.addf %382, %383 : vector<8x128xf32>
    %cst_206 = arith.constant 5.000000e-01 : f32
    %385 = vector.broadcast %cst_206 : f32 to vector<8x128xf32>
    %386 = arith.mulf %385, %384 : vector<8x128xf32>
    %387 = vector.extract_strided_slice %370 {offsets = [0, 256], sizes = [8, 128], strides = [1, 1]} : vector<8x512xf32> to vector<8x128xf32>
    %388 = math.tanh %387 : vector<8x128xf32>
    %389 = vector.extract_strided_slice %370 {offsets = [0, 384], sizes = [8, 128], strides = [1, 1]} : vector<8x512xf32> to vector<8x128xf32>
    %cst_207 = arith.constant 5.000000e-01 : f32
    %390 = vector.broadcast %cst_207 : f32 to vector<8x128xf32>
    %391 = arith.mulf %390, %389 : vector<8x128xf32>
    %392 = math.tanh %391 : vector<8x128xf32>
    %cst_208 = arith.constant 1.000000e+00 : f32
    %393 = vector.broadcast %cst_208 : f32 to vector<8x128xf32>
    %394 = arith.addf %392, %393 : vector<8x128xf32>
    %cst_209 = arith.constant 5.000000e-01 : f32
    %395 = vector.broadcast %cst_209 : f32 to vector<8x128xf32>
    %396 = arith.mulf %395, %394 : vector<8x128xf32>
    %397 = arith.mulf %386, %364 : vector<8x128xf32>
    %398 = arith.mulf %378, %388 : vector<8x128xf32>
    %399 = arith.addf %397, %398 : vector<8x128xf32>
    %400 = math.tanh %399 : vector<8x128xf32>
    %401 = arith.mulf %396, %400 : vector<8x128xf32>
    %402 = arith.index_cast %c8_i32 : i32 to index
    %c0_210 = arith.constant 0 : index
    %c0_211 = arith.constant 0 : index
    %403 = vector.load %arg13[%402, %c0_210, %c0_211] : memref<16x8x128xf32, #tpu.memory_space<vmem>>, vector<1x8x128xf32>
    %404 = vector.shape_cast %403 : vector<1x8x128xf32> to vector<8x128xf32>
    %405 = vector.shape_cast %401 : vector<8x128xf32> to vector<1x8x128xf32>
    tpu.vector_store %arg13[%402, %c0_210, %c0_211], %405 {strides = array<i32>} : memref<16x8x128xf32, #tpu.memory_space<vmem>>, vector<1x8x128xf32>,
    %c0_212 = arith.constant 0 : index
    %c0_213 = arith.constant 0 : index
    %406 = vector.load %arg11[%c0_212, %c0_213] : memref<8x128xf32, #tpu.memory_space<vmem>>, vector<8x128xf32>
    tpu.vector_store %arg11[%c0_212, %c0_213], %401 {strides = array<i32>} : memref<8x128xf32, #tpu.memory_space<vmem>>, vector<8x128xf32>,
    %c0_214 = arith.constant 0 : index
    %c0_215 = arith.constant 0 : index
    %407 = vector.load %arg12[%c0_214, %c0_215] : memref<8x128xf32, #tpu.memory_space<vmem>>, vector<8x128xf32>
    tpu.vector_store %arg12[%c0_214, %c0_215], %399 {strides = array<i32>} : memref<8x128xf32, #tpu.memory_space<vmem>>, vector<8x128xf32>,
    %c9_i32 = arith.constant 9 : i32
    %c0_216 = arith.constant 0 : index
    %c0_217 = arith.constant 0 : index
    %408 = vector.load %arg11[%c0_216, %c0_217] : memref<8x128xf32, #tpu.memory_space<vmem>>, vector<8x128xf32>
    %c0_218 = arith.constant 0 : index
    %c0_219 = arith.constant 0 : index
    %409 = vector.load %arg12[%c0_218, %c0_219] : memref<8x128xf32, #tpu.memory_space<vmem>>, vector<8x128xf32>
    %c0_220 = arith.constant 0 : index
    %c0_221 = arith.constant 0 : index
    %410 = vector.load %arg5[%c0_220, %c0_221] : memref<128x512xf32, #tpu.memory_space<vmem>>, vector<128x512xf32>
    %cst_222 = arith.constant dense<0.000000e+00> : vector<8x512xf32>
    %411 = tpu.matmul %408, %410, %cst_222 {dimension_numbers = #tpu.dot_dimension_numbers<[1], [0], [0], [1], [0, 0, 1, 1], [], []>} : vector<8x128xf32>, vector<128x512xf32>, vector<8x512xf32> -> vector<8x512xf32>
    %412 = arith.index_cast %c9_i32 : i32 to index
    %c0_223 = arith.constant 0 : index
    %c0_224 = arith.constant 0 : index
    %413 = vector.load %arg2[%412, %c0_223, %c0_224] : memref<16x8x512xf32, #tpu.memory_space<vmem>>, vector<1x8x512xf32>
    %414 = vector.shape_cast %413 : vector<1x8x512xf32> to vector<8x512xf32>
    %415 = arith.addf %414, %411 : vector<8x512xf32>
    %416 = vector.extract_strided_slice %415 {offsets = [0, 0], sizes = [8, 128], strides = [1, 1]} : vector<8x512xf32> to vector<8x128xf32>
    %cst_225 = arith.constant 5.000000e-01 : f32
    %417 = vector.broadcast %cst_225 : f32 to vector<8x128xf32>
    %418 = arith.mulf %417, %416 : vector<8x128xf32>
    %419 = math.tanh %418 : vector<8x128xf32>
    %cst_226 = arith.constant 1.000000e+00 : f32
    %420 = vector.broadcast %cst_226 : f32 to vector<8x128xf32>
    %421 = arith.addf %419, %420 : vector<8x128xf32>
    %cst_227 = arith.constant 5.000000e-01 : f32
    %422 = vector.broadcast %cst_227 : f32 to vector<8x128xf32>
    %423 = arith.mulf %422, %421 : vector<8x128xf32>
    %424 = vector.extract_strided_slice %415 {offsets = [0, 128], sizes = [8, 128], strides = [1, 1]} : vector<8x512xf32> to vector<8x128xf32>
    %cst_228 = arith.constant 5.000000e-01 : f32
    %425 = vector.broadcast %cst_228 : f32 to vector<8x128xf32>
    %426 = arith.mulf %425, %424 : vector<8x128xf32>
    %427 = math.tanh %426 : vector<8x128xf32>
    %cst_229 = arith.constant 1.000000e+00 : f32
    %428 = vector.broadcast %cst_229 : f32 to vector<8x128xf32>
    %429 = arith.addf %427, %428 : vector<8x128xf32>
    %cst_230 = arith.constant 5.000000e-01 : f32
    %430 = vector.broadcast %cst_230 : f32 to vector<8x128xf32>
    %431 = arith.mulf %430, %429 : vector<8x128xf32>
    %432 = vector.extract_strided_slice %415 {offsets = [0, 256], sizes = [8, 128], strides = [1, 1]} : vector<8x512xf32> to vector<8x128xf32>
    %433 = math.tanh %432 : vector<8x128xf32>
    %434 = vector.extract_strided_slice %415 {offsets = [0, 384], sizes = [8, 128], strides = [1, 1]} : vector<8x512xf32> to vector<8x128xf32>
    %cst_231 = arith.constant 5.000000e-01 : f32
    %435 = vector.broadcast %cst_231 : f32 to vector<8x128xf32>
    %436 = arith.mulf %435, %434 : vector<8x128xf32>
    %437 = math.tanh %436 : vector<8x128xf32>
    %cst_232 = arith.constant 1.000000e+00 : f32
    %438 = vector.broadcast %cst_232 : f32 to vector<8x128xf32>
    %439 = arith.addf %437, %438 : vector<8x128xf32>
    %cst_233 = arith.constant 5.000000e-01 : f32
    %440 = vector.broadcast %cst_233 : f32 to vector<8x128xf32>
    %441 = arith.mulf %440, %439 : vector<8x128xf32>
    %442 = arith.mulf %431, %409 : vector<8x128xf32>
    %443 = arith.mulf %423, %433 : vector<8x128xf32>
    %444 = arith.addf %442, %443 : vector<8x128xf32>
    %445 = math.tanh %444 : vector<8x128xf32>
    %446 = arith.mulf %441, %445 : vector<8x128xf32>
    %447 = arith.index_cast %c9_i32 : i32 to index
    %c0_234 = arith.constant 0 : index
    %c0_235 = arith.constant 0 : index
    %448 = vector.load %arg13[%447, %c0_234, %c0_235] : memref<16x8x128xf32, #tpu.memory_space<vmem>>, vector<1x8x128xf32>
    %449 = vector.shape_cast %448 : vector<1x8x128xf32> to vector<8x128xf32>
    %450 = vector.shape_cast %446 : vector<8x128xf32> to vector<1x8x128xf32>
    tpu.vector_store %arg13[%447, %c0_234, %c0_235], %450 {strides = array<i32>} : memref<16x8x128xf32, #tpu.memory_space<vmem>>, vector<1x8x128xf32>,
    %c0_236 = arith.constant 0 : index
    %c0_237 = arith.constant 0 : index
    %451 = vector.load %arg11[%c0_236, %c0_237] : memref<8x128xf32, #tpu.memory_space<vmem>>, vector<8x128xf32>
    tpu.vector_store %arg11[%c0_236, %c0_237], %446 {strides = array<i32>} : memref<8x128xf32, #tpu.memory_space<vmem>>, vector<8x128xf32>,
    %c0_238 = arith.constant 0 : index
    %c0_239 = arith.constant 0 : index
    %452 = vector.load %arg12[%c0_238, %c0_239] : memref<8x128xf32, #tpu.memory_space<vmem>>, vector<8x128xf32>
    tpu.vector_store %arg12[%c0_238, %c0_239], %444 {strides = array<i32>} : memref<8x128xf32, #tpu.memory_space<vmem>>, vector<8x128xf32>,
    %c10_i32 = arith.constant 10 : i32
    %c0_240 = arith.constant 0 : index
    %c0_241 = arith.constant 0 : index
    %453 = vector.load %arg11[%c0_240, %c0_241] : memref<8x128xf32, #tpu.memory_space<vmem>>, vector<8x128xf32>
    %c0_242 = arith.constant 0 : index
    %c0_243 = arith.constant 0 : index
    %454 = vector.load %arg12[%c0_242, %c0_243] : memref<8x128xf32, #tpu.memory_space<vmem>>, vector<8x128xf32>
    %c0_244 = arith.constant 0 : index
    %c0_245 = arith.constant 0 : index
    %455 = vector.load %arg5[%c0_244, %c0_245] : memref<128x512xf32, #tpu.memory_space<vmem>>, vector<128x512xf32>
    %cst_246 = arith.constant dense<0.000000e+00> : vector<8x512xf32>
    %456 = tpu.matmul %453, %455, %cst_246 {dimension_numbers = #tpu.dot_dimension_numbers<[1], [0], [0], [1], [0, 0, 1, 1], [], []>} : vector<8x128xf32>, vector<128x512xf32>, vector<8x512xf32> -> vector<8x512xf32>
    %457 = arith.index_cast %c10_i32 : i32 to index
    %c0_247 = arith.constant 0 : index
    %c0_248 = arith.constant 0 : index
    %458 = vector.load %arg2[%457, %c0_247, %c0_248] : memref<16x8x512xf32, #tpu.memory_space<vmem>>, vector<1x8x512xf32>
    %459 = vector.shape_cast %458 : vector<1x8x512xf32> to vector<8x512xf32>
    %460 = arith.addf %459, %456 : vector<8x512xf32>
    %461 = vector.extract_strided_slice %460 {offsets = [0, 0], sizes = [8, 128], strides = [1, 1]} : vector<8x512xf32> to vector<8x128xf32>
    %cst_249 = arith.constant 5.000000e-01 : f32
    %462 = vector.broadcast %cst_249 : f32 to vector<8x128xf32>
    %463 = arith.mulf %462, %461 : vector<8x128xf32>
    %464 = math.tanh %463 : vector<8x128xf32>
    %cst_250 = arith.constant 1.000000e+00 : f32
    %465 = vector.broadcast %cst_250 : f32 to vector<8x128xf32>
    %466 = arith.addf %464, %465 : vector<8x128xf32>
    %cst_251 = arith.constant 5.000000e-01 : f32
    %467 = vector.broadcast %cst_251 : f32 to vector<8x128xf32>
    %468 = arith.mulf %467, %466 : vector<8x128xf32>
    %469 = vector.extract_strided_slice %460 {offsets = [0, 128], sizes = [8, 128], strides = [1, 1]} : vector<8x512xf32> to vector<8x128xf32>
    %cst_252 = arith.constant 5.000000e-01 : f32
    %470 = vector.broadcast %cst_252 : f32 to vector<8x128xf32>
    %471 = arith.mulf %470, %469 : vector<8x128xf32>
    %472 = math.tanh %471 : vector<8x128xf32>
    %cst_253 = arith.constant 1.000000e+00 : f32
    %473 = vector.broadcast %cst_253 : f32 to vector<8x128xf32>
    %474 = arith.addf %472, %473 : vector<8x128xf32>
    %cst_254 = arith.constant 5.000000e-01 : f32
    %475 = vector.broadcast %cst_254 : f32 to vector<8x128xf32>
    %476 = arith.mulf %475, %474 : vector<8x128xf32>
    %477 = vector.extract_strided_slice %460 {offsets = [0, 256], sizes = [8, 128], strides = [1, 1]} : vector<8x512xf32> to vector<8x128xf32>
    %478 = math.tanh %477 : vector<8x128xf32>
    %479 = vector.extract_strided_slice %460 {offsets = [0, 384], sizes = [8, 128], strides = [1, 1]} : vector<8x512xf32> to vector<8x128xf32>
    %cst_255 = arith.constant 5.000000e-01 : f32
    %480 = vector.broadcast %cst_255 : f32 to vector<8x128xf32>
    %481 = arith.mulf %480, %479 : vector<8x128xf32>
    %482 = math.tanh %481 : vector<8x128xf32>
    %cst_256 = arith.constant 1.000000e+00 : f32
    %483 = vector.broadcast %cst_256 : f32 to vector<8x128xf32>
    %484 = arith.addf %482, %483 : vector<8x128xf32>
    %cst_257 = arith.constant 5.000000e-01 : f32
    %485 = vector.broadcast %cst_257 : f32 to vector<8x128xf32>
    %486 = arith.mulf %485, %484 : vector<8x128xf32>
    %487 = arith.mulf %476, %454 : vector<8x128xf32>
    %488 = arith.mulf %468, %478 : vector<8x128xf32>
    %489 = arith.addf %487, %488 : vector<8x128xf32>
    %490 = math.tanh %489 : vector<8x128xf32>
    %491 = arith.mulf %486, %490 : vector<8x128xf32>
    %492 = arith.index_cast %c10_i32 : i32 to index
    %c0_258 = arith.constant 0 : index
    %c0_259 = arith.constant 0 : index
    %493 = vector.load %arg13[%492, %c0_258, %c0_259] : memref<16x8x128xf32, #tpu.memory_space<vmem>>, vector<1x8x128xf32>
    %494 = vector.shape_cast %493 : vector<1x8x128xf32> to vector<8x128xf32>
    %495 = vector.shape_cast %491 : vector<8x128xf32> to vector<1x8x128xf32>
    tpu.vector_store %arg13[%492, %c0_258, %c0_259], %495 {strides = array<i32>} : memref<16x8x128xf32, #tpu.memory_space<vmem>>, vector<1x8x128xf32>,
    %c0_260 = arith.constant 0 : index
    %c0_261 = arith.constant 0 : index
    %496 = vector.load %arg11[%c0_260, %c0_261] : memref<8x128xf32, #tpu.memory_space<vmem>>, vector<8x128xf32>
    tpu.vector_store %arg11[%c0_260, %c0_261], %491 {strides = array<i32>} : memref<8x128xf32, #tpu.memory_space<vmem>>, vector<8x128xf32>,
    %c0_262 = arith.constant 0 : index
    %c0_263 = arith.constant 0 : index
    %497 = vector.load %arg12[%c0_262, %c0_263] : memref<8x128xf32, #tpu.memory_space<vmem>>, vector<8x128xf32>
    tpu.vector_store %arg12[%c0_262, %c0_263], %489 {strides = array<i32>} : memref<8x128xf32, #tpu.memory_space<vmem>>, vector<8x128xf32>,
    %c11_i32 = arith.constant 11 : i32
    %c0_264 = arith.constant 0 : index
    %c0_265 = arith.constant 0 : index
    %498 = vector.load %arg11[%c0_264, %c0_265] : memref<8x128xf32, #tpu.memory_space<vmem>>, vector<8x128xf32>
    %c0_266 = arith.constant 0 : index
    %c0_267 = arith.constant 0 : index
    %499 = vector.load %arg12[%c0_266, %c0_267] : memref<8x128xf32, #tpu.memory_space<vmem>>, vector<8x128xf32>
    %c0_268 = arith.constant 0 : index
    %c0_269 = arith.constant 0 : index
    %500 = vector.load %arg5[%c0_268, %c0_269] : memref<128x512xf32, #tpu.memory_space<vmem>>, vector<128x512xf32>
    %cst_270 = arith.constant dense<0.000000e+00> : vector<8x512xf32>
    %501 = tpu.matmul %498, %500, %cst_270 {dimension_numbers = #tpu.dot_dimension_numbers<[1], [0], [0], [1], [0, 0, 1, 1], [], []>} : vector<8x128xf32>, vector<128x512xf32>, vector<8x512xf32> -> vector<8x512xf32>
    %502 = arith.index_cast %c11_i32 : i32 to index
    %c0_271 = arith.constant 0 : index
    %c0_272 = arith.constant 0 : index
    %503 = vector.load %arg2[%502, %c0_271, %c0_272] : memref<16x8x512xf32, #tpu.memory_space<vmem>>, vector<1x8x512xf32>
    %504 = vector.shape_cast %503 : vector<1x8x512xf32> to vector<8x512xf32>
    %505 = arith.addf %504, %501 : vector<8x512xf32>
    %506 = vector.extract_strided_slice %505 {offsets = [0, 0], sizes = [8, 128], strides = [1, 1]} : vector<8x512xf32> to vector<8x128xf32>
    %cst_273 = arith.constant 5.000000e-01 : f32
    %507 = vector.broadcast %cst_273 : f32 to vector<8x128xf32>
    %508 = arith.mulf %507, %506 : vector<8x128xf32>
    %509 = math.tanh %508 : vector<8x128xf32>
    %cst_274 = arith.constant 1.000000e+00 : f32
    %510 = vector.broadcast %cst_274 : f32 to vector<8x128xf32>
    %511 = arith.addf %509, %510 : vector<8x128xf32>
    %cst_275 = arith.constant 5.000000e-01 : f32
    %512 = vector.broadcast %cst_275 : f32 to vector<8x128xf32>
    %513 = arith.mulf %512, %511 : vector<8x128xf32>
    %514 = vector.extract_strided_slice %505 {offsets = [0, 128], sizes = [8, 128], strides = [1, 1]} : vector<8x512xf32> to vector<8x128xf32>
    %cst_276 = arith.constant 5.000000e-01 : f32
    %515 = vector.broadcast %cst_276 : f32 to vector<8x128xf32>
    %516 = arith.mulf %515, %514 : vector<8x128xf32>
    %517 = math.tanh %516 : vector<8x128xf32>
    %cst_277 = arith.constant 1.000000e+00 : f32
    %518 = vector.broadcast %cst_277 : f32 to vector<8x128xf32>
    %519 = arith.addf %517, %518 : vector<8x128xf32>
    %cst_278 = arith.constant 5.000000e-01 : f32
    %520 = vector.broadcast %cst_278 : f32 to vector<8x128xf32>
    %521 = arith.mulf %520, %519 : vector<8x128xf32>
    %522 = vector.extract_strided_slice %505 {offsets = [0, 256], sizes = [8, 128], strides = [1, 1]} : vector<8x512xf32> to vector<8x128xf32>
    %523 = math.tanh %522 : vector<8x128xf32>
    %524 = vector.extract_strided_slice %505 {offsets = [0, 384], sizes = [8, 128], strides = [1, 1]} : vector<8x512xf32> to vector<8x128xf32>
    %cst_279 = arith.constant 5.000000e-01 : f32
    %525 = vector.broadcast %cst_279 : f32 to vector<8x128xf32>
    %526 = arith.mulf %525, %524 : vector<8x128xf32>
    %527 = math.tanh %526 : vector<8x128xf32>
    %cst_280 = arith.constant 1.000000e+00 : f32
    %528 = vector.broadcast %cst_280 : f32 to vector<8x128xf32>
    %529 = arith.addf %527, %528 : vector<8x128xf32>
    %cst_281 = arith.constant 5.000000e-01 : f32
    %530 = vector.broadcast %cst_281 : f32 to vector<8x128xf32>
    %531 = arith.mulf %530, %529 : vector<8x128xf32>
    %532 = arith.mulf %521, %499 : vector<8x128xf32>
    %533 = arith.mulf %513, %523 : vector<8x128xf32>
    %534 = arith.addf %532, %533 : vector<8x128xf32>
    %535 = math.tanh %534 : vector<8x128xf32>
    %536 = arith.mulf %531, %535 : vector<8x128xf32>
    %537 = arith.index_cast %c11_i32 : i32 to index
    %c0_282 = arith.constant 0 : index
    %c0_283 = arith.constant 0 : index
    %538 = vector.load %arg13[%537, %c0_282, %c0_283] : memref<16x8x128xf32, #tpu.memory_space<vmem>>, vector<1x8x128xf32>
    %539 = vector.shape_cast %538 : vector<1x8x128xf32> to vector<8x128xf32>
    %540 = vector.shape_cast %536 : vector<8x128xf32> to vector<1x8x128xf32>
    tpu.vector_store %arg13[%537, %c0_282, %c0_283], %540 {strides = array<i32>} : memref<16x8x128xf32, #tpu.memory_space<vmem>>, vector<1x8x128xf32>,
    %c0_284 = arith.constant 0 : index
    %c0_285 = arith.constant 0 : index
    %541 = vector.load %arg11[%c0_284, %c0_285] : memref<8x128xf32, #tpu.memory_space<vmem>>, vector<8x128xf32>
    tpu.vector_store %arg11[%c0_284, %c0_285], %536 {strides = array<i32>} : memref<8x128xf32, #tpu.memory_space<vmem>>, vector<8x128xf32>,
    %c0_286 = arith.constant 0 : index
    %c0_287 = arith.constant 0 : index
    %542 = vector.load %arg12[%c0_286, %c0_287] : memref<8x128xf32, #tpu.memory_space<vmem>>, vector<8x128xf32>
    tpu.vector_store %arg12[%c0_286, %c0_287], %534 {strides = array<i32>} : memref<8x128xf32, #tpu.memory_space<vmem>>, vector<8x128xf32>,
    %c12_i32 = arith.constant 12 : i32
    %c0_288 = arith.constant 0 : index
    %c0_289 = arith.constant 0 : index
    %543 = vector.load %arg11[%c0_288, %c0_289] : memref<8x128xf32, #tpu.memory_space<vmem>>, vector<8x128xf32>
    %c0_290 = arith.constant 0 : index
    %c0_291 = arith.constant 0 : index
    %544 = vector.load %arg12[%c0_290, %c0_291] : memref<8x128xf32, #tpu.memory_space<vmem>>, vector<8x128xf32>
    %c0_292 = arith.constant 0 : index
    %c0_293 = arith.constant 0 : index
    %545 = vector.load %arg5[%c0_292, %c0_293] : memref<128x512xf32, #tpu.memory_space<vmem>>, vector<128x512xf32>
    %cst_294 = arith.constant dense<0.000000e+00> : vector<8x512xf32>
    %546 = tpu.matmul %543, %545, %cst_294 {dimension_numbers = #tpu.dot_dimension_numbers<[1], [0], [0], [1], [0, 0, 1, 1], [], []>} : vector<8x128xf32>, vector<128x512xf32>, vector<8x512xf32> -> vector<8x512xf32>
    %547 = arith.index_cast %c12_i32 : i32 to index
    %c0_295 = arith.constant 0 : index
    %c0_296 = arith.constant 0 : index
    %548 = vector.load %arg2[%547, %c0_295, %c0_296] : memref<16x8x512xf32, #tpu.memory_space<vmem>>, vector<1x8x512xf32>
    %549 = vector.shape_cast %548 : vector<1x8x512xf32> to vector<8x512xf32>
    %550 = arith.addf %549, %546 : vector<8x512xf32>
    %551 = vector.extract_strided_slice %550 {offsets = [0, 0], sizes = [8, 128], strides = [1, 1]} : vector<8x512xf32> to vector<8x128xf32>
    %cst_297 = arith.constant 5.000000e-01 : f32
    %552 = vector.broadcast %cst_297 : f32 to vector<8x128xf32>
    %553 = arith.mulf %552, %551 : vector<8x128xf32>
    %554 = math.tanh %553 : vector<8x128xf32>
    %cst_298 = arith.constant 1.000000e+00 : f32
    %555 = vector.broadcast %cst_298 : f32 to vector<8x128xf32>
    %556 = arith.addf %554, %555 : vector<8x128xf32>
    %cst_299 = arith.constant 5.000000e-01 : f32
    %557 = vector.broadcast %cst_299 : f32 to vector<8x128xf32>
    %558 = arith.mulf %557, %556 : vector<8x128xf32>
    %559 = vector.extract_strided_slice %550 {offsets = [0, 128], sizes = [8, 128], strides = [1, 1]} : vector<8x512xf32> to vector<8x128xf32>
    %cst_300 = arith.constant 5.000000e-01 : f32
    %560 = vector.broadcast %cst_300 : f32 to vector<8x128xf32>
    %561 = arith.mulf %560, %559 : vector<8x128xf32>
    %562 = math.tanh %561 : vector<8x128xf32>
    %cst_301 = arith.constant 1.000000e+00 : f32
    %563 = vector.broadcast %cst_301 : f32 to vector<8x128xf32>
    %564 = arith.addf %562, %563 : vector<8x128xf32>
    %cst_302 = arith.constant 5.000000e-01 : f32
    %565 = vector.broadcast %cst_302 : f32 to vector<8x128xf32>
    %566 = arith.mulf %565, %564 : vector<8x128xf32>
    %567 = vector.extract_strided_slice %550 {offsets = [0, 256], sizes = [8, 128], strides = [1, 1]} : vector<8x512xf32> to vector<8x128xf32>
    %568 = math.tanh %567 : vector<8x128xf32>
    %569 = vector.extract_strided_slice %550 {offsets = [0, 384], sizes = [8, 128], strides = [1, 1]} : vector<8x512xf32> to vector<8x128xf32>
    %cst_303 = arith.constant 5.000000e-01 : f32
    %570 = vector.broadcast %cst_303 : f32 to vector<8x128xf32>
    %571 = arith.mulf %570, %569 : vector<8x128xf32>
    %572 = math.tanh %571 : vector<8x128xf32>
    %cst_304 = arith.constant 1.000000e+00 : f32
    %573 = vector.broadcast %cst_304 : f32 to vector<8x128xf32>
    %574 = arith.addf %572, %573 : vector<8x128xf32>
    %cst_305 = arith.constant 5.000000e-01 : f32
    %575 = vector.broadcast %cst_305 : f32 to vector<8x128xf32>
    %576 = arith.mulf %575, %574 : vector<8x128xf32>
    %577 = arith.mulf %566, %544 : vector<8x128xf32>
    %578 = arith.mulf %558, %568 : vector<8x128xf32>
    %579 = arith.addf %577, %578 : vector<8x128xf32>
    %580 = math.tanh %579 : vector<8x128xf32>
    %581 = arith.mulf %576, %580 : vector<8x128xf32>
    %582 = arith.index_cast %c12_i32 : i32 to index
    %c0_306 = arith.constant 0 : index
    %c0_307 = arith.constant 0 : index
    %583 = vector.load %arg13[%582, %c0_306, %c0_307] : memref<16x8x128xf32, #tpu.memory_space<vmem>>, vector<1x8x128xf32>
    %584 = vector.shape_cast %583 : vector<1x8x128xf32> to vector<8x128xf32>
    %585 = vector.shape_cast %581 : vector<8x128xf32> to vector<1x8x128xf32>
    tpu.vector_store %arg13[%582, %c0_306, %c0_307], %585 {strides = array<i32>} : memref<16x8x128xf32, #tpu.memory_space<vmem>>, vector<1x8x128xf32>,
    %c0_308 = arith.constant 0 : index
    %c0_309 = arith.constant 0 : index
    %586 = vector.load %arg11[%c0_308, %c0_309] : memref<8x128xf32, #tpu.memory_space<vmem>>, vector<8x128xf32>
    tpu.vector_store %arg11[%c0_308, %c0_309], %581 {strides = array<i32>} : memref<8x128xf32, #tpu.memory_space<vmem>>, vector<8x128xf32>,
    %c0_310 = arith.constant 0 : index
    %c0_311 = arith.constant 0 : index
    %587 = vector.load %arg12[%c0_310, %c0_311] : memref<8x128xf32, #tpu.memory_space<vmem>>, vector<8x128xf32>
    tpu.vector_store %arg12[%c0_310, %c0_311], %579 {strides = array<i32>} : memref<8x128xf32, #tpu.memory_space<vmem>>, vector<8x128xf32>,
    %c13_i32 = arith.constant 13 : i32
    %c0_312 = arith.constant 0 : index
    %c0_313 = arith.constant 0 : index
    %588 = vector.load %arg11[%c0_312, %c0_313] : memref<8x128xf32, #tpu.memory_space<vmem>>, vector<8x128xf32>
    %c0_314 = arith.constant 0 : index
    %c0_315 = arith.constant 0 : index
    %589 = vector.load %arg12[%c0_314, %c0_315] : memref<8x128xf32, #tpu.memory_space<vmem>>, vector<8x128xf32>
    %c0_316 = arith.constant 0 : index
    %c0_317 = arith.constant 0 : index
    %590 = vector.load %arg5[%c0_316, %c0_317] : memref<128x512xf32, #tpu.memory_space<vmem>>, vector<128x512xf32>
    %cst_318 = arith.constant dense<0.000000e+00> : vector<8x512xf32>
    %591 = tpu.matmul %588, %590, %cst_318 {dimension_numbers = #tpu.dot_dimension_numbers<[1], [0], [0], [1], [0, 0, 1, 1], [], []>} : vector<8x128xf32>, vector<128x512xf32>, vector<8x512xf32> -> vector<8x512xf32>
    %592 = arith.index_cast %c13_i32 : i32 to index
    %c0_319 = arith.constant 0 : index
    %c0_320 = arith.constant 0 : index
    %593 = vector.load %arg2[%592, %c0_319, %c0_320] : memref<16x8x512xf32, #tpu.memory_space<vmem>>, vector<1x8x512xf32>
    %594 = vector.shape_cast %593 : vector<1x8x512xf32> to vector<8x512xf32>
    %595 = arith.addf %594, %591 : vector<8x512xf32>
    %596 = vector.extract_strided_slice %595 {offsets = [0, 0], sizes = [8, 128], strides = [1, 1]} : vector<8x512xf32> to vector<8x128xf32>
    %cst_321 = arith.constant 5.000000e-01 : f32
    %597 = vector.broadcast %cst_321 : f32 to vector<8x128xf32>
    %598 = arith.mulf %597, %596 : vector<8x128xf32>
    %599 = math.tanh %598 : vector<8x128xf32>
    %cst_322 = arith.constant 1.000000e+00 : f32
    %600 = vector.broadcast %cst_322 : f32 to vector<8x128xf32>
    %601 = arith.addf %599, %600 : vector<8x128xf32>
    %cst_323 = arith.constant 5.000000e-01 : f32
    %602 = vector.broadcast %cst_323 : f32 to vector<8x128xf32>
    %603 = arith.mulf %602, %601 : vector<8x128xf32>
    %604 = vector.extract_strided_slice %595 {offsets = [0, 128], sizes = [8, 128], strides = [1, 1]} : vector<8x512xf32> to vector<8x128xf32>
    %cst_324 = arith.constant 5.000000e-01 : f32
    %605 = vector.broadcast %cst_324 : f32 to vector<8x128xf32>
    %606 = arith.mulf %605, %604 : vector<8x128xf32>
    %607 = math.tanh %606 : vector<8x128xf32>
    %cst_325 = arith.constant 1.000000e+00 : f32
    %608 = vector.broadcast %cst_325 : f32 to vector<8x128xf32>
    %609 = arith.addf %607, %608 : vector<8x128xf32>
    %cst_326 = arith.constant 5.000000e-01 : f32
    %610 = vector.broadcast %cst_326 : f32 to vector<8x128xf32>
    %611 = arith.mulf %610, %609 : vector<8x128xf32>
    %612 = vector.extract_strided_slice %595 {offsets = [0, 256], sizes = [8, 128], strides = [1, 1]} : vector<8x512xf32> to vector<8x128xf32>
    %613 = math.tanh %612 : vector<8x128xf32>
    %614 = vector.extract_strided_slice %595 {offsets = [0, 384], sizes = [8, 128], strides = [1, 1]} : vector<8x512xf32> to vector<8x128xf32>
    %cst_327 = arith.constant 5.000000e-01 : f32
    %615 = vector.broadcast %cst_327 : f32 to vector<8x128xf32>
    %616 = arith.mulf %615, %614 : vector<8x128xf32>
    %617 = math.tanh %616 : vector<8x128xf32>
    %cst_328 = arith.constant 1.000000e+00 : f32
    %618 = vector.broadcast %cst_328 : f32 to vector<8x128xf32>
    %619 = arith.addf %617, %618 : vector<8x128xf32>
    %cst_329 = arith.constant 5.000000e-01 : f32
    %620 = vector.broadcast %cst_329 : f32 to vector<8x128xf32>
    %621 = arith.mulf %620, %619 : vector<8x128xf32>
    %622 = arith.mulf %611, %589 : vector<8x128xf32>
    %623 = arith.mulf %603, %613 : vector<8x128xf32>
    %624 = arith.addf %622, %623 : vector<8x128xf32>
    %625 = math.tanh %624 : vector<8x128xf32>
    %626 = arith.mulf %621, %625 : vector<8x128xf32>
    %627 = arith.index_cast %c13_i32 : i32 to index
    %c0_330 = arith.constant 0 : index
    %c0_331 = arith.constant 0 : index
    %628 = vector.load %arg13[%627, %c0_330, %c0_331] : memref<16x8x128xf32, #tpu.memory_space<vmem>>, vector<1x8x128xf32>
    %629 = vector.shape_cast %628 : vector<1x8x128xf32> to vector<8x128xf32>
    %630 = vector.shape_cast %626 : vector<8x128xf32> to vector<1x8x128xf32>
    tpu.vector_store %arg13[%627, %c0_330, %c0_331], %630 {strides = array<i32>} : memref<16x8x128xf32, #tpu.memory_space<vmem>>, vector<1x8x128xf32>,
    %c0_332 = arith.constant 0 : index
    %c0_333 = arith.constant 0 : index
    %631 = vector.load %arg11[%c0_332, %c0_333] : memref<8x128xf32, #tpu.memory_space<vmem>>, vector<8x128xf32>
    tpu.vector_store %arg11[%c0_332, %c0_333], %626 {strides = array<i32>} : memref<8x128xf32, #tpu.memory_space<vmem>>, vector<8x128xf32>,
    %c0_334 = arith.constant 0 : index
    %c0_335 = arith.constant 0 : index
    %632 = vector.load %arg12[%c0_334, %c0_335] : memref<8x128xf32, #tpu.memory_space<vmem>>, vector<8x128xf32>
    tpu.vector_store %arg12[%c0_334, %c0_335], %624 {strides = array<i32>} : memref<8x128xf32, #tpu.memory_space<vmem>>, vector<8x128xf32>,
    %c14_i32 = arith.constant 14 : i32
    %c0_336 = arith.constant 0 : index
    %c0_337 = arith.constant 0 : index
    %633 = vector.load %arg11[%c0_336, %c0_337] : memref<8x128xf32, #tpu.memory_space<vmem>>, vector<8x128xf32>
    %c0_338 = arith.constant 0 : index
    %c0_339 = arith.constant 0 : index
    %634 = vector.load %arg12[%c0_338, %c0_339] : memref<8x128xf32, #tpu.memory_space<vmem>>, vector<8x128xf32>
    %c0_340 = arith.constant 0 : index
    %c0_341 = arith.constant 0 : index
    %635 = vector.load %arg5[%c0_340, %c0_341] : memref<128x512xf32, #tpu.memory_space<vmem>>, vector<128x512xf32>
    %cst_342 = arith.constant dense<0.000000e+00> : vector<8x512xf32>
    %636 = tpu.matmul %633, %635, %cst_342 {dimension_numbers = #tpu.dot_dimension_numbers<[1], [0], [0], [1], [0, 0, 1, 1], [], []>} : vector<8x128xf32>, vector<128x512xf32>, vector<8x512xf32> -> vector<8x512xf32>
    %637 = arith.index_cast %c14_i32 : i32 to index
    %c0_343 = arith.constant 0 : index
    %c0_344 = arith.constant 0 : index
    %638 = vector.load %arg2[%637, %c0_343, %c0_344] : memref<16x8x512xf32, #tpu.memory_space<vmem>>, vector<1x8x512xf32>
    %639 = vector.shape_cast %638 : vector<1x8x512xf32> to vector<8x512xf32>
    %640 = arith.addf %639, %636 : vector<8x512xf32>
    %641 = vector.extract_strided_slice %640 {offsets = [0, 0], sizes = [8, 128], strides = [1, 1]} : vector<8x512xf32> to vector<8x128xf32>
    %cst_345 = arith.constant 5.000000e-01 : f32
    %642 = vector.broadcast %cst_345 : f32 to vector<8x128xf32>
    %643 = arith.mulf %642, %641 : vector<8x128xf32>
    %644 = math.tanh %643 : vector<8x128xf32>
    %cst_346 = arith.constant 1.000000e+00 : f32
    %645 = vector.broadcast %cst_346 : f32 to vector<8x128xf32>
    %646 = arith.addf %644, %645 : vector<8x128xf32>
    %cst_347 = arith.constant 5.000000e-01 : f32
    %647 = vector.broadcast %cst_347 : f32 to vector<8x128xf32>
    %648 = arith.mulf %647, %646 : vector<8x128xf32>
    %649 = vector.extract_strided_slice %640 {offsets = [0, 128], sizes = [8, 128], strides = [1, 1]} : vector<8x512xf32> to vector<8x128xf32>
    %cst_348 = arith.constant 5.000000e-01 : f32
    %650 = vector.broadcast %cst_348 : f32 to vector<8x128xf32>
    %651 = arith.mulf %650, %649 : vector<8x128xf32>
    %652 = math.tanh %651 : vector<8x128xf32>
    %cst_349 = arith.constant 1.000000e+00 : f32
    %653 = vector.broadcast %cst_349 : f32 to vector<8x128xf32>
    %654 = arith.addf %652, %653 : vector<8x128xf32>
    %cst_350 = arith.constant 5.000000e-01 : f32
    %655 = vector.broadcast %cst_350 : f32 to vector<8x128xf32>
    %656 = arith.mulf %655, %654 : vector<8x128xf32>
    %657 = vector.extract_strided_slice %640 {offsets = [0, 256], sizes = [8, 128], strides = [1, 1]} : vector<8x512xf32> to vector<8x128xf32>
    %658 = math.tanh %657 : vector<8x128xf32>
    %659 = vector.extract_strided_slice %640 {offsets = [0, 384], sizes = [8, 128], strides = [1, 1]} : vector<8x512xf32> to vector<8x128xf32>
    %cst_351 = arith.constant 5.000000e-01 : f32
    %660 = vector.broadcast %cst_351 : f32 to vector<8x128xf32>
    %661 = arith.mulf %660, %659 : vector<8x128xf32>
    %662 = math.tanh %661 : vector<8x128xf32>
    %cst_352 = arith.constant 1.000000e+00 : f32
    %663 = vector.broadcast %cst_352 : f32 to vector<8x128xf32>
    %664 = arith.addf %662, %663 : vector<8x128xf32>
    %cst_353 = arith.constant 5.000000e-01 : f32
    %665 = vector.broadcast %cst_353 : f32 to vector<8x128xf32>
    %666 = arith.mulf %665, %664 : vector<8x128xf32>
    %667 = arith.mulf %656, %634 : vector<8x128xf32>
    %668 = arith.mulf %648, %658 : vector<8x128xf32>
    %669 = arith.addf %667, %668 : vector<8x128xf32>
    %670 = math.tanh %669 : vector<8x128xf32>
    %671 = arith.mulf %666, %670 : vector<8x128xf32>
    %672 = arith.index_cast %c14_i32 : i32 to index
    %c0_354 = arith.constant 0 : index
    %c0_355 = arith.constant 0 : index
    %673 = vector.load %arg13[%672, %c0_354, %c0_355] : memref<16x8x128xf32, #tpu.memory_space<vmem>>, vector<1x8x128xf32>
    %674 = vector.shape_cast %673 : vector<1x8x128xf32> to vector<8x128xf32>
    %675 = vector.shape_cast %671 : vector<8x128xf32> to vector<1x8x128xf32>
    tpu.vector_store %arg13[%672, %c0_354, %c0_355], %675 {strides = array<i32>} : memref<16x8x128xf32, #tpu.memory_space<vmem>>, vector<1x8x128xf32>,
    %c0_356 = arith.constant 0 : index
    %c0_357 = arith.constant 0 : index
    %676 = vector.load %arg11[%c0_356, %c0_357] : memref<8x128xf32, #tpu.memory_space<vmem>>, vector<8x128xf32>
    tpu.vector_store %arg11[%c0_356, %c0_357], %671 {strides = array<i32>} : memref<8x128xf32, #tpu.memory_space<vmem>>, vector<8x128xf32>,
    %c0_358 = arith.constant 0 : index
    %c0_359 = arith.constant 0 : index
    %677 = vector.load %arg12[%c0_358, %c0_359] : memref<8x128xf32, #tpu.memory_space<vmem>>, vector<8x128xf32>
    tpu.vector_store %arg12[%c0_358, %c0_359], %669 {strides = array<i32>} : memref<8x128xf32, #tpu.memory_space<vmem>>, vector<8x128xf32>,
    %c15_i32 = arith.constant 15 : i32
    %c0_360 = arith.constant 0 : index
    %c0_361 = arith.constant 0 : index
    %678 = vector.load %arg11[%c0_360, %c0_361] : memref<8x128xf32, #tpu.memory_space<vmem>>, vector<8x128xf32>
    %c0_362 = arith.constant 0 : index
    %c0_363 = arith.constant 0 : index
    %679 = vector.load %arg12[%c0_362, %c0_363] : memref<8x128xf32, #tpu.memory_space<vmem>>, vector<8x128xf32>
    %c0_364 = arith.constant 0 : index
    %c0_365 = arith.constant 0 : index
    %680 = vector.load %arg5[%c0_364, %c0_365] : memref<128x512xf32, #tpu.memory_space<vmem>>, vector<128x512xf32>
    %cst_366 = arith.constant dense<0.000000e+00> : vector<8x512xf32>
    %681 = tpu.matmul %678, %680, %cst_366 {dimension_numbers = #tpu.dot_dimension_numbers<[1], [0], [0], [1], [0, 0, 1, 1], [], []>} : vector<8x128xf32>, vector<128x512xf32>, vector<8x512xf32> -> vector<8x512xf32>
    %682 = arith.index_cast %c15_i32 : i32 to index
    %c0_367 = arith.constant 0 : index
    %c0_368 = arith.constant 0 : index
    %683 = vector.load %arg2[%682, %c0_367, %c0_368] : memref<16x8x512xf32, #tpu.memory_space<vmem>>, vector<1x8x512xf32>
    %684 = vector.shape_cast %683 : vector<1x8x512xf32> to vector<8x512xf32>
    %685 = arith.addf %684, %681 : vector<8x512xf32>
    %686 = vector.extract_strided_slice %685 {offsets = [0, 0], sizes = [8, 128], strides = [1, 1]} : vector<8x512xf32> to vector<8x128xf32>
    %cst_369 = arith.constant 5.000000e-01 : f32
    %687 = vector.broadcast %cst_369 : f32 to vector<8x128xf32>
    %688 = arith.mulf %687, %686 : vector<8x128xf32>
    %689 = math.tanh %688 : vector<8x128xf32>
    %cst_370 = arith.constant 1.000000e+00 : f32
    %690 = vector.broadcast %cst_370 : f32 to vector<8x128xf32>
    %691 = arith.addf %689, %690 : vector<8x128xf32>
    %cst_371 = arith.constant 5.000000e-01 : f32
    %692 = vector.broadcast %cst_371 : f32 to vector<8x128xf32>
    %693 = arith.mulf %692, %691 : vector<8x128xf32>
    %694 = vector.extract_strided_slice %685 {offsets = [0, 128], sizes = [8, 128], strides = [1, 1]} : vector<8x512xf32> to vector<8x128xf32>
    %cst_372 = arith.constant 5.000000e-01 : f32
    %695 = vector.broadcast %cst_372 : f32 to vector<8x128xf32>
    %696 = arith.mulf %695, %694 : vector<8x128xf32>
    %697 = math.tanh %696 : vector<8x128xf32>
    %cst_373 = arith.constant 1.000000e+00 : f32
    %698 = vector.broadcast %cst_373 : f32 to vector<8x128xf32>
    %699 = arith.addf %697, %698 : vector<8x128xf32>
    %cst_374 = arith.constant 5.000000e-01 : f32
    %700 = vector.broadcast %cst_374 : f32 to vector<8x128xf32>
    %701 = arith.mulf %700, %699 : vector<8x128xf32>
    %702 = vector.extract_strided_slice %685 {offsets = [0, 256], sizes = [8, 128], strides = [1, 1]} : vector<8x512xf32> to vector<8x128xf32>
    %703 = math.tanh %702 : vector<8x128xf32>
    %704 = vector.extract_strided_slice %685 {offsets = [0, 384], sizes = [8, 128], strides = [1, 1]} : vector<8x512xf32> to vector<8x128xf32>
    %cst_375 = arith.constant 5.000000e-01 : f32
    %705 = vector.broadcast %cst_375 : f32 to vector<8x128xf32>
    %706 = arith.mulf %705, %704 : vector<8x128xf32>
    %707 = math.tanh %706 : vector<8x128xf32>
    %cst_376 = arith.constant 1.000000e+00 : f32
    %708 = vector.broadcast %cst_376 : f32 to vector<8x128xf32>
    %709 = arith.addf %707, %708 : vector<8x128xf32>
    %cst_377 = arith.constant 5.000000e-01 : f32
    %710 = vector.broadcast %cst_377 : f32 to vector<8x128xf32>
    %711 = arith.mulf %710, %709 : vector<8x128xf32>
    %712 = arith.mulf %701, %679 : vector<8x128xf32>
    %713 = arith.mulf %693, %703 : vector<8x128xf32>
    %714 = arith.addf %712, %713 : vector<8x128xf32>
    %715 = math.tanh %714 : vector<8x128xf32>
    %716 = arith.mulf %711, %715 : vector<8x128xf32>
    %717 = arith.index_cast %c15_i32 : i32 to index
    %c0_378 = arith.constant 0 : index
    %c0_379 = arith.constant 0 : index
    %718 = vector.load %arg13[%717, %c0_378, %c0_379] : memref<16x8x128xf32, #tpu.memory_space<vmem>>, vector<1x8x128xf32>
    %719 = vector.shape_cast %718 : vector<1x8x128xf32> to vector<8x128xf32>
    %720 = vector.shape_cast %716 : vector<8x128xf32> to vector<1x8x128xf32>
    tpu.vector_store %arg13[%717, %c0_378, %c0_379], %720 {strides = array<i32>} : memref<16x8x128xf32, #tpu.memory_space<vmem>>, vector<1x8x128xf32>,
    %c0_380 = arith.constant 0 : index
    %c0_381 = arith.constant 0 : index
    %721 = vector.load %arg11[%c0_380, %c0_381] : memref<8x128xf32, #tpu.memory_space<vmem>>, vector<8x128xf32>
    tpu.vector_store %arg11[%c0_380, %c0_381], %716 {strides = array<i32>} : memref<8x128xf32, #tpu.memory_space<vmem>>, vector<8x128xf32>,
    %c0_382 = arith.constant 0 : index
    %c0_383 = arith.constant 0 : index
    %722 = vector.load %arg12[%c0_382, %c0_383] : memref<8x128xf32, #tpu.memory_space<vmem>>, vector<8x128xf32>
    tpu.vector_store %arg12[%c0_382, %c0_383], %714 {strides = array<i32>} : memref<8x128xf32, #tpu.memory_space<vmem>>, vector<8x128xf32>,
    %c16_i32 = arith.constant 16 : i32
    %c0_384 = arith.constant 0 : index
    %c0_385 = arith.constant 0 : index
    %c0_386 = arith.constant 0 : index
    %723 = vector.load %arg13[%c0_384, %c0_385, %c0_386] : memref<16x8x128xf32, #tpu.memory_space<vmem>>, vector<16x8x128xf32>
    %cst_387 = arith.constant 0.000000e+00 : f32
    %724 = vector.broadcast %cst_387 : f32 to vector<16x8x128xf32>
    %725 = arith.cmpf oge, %723, %724 : vector<16x8x128xf32>
    %cst_388 = arith.constant 0.00999999977 : f32
    %726 = vector.broadcast %cst_388 : f32 to vector<16x8x128xf32>
    %727 = arith.mulf %726, %723 : vector<16x8x128xf32>
    %728 = arith.select %725, %723, %727 : vector<16x8x128xi1>, vector<16x8x128xf32>
    %729 = vector.shape_cast %728 : vector<16x8x128xf32> to vector<128x128xf32>
    %c0_389 = arith.constant 0 : index
    %c0_390 = arith.constant 0 : index
    %730 = vector.load %arg6[%c0_389, %c0_390] : memref<128x128xf32, #tpu.memory_space<vmem>>, vector<128x128xf32>
    %cst_391 = arith.constant dense<0.000000e+00> : vector<128x128xf32>
    %731 = tpu.matmul %729, %730, %cst_391 {dimension_numbers = #tpu.dot_dimension_numbers<[1], [0], [0], [1], [0, 0, 1, 1], [], []>} : vector<128x128xf32>, vector<128x128xf32>, vector<128x128xf32> -> vector<128x128xf32>
    %c0_392 = arith.constant 0 : index
    %c0_393 = arith.constant 0 : index
    %732 = vector.load %arg7[%c0_392, %c0_393] : memref<1x128xf32, #tpu.memory_space<vmem>>, vector<1x128xf32>
    %733 = vector.broadcast %732 : vector<1x128xf32> to vector<128x128xf32>
    %734 = arith.addf %731, %733 : vector<128x128xf32>
    %735 = vector.shape_cast %734 : vector<128x128xf32> to vector<16x8x128xf32>
    %c0_394 = arith.constant 0 : index
    %c0_395 = arith.constant 0 : index
    %c0_396 = arith.constant 0 : index
    %736 = vector.load %arg8[%c0_394, %c0_395, %c0_396] : memref<16x8x128xf32, #tpu.memory_space<vmem>>, vector<16x8x128xf32>
    tpu.vector_store %arg8[%c0_394, %c0_395, %c0_396], %735 {strides = array<i32>} : memref<16x8x128xf32, #tpu.memory_space<vmem>>, vector<16x8x128xf32>,
    %c0_i32_397 = arith.constant 0 : i32
    %737 = arith.cmpi eq, %arg1, %c0_i32_397 : i32
    %738 = arith.extui %737 : i1 to i32
    %c0_i32_398 = arith.constant 0 : i32
    %739 = arith.cmpi ne, %738, %c0_i32_398 : i32
    scf.if %739 {
      %c0_399 = arith.constant 0 : index
      %c0_400 = arith.constant 0 : index
      %740 = vector.load %arg11[%c0_399, %c0_400] : memref<8x128xf32, #tpu.memory_space<vmem>>, vector<8x128xf32>
      %c0_401 = arith.constant 0 : index
      %c0_402 = arith.constant 0 : index
      %741 = vector.load %arg9[%c0_401, %c0_402] : memref<8x128xf32, #tpu.memory_space<vmem>>, vector<8x128xf32>
      tpu.vector_store %arg9[%c0_401, %c0_402], %740 {strides = array<i32>} : memref<8x128xf32, #tpu.memory_space<vmem>>, vector<8x128xf32>,
      %c0_403 = arith.constant 0 : index
      %c0_404 = arith.constant 0 : index
      %742 = vector.load %arg12[%c0_403, %c0_404] : memref<8x128xf32, #tpu.memory_space<vmem>>, vector<8x128xf32>
      %c0_405 = arith.constant 0 : index
      %c0_406 = arith.constant 0 : index
      %743 = vector.load %arg10[%c0_405, %c0_406] : memref<8x128xf32, #tpu.memory_space<vmem>>, vector<8x128xf32>
      tpu.vector_store %arg10[%c0_405, %c0_406], %742 {strides = array<i32>} : memref<8x128xf32, #tpu.memory_space<vmem>>, vector<8x128xf32>,
    } else {
    }
    return
  }
  func.func @transform_0(%arg0: i32, %arg1: i32) -> (i32, i32, i32) {
    %c0_i32 = arith.constant 0 : i32
    %c0_i32_0 = arith.constant 0 : i32
    return %arg1, %arg0, %c0_i32 : i32, i32, i32
  }
  func.func @transform_1(%arg0: i32, %arg1: i32) -> (i32, i32) {
    %c0_i32 = arith.constant 0 : i32
    %c0_i32_0 = arith.constant 0 : i32
    return %arg0, %c0_i32 : i32, i32
  }
  func.func @transform_2(%arg0: i32, %arg1: i32) -> (i32, i32) {
    %c0_i32 = arith.constant 0 : i32
    %c0_i32_0 = arith.constant 0 : i32
    return %arg0, %c0_i32 : i32, i32
  }
  func.func @transform_3(%arg0: i32, %arg1: i32) -> (i32, i32) {
    %c0_i32 = arith.constant 0 : i32
    %c0_i32_0 = arith.constant 0 : i32
    %c0_i32_1 = arith.constant 0 : i32
    return %c0_i32, %c0_i32_0 : i32, i32
  }
  func.func @transform_4(%arg0: i32, %arg1: i32) -> (i32, i32) {
    %c0_i32 = arith.constant 0 : i32
    %c0_i32_0 = arith.constant 0 : i32
    %c0_i32_1 = arith.constant 0 : i32
    return %c0_i32, %c0_i32_0 : i32, i32
  }
  func.func @transform_5(%arg0: i32, %arg1: i32) -> (i32, i32) {
    %c0_i32 = arith.constant 0 : i32
    %c0_i32_0 = arith.constant 0 : i32
    %c0_i32_1 = arith.constant 0 : i32
    return %c0_i32, %c0_i32_0 : i32, i32
  }
  func.func @transform_6(%arg0: i32, %arg1: i32) -> (i32, i32, i32) {
    %c0_i32 = arith.constant 0 : i32
    %c0_i32_0 = arith.constant 0 : i32
    return %arg1, %arg0, %c0_i32 : i32, i32, i32
  }
  func.func @transform_7(%arg0: i32, %arg1: i32) -> (i32, i32) {
    %c0_i32 = arith.constant 0 : i32
    %c0_i32_0 = arith.constant 0 : i32
    return %arg0, %c0_i32 : i32, i32
  }
  func.func @transform_8(%arg0: i32, %arg1: i32) -> (i32, i32) {
    %c0_i32 = arith.constant 0 : i32
    %c0_i32_0 = arith.constant 0 : i32
    return %arg0, %c0_i32 : i32, i32
  }
}

</mosaic_0001>

<llo_original>
// kernel: tpu_custom_call.1
$region0: #{tpu_custom_call.1}
  #allocation0 [shape = 'u32[]', space=smem, size = 0x4, offset = 0x4, fixed_abs, tag = 'smem constant byte address 0x4 - core index']
  #allocation1 [shape = 'u32[144,128]{1,0:T(1,128)}', space=vmem, size = 0x12000, scoped, tag = 'internal scratch']
  #allocation2 [shape = 'f32[8,128]{1,0:T(8,128)}', space=vmem, size = 0x1000, scoped, tag = 'scratch operand']
  #allocation3 [shape = 'f32[8,128]{1,0:T(8,128)}', space=vmem, size = 0x1000, scoped, tag = 'scratch operand']
  #allocation4 [shape = 'f32[16,8,128]{2,1,0:T(8,128)}', space=vmem, size = 0x10000, scoped, tag = 'scratch operand']
  %s0 = inlined_call_operand.hbm [shape: f32[16,8,512], index: 0, kind: input, shape index: {}]
  %s1 = inlined_call_operand.hbm [shape: f32[8,128], index: 1, kind: input, shape index: {}]
  %s2 = inlined_call_operand.hbm [shape: f32[8,128], index: 2, kind: input, shape index: {}]
  %s3 = inlined_call_operand.hbm [shape: f32[128,512], index: 3, kind: input, shape index: {}]
  %s4 = inlined_call_operand.hbm [shape: f32[128,128], index: 4, kind: input, shape index: {}]
  %s5 = inlined_call_operand.vmem [shape: f32[1,128], index: 5, kind: input, shape index: {}]
  %s6 = inlined_call_operand.hbm [shape: f32[16,8,128], index: 6, kind: output, shape index: {0}]
  %s7 = inlined_call_operand.hbm [shape: f32[8,128], index: 7, kind: output, shape index: {1}]
  %s8 = inlined_call_operand.hbm [shape: f32[8,128], index: 8, kind: output, shape index: {2}]
  %9 = xla_tuple %s6, %s7, %s8
  %s10 = sld [smem:[#allocation0]]
  $region78: #{tpu_custom_call.1} parent=0
    _
  %s12 = ssub.s32 1, %s10
  %s13 = scalar_select 0, %s12, %s10
  $region1: #{tpu_custom_call.1} parent=0
    #allocation5 [shape = 'u8[262144]{0}', space=vmem, size = 0x40000, scoped, tag = 'input window, operand 0, single buffered']
    #allocation6 [shape = 's32[1]{0}', space=sflag, size = 0x4, scoped, tag = 'scoped memory for tpu_custom_call.1']
    #allocation7 [shape = 's32[1]{0}', space=sflag, size = 0x4, scoped, tag = 'scoped memory for tpu_custom_call.1']
    #allocation8 [shape = 'u8[4096]{0}', space=vmem, size = 0x1000, scoped, tag = 'input window, operand 1, single buffered']
    #allocation9 [shape = 's32[1]{0}', space=sflag, size = 0x4, scoped, tag = 'scoped memory for tpu_custom_call.1']
    #allocation10 [shape = 'u8[4096]{0}', space=vmem, size = 0x1000, scoped, tag = 'input window, operand 2, single buffered']
    #allocation11 [shape = 'u8[262144]{0}', space=vmem, size = 0x40000, scoped, tag = 'input window, operand 3, single buffered']
    #allocation12 [shape = 's32[1]{0}', space=sflag, size = 0x4, scoped, tag = 'scoped memory for tpu_custom_call.1']
    #allocation13 [shape = 'u8[65536]{0}', space=vmem, size = 0x10000, scoped, tag = 'input window, operand 4, single buffered']
    #allocation14 [shape = 'u8[65536]{0}', space=vmem, size = 0x10000, scoped, tag = 'output window, operand 0, single buffered']
    #allocation15 [shape = 'u8[4096]{0}', space=vmem, size = 0x1000, scoped, tag = 'output window, operand 1, single buffered']
    #allocation16 [shape = 's32[1]{0}', space=sflag, size = 0x4, scoped, tag = 'scoped memory for tpu_custom_call.1']
    #allocation17 [shape = 'u8[4096]{0}', space=vmem, size = 0x1000, scoped, tag = 'output window, operand 2, single buffered']
    %14 = vsyncpa [#allocation6], 0
    %15 = vsyncpa [#allocation9], 0
    %16 = vsyncpa [#allocation12], 0
    %17 = vsyncpa [#allocation7], 0
    %18 = vsyncpa [#allocation16], 0
    // Predicated region
    $region2: #{tpu_custom_call.1} parent=1 // pred_check
      _
    $region3: #{tpu_custom_call.1} parent=1 // pred_check_branch
      %20 = sbr.rel (0) target = $region5
    $region4: #{tpu_custom_call.1} parent=1 // pred_region
      %s22 = ssub.s32 8192, 8192
      %23 = vsyncadd [#allocation6], %s22
      %s24 = sshll.u32 [#allocation5], 4
      %s25 = int_to_ptr.vmem [resolvable:$true] %s24
      %30 = dma.hbm_to_vmem [thread:$0]  %s0, 8192, %s25, [#allocation6], 512, 512, 32
    $region5: #{tpu_custom_call.1} parent=1 // pred_fallthru
      _
    // Predicated region
    $region6: #{tpu_custom_call.1} parent=1 // pred_check
      _
    $region7: #{tpu_custom_call.1} parent=1 // pred_check_branch
      %32 = sbr.rel (0) target = $region9
    $region8: #{tpu_custom_call.1} parent=1 // pred_region
      %s34 = ssub.s32 128, 128
      %35 = vsyncadd [#allocation9], %s34
      %s37 = sshll.u32 [#allocation8], 4
      %s38 = int_to_ptr.vmem [resolvable:$true] %s37
      %40 = dma.hbm_to_vmem [thread:$0]  %s1, 128, %s38, [#allocation9]
    $region9: #{tpu_custom_call.1} parent=1 // pred_fallthru
      _
    // Predicated region
    $region10: #{tpu_custom_call.1} parent=1 // pred_check
      _
    $region11: #{tpu_custom_call.1} parent=1 // pred_check_branch
      %42 = sbr.rel (0) target = $region13
    $region12: #{tpu_custom_call.1} parent=1 // pred_region
      %s44 = ssub.s32 128, 128
      %45 = vsyncadd [#allocation9], %s44
      %s47 = sshll.u32 [#allocation10], 4
      %s48 = int_to_ptr.vmem [resolvable:$true] %s47
      %50 = dma.hbm_to_vmem [thread:$0]  %s2, 128, %s48, [#allocation9]
    $region13: #{tpu_custom_call.1} parent=1 // pred_fallthru
      _
    // Predicated region
    $region14: #{tpu_custom_call.1} parent=1 // pred_check
      _
    $region15: #{tpu_custom_call.1} parent=1 // pred_check_branch
      %52 = sbr.rel (0) target = $region17
    $region16: #{tpu_custom_call.1} parent=1 // pred_region
      %s54 = ssub.s32 8192, 8192
      %55 = vsyncadd [#allocation12], %s54
      %s56 = sshll.u32 [#allocation11], 4
      %s57 = int_to_ptr.vmem [resolvable:$true] %s56
      %62 = dma.hbm_to_vmem [thread:$0]  %s3, 8192, %s57, [#allocation12], 512, 512, 32
    $region17: #{tpu_custom_call.1} parent=1 // pred_fallthru
      _
    // Predicated region
    $region18: #{tpu_custom_call.1} parent=1 // pred_check
      _
    $region19: #{tpu_custom_call.1} parent=1 // pred_check_branch
      %64 = sbr.rel (0) target = $region21
    $region20: #{tpu_custom_call.1} parent=1 // pred_region
      %s66 = ssub.s32 2048, 2048
      %67 = vsyncadd [#allocation12], %s66
      %s68 = sshll.u32 [#allocation13], 4
      %s69 = int_to_ptr.vmem [resolvable:$true] %s68
      %74 = dma.hbm_to_vmem [thread:$0]  %s4, 2048, %s69, [#allocation12], 128, 128, 8
    $region21: #{tpu_custom_call.1} parent=1 // pred_fallthru
      _
    // Predicated region
    $region22: #{tpu_custom_call.1} parent=1 // pred_check
      _
    $region23: #{tpu_custom_call.1} parent=1 // pred_check_branch
      %76 = sbr.rel (0) target = $region25
    $region24: #{tpu_custom_call.1} parent=1 // pred_region
      _
    $region25: #{tpu_custom_call.1} parent=1 // pred_fallthru
      _
    // Predicated region
    $region26: #{tpu_custom_call.1} parent=1 // pred_check
      _
    $region27: #{tpu_custom_call.1} parent=1 // pred_check_branch
      %78 = sbr.rel (0) target = $region29
    $region28: #{tpu_custom_call.1} parent=1 // pred_region
      %79 = dma.done [#allocation6], 8192
    $region29: #{tpu_custom_call.1} parent=1 // pred_fallthru
      _
    // Predicated region
    $region30: #{tpu_custom_call.1} parent=1 // pred_check
      _
    $region31: #{tpu_custom_call.1} parent=1 // pred_check_branch
      %81 = sbr.rel (0) target = $region33
    $region32: #{tpu_custom_call.1} parent=1 // pred_region
      %82 = dma.done [#allocation9], 128
    $region33: #{tpu_custom_call.1} parent=1 // pred_fallthru
      _
    // Predicated region
    $region34: #{tpu_custom_call.1} parent=1 // pred_check
      _
    $region35: #{tpu_custom_call.1} parent=1 // pred_check_branch
      %84 = sbr.rel (0) target = $region37
    $region36: #{tpu_custom_call.1} parent=1 // pred_region
      %85 = dma.done [#allocation9], 128
    $region37: #{tpu_custom_call.1} parent=1 // pred_fallthru
      _
    // Predicated region
    $region38: #{tpu_custom_call.1} parent=1 // pred_check
      _
    $region39: #{tpu_custom_call.1} parent=1 // pred_check_branch
      %87 = sbr.rel (0) target = $region41
    $region40: #{tpu_custom_call.1} parent=1 // pred_region
      %88 = dma.done [#allocation12], 8192
    $region41: #{tpu_custom_call.1} parent=1 // pred_fallthru
      _
    // Predicated region
    $region42: #{tpu_custom_call.1} parent=1 // pred_check
      _
    $region43: #{tpu_custom_call.1} parent=1 // pred_check_branch
      %90 = sbr.rel (0) target = $region45
    $region44: #{tpu_custom_call.1} parent=1 // pred_region
      %91 = dma.done [#allocation12], 2048
    $region45: #{tpu_custom_call.1} parent=1 // pred_fallthru
      _
    %p92 = scmp.eq.s32.totalorder 0, 0
    // Predicated region
    $region46: #{tpu_custom_call.1} parent=1 // pred_check
      %p93 = pneg %p92
    $region47: #{tpu_custom_call.1} parent=1 // pred_check_branch
      %95 = sbr.rel (%p93) target = $region49
    $region48: #{tpu_custom_call.1} parent=1 // pred_region
      %v96 = vld [vmem:[#allocation8] sm:$0xff]
      %97 = vst [vmem:[#allocation2] sm:$0xff] %v96
      %v98 = vld [vmem:[#allocation10] sm:$0xff]
      %99 = vst [vmem:[#allocation3] sm:$0xff] %v98
    $region49: #{tpu_custom_call.1} parent=1 // pred_fallthru
      _
    %v100 = vld [vmem:[#allocation2] sm:$0xff]
    %v101 = vld [vmem:[#allocation3] sm:$0xff]
    %v102 = vld [vmem:[#allocation11] sm:$0xff]
    %v103 = vld [vmem:[#allocation11 + $0x8] sm:$0xff]
    %v104 = vld [vmem:[#allocation11 + $0x10] sm:$0xff]
    %v105 = vld [vmem:[#allocation11 + $0x18] sm:$0xff]
    %v106 = vld [vmem:[#allocation11 + $0x20] sm:$0xff]
    %v107 = vld [vmem:[#allocation11 + $0x28] sm:$0xff]
    %v108 = vld [vmem:[#allocation11 + $0x30] sm:$0xff]
    %v109 = vld [vmem:[#allocation11 + $0x38] sm:$0xff]
    %v110 = vld [vmem:[#allocation11 + $0x40] sm:$0xff]
    %v111 = vld [vmem:[#allocation11 + $0x48] sm:$0xff]
    %v112 = vld [vmem:[#allocation11 + $0x50] sm:$0xff]
    %v113 = vld [vmem:[#allocation11 + $0x58] sm:$0xff]
    %v114 = vld [vmem:[#allocation11 + $0x60] sm:$0xff]
    %v115 = vld [vmem:[#allocation11 + $0x68] sm:$0xff]
    %v116 = vld [vmem:[#allocation11 + $0x70] sm:$0xff]
    %v117 = vld [vmem:[#allocation11 + $0x78] sm:$0xff]
    %v118 = vld [vmem:[#allocation11 + $0x80] sm:$0xff]
    %v119 = vld [vmem:[#allocation11 + $0x88] sm:$0xff]
    %v120 = vld [vmem:[#allocation11 + $0x90] sm:$0xff]
    %v121 = vld [vmem:[#allocation11 + $0x98] sm:$0xff]
    %v122 = vld [vmem:[#allocation11 + $0xa0] sm:$0xff]
    %v123 = vld [vmem:[#allocation11 + $0xa8] sm:$0xff]
    %v124 = vld [vmem:[#allocation11 + $0xb0] sm:$0xff]
    %v125 = vld [vmem:[#allocation11 + $0xb8] sm:$0xff]
    %v126 = vld [vmem:[#allocation11 + $0xc0] sm:$0xff]
    %v127 = vld [vmem:[#allocation11 + $0xc8] sm:$0xff]
    %v128 = vld [vmem:[#allocation11 + $0xd0] sm:$0xff]
    %v129 = vld [vmem:[#allocation11 + $0xd8] sm:$0xff]
    %v130 = vld [vmem:[#allocation11 + $0xe0] sm:$0xff]
    %v131 = vld [vmem:[#allocation11 + $0xe8] sm:$0xff]
    %v132 = vld [vmem:[#allocation11 + $0xf0] sm:$0xff]
    %v133 = vld [vmem:[#allocation11 + $0xf8] sm:$0xff]
    %v134 = vld [vmem:[#allocation11 + $0x100] sm:$0xff]
    %v135 = vld [vmem:[#allocation11 + $0x108] sm:$0xff]
    %v136 = vld [vmem:[#allocation11 + $0x110] sm:$0xff]
    %v137 = vld [vmem:[#allocation11 + $0x118] sm:$0xff]
    %v138 = vld [vmem:[#allocation11 + $0x120] sm:$0xff]
    %v139 = vld [vmem:[#allocation11 + $0x128] sm:$0xff]
    %v140 = vld [vmem:[#allocation11 + $0x130] sm:$0xff]
    %v141 = vld [vmem:[#allocation11 + $0x138] sm:$0xff]
    %v142 = vld [vmem:[#allocation11 + $0x140] sm:$0xff]
    %v143 = vld [vmem:[#allocation11 + $0x148] sm:$0xff]
    %v144 = vld [vmem:[#allocation11 + $0x150] sm:$0xff]
    %v145 = vld [vmem:[#allocation11 + $0x158] sm:$0xff]
    %v146 = vld [vmem:[#allocation11 + $0x160] sm:$0xff]
    %v147 = vld [vmem:[#allocation11 + $0x168] sm:$0xff]
    %v148 = vld [vmem:[#allocation11 + $0x170] sm:$0xff]
    %v149 = vld [vmem:[#allocation11 + $0x178] sm:$0xff]
    %v150 = vld [vmem:[#allocation11 + $0x180] sm:$0xff]
    %v151 = vld [vmem:[#allocation11 + $0x188] sm:$0xff]
    %v152 = vld [vmem:[#allocation11 + $0x190] sm:$0xff]
    %v153 = vld [vmem:[#allocation11 + $0x198] sm:$0xff]
    %v154 = vld [vmem:[#allocation11 + $0x1a0] sm:$0xff]
    %v155 = vld [vmem:[#allocation11 + $0x1a8] sm:$0xff]
    %v156 = vld [vmem:[#allocation11 + $0x1b0] sm:$0xff]
    %v157 = vld [vmem:[#allocation11 + $0x1b8] sm:$0xff]
    %v158 = vld [vmem:[#allocation11 + $0x1c0] sm:$0xff]
    %v159 = vld [vmem:[#allocation11 + $0x1c8] sm:$0xff]
    %v160 = vld [vmem:[#allocation11 + $0x1d0] sm:$0xff]
    %v161 = vld [vmem:[#allocation11 + $0x1d8] sm:$0xff]
    %v162 = vld [vmem:[#allocation11 + $0x1e0] sm:$0xff]
    %v163 = vld [vmem:[#allocation11 + $0x1e8] sm:$0xff]
    %v164 = vld [vmem:[#allocation11 + $0x1f0] sm:$0xff]
    %v165 = vld [vmem:[#allocation11 + $0x1f8] sm:$0xff]
    %166 = vmatprep.subr.mxu0 %v103
    %167 = vmatpush1.msra.mxu0 %v102
    %168 = vmatprep.subr.mxu0 %v107
    %169 = vmatpush1.msra.mxu0 %v106
    %170 = vmatprep.subr.mxu0 %v111
    %171 = vmatpush1.msra.mxu0 %v110
    %172 = vmatprep.subr.mxu0 %v115
    %173 = vmatpush1.msra.mxu0 %v114
    %174 = vmatprep.subr.mxu0 %v119
    %175 = vmatpush1.msra.mxu0 %v118
    %176 = vmatprep.subr.mxu0 %v123
    %177 = vmatpush1.msra.mxu0 %v122
    %178 = vmatprep.subr.mxu0 %v127
    %179 = vmatpush1.msra.mxu0 %v126
    %180 = vmatprep.subr.mxu0 %v131
    %181 = vmatpush1.msra.mxu0 %v130
    %182 = vmatprep.subr.mxu0 %v135
    %183 = vmatpush1.msra.mxu0 %v134
    %184 = vmatprep.subr.mxu0 %v139
    %185 = vmatpush1.msra.mxu0 %v138
    %186 = vmatprep.subr.mxu0 %v143
    %187 = vmatpush1.msra.mxu0 %v142
    %188 = vmatprep.subr.mxu0 %v147
    %189 = vmatpush1.msra.mxu0 %v146
    %190 = vmatprep.subr.mxu0 %v151
    %191 = vmatpush1.msra.mxu0 %v150
    %192 = vmatprep.subr.mxu0 %v155
    %193 = vmatpush1.msra.mxu0 %v154
    %194 = vmatprep.subr.mxu0 %v159
    %195 = vmatpush1.msra.mxu0 %v158
    %196 = vmatprep.subr.mxu0 %v163
    %197 = vmatpush1.msra.mxu0 %v162
    %198 = vmatprep.subr.mxu0 0.0
    %199 = vmatpush1.msra.mxu0 0.0
    %200 = vmatprep.subr.mxu0 0.0
    %201 = vmatpush1.msra.mxu0 0.0
    %202 = vmatprep.subr.mxu0 0.0
    %203 = vmatpush1.msra.mxu0 0.0
    %204 = vmatprep.subr.mxu0 0.0
    %205 = vmatpush1.msra.mxu0 0.0
    %206 = vmatprep.subr.mxu0 0.0
    %207 = vmatpush1.msra.mxu0 0.0
    %208 = vmatprep.subr.mxu0 0.0
    %209 = vmatpush1.msra.mxu0 0.0
    %210 = vmatprep.subr.mxu0 0.0
    %211 = vmatpush1.msra.mxu0 0.0
    %212 = vmatprep.subr.mxu0 0.0
    %213 = vmatpush1.msra.mxu0 0.0
    %214 = vmatprep.subr.mxu0 0.0
    %215 = vmatpush1.msra.mxu0 0.0
    %216 = vmatprep.subr.mxu0 0.0
    %217 = vmatpush1.msra.mxu0 0.0
    %218 = vmatprep.subr.mxu0 0.0
    %219 = vmatpush1.msra.mxu0 0.0
    %220 = vmatprep.subr.mxu0 0.0
    %221 = vmatpush1.msra.mxu0 0.0
    %222 = vmatprep.subr.mxu0 0.0
    %223 = vmatpush1.msra.mxu0 0.0
    %224 = vmatprep.subr.mxu0 0.0
    %225 = vmatpush1.msra.mxu0 0.0
    %226 = vmatprep.subr.mxu0 0.0
    %227 = vmatpush1.msra.mxu0 0.0
    %228 = vmatprep.subr.mxu0 0.0
    %229 = vmatpush1.msra.mxu0 0.0
    %230 = vmatprep.mubr.f32.mxu0 0.0
    %231 = vmatmul.mubr.f32.gmra.mrb[0].mxu0 %v100
    %v232 = vpop.f32.mrb[0].mxu0
    %v233 = vadd.f32 0.0, %v232
    %v234 = vpop.f32.mrb[0].mxu0
    %v235 = vadd.f32 0.0, %v234
    %236 = vdwg.mxu0
    %237 = vmatprep.subr.mxu0 %v105
    %238 = vmatpush1.msra.mxu0 %v104
    %239 = vmatprep.subr.mxu0 %v109
    %240 = vmatpush1.msra.mxu0 %v108
    %241 = vmatprep.subr.mxu0 %v113
    %242 = vmatpush1.msra.mxu0 %v112
    %243 = vmatprep.subr.mxu0 %v117
    %244 = vmatpush1.msra.mxu0 %v116
    %245 = vmatprep.subr.mxu0 %v121
    %246 = vmatpush1.msra.mxu0 %v120
    %247 = vmatprep.subr.mxu0 %v125
    %248 = vmatpush1.msra.mxu0 %v124
    %249 = vmatprep.subr.mxu0 %v129
    %250 = vmatpush1.msra.mxu0 %v128
    %251 = vmatprep.subr.mxu0 %v133
    %252 = vmatpush1.msra.mxu0 %v132
    %253 = vmatprep.subr.mxu0 %v137
    %254 = vmatpush1.msra.mxu0 %v136
    %255 = vmatprep.subr.mxu0 %v141
    %256 = vmatpush1.msra.mxu0 %v140
    %257 = vmatprep.subr.mxu0 %v145
    %258 = vmatpush1.msra.mxu0 %v144
    %259 = vmatprep.subr.mxu0 %v149
    %260 = vmatpush1.msra.mxu0 %v148
    %261 = vmatprep.subr.mxu0 %v153
    %262 = vmatpush1.msra.mxu0 %v152
    %263 = vmatprep.subr.mxu0 %v157
    %264 = vmatpush1.msra.mxu0 %v156
    %265 = vmatprep.subr.mxu0 %v161
    %266 = vmatpush1.msra.mxu0 %v160
    %267 = vmatprep.subr.mxu0 %v165
    %268 = vmatpush1.msra.mxu0 %v164
    %269 = vmatprep.subr.mxu0 0.0
    %270 = vmatpush1.msra.mxu0 0.0
    %271 = vmatprep.subr.mxu0 0.0
    %272 = vmatpush1.msra.mxu0 0.0
    %273 = vmatprep.subr.mxu0 0.0
    %274 = vmatpush1.msra.mxu0 0.0
    %275 = vmatprep.subr.mxu0 0.0
    %276 = vmatpush1.msra.mxu0 0.0
    %277 = vmatprep.subr.mxu0 0.0
    %278 = vmatpush1.msra.mxu0 0.0
    %279 = vmatprep.subr.mxu0 0.0
    %280 = vmatpush1.msra.mxu0 0.0
    %281 = vmatprep.subr.mxu0 0.0
    %282 = vmatpush1.msra.mxu0 0.0
    %283 = vmatprep.subr.mxu0 0.0
    %284 = vmatpush1.msra.mxu0 0.0
    %285 = vmatprep.subr.mxu0 0.0
    %286 = vmatpush1.msra.mxu0 0.0
    %287 = vmatprep.subr.mxu0 0.0
    %288 = vmatpush1.msra.mxu0 0.0
    %289 = vmatprep.subr.mxu0 0.0
    %290 = vmatpush1.msra.mxu0 0.0
    %291 = vmatprep.subr.mxu0 0.0
    %292 = vmatpush1.msra.mxu0 0.0
    %293 = vmatprep.subr.mxu0 0.0
    %294 = vmatpush1.msra.mxu0 0.0
    %295 = vmatprep.subr.mxu0 0.0
    %296 = vmatpush1.msra.mxu0 0.0
    %297 = vmatprep.subr.mxu0 0.0
    %298 = vmatpush1.msra.mxu0 0.0
    %299 = vmatprep.subr.mxu0 0.0
    %300 = vmatpush1.msra.mxu0 0.0
    %301 = vmatprep.mubr.f32.mxu0 0.0
    %302 = vmatmul.mubr.f32.gmra.mrb[0].mxu0 %v100
    %v303 = vpop.f32.mrb[0].mxu0
    %v304 = vadd.f32 0.0, %v303
    %v305 = vpop.f32.mrb[0].mxu0
    %v306 = vadd.f32 0.0, %v305
    %307 = vdwg.mxu0
    %v308 = vld [vmem:[#allocation5] sm:$0xff]
    %v309 = vld [vmem:[#allocation5 + $0x8] sm:$0xff]
    %v310 = vld [vmem:[#allocation5 + $0x10] sm:$0xff]
    %v311 = vld [vmem:[#allocation5 + $0x18] sm:$0xff]
    %v312 = vadd.f32 %v308, %v233
    %v313 = vadd.f32 %v309, %v235
    %v314 = vadd.f32 %v310, %v304
    %v315 = vadd.f32 %v311, %v306
    %v316 = vmul.f32 %v312, 0.5
    %v317 = vtanh.pop %v316
    %v318 = vadd.f32 %v317, 1.0
    %v319 = vmul.f32 %v318, 0.5
    %v320 = vmul.f32 %v313, 0.5
    %v321 = vtanh.pop %v320
    %v322 = vadd.f32 %v321, 1.0
    %v323 = vmul.f32 %v322, 0.5
    %v324 = vtanh.pop %v314
    %v325 = vmul.f32 %v315, 0.5
    %v326 = vtanh.pop %v325
    %v327 = vadd.f32 %v326, 1.0
    %v328 = vmul.f32 %v327, 0.5
    %v329 = vmul.f32 %v323, %v101
    %v330 = vmul.f32 %v319, %v324
    %v331 = vadd.f32 %v329, %v330
    %v332 = vtanh.pop %v331
    %v333 = vmul.f32 %v328, %v332
    %334 = vst [vmem:[#allocation4] sm:$0xff] %v333
    %335 = vst [vmem:[#allocation2] sm:$0xff] %v333
    %336 = vst [vmem:[#allocation3] sm:$0xff] %v331
    %v337 = vld [vmem:[#allocation2] sm:$0xff]
    %v338 = vld [vmem:[#allocation3] sm:$0xff]
    %v339 = vld [vmem:[#allocation11] sm:$0xff]
    %v340 = vld [vmem:[#allocation11 + $0x8] sm:$0xff]
    %v341 = vld [vmem:[#allocation11 + $0x10] sm:$0xff]
    %v342 = vld [vmem:[#allocation11 + $0x18] sm:$0xff]
    %v343 = vld [vmem:[#allocation11 + $0x20] sm:$0xff]
    %v344 = vld [vmem:[#allocation11 + $0x28] sm:$0xff]
    %v345 = vld [vmem:[#allocation11 + $0x30] sm:$0xff]
    %v346 = vld [vmem:[#allocation11 + $0x38] sm:$0xff]
    %v347 = vld [vmem:[#allocation11 + $0x40] sm:$0xff]
    %v348 = vld [vmem:[#allocation11 + $0x48] sm:$0xff]
    %v349 = vld [vmem:[#allocation11 + $0x50] sm:$0xff]
    %v350 = vld [vmem:[#allocation11 + $0x58] sm:$0xff]
    %v351 = vld [vmem:[#allocation11 + $0x60] sm:$0xff]
    %v352 = vld [vmem:[#allocation11 + $0x68] sm:$0xff]
    %v353 = vld [vmem:[#allocation11 + $0x70] sm:$0xff]
    %v354 = vld [vmem:[#allocation11 + $0x78] sm:$0xff]
    %v355 = vld [vmem:[#allocation11 + $0x80] sm:$0xff]
    %v356 = vld [vmem:[#allocation11 + $0x88] sm:$0xff]
    %v357 = vld [vmem:[#allocation11 + $0x90] sm:$0xff]
    %v358 = vld [vmem:[#allocation11 + $0x98] sm:$0xff]
    %v359 = vld [vmem:[#allocation11 + $0xa0] sm:$0xff]
    %v360 = vld [vmem:[#allocation11 + $0xa8] sm:$0xff]
    %v361 = vld [vmem:[#allocation11 + $0xb0] sm:$0xff]
    %v362 = vld [vmem:[#allocation11 + $0xb8] sm:$0xff]
    %v363 = vld [vmem:[#allocation11 + $0xc0] sm:$0xff]
    %v364 = vld [vmem:[#allocation11 + $0xc8] sm:$0xff]
    %v365 = vld [vmem:[#allocation11 + $0xd0] sm:$0xff]
    %v366 = vld [vmem:[#allocation11 + $0xd8] sm:$0xff]
    %v367 = vld [vmem:[#allocation11 + $0xe0] sm:$0xff]
    %v368 = vld [vmem:[#allocation11 + $0xe8] sm:$0xff]
    %v369 = vld [vmem:[#allocation11 + $0xf0] sm:$0xff]
    %v370 = vld [vmem:[#allocation11 + $0xf8] sm:$0xff]
    %v371 = vld [vmem:[#allocation11 + $0x100] sm:$0xff]
    %v372 = vld [vmem:[#allocation11 + $0x108] sm:$0xff]
    %v373 = vld [vmem:[#allocation11 + $0x110] sm:$0xff]
    %v374 = vld [vmem:[#allocation11 + $0x118] sm:$0xff]
    %v375 = vld [vmem:[#allocation11 + $0x120] sm:$0xff]
    %v376 = vld [vmem:[#allocation11 + $0x128] sm:$0xff]
    %v377 = vld [vmem:[#allocation11 + $0x130] sm:$0xff]
    %v378 = vld [vmem:[#allocation11 + $0x138] sm:$0xff]
    %v379 = vld [vmem:[#allocation11 + $0x140] sm:$0xff]
    %v380 = vld [vmem:[#allocation11 + $0x148] sm:$0xff]
    %v381 = vld [vmem:[#allocation11 + $0x150] sm:$0xff]
    %v382 = vld [vmem:[#allocation11 + $0x158] sm:$0xff]
    %v383 = vld [vmem:[#allocation11 + $0x160] sm:$0xff]
    %v384 = vld [vmem:[#allocation11 + $0x168] sm:$0xff]
    %v385 = vld [vmem:[#allocation11 + $0x170] sm:$0xff]
    %v386 = vld [vmem:[#allocation11 + $0x178] sm:$0xff]
    %v387 = vld [vmem:[#allocation11 + $0x180] sm:$0xff]
    %v388 = vld [vmem:[#allocation11 + $0x188] sm:$0xff]
    %v389 = vld [vmem:[#allocation11 + $0x190] sm:$0xff]
    %v390 = vld [vmem:[#allocation11 + $0x198] sm:$0xff]
    %v391 = vld [vmem:[#allocation11 + $0x1a0] sm:$0xff]
    %v392 = vld [vmem:[#allocation11 + $0x1a8] sm:$0xff]
    %v393 = vld [vmem:[#allocation11 + $0x1b0] sm:$0xff]
    %v394 = vld [vmem:[#allocation11 + $0x1b8] sm:$0xff]
    %v395 = vld [vmem:[#allocation11 + $0x1c0] sm:$0xff]
    %v396 = vld [vmem:[#allocation11 + $0x1c8] sm:$0xff]
    %v397 = vld [vmem:[#allocation11 + $0x1d0] sm:$0xff]
    %v398 = vld [vmem:[#allocation11 + $0x1d8] sm:$0xff]
    %v399 = vld [vmem:[#allocation11 + $0x1e0] sm:$0xff]
    %v400 = vld [vmem:[#allocation11 + $0x1e8] sm:$0xff]
    %v401 = vld [vmem:[#allocation11 + $0x1f0] sm:$0xff]
    %v402 = vld [vmem:[#allocation11 + $0x1f8] sm:$0xff]
    %403 = vmatprep.subr.mxu0 %v340
    %404 = vmatpush1.msra.mxu0 %v339
    %405 = vmatprep.subr.mxu0 %v344
    %406 = vmatpush1.msra.mxu0 %v343
    %407 = vmatprep.subr.mxu0 %v348
    %408 = vmatpush1.msra.mxu0 %v347
    %409 = vmatprep.subr.mxu0 %v352
    %410 = vmatpush1.msra.mxu0 %v351
    %411 = vmatprep.subr.mxu0 %v356
    %412 = vmatpush1.msra.mxu0 %v355
    %413 = vmatprep.subr.mxu0 %v360
    %414 = vmatpush1.msra.mxu0 %v359
    %415 = vmatprep.subr.mxu0 %v364
    %416 = vmatpush1.msra.mxu0 %v363
    %417 = vmatprep.subr.mxu0 %v368
    %418 = vmatpush1.msra.mxu0 %v367
    %419 = vmatprep.subr.mxu0 %v372
    %420 = vmatpush1.msra.mxu0 %v371
    %421 = vmatprep.subr.mxu0 %v376
    %422 = vmatpush1.msra.mxu0 %v375
    %423 = vmatprep.subr.mxu0 %v380
    %424 = vmatpush1.msra.mxu0 %v379
    %425 = vmatprep.subr.mxu0 %v384
    %426 = vmatpush1.msra.mxu0 %v383
    %427 = vmatprep.subr.mxu0 %v388
    %428 = vmatpush1.msra.mxu0 %v387
    %429 = vmatprep.subr.mxu0 %v392
    %430 = vmatpush1.msra.mxu0 %v391
    %431 = vmatprep.subr.mxu0 %v396
    %432 = vmatpush1.msra.mxu0 %v395
    %433 = vmatprep.subr.mxu0 %v400
    %434 = vmatpush1.msra.mxu0 %v399
    %435 = vmatprep.subr.mxu0 0.0
    %436 = vmatpush1.msra.mxu0 0.0
    %437 = vmatprep.subr.mxu0 0.0
    %438 = vmatpush1.msra.mxu0 0.0
    %439 = vmatprep.subr.mxu0 0.0
    %440 = vmatpush1.msra.mxu0 0.0
    %441 = vmatprep.subr.mxu0 0.0
    %442 = vmatpush1.msra.mxu0 0.0
    %443 = vmatprep.subr.mxu0 0.0
    %444 = vmatpush1.msra.mxu0 0.0
    %445 = vmatprep.subr.mxu0 0.0
    %446 = vmatpush1.msra.mxu0 0.0
    %447 = vmatprep.subr.mxu0 0.0
    %448 = vmatpush1.msra.mxu0 0.0
    %449 = vmatprep.subr.mxu0 0.0
    %450 = vmatpush1.msra.mxu0 0.0
    %451 = vmatprep.subr.mxu0 0.0
    %452 = vmatpush1.msra.mxu0 0.0
    %453 = vmatprep.subr.mxu0 0.0
    %454 = vmatpush1.msra.mxu0 0.0
    %455 = vmatprep.subr.mxu0 0.0
    %456 = vmatpush1.msra.mxu0 0.0
    %457 = vmatprep.subr.mxu0 0.0
    %458 = vmatpush1.msra.mxu0 0.0
    %459 = vmatprep.subr.mxu0 0.0
    %460 = vmatpush1.msra.mxu0 0.0
    %461 = vmatprep.subr.mxu0 0.0
    %462 = vmatpush1.msra.mxu0 0.0
    %463 = vmatprep.subr.mxu0 0.0
    %464 = vmatpush1.msra.mxu0 0.0
    %465 = vmatprep.subr.mxu0 0.0
    %466 = vmatpush1.msra.mxu0 0.0
    %467 = vmatprep.mubr.f32.mxu0 0.0
    %468 = vmatmul.mubr.f32.gmra.mrb[0].mxu0 %v337
    %v469 = vpop.f32.mrb[0].mxu0
    %v470 = vadd.f32 0.0, %v469
    %v471 = vpop.f32.mrb[0].mxu0
    %v472 = vadd.f32 0.0, %v471
    %473 = vdwg.mxu0
    %474 = vmatprep.subr.mxu0 %v342
    %475 = vmatpush1.msra.mxu0 %v341
    %476 = vmatprep.subr.mxu0 %v346
    %477 = vmatpush1.msra.mxu0 %v345
    %478 = vmatprep.subr.mxu0 %v350
    %479 = vmatpush1.msra.mxu0 %v349
    %480 = vmatprep.subr.mxu0 %v354
    %481 = vmatpush1.msra.mxu0 %v353
    %482 = vmatprep.subr.mxu0 %v358
    %483 = vmatpush1.msra.mxu0 %v357
    %484 = vmatprep.subr.mxu0 %v362
    %485 = vmatpush1.msra.mxu0 %v361
    %486 = vmatprep.subr.mxu0 %v366
    %487 = vmatpush1.msra.mxu0 %v365
    %488 = vmatprep.subr.mxu0 %v370
    %489 = vmatpush1.msra.mxu0 %v369
    %490 = vmatprep.subr.mxu0 %v374
    %491 = vmatpush1.msra.mxu0 %v373
    %492 = vmatprep.subr.mxu0 %v378
    %493 = vmatpush1.msra.mxu0 %v377
    %494 = vmatprep.subr.mxu0 %v382
    %495 = vmatpush1.msra.mxu0 %v381
    %496 = vmatprep.subr.mxu0 %v386
    %497 = vmatpush1.msra.mxu0 %v385
    %498 = vmatprep.subr.mxu0 %v390
    %499 = vmatpush1.msra.mxu0 %v389
    %500 = vmatprep.subr.mxu0 %v394
    %501 = vmatpush1.msra.mxu0 %v393
    %502 = vmatprep.subr.mxu0 %v398
    %503 = vmatpush1.msra.mxu0 %v397
    %504 = vmatprep.subr.mxu0 %v402
    %505 = vmatpush1.msra.mxu0 %v401
    %506 = vmatprep.subr.mxu0 0.0
    %507 = vmatpush1.msra.mxu0 0.0
    %508 = vmatprep.subr.mxu0 0.0
    %509 = vmatpush1.msra.mxu0 0.0
    %510 = vmatprep.subr.mxu0 0.0
    %511 = vmatpush1.msra.mxu0 0.0
    %512 = vmatprep.subr.mxu0 0.0
    %513 = vmatpush1.msra.mxu0 0.0
    %514 = vmatprep.subr.mxu0 0.0
    %515 = vmatpush1.msra.mxu0 0.0
    %516 = vmatprep.subr.mxu0 0.0
    %517 = vmatpush1.msra.mxu0 0.0
    %518 = vmatprep.subr.mxu0 0.0
    %519 = vmatpush1.msra.mxu0 0.0
    %520 = vmatprep.subr.mxu0 0.0
    %521 = vmatpush1.msra.mxu0 0.0
    %522 = vmatprep.subr.mxu0 0.0
    %523 = vmatpush1.msra.mxu0 0.0
    %524 = vmatprep.subr.mxu0 0.0
    %525 = vmatpush1.msra.mxu0 0.0
    %526 = vmatprep.subr.mxu0 0.0
    %527 = vmatpush1.msra.mxu0 0.0
    %528 = vmatprep.subr.mxu0 0.0
    %529 = vmatpush1.msra.mxu0 0.0
    %530 = vmatprep.subr.mxu0 0.0
    %531 = vmatpush1.msra.mxu0 0.0
    %532 = vmatprep.subr.mxu0 0.0
    %533 = vmatpush1.msra.mxu0 0.0
    %534 = vmatprep.subr.mxu0 0.0
    %535 = vmatpush1.msra.mxu0 0.0
    %536 = vmatprep.subr.mxu0 0.0
    %537 = vmatpush1.msra.mxu0 0.0
    %538 = vmatprep.mubr.f32.mxu0 0.0
    %539 = vmatmul.mubr.f32.gmra.mrb[0].mxu0 %v337
    %v540 = vpop.f32.mrb[0].mxu0
    %v541 = vadd.f32 0.0, %v540
    %v542 = vpop.f32.mrb[0].mxu0
    %v543 = vadd.f32 0.0, %v542
    %544 = vdwg.mxu0
    %s545 = scalar_lea.vmem [#allocation5], 32
    %v546 = vld [vmem:[%s545] sm:$0xff]
    %v547 = vld [vmem:[%s545 + $0x8] sm:$0xff]
    %v548 = vld [vmem:[%s545 + $0x10] sm:$0xff]
    %v549 = vld [vmem:[%s545 + $0x18] sm:$0xff]
    %v550 = vadd.f32 %v546, %v470
    %v551 = vadd.f32 %v547, %v472
    %v552 = vadd.f32 %v548, %v541
    %v553 = vadd.f32 %v549, %v543
    %v554 = vmul.f32 %v550, 0.5
    %v555 = vtanh.pop %v554
    %v556 = vadd.f32 %v555, 1.0
    %v557 = vmul.f32 %v556, 0.5
    %v558 = vmul.f32 %v551, 0.5
    %v559 = vtanh.pop %v558
    %v560 = vadd.f32 %v559, 1.0
    %v561 = vmul.f32 %v560, 0.5
    %v562 = vtanh.pop %v552
    %v563 = vmul.f32 %v553, 0.5
    %v564 = vtanh.pop %v563
    %v565 = vadd.f32 %v564, 1.0
    %v566 = vmul.f32 %v565, 0.5
    %v567 = vmul.f32 %v561, %v338
    %v568 = vmul.f32 %v557, %v562
    %v569 = vadd.f32 %v567, %v568
    %v570 = vtanh.pop %v569
    %v571 = vmul.f32 %v566, %v570
    %s572 = scalar_lea.vmem [#allocation4], 8
    %573 = vst [vmem:[%s572] sm:$0xff] %v571
    %574 = vst [vmem:[#allocation2] sm:$0xff] %v571
    %575 = vst [vmem:[#allocation3] sm:$0xff] %v569
    %v576 = vld [vmem:[#allocation2] sm:$0xff]
    %v577 = vld [vmem:[#allocation3] sm:$0xff]
    %v578 = vld [vmem:[#allocation11] sm:$0xff]
    %v579 = vld [vmem:[#allocation11 + $0x8] sm:$0xff]
    %v580 = vld [vmem:[#allocation11 + $0x10] sm:$0xff]
    %v581 = vld [vmem:[#allocation11 + $0x18] sm:$0xff]
    %v582 = vld [vmem:[#allocation11 + $0x20] sm:$0xff]
    %v583 = vld [vmem:[#allocation11 + $0x28] sm:$0xff]
    %v584 = vld [vmem:[#allocation11 + $0x30] sm:$0xff]
    %v585 = vld [vmem:[#allocation11 + $0x38] sm:$0xff]
    %v586 = vld [vmem:[#allocation11 + $0x40] sm:$0xff]
    %v587 = vld [vmem:[#allocation11 + $0x48] sm:$0xff]
    %v588 = vld [vmem:[#allocation11 + $0x50] sm:$0xff]
    %v589 = vld [vmem:[#allocation11 + $0x58] sm:$0xff]
    %v590 = vld [vmem:[#allocation11 + $0x60] sm:$0xff]
    %v591 = vld [vmem:[#allocation11 + $0x68] sm:$0xff]
    %v592 = vld [vmem:[#allocation11 + $0x70] sm:$0xff]
    %v593 = vld [vmem:[#allocation11 + $0x78] sm:$0xff]
    %v594 = vld [vmem:[#allocation11 + $0x80] sm:$0xff]
    %v595 = vld [vmem:[#allocation11 + $0x88] sm:$0xff]
    %v596 = vld [vmem:[#allocation11 + $0x90] sm:$0xff]
    %v597 = vld [vmem:[#allocation11 + $0x98] sm:$0xff]
    %v598 = vld [vmem:[#allocation11 + $0xa0] sm:$0xff]
    %v599 = vld [vmem:[#allocation11 + $0xa8] sm:$0xff]
    %v600 = vld [vmem:[#allocation11 + $0xb0] sm:$0xff]
    %v601 = vld [vmem:[#allocation11 + $0xb8] sm:$0xff]
    %v602 = vld [vmem:[#allocation11 + $0xc0] sm:$0xff]
    %v603 = vld [vmem:[#allocation11 + $0xc8] sm:$0xff]
    %v604 = vld [vmem:[#allocation11 + $0xd0] sm:$0xff]
    %v605 = vld [vmem:[#allocation11 + $0xd8] sm:$0xff]
    %v606 = vld [vmem:[#allocation11 + $0xe0] sm:$0xff]
    %v607 = vld [vmem:[#allocation11 + $0xe8] sm:$0xff]
    %v608 = vld [vmem:[#allocation11 + $0xf0] sm:$0xff]
    %v609 = vld [vmem:[#allocation11 + $0xf8] sm:$0xff]
    %v610 = vld [vmem:[#allocation11 + $0x100] sm:$0xff]
    %v611 = vld [vmem:[#allocation11 + $0x108] sm:$0xff]
    %v612 = vld [vmem:[#allocation11 + $0x110] sm:$0xff]
    %v613 = vld [vmem:[#allocation11 + $0x118] sm:$0xff]
    %v614 = vld [vmem:[#allocation11 + $0x120] sm:$0xff]
    %v615 = vld [vmem:[#allocation11 + $0x128] sm:$0xff]
    %v616 = vld [vmem:[#allocation11 + $0x130] sm:$0xff]
    %v617 = vld [vmem:[#allocation11 + $0x138] sm:$0xff]
    %v618 = vld [vmem:[#allocation11 + $0x140] sm:$0xff]
    %v619 = vld [vmem:[#allocation11 + $0x148] sm:$0xff]
    %v620 = vld [vmem:[#allocation11 + $0x150] sm:$0xff]
    %v621 = vld [vmem:[#allocation11 + $0x158] sm:$0xff]
    %v622 = vld [vmem:[#allocation11 + $0x160] sm:$0xff]
    %v623 = vld [vmem:[#allocation11 + $0x168] sm:$0xff]
    %v624 = vld [vmem:[#allocation11 + $0x170] sm:$0xff]
    %v625 = vld [vmem:[#allocation11 + $0x178] sm:$0xff]
    %v626 = vld [vmem:[#allocation11 + $0x180] sm:$0xff]
    %v627 = vld [vmem:[#allocation11 + $0x188] sm:$0xff]
    %v628 = vld [vmem:[#allocation11 + $0x190] sm:$0xff]
    %v629 = vld [vmem:[#allocation11 + $0x198] sm:$0xff]
    %v630 = vld [vmem:[#allocation11 + $0x1a0] sm:$0xff]
    %v631 = vld [vmem:[#allocation11 + $0x1a8] sm:$0xff]
    %v632 = vld [vmem:[#allocation11 + $0x1b0] sm:$0xff]
    %v633 = vld [vmem:[#allocation11 + $0x1b8] sm:$0xff]
    %v634 = vld [vmem:[#allocation11 + $0x1c0] sm:$0xff]
    %v635 = vld [vmem:[#allocation11 + $0x1c8] sm:$0xff]
    %v636 = vld [vmem:[#allocation11 + $0x1d0] sm:$0xff]
    %v637 = vld [vmem:[#allocation11 + $0x1d8] sm:$0xff]
    %v638 = vld [vmem:[#allocation11 + $0x1e0] sm:$0xff]
    %v639 = vld [vmem:[#allocation11 + $0x1e8] sm:$0xff]
    %v640 = vld [vmem:[#allocation11 + $0x1f0] sm:$0xff]
    %v641 = vld [vmem:[#allocation11 + $0x1f8] sm:$0xff]
    %642 = vmatprep.subr.mxu0 %v579
    %643 = vmatpush1.msra.mxu0 %v578
    %644 = vmatprep.subr.mxu0 %v583
    %645 = vmatpush1.msra.mxu0 %v582
    %646 = vmatprep.subr.mxu0 %v587
    %647 = vmatpush1.msra.mxu0 %v586
    %648 = vmatprep.subr.mxu0 %v591
    %649 = vmatpush1.msra.mxu0 %v590
    %650 = vmatprep.subr.mxu0 %v595
    %651 = vmatpush1.msra.mxu0 %v594
    %652 = vmatprep.subr.mxu0 %v599
    %653 = vmatpush1.msra.mxu0 %v598
    %654 = vmatprep.subr.mxu0 %v603
    %655 = vmatpush1.msra.mxu0 %v602
    %656 = vmatprep.subr.mxu0 %v607
    %657 = vmatpush1.msra.mxu0 %v606
    %658 = vmatprep.subr.mxu0 %v611
    %659 = vmatpush1.msra.mxu0 %v610
    %660 = vmatprep.subr.mxu0 %v615
    %661 = vmatpush1.msra.mxu0 %v614
    %662 = vmatprep.subr.mxu0 %v619
    %663 = vmatpush1.msra.mxu0 %v618
    %664 = vmatprep.subr.mxu0 %v623
    %665 = vmatpush1.msra.mxu0 %v622
    %666 = vmatprep.subr.mxu0 %v627
    %667 = vmatpush1.msra.mxu0 %v626
    %668 = vmatprep.subr.mxu0 %v631
    %669 = vmatpush1.msra.mxu0 %v630
    %670 = vmatprep.subr.mxu0 %v635
    %671 = vmatpush1.msra.mxu0 %v634
    %672 = vmatprep.subr.mxu0 %v639
    %673 = vmatpush1.msra.mxu0 %v638
    %674 = vmatprep.subr.mxu0 0.0
    %675 = vmatpush1.msra.mxu0 0.0
    %676 = vmatprep.subr.mxu0 0.0
    %677 = vmatpush1.msra.mxu0 0.0
    %678 = vmatprep.subr.mxu0 0.0
    %679 = vmatpush1.msra.mxu0 0.0
    %680 = vmatprep.subr.mxu0 0.0
    %681 = vmatpush1.msra.mxu0 0.0
    %682 = vmatprep.subr.mxu0 0.0
    %683 = vmatpush1.msra.mxu0 0.0
    %684 = vmatprep.subr.mxu0 0.0
    %685 = vmatpush1.msra.mxu0 0.0
    %686 = vmatprep.subr.mxu0 0.0
    %687 = vmatpush1.msra.mxu0 0.0
    %688 = vmatprep.subr.mxu0 0.0
    %689 = vmatpush1.msra.mxu0 0.0
    %690 = vmatprep.subr.mxu0 0.0
    %691 = vmatpush1.msra.mxu0 0.0
    %692 = vmatprep.subr.mxu0 0.0
    %693 = vmatpush1.msra.mxu0 0.0
    %694 = vmatprep.subr.mxu0 0.0
    %695 = vmatpush1.msra.mxu0 0.0
    %696 = vmatprep.subr.mxu0 0.0
    %697 = vmatpush1.msra.mxu0 0.0
    %698 = vmatprep.subr.mxu0 0.0
    %699 = vmatpush1.msra.mxu0 0.0
    %700 = vmatprep.subr.mxu0 0.0
    %701 = vmatpush1.msra.mxu0 0.0
    %702 = vmatprep.subr.mxu0 0.0
    %703 = vmatpush1.msra.mxu0 0.0
    %704 = vmatprep.subr.mxu0 0.0
    %705 = vmatpush1.msra.mxu0 0.0
    %706 = vmatprep.mubr.f32.mxu0 0.0
    %707 = vmatmul.mubr.f32.gmra.mrb[0].mxu0 %v576
    %v708 = vpop.f32.mrb[0].mxu0
    %v709 = vadd.f32 0.0, %v708
    %v710 = vpop.f32.mrb[0].mxu0
    %v711 = vadd.f32 0.0, %v710
    %712 = vdwg.mxu0
    %713 = vmatprep.subr.mxu0 %v581
    %714 = vmatpush1.msra.mxu0 %v580
    %715 = vmatprep.subr.mxu0 %v585
    %716 = vmatpush1.msra.mxu0 %v584
    %717 = vmatprep.subr.mxu0 %v589
    %718 = vmatpush1.msra.mxu0 %v588
    %719 = vmatprep.subr.mxu0 %v593
    %720 = vmatpush1.msra.mxu0 %v592
    %721 = vmatprep.subr.mxu0 %v597
    %722 = vmatpush1.msra.mxu0 %v596
    %723 = vmatprep.subr.mxu0 %v601
    %724 = vmatpush1.msra.mxu0 %v600
    %725 = vmatprep.subr.mxu0 %v605
    %726 = vmatpush1.msra.mxu0 %v604
    %727 = vmatprep.subr.mxu0 %v609
    %728 = vmatpush1.msra.mxu0 %v608
    %729 = vmatprep.subr.mxu0 %v613
    %730 = vmatpush1.msra.mxu0 %v612
    %731 = vmatprep.subr.mxu0 %v617
    %732 = vmatpush1.msra.mxu0 %v616
    %733 = vmatprep.subr.mxu0 %v621
    %734 = vmatpush1.msra.mxu0 %v620
    %735 = vmatprep.subr.mxu0 %v625
    %736 = vmatpush1.msra.mxu0 %v624
    %737 = vmatprep.subr.mxu0 %v629
    %738 = vmatpush1.msra.mxu0 %v628
    %739 = vmatprep.subr.mxu0 %v633
    %740 = vmatpush1.msra.mxu0 %v632
    %741 = vmatprep.subr.mxu0 %v637
    %742 = vmatpush1.msra.mxu0 %v636
    %743 = vmatprep.subr.mxu0 %v641
    %744 = vmatpush1.msra.mxu0 %v640
    %745 = vmatprep.subr.mxu0 0.0
    %746 = vmatpush1.msra.mxu0 0.0
    %747 = vmatprep.subr.mxu0 0.0
    %748 = vmatpush1.msra.mxu0 0.0
    %749 = vmatprep.subr.mxu0 0.0
    %750 = vmatpush1.msra.mxu0 0.0
    %751 = vmatprep.subr.mxu0 0.0
    %752 = vmatpush1.msra.mxu0 0.0
    %753 = vmatprep.subr.mxu0 0.0
    %754 = vmatpush1.msra.mxu0 0.0
    %755 = vmatprep.subr.mxu0 0.0
    %756 = vmatpush1.msra.mxu0 0.0
    %757 = vmatprep.subr.mxu0 0.0
    %758 = vmatpush1.msra.mxu0 0.0
    %759 = vmatprep.subr.mxu0 0.0
    %760 = vmatpush1.msra.mxu0 0.0
    %761 = vmatprep.subr.mxu0 0.0
    %762 = vmatpush1.msra.mxu0 0.0
    %763 = vmatprep.subr.mxu0 0.0
    %764 = vmatpush1.msra.mxu0 0.0
    %765 = vmatprep.subr.mxu0 0.0
    %766 = vmatpush1.msra.mxu0 0.0
    %767 = vmatprep.subr.mxu0 0.0
    %768 = vmatpush1.msra.mxu0 0.0
    %769 = vmatprep.subr.mxu0 0.0
    %770 = vmatpush1.msra.mxu0 0.0
    %771 = vmatprep.subr.mxu0 0.0
    %772 = vmatpush1.msra.mxu0 0.0
    %773 = vmatprep.subr.mxu0 0.0
    %774 = vmatpush1.msra.mxu0 0.0
    %775 = vmatprep.subr.mxu0 0.0
    %776 = vmatpush1.msra.mxu0 0.0
    %777 = vmatprep.mubr.f32.mxu0 0.0
    %778 = vmatmul.mubr.f32.gmra.mrb[0].mxu0 %v576
    %v779 = vpop.f32.mrb[0].mxu0
    %v780 = vadd.f32 0.0, %v779
    %v781 = vpop.f32.mrb[0].mxu0
    %v782 = vadd.f32 0.0, %v781
    %783 = vdwg.mxu0
    %s784 = scalar_lea.vmem [#allocation5], 64
    %v785 = vld [vmem:[%s784] sm:$0xff]
    %v786 = vld [vmem:[%s784 + $0x8] sm:$0xff]
    %v787 = vld [vmem:[%s784 + $0x10] sm:$0xff]
    %v788 = vld [vmem:[%s784 + $0x18] sm:$0xff]
    %v789 = vadd.f32 %v785, %v709
    %v790 = vadd.f32 %v786, %v711
    %v791 = vadd.f32 %v787, %v780
    %v792 = vadd.f32 %v788, %v782
    %v793 = vmul.f32 %v789, 0.5
    %v794 = vtanh.pop %v793
    %v795 = vadd.f32 %v794, 1.0
    %v796 = vmul.f32 %v795, 0.5
    %v797 = vmul.f32 %v790, 0.5
    %v798 = vtanh.pop %v797
    %v799 = vadd.f32 %v798, 1.0
    %v800 = vmul.f32 %v799, 0.5
    %v801 = vtanh.pop %v791
    %v802 = vmul.f32 %v792, 0.5
    %v803 = vtanh.pop %v802
    %v804 = vadd.f32 %v803, 1.0
    %v805 = vmul.f32 %v804, 0.5
    %v806 = vmul.f32 %v800, %v577
    %v807 = vmul.f32 %v796, %v801
    %v808 = vadd.f32 %v806, %v807
    %v809 = vtanh.pop %v808
    %v810 = vmul.f32 %v805, %v809
    %s811 = scalar_lea.vmem [#allocation4], 16
    %812 = vst [vmem:[%s811] sm:$0xff] %v810
    %813 = vst [vmem:[#allocation2] sm:$0xff] %v810
    %814 = vst [vmem:[#allocation3] sm:$0xff] %v808
    %v815 = vld [vmem:[#allocation2] sm:$0xff]
    %v816 = vld [vmem:[#allocation3] sm:$0xff]
    %v817 = vld [vmem:[#allocation11] sm:$0xff]
    %v818 = vld [vmem:[#allocation11 + $0x8] sm:$0xff]
    %v819 = vld [vmem:[#allocation11 + $0x10] sm:$0xff]
    %v820 = vld [vmem:[#allocation11 + $0x18] sm:$0xff]
    %v821 = vld [vmem:[#allocation11 + $0x20] sm:$0xff]
    %v822 = vld [vmem:[#allocation11 + $0x28] sm:$0xff]
    %v823 = vld [vmem:[#allocation11 + $0x30] sm:$0xff]
    %v824 = vld [vmem:[#allocation11 + $0x38] sm:$0xff]
    %v825 = vld [vmem:[#allocation11 + $0x40] sm:$0xff]
    %v826 = vld [vmem:[#allocation11 + $0x48] sm:$0xff]
    %v827 = vld [vmem:[#allocation11 + $0x50] sm:$0xff]
    %v828 = vld [vmem:[#allocation11 + $0x58] sm:$0xff]
    %v829 = vld [vmem:[#allocation11 + $0x60] sm:$0xff]
    %v830 = vld [vmem:[#allocation11 + $0x68] sm:$0xff]
    %v831 = vld [vmem:[#allocation11 + $0x70] sm:$0xff]
    %v832 = vld [vmem:[#allocation11 + $0x78] sm:$0xff]
    %v833 = vld [vmem:[#allocation11 + $0x80] sm:$0xff]
    %v834 = vld [vmem:[#allocation11 + $0x88] sm:$0xff]
    %v835 = vld [vmem:[#allocation11 + $0x90] sm:$0xff]
    %v836 = vld [vmem:[#allocation11 + $0x98] sm:$0xff]
    %v837 = vld [vmem:[#allocation11 + $0xa0] sm:$0xff]
    %v838 = vld [vmem:[#allocation11 + $0xa8] sm:$0xff]
    %v839 = vld [vmem:[#allocation11 + $0xb0] sm:$0xff]
    %v840 = vld [vmem:[#allocation11 + $0xb8] sm:$0xff]
    %v841 = vld [vmem:[#allocation11 + $0xc0] sm:$0xff]
    %v842 = vld [vmem:[#allocation11 + $0xc8] sm:$0xff]
    %v843 = vld [vmem:[#allocation11 + $0xd0] sm:$0xff]
    %v844 = vld [vmem:[#allocation11 + $0xd8] sm:$0xff]
    %v845 = vld [vmem:[#allocation11 + $0xe0] sm:$0xff]
    %v846 = vld [vmem:[#allocation11 + $0xe8] sm:$0xff]
    %v847 = vld [vmem:[#allocation11 + $0xf0] sm:$0xff]
    %v848 = vld [vmem:[#allocation11 + $0xf8] sm:$0xff]
    %v849 = vld [vmem:[#allocation11 + $0x100] sm:$0xff]
    %v850 = vld [vmem:[#allocation11 + $0x108] sm:$0xff]
    %v851 = vld [vmem:[#allocation11 + $0x110] sm:$0xff]
    %v852 = vld [vmem:[#allocation11 + $0x118] sm:$0xff]
    %v853 = vld [vmem:[#allocation11 + $0x120] sm:$0xff]
    %v854 = vld [vmem:[#allocation11 + $0x128] sm:$0xff]
    %v855 = vld [vmem:[#allocation11 + $0x130] sm:$0xff]
    %v856 = vld [vmem:[#allocation11 + $0x138] sm:$0xff]
    %v857 = vld [vmem:[#allocation11 + $0x140] sm:$0xff]
    %v858 = vld [vmem:[#allocation11 + $0x148] sm:$0xff]
    %v859 = vld [vmem:[#allocation11 + $0x150] sm:$0xff]
    %v860 = vld [vmem:[#allocation11 + $0x158] sm:$0xff]
    %v861 = vld [vmem:[#allocation11 + $0x160] sm:$0xff]
    %v862 = vld [vmem:[#allocation11 + $0x168] sm:$0xff]
    %v863 = vld [vmem:[#allocation11 + $0x170] sm:$0xff]
    %v864 = vld [vmem:[#allocation11 + $0x178] sm:$0xff]
    %v865 = vld [vmem:[#allocation11 + $0x180] sm:$0xff]
    %v866 = vld [vmem:[#allocation11 + $0x188] sm:$0xff]
    %v867 = vld [vmem:[#allocation11 + $0x190] sm:$0xff]
    %v868 = vld [vmem:[#allocation11 + $0x198] sm:$0xff]
    %v869 = vld [vmem:[#allocation11 + $0x1a0] sm:$0xff]
    %v870 = vld [vmem:[#allocation11 + $0x1a8] sm:$0xff]
    %v871 = vld [vmem:[#allocation11 + $0x1b0] sm:$0xff]
    %v872 = vld [vmem:[#allocation11 + $0x1b8] sm:$0xff]
    %v873 = vld [vmem:[#allocation11 + $0x1c0] sm:$0xff]
    %v874 = vld [vmem:[#allocation11 + $0x1c8] sm:$0xff]
    %v875 = vld [vmem:[#allocation11 + $0x1d0] sm:$0xff]
    %v876 = vld [vmem:[#allocation11 + $0x1d8] sm:$0xff]
    %v877 = vld [vmem:[#allocation11 + $0x1e0] sm:$0xff]
    %v878 = vld [vmem:[#allocation11 + $0x1e8] sm:$0xff]
    %v879 = vld [vmem:[#allocation11 + $0x1f0] sm:$0xff]
    %v880 = vld [vmem:[#allocation11 + $0x1f8] sm:$0xff]
    %881 = vmatprep.subr.mxu0 %v818
    %882 = vmatpush1.msra.mxu0 %v817
    %883 = vmatprep.subr.mxu0 %v822
    %884 = vmatpush1.msra.mxu0 %v821
    %885 = vmatprep.subr.mxu0 %v826
    %886 = vmatpush1.msra.mxu0 %v825
    %887 = vmatprep.subr.mxu0 %v830
    %888 = vmatpush1.msra.mxu0 %v829
    %889 = vmatprep.subr.mxu0 %v834
    %890 = vmatpush1.msra.mxu0 %v833
    %891 = vmatprep.subr.mxu0 %v838
    %892 = vmatpush1.msra.mxu0 %v837
    %893 = vmatprep.subr.mxu0 %v842
    %894 = vmatpush1.msra.mxu0 %v841
    %895 = vmatprep.subr.mxu0 %v846
    %896 = vmatpush1.msra.mxu0 %v845
    %897 = vmatprep.subr.mxu0 %v850
    %898 = vmatpush1.msra.mxu0 %v849
    %899 = vmatprep.subr.mxu0 %v854
    %900 = vmatpush1.msra.mxu0 %v853
    %901 = vmatprep.subr.mxu0 %v858
    %902 = vmatpush1.msra.mxu0 %v857
    %903 = vmatprep.subr.mxu0 %v862
    %904 = vmatpush1.msra.mxu0 %v861
    %905 = vmatprep.subr.mxu0 %v866
    %906 = vmatpush1.msra.mxu0 %v865
    %907 = vmatprep.subr.mxu0 %v870
    %908 = vmatpush1.msra.mxu0 %v869
    %909 = vmatprep.subr.mxu0 %v874
    %910 = vmatpush1.msra.mxu0 %v873
    %911 = vmatprep.subr.mxu0 %v878
    %912 = vmatpush1.msra.mxu0 %v877
    %913 = vmatprep.subr.mxu0 0.0
    %914 = vmatpush1.msra.mxu0 0.0
    %915 = vmatprep.subr.mxu0 0.0
    %916 = vmatpush1.msra.mxu0 0.0
    %917 = vmatprep.subr.mxu0 0.0
    %918 = vmatpush1.msra.mxu0 0.0
    %919 = vmatprep.subr.mxu0 0.0
    %920 = vmatpush1.msra.mxu0 0.0
    %921 = vmatprep.subr.mxu0 0.0
    %922 = vmatpush1.msra.mxu0 0.0
    %923 = vmatprep.subr.mxu0 0.0
    %924 = vmatpush1.msra.mxu0 0.0
    %925 = vmatprep.subr.mxu0 0.0
    %926 = vmatpush1.msra.mxu0 0.0
    %927 = vmatprep.subr.mxu0 0.0
    %928 = vmatpush1.msra.mxu0 0.0
    %929 = vmatprep.subr.mxu0 0.0
    %930 = vmatpush1.msra.mxu0 0.0
    %931 = vmatprep.subr.mxu0 0.0
    %932 = vmatpush1.msra.mxu0 0.0
    %933 = vmatprep.subr.mxu0 0.0
    %934 = vmatpush1.msra.mxu0 0.0
    %935 = vmatprep.subr.mxu0 0.0
    %936 = vmatpush1.msra.mxu0 0.0
    %937 = vmatprep.subr.mxu0 0.0
    %938 = vmatpush1.msra.mxu0 0.0
    %939 = vmatprep.subr.mxu0 0.0
    %940 = vmatpush1.msra.mxu0 0.0
    %941 = vmatprep.subr.mxu0 0.0
    %942 = vmatpush1.msra.mxu0 0.0
    %943 = vmatprep.subr.mxu0 0.0
    %944 = vmatpush1.msra.mxu0 0.0
    %945 = vmatprep.mubr.f32.mxu0 0.0
    %946 = vmatmul.mubr.f32.gmra.mrb[0].mxu0 %v815
    %v947 = vpop.f32.mrb[0].mxu0
    %v948 = vadd.f32 0.0, %v947
    %v949 = vpop.f32.mrb[0].mxu0
    %v950 = vadd.f32 0.0, %v949
    %951 = vdwg.mxu0
    %952 = vmatprep.subr.mxu0 %v820
    %953 = vmatpush1.msra.mxu0 %v819
    %954 = vmatprep.subr.mxu0 %v824
    %955 = vmatpush1.msra.mxu0 %v823
    %956 = vmatprep.subr.mxu0 %v828
    %957 = vmatpush1.msra.mxu0 %v827
    %958 = vmatprep.subr.mxu0 %v832
    %959 = vmatpush1.msra.mxu0 %v831
    %960 = vmatprep.subr.mxu0 %v836
    %961 = vmatpush1.msra.mxu0 %v835
    %962 = vmatprep.subr.mxu0 %v840
    %963 = vmatpush1.msra.mxu0 %v839
    %964 = vmatprep.subr.mxu0 %v844
    %965 = vmatpush1.msra.mxu0 %v843
    %966 = vmatprep.subr.mxu0 %v848
    %967 = vmatpush1.msra.mxu0 %v847
    %968 = vmatprep.subr.mxu0 %v852
    %969 = vmatpush1.msra.mxu0 %v851
    %970 = vmatprep.subr.mxu0 %v856
    %971 = vmatpush1.msra.mxu0 %v855
    %972 = vmatprep.subr.mxu0 %v860
    %973 = vmatpush1.msra.mxu0 %v859
    %974 = vmatprep.subr.mxu0 %v864
    %975 = vmatpush1.msra.mxu0 %v863
    %976 = vmatprep.subr.mxu0 %v868
    %977 = vmatpush1.msra.mxu0 %v867
    %978 = vmatprep.subr.mxu0 %v872
    %979 = vmatpush1.msra.mxu0 %v871
    %980 = vmatprep.subr.mxu0 %v876
    %981 = vmatpush1.msra.mxu0 %v875
    %982 = vmatprep.subr.mxu0 %v880
    %983 = vmatpush1.msra.mxu0 %v879
    %984 = vmatprep.subr.mxu0 0.0
    %985 = vmatpush1.msra.mxu0 0.0
    %986 = vmatprep.subr.mxu0 0.0
    %987 = vmatpush1.msra.mxu0 0.0
    %988 = vmatprep.subr.mxu0 0.0
    %989 = vmatpush1.msra.mxu0 0.0
    %990 = vmatprep.subr.mxu0 0.0
    %991 = vmatpush1.msra.mxu0 0.0
    %992 = vmatprep.subr.mxu0 0.0
    %993 = vmatpush1.msra.mxu0 0.0
    %994 = vmatprep.subr.mxu0 0.0
    %995 = vmatpush1.msra.mxu0 0.0
    %996 = vmatprep.subr.mxu0 0.0
    %997 = vmatpush1.msra.mxu0 0.0
    %998 = vmatprep.subr.mxu0 0.0
    %999 = vmatpush1.msra.mxu0 0.0
    %1000 = vmatprep.subr.mxu0 0.0
    %1001 = vmatpush1.msra.mxu0 0.0
    %1002 = vmatprep.subr.mxu0 0.0
    %1003 = vmatpush1.msra.mxu0 0.0
    %1004 = vmatprep.subr.mxu0 0.0
    %1005 = vmatpush1.msra.mxu0 0.0
    %1006 = vmatprep.subr.mxu0 0.0
    %1007 = vmatpush1.msra.mxu0 0.0
    %1008 = vmatprep.subr.mxu0 0.0
    %1009 = vmatpush1.msra.mxu0 0.0
    %1010 = vmatprep.subr.mxu0 0.0
    %1011 = vmatpush1.msra.mxu0 0.0
    %1012 = vmatprep.subr.mxu0 0.0
    %1013 = vmatpush1.msra.mxu0 0.0
    %1014 = vmatprep.subr.mxu0 0.0
    %1015 = vmatpush1.msra.mxu0 0.0
    %1016 = vmatprep.mubr.f32.mxu0 0.0
    %1017 = vmatmul.mubr.f32.gmra.mrb[0].mxu0 %v815
    %v1018 = vpop.f32.mrb[0].mxu0
    %v1019 = vadd.f32 0.0, %v1018
    %v1020 = vpop.f32.mrb[0].mxu0
    %v1021 = vadd.f32 0.0, %v1020
    %1022 = vdwg.mxu0
    %s1023 = scalar_lea.vmem [#allocation5], 96
    %v1024 = vld [vmem:[%s1023] sm:$0xff]
    %v1025 = vld [vmem:[%s1023 + $0x8] sm:$0xff]
    %v1026 = vld [vmem:[%s1023 + $0x10] sm:$0xff]
    %v1027 = vld [vmem:[%s1023 + $0x18] sm:$0xff]
    %v1028 = vadd.f32 %v1024, %v948
    %v1029 = vadd.f32 %v1025, %v950
    %v1030 = vadd.f32 %v1026, %v1019
    %v1031 = vadd.f32 %v1027, %v1021
    %v1032 = vmul.f32 %v1028, 0.5
    %v1033 = vtanh.pop %v1032
    %v1034 = vadd.f32 %v1033, 1.0
    %v1035 = vmul.f32 %v1034, 0.5
    %v1036 = vmul.f32 %v1029, 0.5
    %v1037 = vtanh.pop %v1036
    %v1038 = vadd.f32 %v1037, 1.0
    %v1039 = vmul.f32 %v1038, 0.5
    %v1040 = vtanh.pop %v1030
    %v1041 = vmul.f32 %v1031, 0.5
    %v1042 = vtanh.pop %v1041
    %v1043 = vadd.f32 %v1042, 1.0
    %v1044 = vmul.f32 %v1043, 0.5
    %v1045 = vmul.f32 %v1039, %v816
    %v1046 = vmul.f32 %v1035, %v1040
    %v1047 = vadd.f32 %v1045, %v1046
    %v1048 = vtanh.pop %v1047
    %v1049 = vmul.f32 %v1044, %v1048
    %s1050 = scalar_lea.vmem [#allocation4], 24
    %1051 = vst [vmem:[%s1050] sm:$0xff] %v1049
    %1052 = vst [vmem:[#allocation2] sm:$0xff] %v1049
    %1053 = vst [vmem:[#allocation3] sm:$0xff] %v1047
    %v1054 = vld [vmem:[#allocation2] sm:$0xff]
    %v1055 = vld [vmem:[#allocation3] sm:$0xff]
    %v1056 = vld [vmem:[#allocation11] sm:$0xff]
    %v1057 = vld [vmem:[#allocation11 + $0x8] sm:$0xff]
    %v1058 = vld [vmem:[#allocation11 + $0x10] sm:$0xff]
    %v1059 = vld [vmem:[#allocation11 + $0x18] sm:$0xff]
    %v1060 = vld [vmem:[#allocation11 + $0x20] sm:$0xff]
    %v1061 = vld [vmem:[#allocation11 + $0x28] sm:$0xff]
    %v1062 = vld [vmem:[#allocation11 + $0x30] sm:$0xff]
    %v1063 = vld [vmem:[#allocation11 + $0x38] sm:$0xff]
    %v1064 = vld [vmem:[#allocation11 + $0x40] sm:$0xff]
    %v1065 = vld [vmem:[#allocation11 + $0x48] sm:$0xff]
    %v1066 = vld [vmem:[#allocation11 + $0x50] sm:$0xff]
    %v1067 = vld [vmem:[#allocation11 + $0x58] sm:$0xff]
    %v1068 = vld [vmem:[#allocation11 + $0x60] sm:$0xff]
    %v1069 = vld [vmem:[#allocation11 + $0x68] sm:$0xff]
    %v1070 = vld [vmem:[#allocation11 + $0x70] sm:$0xff]
    %v1071 = vld [vmem:[#allocation11 + $0x78] sm:$0xff]
    %v1072 = vld [vmem:[#allocation11 + $0x80] sm:$0xff]
    %v1073 = vld [vmem:[#allocation11 + $0x88] sm:$0xff]
    %v1074 = vld [vmem:[#allocation11 + $0x90] sm:$0xff]
    %v1075 = vld [vmem:[#allocation11 + $0x98] sm:$0xff]
    %v1076 = vld [vmem:[#allocation11 + $0xa0] sm:$0xff]
    %v1077 = vld [vmem:[#allocation11 + $0xa8] sm:$0xff]
    %v1078 = vld [vmem:[#allocation11 + $0xb0] sm:$0xff]
    %v1079 = vld [vmem:[#allocation11 + $0xb8] sm:$0xff]
    %v1080 = vld [vmem:[#allocation11 + $0xc0] sm:$0xff]
    %v1081 = vld [vmem:[#allocation11 + $0xc8] sm:$0xff]
    %v1082 = vld [vmem:[#allocation11 + $0xd0] sm:$0xff]
    %v1083 = vld [vmem:[#allocation11 + $0xd8] sm:$0xff]
    %v1084 = vld [vmem:[#allocation11 + $0xe0] sm:$0xff]
    %v1085 = vld [vmem:[#allocation11 + $0xe8] sm:$0xff]
    %v1086 = vld [vmem:[#allocation11 + $0xf0] sm:$0xff]
    %v1087 = vld [vmem:[#allocation11 + $0xf8] sm:$0xff]
    %v1088 = vld [vmem:[#allocation11 + $0x100] sm:$0xff]
    %v1089 = vld [vmem:[#allocation11 + $0x108] sm:$0xff]
    %v1090 = vld [vmem:[#allocation11 + $0x110] sm:$0xff]
    %v1091 = vld [vmem:[#allocation11 + $0x118] sm:$0xff]
    %v1092 = vld [vmem:[#allocation11 + $0x120] sm:$0xff]
    %v1093 = vld [vmem:[#allocation11 + $0x128] sm:$0xff]
    %v1094 = vld [vmem:[#allocation11 + $0x130] sm:$0xff]
    %v1095 = vld [vmem:[#allocation11 + $0x138] sm:$0xff]
    %v1096 = vld [vmem:[#allocation11 + $0x140] sm:$0xff]
    %v1097 = vld [vmem:[#allocation11 + $0x148] sm:$0xff]
    %v1098 = vld [vmem:[#allocation11 + $0x150] sm:$0xff]
    %v1099 = vld [vmem:[#allocation11 + $0x158] sm:$0xff]
    %v1100 = vld [vmem:[#allocation11 + $0x160] sm:$0xff]
    %v1101 = vld [vmem:[#allocation11 + $0x168] sm:$0xff]
    %v1102 = vld [vmem:[#allocation11 + $0x170] sm:$0xff]
    %v1103 = vld [vmem:[#allocation11 + $0x178] sm:$0xff]
    %v1104 = vld [vmem:[#allocation11 + $0x180] sm:$0xff]
    %v1105 = vld [vmem:[#allocation11 + $0x188] sm:$0xff]
    %v1106 = vld [vmem:[#allocation11 + $0x190] sm:$0xff]
    %v1107 = vld [vmem:[#allocation11 + $0x198] sm:$0xff]
    %v1108 = vld [vmem:[#allocation11 + $0x1a0] sm:$0xff]
    %v1109 = vld [vmem:[#allocation11 + $0x1a8] sm:$0xff]
    %v1110 = vld [vmem:[#allocation11 + $0x1b0] sm:$0xff]
    %v1111 = vld [vmem:[#allocation11 + $0x1b8] sm:$0xff]
    %v1112 = vld [vmem:[#allocation11 + $0x1c0] sm:$0xff]
    %v1113 = vld [vmem:[#allocation11 + $0x1c8] sm:$0xff]
    %v1114 = vld [vmem:[#allocation11 + $0x1d0] sm:$0xff]
    %v1115 = vld [vmem:[#allocation11 + $0x1d8] sm:$0xff]
    %v1116 = vld [vmem:[#allocation11 + $0x1e0] sm:$0xff]
    %v1117 = vld [vmem:[#allocation11 + $0x1e8] sm:$0xff]
    %v1118 = vld [vmem:[#allocation11 + $0x1f0] sm:$0xff]
    %v1119 = vld [vmem:[#allocation11 + $0x1f8] sm:$0xff]
    %1120 = vmatprep.subr.mxu0 %v1057
    %1121 = vmatpush1.msra.mxu0 %v1056
    %1122 = vmatprep.subr.mxu0 %v1061
    %1123 = vmatpush1.msra.mxu0 %v1060
    %1124 = vmatprep.subr.mxu0 %v1065
    %1125 = vmatpush1.msra.mxu0 %v1064
    %1126 = vmatprep.subr.mxu0 %v1069
    %1127 = vmatpush1.msra.mxu0 %v1068
    %1128 = vmatprep.subr.mxu0 %v1073
    %1129 = vmatpush1.msra.mxu0 %v1072
    %1130 = vmatprep.subr.mxu0 %v1077
    %1131 = vmatpush1.msra.mxu0 %v1076
    %1132 = vmatprep.subr.mxu0 %v1081
    %1133 = vmatpush1.msra.mxu0 %v1080
    %1134 = vmatprep.subr.mxu0 %v1085
    %1135 = vmatpush1.msra.mxu0 %v1084
    %1136 = vmatprep.subr.mxu0 %v1089
    %1137 = vmatpush1.msra.mxu0 %v1088
    %1138 = vmatprep.subr.mxu0 %v1093
    %1139 = vmatpush1.msra.mxu0 %v1092
    %1140 = vmatprep.subr.mxu0 %v1097
    %1141 = vmatpush1.msra.mxu0 %v1096
    %1142 = vmatprep.subr.mxu0 %v1101
    %1143 = vmatpush1.msra.mxu0 %v1100
    %1144 = vmatprep.subr.mxu0 %v1105
    %1145 = vmatpush1.msra.mxu0 %v1104
    %1146 = vmatprep.subr.mxu0 %v1109
    %1147 = vmatpush1.msra.mxu0 %v1108
    %1148 = vmatprep.subr.mxu0 %v1113
    %1149 = vmatpush1.msra.mxu0 %v1112
    %1150 = vmatprep.subr.mxu0 %v1117
    %1151 = vmatpush1.msra.mxu0 %v1116
    %1152 = vmatprep.subr.mxu0 0.0
    %1153 = vmatpush1.msra.mxu0 0.0
    %1154 = vmatprep.subr.mxu0 0.0
    %1155 = vmatpush1.msra.mxu0 0.0
    %1156 = vmatprep.subr.mxu0 0.0
    %1157 = vmatpush1.msra.mxu0 0.0
    %1158 = vmatprep.subr.mxu0 0.0
    %1159 = vmatpush1.msra.mxu0 0.0
    %1160 = vmatprep.subr.mxu0 0.0
    %1161 = vmatpush1.msra.mxu0 0.0
    %1162 = vmatprep.subr.mxu0 0.0
    %1163 = vmatpush1.msra.mxu0 0.0
    %1164 = vmatprep.subr.mxu0 0.0
    %1165 = vmatpush1.msra.mxu0 0.0
    %1166 = vmatprep.subr.mxu0 0.0
    %1167 = vmatpush1.msra.mxu0 0.0
    %1168 = vmatprep.subr.mxu0 0.0
    %1169 = vmatpush1.msra.mxu0 0.0
    %1170 = vmatprep.subr.mxu0 0.0
    %1171 = vmatpush1.msra.mxu0 0.0
    %1172 = vmatprep.subr.mxu0 0.0
    %1173 = vmatpush1.msra.mxu0 0.0
    %1174 = vmatprep.subr.mxu0 0.0
    %1175 = vmatpush1.msra.mxu0 0.0
    %1176 = vmatprep.subr.mxu0 0.0
    %1177 = vmatpush1.msra.mxu0 0.0
    %1178 = vmatprep.subr.mxu0 0.0
    %1179 = vmatpush1.msra.mxu0 0.0
    %1180 = vmatprep.subr.mxu0 0.0
    %1181 = vmatpush1.msra.mxu0 0.0
    %1182 = vmatprep.subr.mxu0 0.0
    %1183 = vmatpush1.msra.mxu0 0.0
    %1184 = vmatprep.mubr.f32.mxu0 0.0
    %1185 = vmatmul.mubr.f32.gmra.mrb[0].mxu0 %v1054
    %v1186 = vpop.f32.mrb[0].mxu0
    %v1187 = vadd.f32 0.0, %v1186
    %v1188 = vpop.f32.mrb[0].mxu0
    %v1189 = vadd.f32 0.0, %v1188
    %1190 = vdwg.mxu0
    %1191 = vmatprep.subr.mxu0 %v1059
    %1192 = vmatpush1.msra.mxu0 %v1058
    %1193 = vmatprep.subr.mxu0 %v1063
    %1194 = vmatpush1.msra.mxu0 %v1062
    %1195 = vmatprep.subr.mxu0 %v1067
    %1196 = vmatpush1.msra.mxu0 %v1066
    %1197 = vmatprep.subr.mxu0 %v1071
    %1198 = vmatpush1.msra.mxu0 %v1070
    %1199 = vmatprep.subr.mxu0 %v1075
    %1200 = vmatpush1.msra.mxu0 %v1074
    %1201 = vmatprep.subr.mxu0 %v1079
    %1202 = vmatpush1.msra.mxu0 %v1078
    %1203 = vmatprep.subr.mxu0 %v1083
    %1204 = vmatpush1.msra.mxu0 %v1082
    %1205 = vmatprep.subr.mxu0 %v1087
    %1206 = vmatpush1.msra.mxu0 %v1086
    %1207 = vmatprep.subr.mxu0 %v1091
    %1208 = vmatpush1.msra.mxu0 %v1090
    %1209 = vmatprep.subr.mxu0 %v1095
    %1210 = vmatpush1.msra.mxu0 %v1094
    %1211 = vmatprep.subr.mxu0 %v1099
    %1212 = vmatpush1.msra.mxu0 %v1098
    %1213 = vmatprep.subr.mxu0 %v1103
    %1214 = vmatpush1.msra.mxu0 %v1102
    %1215 = vmatprep.subr.mxu0 %v1107
    %1216 = vmatpush1.msra.mxu0 %v1106
    %1217 = vmatprep.subr.mxu0 %v1111
    %1218 = vmatpush1.msra.mxu0 %v1110
    %1219 = vmatprep.subr.mxu0 %v1115
    %1220 = vmatpush1.msra.mxu0 %v1114
    %1221 = vmatprep.subr.mxu0 %v1119
    %1222 = vmatpush1.msra.mxu0 %v1118
    %1223 = vmatprep.subr.mxu0 0.0
    %1224 = vmatpush1.msra.mxu0 0.0
    %1225 = vmatprep.subr.mxu0 0.0
    %1226 = vmatpush1.msra.mxu0 0.0
    %1227 = vmatprep.subr.mxu0 0.0
    %1228 = vmatpush1.msra.mxu0 0.0
    %1229 = vmatprep.subr.mxu0 0.0
    %1230 = vmatpush1.msra.mxu0 0.0
    %1231 = vmatprep.subr.mxu0 0.0
    %1232 = vmatpush1.msra.mxu0 0.0
    %1233 = vmatprep.subr.mxu0 0.0
    %1234 = vmatpush1.msra.mxu0 0.0
    %1235 = vmatprep.subr.mxu0 0.0
    %1236 = vmatpush1.msra.mxu0 0.0
    %1237 = vmatprep.subr.mxu0 0.0
    %1238 = vmatpush1.msra.mxu0 0.0
    %1239 = vmatprep.subr.mxu0 0.0
    %1240 = vmatpush1.msra.mxu0 0.0
    %1241 = vmatprep.subr.mxu0 0.0
    %1242 = vmatpush1.msra.mxu0 0.0
    %1243 = vmatprep.subr.mxu0 0.0
    %1244 = vmatpush1.msra.mxu0 0.0
    %1245 = vmatprep.subr.mxu0 0.0
    %1246 = vmatpush1.msra.mxu0 0.0
    %1247 = vmatprep.subr.mxu0 0.0
    %1248 = vmatpush1.msra.mxu0 0.0
    %1249 = vmatprep.subr.mxu0 0.0
    %1250 = vmatpush1.msra.mxu0 0.0
    %1251 = vmatprep.subr.mxu0 0.0
    %1252 = vmatpush1.msra.mxu0 0.0
    %1253 = vmatprep.subr.mxu0 0.0
    %1254 = vmatpush1.msra.mxu0 0.0
    %1255 = vmatprep.mubr.f32.mxu0 0.0
    %1256 = vmatmul.mubr.f32.gmra.mrb[0].mxu0 %v1054
    %v1257 = vpop.f32.mrb[0].mxu0
    %v1258 = vadd.f32 0.0, %v1257
    %v1259 = vpop.f32.mrb[0].mxu0
    %v1260 = vadd.f32 0.0, %v1259
    %1261 = vdwg.mxu0
    %s1262 = scalar_lea.vmem [#allocation5], 128
    %v1263 = vld [vmem:[%s1262] sm:$0xff]
    %v1264 = vld [vmem:[%s1262 + $0x8] sm:$0xff]
    %v1265 = vld [vmem:[%s1262 + $0x10] sm:$0xff]
    %v1266 = vld [vmem:[%s1262 + $0x18] sm:$0xff]
    %v1267 = vadd.f32 %v1263, %v1187
    %v1268 = vadd.f32 %v1264, %v1189
    %v1269 = vadd.f32 %v1265, %v1258
    %v1270 = vadd.f32 %v1266, %v1260
    %v1271 = vmul.f32 %v1267, 0.5
    %v1272 = vtanh.pop %v1271
    %v1273 = vadd.f32 %v1272, 1.0
    %v1274 = vmul.f32 %v1273, 0.5
    %v1275 = vmul.f32 %v1268, 0.5
    %v1276 = vtanh.pop %v1275
    %v1277 = vadd.f32 %v1276, 1.0
    %v1278 = vmul.f32 %v1277, 0.5
    %v1279 = vtanh.pop %v1269
    %v1280 = vmul.f32 %v1270, 0.5
    %v1281 = vtanh.pop %v1280
    %v1282 = vadd.f32 %v1281, 1.0
    %v1283 = vmul.f32 %v1282, 0.5
    %v1284 = vmul.f32 %v1278, %v1055
    %v1285 = vmul.f32 %v1274, %v1279
    %v1286 = vadd.f32 %v1284, %v1285
    %v1287 = vtanh.pop %v1286
    %v1288 = vmul.f32 %v1283, %v1287
    %s1289 = scalar_lea.vmem [#allocation4], 32
    %1290 = vst [vmem:[%s1289] sm:$0xff] %v1288
    %1291 = vst [vmem:[#allocation2] sm:$0xff] %v1288
    %1292 = vst [vmem:[#allocation3] sm:$0xff] %v1286
    %v1293 = vld [vmem:[#allocation2] sm:$0xff]
    %v1294 = vld [vmem:[#allocation3] sm:$0xff]
    %v1295 = vld [vmem:[#allocation11] sm:$0xff]
    %v1296 = vld [vmem:[#allocation11 + $0x8] sm:$0xff]
    %v1297 = vld [vmem:[#allocation11 + $0x10] sm:$0xff]
    %v1298 = vld [vmem:[#allocation11 + $0x18] sm:$0xff]
    %v1299 = vld [vmem:[#allocation11 + $0x20] sm:$0xff]
    %v1300 = vld [vmem:[#allocation11 + $0x28] sm:$0xff]
    %v1301 = vld [vmem:[#allocation11 + $0x30] sm:$0xff]
    %v1302 = vld [vmem:[#allocation11 + $0x38] sm:$0xff]
    %v1303 = vld [vmem:[#allocation11 + $0x40] sm:$0xff]
    %v1304 = vld [vmem:[#allocation11 + $0x48] sm:$0xff]
    %v1305 = vld [vmem:[#allocation11 + $0x50] sm:$0xff]
    %v1306 = vld [vmem:[#allocation11 + $0x58] sm:$0xff]
    %v1307 = vld [vmem:[#allocation11 + $0x60] sm:$0xff]
    %v1308 = vld [vmem:[#allocation11 + $0x68] sm:$0xff]
    %v1309 = vld [vmem:[#allocation11 + $0x70] sm:$0xff]
    %v1310 = vld [vmem:[#allocation11 + $0x78] sm:$0xff]
    %v1311 = vld [vmem:[#allocation11 + $0x80] sm:$0xff]
    %v1312 = vld [vmem:[#allocation11 + $0x88] sm:$0xff]
    %v1313 = vld [vmem:[#allocation11 + $0x90] sm:$0xff]
    %v1314 = vld [vmem:[#allocation11 + $0x98] sm:$0xff]
    %v1315 = vld [vmem:[#allocation11 + $0xa0] sm:$0xff]
    %v1316 = vld [vmem:[#allocation11 + $0xa8] sm:$0xff]
    %v1317 = vld [vmem:[#allocation11 + $0xb0] sm:$0xff]
    %v1318 = vld [vmem:[#allocation11 + $0xb8] sm:$0xff]
    %v1319 = vld [vmem:[#allocation11 + $0xc0] sm:$0xff]
    %v1320 = vld [vmem:[#allocation11 + $0xc8] sm:$0xff]
    %v1321 = vld [vmem:[#allocation11 + $0xd0] sm:$0xff]
    %v1322 = vld [vmem:[#allocation11 + $0xd8] sm:$0xff]
    %v1323 = vld [vmem:[#allocation11 + $0xe0] sm:$0xff]
    %v1324 = vld [vmem:[#allocation11 + $0xe8] sm:$0xff]
    %v1325 = vld [vmem:[#allocation11 + $0xf0] sm:$0xff]
    %v1326 = vld [vmem:[#allocation11 + $0xf8] sm:$0xff]
    %v1327 = vld [vmem:[#allocation11 + $0x100] sm:$0xff]
    %v1328 = vld [vmem:[#allocation11 + $0x108] sm:$0xff]
    %v1329 = vld [vmem:[#allocation11 + $0x110] sm:$0xff]
    %v1330 = vld [vmem:[#allocation11 + $0x118] sm:$0xff]
    %v1331 = vld [vmem:[#allocation11 + $0x120] sm:$0xff]
    %v1332 = vld [vmem:[#allocation11 + $0x128] sm:$0xff]
    %v1333 = vld [vmem:[#allocation11 + $0x130] sm:$0xff]
    %v1334 = vld [vmem:[#allocation11 + $0x138] sm:$0xff]
    %v1335 = vld [vmem:[#allocation11 + $0x140] sm:$0xff]
    %v1336 = vld [vmem:[#allocation11 + $0x148] sm:$0xff]
    %v1337 = vld [vmem:[#allocation11 + $0x150] sm:$0xff]
    %v1338 = vld [vmem:[#allocation11 + $0x158] sm:$0xff]
    %v1339 = vld [vmem:[#allocation11 + $0x160] sm:$0xff]
    %v1340 = vld [vmem:[#allocation11 + $0x168] sm:$0xff]
    %v1341 = vld [vmem:[#allocation11 + $0x170] sm:$0xff]
    %v1342 = vld [vmem:[#allocation11 + $0x178] sm:$0xff]
    %v1343 = vld [vmem:[#allocation11 + $0x180] sm:$0xff]
    %v1344 = vld [vmem:[#allocation11 + $0x188] sm:$0xff]
    %v1345 = vld [vmem:[#allocation11 + $0x190] sm:$0xff]
    %v1346 = vld [vmem:[#allocation11 + $0x198] sm:$0xff]
    %v1347 = vld [vmem:[#allocation11 + $0x1a0] sm:$0xff]
    %v1348 = vld [vmem:[#allocation11 + $0x1a8] sm:$0xff]
    %v1349 = vld [vmem:[#allocation11 + $0x1b0] sm:$0xff]
    %v1350 = vld [vmem:[#allocation11 + $0x1b8] sm:$0xff]
    %v1351 = vld [vmem:[#allocation11 + $0x1c0] sm:$0xff]
    %v1352 = vld [vmem:[#allocation11 + $0x1c8] sm:$0xff]
    %v1353 = vld [vmem:[#allocation11 + $0x1d0] sm:$0xff]
    %v1354 = vld [vmem:[#allocation11 + $0x1d8] sm:$0xff]
    %v1355 = vld [vmem:[#allocation11 + $0x1e0] sm:$0xff]
    %v1356 = vld [vmem:[#allocation11 + $0x1e8] sm:$0xff]
    %v1357 = vld [vmem:[#allocation11 + $0x1f0] sm:$0xff]
    %v1358 = vld [vmem:[#allocation11 + $0x1f8] sm:$0xff]
    %1359 = vmatprep.subr.mxu0 %v1296
    %1360 = vmatpush1.msra.mxu0 %v1295
    %1361 = vmatprep.subr.mxu0 %v1300
    %1362 = vmatpush1.msra.mxu0 %v1299
    %1363 = vmatprep.subr.mxu0 %v1304
    %1364 = vmatpush1.msra.mxu0 %v1303
    %1365 = vmatprep.subr.mxu0 %v1308
    %1366 = vmatpush1.msra.mxu0 %v1307
    %1367 = vmatprep.subr.mxu0 %v1312
    %1368 = vmatpush1.msra.mxu0 %v1311
    %1369 = vmatprep.subr.mxu0 %v1316
    %1370 = vmatpush1.msra.mxu0 %v1315
    %1371 = vmatprep.subr.mxu0 %v1320
    %1372 = vmatpush1.msra.mxu0 %v1319
    %1373 = vmatprep.subr.mxu0 %v1324
    %1374 = vmatpush1.msra.mxu0 %v1323
    %1375 = vmatprep.subr.mxu0 %v1328
    %1376 = vmatpush1.msra.mxu0 %v1327
    %1377 = vmatprep.subr.mxu0 %v1332
    %1378 = vmatpush1.msra.mxu0 %v1331
    %1379 = vmatprep.subr.mxu0 %v1336
    %1380 = vmatpush1.msra.mxu0 %v1335
    %1381 = vmatprep.subr.mxu0 %v1340
    %1382 = vmatpush1.msra.mxu0 %v1339
    %1383 = vmatprep.subr.mxu0 %v1344
    %1384 = vmatpush1.msra.mxu0 %v1343
    %1385 = vmatprep.subr.mxu0 %v1348
    %1386 = vmatpush1.msra.mxu0 %v1347
    %1387 = vmatprep.subr.mxu0 %v1352
    %1388 = vmatpush1.msra.mxu0 %v1351
    %1389 = vmatprep.subr.mxu0 %v1356
    %1390 = vmatpush1.msra.mxu0 %v1355
    %1391 = vmatprep.subr.mxu0 0.0
    %1392 = vmatpush1.msra.mxu0 0.0
    %1393 = vmatprep.subr.mxu0 0.0
    %1394 = vmatpush1.msra.mxu0 0.0
    %1395 = vmatprep.subr.mxu0 0.0
    %1396 = vmatpush1.msra.mxu0 0.0
    %1397 = vmatprep.subr.mxu0 0.0
    %1398 = vmatpush1.msra.mxu0 0.0
    %1399 = vmatprep.subr.mxu0 0.0
    %1400 = vmatpush1.msra.mxu0 0.0
    %1401 = vmatprep.subr.mxu0 0.0
    %1402 = vmatpush1.msra.mxu0 0.0
    %1403 = vmatprep.subr.mxu0 0.0
    %1404 = vmatpush1.msra.mxu0 0.0
    %1405 = vmatprep.subr.mxu0 0.0
    %1406 = vmatpush1.msra.mxu0 0.0
    %1407 = vmatprep.subr.mxu0 0.0
    %1408 = vmatpush1.msra.mxu0 0.0
    %1409 = vmatprep.subr.mxu0 0.0
    %1410 = vmatpush1.msra.mxu0 0.0
    %1411 = vmatprep.subr.mxu0 0.0
    %1412 = vmatpush1.msra.mxu0 0.0
    %1413 = vmatprep.subr.mxu0 0.0
    %1414 = vmatpush1.msra.mxu0 0.0
    %1415 = vmatprep.subr.mxu0 0.0
    %1416 = vmatpush1.msra.mxu0 0.0
    %1417 = vmatprep.subr.mxu0 0.0
    %1418 = vmatpush1.msra.mxu0 0.0
    %1419 = vmatprep.subr.mxu0 0.0
    %1420 = vmatpush1.msra.mxu0 0.0
    %1421 = vmatprep.subr.mxu0 0.0
    %1422 = vmatpush1.msra.mxu0 0.0
    %1423 = vmatprep.mubr.f32.mxu0 0.0
    %1424 = vmatmul.mubr.f32.gmra.mrb[0].mxu0 %v1293
    %v1425 = vpop.f32.mrb[0].mxu0
    %v1426 = vadd.f32 0.0, %v1425
    %v1427 = vpop.f32.mrb[0].mxu0
    %v1428 = vadd.f32 0.0, %v1427
    %1429 = vdwg.mxu0
    %1430 = vmatprep.subr.mxu0 %v1298
    %1431 = vmatpush1.msra.mxu0 %v1297
    %1432 = vmatprep.subr.mxu0 %v1302
    %1433 = vmatpush1.msra.mxu0 %v1301
    %1434 = vmatprep.subr.mxu0 %v1306
    %1435 = vmatpush1.msra.mxu0 %v1305
    %1436 = vmatprep.subr.mxu0 %v1310
    %1437 = vmatpush1.msra.mxu0 %v1309
    %1438 = vmatprep.subr.mxu0 %v1314
    %1439 = vmatpush1.msra.mxu0 %v1313
    %1440 = vmatprep.subr.mxu0 %v1318
    %1441 = vmatpush1.msra.mxu0 %v1317
    %1442 = vmatprep.subr.mxu0 %v1322
    %1443 = vmatpush1.msra.mxu0 %v1321
    %1444 = vmatprep.subr.mxu0 %v1326
    %1445 = vmatpush1.msra.mxu0 %v1325
    %1446 = vmatprep.subr.mxu0 %v1330
    %1447 = vmatpush1.msra.mxu0 %v1329
    %1448 = vmatprep.subr.mxu0 %v1334
    %1449 = vmatpush1.msra.mxu0 %v1333
    %1450 = vmatprep.subr.mxu0 %v1338
    %1451 = vmatpush1.msra.mxu0 %v1337
    %1452 = vmatprep.subr.mxu0 %v1342
    %1453 = vmatpush1.msra.mxu0 %v1341
    %1454 = vmatprep.subr.mxu0 %v1346
    %1455 = vmatpush1.msra.mxu0 %v1345
    %1456 = vmatprep.subr.mxu0 %v1350
    %1457 = vmatpush1.msra.mxu0 %v1349
    %1458 = vmatprep.subr.mxu0 %v1354
    %1459 = vmatpush1.msra.mxu0 %v1353
    %1460 = vmatprep.subr.mxu0 %v1358
    %1461 = vmatpush1.msra.mxu0 %v1357
    %1462 = vmatprep.subr.mxu0 0.0
    %1463 = vmatpush1.msra.mxu0 0.0
    %1464 = vmatprep.subr.mxu0 0.0
    %1465 = vmatpush1.msra.mxu0 0.0
    %1466 = vmatprep.subr.mxu0 0.0
    %1467 = vmatpush1.msra.mxu0 0.0
    %1468 = vmatprep.subr.mxu0 0.0
    %1469 = vmatpush1.msra.mxu0 0.0
    %1470 = vmatprep.subr.mxu0 0.0
    %1471 = vmatpush1.msra.mxu0 0.0
    %1472 = vmatprep.subr.mxu0 0.0
    %1473 = vmatpush1.msra.mxu0 0.0
    %1474 = vmatprep.subr.mxu0 0.0
    %1475 = vmatpush1.msra.mxu0 0.0
    %1476 = vmatprep.subr.mxu0 0.0
    %1477 = vmatpush1.msra.mxu0 0.0
    %1478 = vmatprep.subr.mxu0 0.0
    %1479 = vmatpush1.msra.mxu0 0.0
    %1480 = vmatprep.subr.mxu0 0.0
    %1481 = vmatpush1.msra.mxu0 0.0
    %1482 = vmatprep.subr.mxu0 0.0
    %1483 = vmatpush1.msra.mxu0 0.0
    %1484 = vmatprep.subr.mxu0 0.0
    %1485 = vmatpush1.msra.mxu0 0.0
    %1486 = vmatprep.subr.mxu0 0.0
    %1487 = vmatpush1.msra.mxu0 0.0
    %1488 = vmatprep.subr.mxu0 0.0
    %1489 = vmatpush1.msra.mxu0 0.0
    %1490 = vmatprep.subr.mxu0 0.0
    %1491 = vmatpush1.msra.mxu0 0.0
    %1492 = vmatprep.subr.mxu0 0.0
    %1493 = vmatpush1.msra.mxu0 0.0
    %1494 = vmatprep.mubr.f32.mxu0 0.0
    %1495 = vmatmul.mubr.f32.gmra.mrb[0].mxu0 %v1293
    %v1496 = vpop.f32.mrb[0].mxu0
    %v1497 = vadd.f32 0.0, %v1496
    %v1498 = vpop.f32.mrb[0].mxu0
    %v1499 = vadd.f32 0.0, %v1498
    %1500 = vdwg.mxu0
    %s1501 = scalar_lea.vmem [#allocation5], 160
    %v1502 = vld [vmem:[%s1501] sm:$0xff]
    %v1503 = vld [vmem:[%s1501 + $0x8] sm:$0xff]
    %v1504 = vld [vmem:[%s1501 + $0x10] sm:$0xff]
    %v1505 = vld [vmem:[%s1501 + $0x18] sm:$0xff]
    %v1506 = vadd.f32 %v1502, %v1426
    %v1507 = vadd.f32 %v1503, %v1428
    %v1508 = vadd.f32 %v1504, %v1497
    %v1509 = vadd.f32 %v1505, %v1499
    %v1510 = vmul.f32 %v1506, 0.5
    %v1511 = vtanh.pop %v1510
    %v1512 = vadd.f32 %v1511, 1.0
    %v1513 = vmul.f32 %v1512, 0.5
    %v1514 = vmul.f32 %v1507, 0.5
    %v1515 = vtanh.pop %v1514
    %v1516 = vadd.f32 %v1515, 1.0
    %v1517 = vmul.f32 %v1516, 0.5
    %v1518 = vtanh.pop %v1508
    %v1519 = vmul.f32 %v1509, 0.5
    %v1520 = vtanh.pop %v1519
    %v1521 = vadd.f32 %v1520, 1.0
    %v1522 = vmul.f32 %v1521, 0.5
    %v1523 = vmul.f32 %v1517, %v1294
    %v1524 = vmul.f32 %v1513, %v1518
    %v1525 = vadd.f32 %v1523, %v1524
    %v1526 = vtanh.pop %v1525
    %v1527 = vmul.f32 %v1522, %v1526
    %s1528 = scalar_lea.vmem [#allocation4], 40
    %1529 = vst [vmem:[%s1528] sm:$0xff] %v1527
    %1530 = vst [vmem:[#allocation2] sm:$0xff] %v1527
    %1531 = vst [vmem:[#allocation3] sm:$0xff] %v1525
    %v1532 = vld [vmem:[#allocation2] sm:$0xff]
    %v1533 = vld [vmem:[#allocation3] sm:$0xff]
    %v1534 = vld [vmem:[#allocation11] sm:$0xff]
    %v1535 = vld [vmem:[#allocation11 + $0x8] sm:$0xff]
    %v1536 = vld [vmem:[#allocation11 + $0x10] sm:$0xff]
    %v1537 = vld [vmem:[#allocation11 + $0x18] sm:$0xff]
    %v1538 = vld [vmem:[#allocation11 + $0x20] sm:$0xff]
    %v1539 = vld [vmem:[#allocation11 + $0x28] sm:$0xff]
    %v1540 = vld [vmem:[#allocation11 + $0x30] sm:$0xff]
    %v1541 = vld [vmem:[#allocation11 + $0x38] sm:$0xff]
    %v1542 = vld [vmem:[#allocation11 + $0x40] sm:$0xff]
    %v1543 = vld [vmem:[#allocation11 + $0x48] sm:$0xff]
    %v1544 = vld [vmem:[#allocation11 + $0x50] sm:$0xff]
    %v1545 = vld [vmem:[#allocation11 + $0x58] sm:$0xff]
    %v1546 = vld [vmem:[#allocation11 + $0x60] sm:$0xff]
    %v1547 = vld [vmem:[#allocation11 + $0x68] sm:$0xff]
    %v1548 = vld [vmem:[#allocation11 + $0x70] sm:$0xff]
    %v1549 = vld [vmem:[#allocation11 + $0x78] sm:$0xff]
    %v1550 = vld [vmem:[#allocation11 + $0x80] sm:$0xff]
    %v1551 = vld [vmem:[#allocation11 + $0x88] sm:$0xff]
    %v1552 = vld [vmem:[#allocation11 + $0x90] sm:$0xff]
    %v1553 = vld [vmem:[#allocation11 + $0x98] sm:$0xff]
    %v1554 = vld [vmem:[#allocation11 + $0xa0] sm:$0xff]
    %v1555 = vld [vmem:[#allocation11 + $0xa8] sm:$0xff]
    %v1556 = vld [vmem:[#allocation11 + $0xb0] sm:$0xff]
    %v1557 = vld [vmem:[#allocation11 + $0xb8] sm:$0xff]
    %v1558 = vld [vmem:[#allocation11 + $0xc0] sm:$0xff]
    %v1559 = vld [vmem:[#allocation11 + $0xc8] sm:$0xff]
    %v1560 = vld [vmem:[#allocation11 + $0xd0] sm:$0xff]
    %v1561 = vld [vmem:[#allocation11 + $0xd8] sm:$0xff]
    %v1562 = vld [vmem:[#allocation11 + $0xe0] sm:$0xff]
    %v1563 = vld [vmem:[#allocation11 + $0xe8] sm:$0xff]
    %v1564 = vld [vmem:[#allocation11 + $0xf0] sm:$0xff]
    %v1565 = vld [vmem:[#allocation11 + $0xf8] sm:$0xff]
    %v1566 = vld [vmem:[#allocation11 + $0x100] sm:$0xff]
    %v1567 = vld [vmem:[#allocation11 + $0x108] sm:$0xff]
    %v1568 = vld [vmem:[#allocation11 + $0x110] sm:$0xff]
    %v1569 = vld [vmem:[#allocation11 + $0x118] sm:$0xff]
    %v1570 = vld [vmem:[#allocation11 + $0x120] sm:$0xff]
    %v1571 = vld [vmem:[#allocation11 + $0x128] sm:$0xff]
    %v1572 = vld [vmem:[#allocation11 + $0x130] sm:$0xff]
    %v1573 = vld [vmem:[#allocation11 + $0x138] sm:$0xff]
    %v1574 = vld [vmem:[#allocation11 + $0x140] sm:$0xff]
    %v1575 = vld [vmem:[#allocation11 + $0x148] sm:$0xff]
    %v1576 = vld [vmem:[#allocation11 + $0x150] sm:$0xff]
    %v1577 = vld [vmem:[#allocation11 + $0x158] sm:$0xff]
    %v1578 = vld [vmem:[#allocation11 + $0x160] sm:$0xff]
    %v1579 = vld [vmem:[#allocation11 + $0x168] sm:$0xff]
    %v1580 = vld [vmem:[#allocation11 + $0x170] sm:$0xff]
    %v1581 = vld [vmem:[#allocation11 + $0x178] sm:$0xff]
    %v1582 = vld [vmem:[#allocation11 + $0x180] sm:$0xff]
    %v1583 = vld [vmem:[#allocation11 + $0x188] sm:$0xff]
    %v1584 = vld [vmem:[#allocation11 + $0x190] sm:$0xff]
    %v1585 = vld [vmem:[#allocation11 + $0x198] sm:$0xff]
    %v1586 = vld [vmem:[#allocation11 + $0x1a0] sm:$0xff]
    %v1587 = vld [vmem:[#allocation11 + $0x1a8] sm:$0xff]
    %v1588 = vld [vmem:[#allocation11 + $0x1b0] sm:$0xff]
    %v1589 = vld [vmem:[#allocation11 + $0x1b8] sm:$0xff]
    %v1590 = vld [vmem:[#allocation11 + $0x1c0] sm:$0xff]
    %v1591 = vld [vmem:[#allocation11 + $0x1c8] sm:$0xff]
    %v1592 = vld [vmem:[#allocation11 + $0x1d0] sm:$0xff]
    %v1593 = vld [vmem:[#allocation11 + $0x1d8] sm:$0xff]
    %v1594 = vld [vmem:[#allocation11 + $0x1e0] sm:$0xff]
    %v1595 = vld [vmem:[#allocation11 + $0x1e8] sm:$0xff]
    %v1596 = vld [vmem:[#allocation11 + $0x1f0] sm:$0xff]
    %v1597 = vld [vmem:[#allocation11 + $0x1f8] sm:$0xff]
    %1598 = vmatprep.subr.mxu0 %v1535
    %1599 = vmatpush1.msra.mxu0 %v1534
    %1600 = vmatprep.subr.mxu0 %v1539
    %1601 = vmatpush1.msra.mxu0 %v1538
    %1602 = vmatprep.subr.mxu0 %v1543
    %1603 = vmatpush1.msra.mxu0 %v1542
    %1604 = vmatprep.subr.mxu0 %v1547
    %1605 = vmatpush1.msra.mxu0 %v1546
    %1606 = vmatprep.subr.mxu0 %v1551
    %1607 = vmatpush1.msra.mxu0 %v1550
    %1608 = vmatprep.subr.mxu0 %v1555
    %1609 = vmatpush1.msra.mxu0 %v1554
    %1610 = vmatprep.subr.mxu0 %v1559
    %1611 = vmatpush1.msra.mxu0 %v1558
    %1612 = vmatprep.subr.mxu0 %v1563
    %1613 = vmatpush1.msra.mxu0 %v1562
    %1614 = vmatprep.subr.mxu0 %v1567
    %1615 = vmatpush1.msra.mxu0 %v1566
    %1616 = vmatprep.subr.mxu0 %v1571
    %1617 = vmatpush1.msra.mxu0 %v1570
    %1618 = vmatprep.subr.mxu0 %v1575
    %1619 = vmatpush1.msra.mxu0 %v1574
    %1620 = vmatprep.subr.mxu0 %v1579
    %1621 = vmatpush1.msra.mxu0 %v1578
    %1622 = vmatprep.subr.mxu0 %v1583
    %1623 = vmatpush1.msra.mxu0 %v1582
    %1624 = vmatprep.subr.mxu0 %v1587
    %1625 = vmatpush1.msra.mxu0 %v1586
    %1626 = vmatprep.subr.mxu0 %v1591
    %1627 = vmatpush1.msra.mxu0 %v1590
    %1628 = vmatprep.subr.mxu0 %v1595
    %1629 = vmatpush1.msra.mxu0 %v1594
    %1630 = vmatprep.subr.mxu0 0.0
    %1631 = vmatpush1.msra.mxu0 0.0
    %1632 = vmatprep.subr.mxu0 0.0
    %1633 = vmatpush1.msra.mxu0 0.0
    %1634 = vmatprep.subr.mxu0 0.0
    %1635 = vmatpush1.msra.mxu0 0.0
    %1636 = vmatprep.subr.mxu0 0.0
    %1637 = vmatpush1.msra.mxu0 0.0
    %1638 = vmatprep.subr.mxu0 0.0
    %1639 = vmatpush1.msra.mxu0 0.0
    %1640 = vmatprep.subr.mxu0 0.0
    %1641 = vmatpush1.msra.mxu0 0.0
    %1642 = vmatprep.subr.mxu0 0.0
    %1643 = vmatpush1.msra.mxu0 0.0
    %1644 = vmatprep.subr.mxu0 0.0
    %1645 = vmatpush1.msra.mxu0 0.0
    %1646 = vmatprep.subr.mxu0 0.0
    %1647 = vmatpush1.msra.mxu0 0.0
    %1648 = vmatprep.subr.mxu0 0.0
    %1649 = vmatpush1.msra.mxu0 0.0
    %1650 = vmatprep.subr.mxu0 0.0
    %1651 = vmatpush1.msra.mxu0 0.0
    %1652 = vmatprep.subr.mxu0 0.0
    %1653 = vmatpush1.msra.mxu0 0.0
    %1654 = vmatprep.subr.mxu0 0.0
    %1655 = vmatpush1.msra.mxu0 0.0
    %1656 = vmatprep.subr.mxu0 0.0
    %1657 = vmatpush1.msra.mxu0 0.0
    %1658 = vmatprep.subr.mxu0 0.0
    %1659 = vmatpush1.msra.mxu0 0.0
    %1660 = vmatprep.subr.mxu0 0.0
    %1661 = vmatpush1.msra.mxu0 0.0
    %1662 = vmatprep.mubr.f32.mxu0 0.0
    %1663 = vmatmul.mubr.f32.gmra.mrb[0].mxu0 %v1532
    %v1664 = vpop.f32.mrb[0].mxu0
    %v1665 = vadd.f32 0.0, %v1664
    %v1666 = vpop.f32.mrb[0].mxu0
    %v1667 = vadd.f32 0.0, %v1666
    %1668 = vdwg.mxu0
    %1669 = vmatprep.subr.mxu0 %v1537
    %1670 = vmatpush1.msra.mxu0 %v1536
    %1671 = vmatprep.subr.mxu0 %v1541
    %1672 = vmatpush1.msra.mxu0 %v1540
    %1673 = vmatprep.subr.mxu0 %v1545
    %1674 = vmatpush1.msra.mxu0 %v1544
    %1675 = vmatprep.subr.mxu0 %v1549
    %1676 = vmatpush1.msra.mxu0 %v1548
    %1677 = vmatprep.subr.mxu0 %v1553
    %1678 = vmatpush1.msra.mxu0 %v1552
    %1679 = vmatprep.subr.mxu0 %v1557
    %1680 = vmatpush1.msra.mxu0 %v1556
    %1681 = vmatprep.subr.mxu0 %v1561
    %1682 = vmatpush1.msra.mxu0 %v1560
    %1683 = vmatprep.subr.mxu0 %v1565
    %1684 = vmatpush1.msra.mxu0 %v1564
    %1685 = vmatprep.subr.mxu0 %v1569
    %1686 = vmatpush1.msra.mxu0 %v1568
    %1687 = vmatprep.subr.mxu0 %v1573
    %1688 = vmatpush1.msra.mxu0 %v1572
    %1689 = vmatprep.subr.mxu0 %v1577
    %1690 = vmatpush1.msra.mxu0 %v1576
    %1691 = vmatprep.subr.mxu0 %v1581
    %1692 = vmatpush1.msra.mxu0 %v1580
    %1693 = vmatprep.subr.mxu0 %v1585
    %1694 = vmatpush1.msra.mxu0 %v1584
    %1695 = vmatprep.subr.mxu0 %v1589
    %1696 = vmatpush1.msra.mxu0 %v1588
    %1697 = vmatprep.subr.mxu0 %v1593
    %1698 = vmatpush1.msra.mxu0 %v1592
    %1699 = vmatprep.subr.mxu0 %v1597
    %1700 = vmatpush1.msra.mxu0 %v1596
    %1701 = vmatprep.subr.mxu0 0.0
    %1702 = vmatpush1.msra.mxu0 0.0
    %1703 = vmatprep.subr.mxu0 0.0
    %1704 = vmatpush1.msra.mxu0 0.0
    %1705 = vmatprep.subr.mxu0 0.0
    %1706 = vmatpush1.msra.mxu0 0.0
    %1707 = vmatprep.subr.mxu0 0.0
    %1708 = vmatpush1.msra.mxu0 0.0
    %1709 = vmatprep.subr.mxu0 0.0
    %1710 = vmatpush1.msra.mxu0 0.0
    %1711 = vmatprep.subr.mxu0 0.0
    %1712 = vmatpush1.msra.mxu0 0.0
    %1713 = vmatprep.subr.mxu0 0.0
    %1714 = vmatpush1.msra.mxu0 0.0
    %1715 = vmatprep.subr.mxu0 0.0
    %1716 = vmatpush1.msra.mxu0 0.0
    %1717 = vmatprep.subr.mxu0 0.0
    %1718 = vmatpush1.msra.mxu0 0.0
    %1719 = vmatprep.subr.mxu0 0.0
    %1720 = vmatpush1.msra.mxu0 0.0
    %1721 = vmatprep.subr.mxu0 0.0
    %1722 = vmatpush1.msra.mxu0 0.0
    %1723 = vmatprep.subr.mxu0 0.0
    %1724 = vmatpush1.msra.mxu0 0.0
    %1725 = vmatprep.subr.mxu0 0.0
    %1726 = vmatpush1.msra.mxu0 0.0
    %1727 = vmatprep.subr.mxu0 0.0
    %1728 = vmatpush1.msra.mxu0 0.0
    %1729 = vmatprep.subr.mxu0 0.0
    %1730 = vmatpush1.msra.mxu0 0.0
    %1731 = vmatprep.subr.mxu0 0.0
    %1732 = vmatpush1.msra.mxu0 0.0
    %1733 = vmatprep.mubr.f32.mxu0 0.0
    %1734 = vmatmul.mubr.f32.gmra.mrb[0].mxu0 %v1532
    %v1735 = vpop.f32.mrb[0].mxu0
    %v1736 = vadd.f32 0.0, %v1735
    %v1737 = vpop.f32.mrb[0].mxu0
    %v1738 = vadd.f32 0.0, %v1737
    %1739 = vdwg.mxu0
    %s1740 = scalar_lea.vmem [#allocation5], 192
    %v1741 = vld [vmem:[%s1740] sm:$0xff]
    %v1742 = vld [vmem:[%s1740 + $0x8] sm:$0xff]
    %v1743 = vld [vmem:[%s1740 + $0x10] sm:$0xff]
    %v1744 = vld [vmem:[%s1740 + $0x18] sm:$0xff]
    %v1745 = vadd.f32 %v1741, %v1665
    %v1746 = vadd.f32 %v1742, %v1667
    %v1747 = vadd.f32 %v1743, %v1736
    %v1748 = vadd.f32 %v1744, %v1738
    %v1749 = vmul.f32 %v1745, 0.5
    %v1750 = vtanh.pop %v1749
    %v1751 = vadd.f32 %v1750, 1.0
    %v1752 = vmul.f32 %v1751, 0.5
    %v1753 = vmul.f32 %v1746, 0.5
    %v1754 = vtanh.pop %v1753
    %v1755 = vadd.f32 %v1754, 1.0
    %v1756 = vmul.f32 %v1755, 0.5
    %v1757 = vtanh.pop %v1747
    %v1758 = vmul.f32 %v1748, 0.5
    %v1759 = vtanh.pop %v1758
    %v1760 = vadd.f32 %v1759, 1.0
    %v1761 = vmul.f32 %v1760, 0.5
    %v1762 = vmul.f32 %v1756, %v1533
    %v1763 = vmul.f32 %v1752, %v1757
    %v1764 = vadd.f32 %v1762, %v1763
    %v1765 = vtanh.pop %v1764
    %v1766 = vmul.f32 %v1761, %v1765
    %s1767 = scalar_lea.vmem [#allocation4], 48
    %1768 = vst [vmem:[%s1767] sm:$0xff] %v1766
    %1769 = vst [vmem:[#allocation2] sm:$0xff] %v1766
    %1770 = vst [vmem:[#allocation3] sm:$0xff] %v1764
    %v1771 = vld [vmem:[#allocation2] sm:$0xff]
    %v1772 = vld [vmem:[#allocation3] sm:$0xff]
    %v1773 = vld [vmem:[#allocation11] sm:$0xff]
    %v1774 = vld [vmem:[#allocation11 + $0x8] sm:$0xff]
    %v1775 = vld [vmem:[#allocation11 + $0x10] sm:$0xff]
    %v1776 = vld [vmem:[#allocation11 + $0x18] sm:$0xff]
    %v1777 = vld [vmem:[#allocation11 + $0x20] sm:$0xff]
    %v1778 = vld [vmem:[#allocation11 + $0x28] sm:$0xff]
    %v1779 = vld [vmem:[#allocation11 + $0x30] sm:$0xff]
    %v1780 = vld [vmem:[#allocation11 + $0x38] sm:$0xff]
    %v1781 = vld [vmem:[#allocation11 + $0x40] sm:$0xff]
    %v1782 = vld [vmem:[#allocation11 + $0x48] sm:$0xff]
    %v1783 = vld [vmem:[#allocation11 + $0x50] sm:$0xff]
    %v1784 = vld [vmem:[#allocation11 + $0x58] sm:$0xff]
    %v1785 = vld [vmem:[#allocation11 + $0x60] sm:$0xff]
    %v1786 = vld [vmem:[#allocation11 + $0x68] sm:$0xff]
    %v1787 = vld [vmem:[#allocation11 + $0x70] sm:$0xff]
    %v1788 = vld [vmem:[#allocation11 + $0x78] sm:$0xff]
    %v1789 = vld [vmem:[#allocation11 + $0x80] sm:$0xff]
    %v1790 = vld [vmem:[#allocation11 + $0x88] sm:$0xff]
    %v1791 = vld [vmem:[#allocation11 + $0x90] sm:$0xff]
    %v1792 = vld [vmem:[#allocation11 + $0x98] sm:$0xff]
    %v1793 = vld [vmem:[#allocation11 + $0xa0] sm:$0xff]
    %v1794 = vld [vmem:[#allocation11 + $0xa8] sm:$0xff]
    %v1795 = vld [vmem:[#allocation11 + $0xb0] sm:$0xff]
    %v1796 = vld [vmem:[#allocation11 + $0xb8] sm:$0xff]
    %v1797 = vld [vmem:[#allocation11 + $0xc0] sm:$0xff]
    %v1798 = vld [vmem:[#allocation11 + $0xc8] sm:$0xff]
    %v1799 = vld [vmem:[#allocation11 + $0xd0] sm:$0xff]
    %v1800 = vld [vmem:[#allocation11 + $0xd8] sm:$0xff]
    %v1801 = vld [vmem:[#allocation11 + $0xe0] sm:$0xff]
    %v1802 = vld [vmem:[#allocation11 + $0xe8] sm:$0xff]
    %v1803 = vld [vmem:[#allocation11 + $0xf0] sm:$0xff]
    %v1804 = vld [vmem:[#allocation11 + $0xf8] sm:$0xff]
    %v1805 = vld [vmem:[#allocation11 + $0x100] sm:$0xff]
    %v1806 = vld [vmem:[#allocation11 + $0x108] sm:$0xff]
    %v1807 = vld [vmem:[#allocation11 + $0x110] sm:$0xff]
    %v1808 = vld [vmem:[#allocation11 + $0x118] sm:$0xff]
    %v1809 = vld [vmem:[#allocation11 + $0x120] sm:$0xff]
    %v1810 = vld [vmem:[#allocation11 + $0x128] sm:$0xff]
    %v1811 = vld [vmem:[#allocation11 + $0x130] sm:$0xff]
    %v1812 = vld [vmem:[#allocation11 + $0x138] sm:$0xff]
    %v1813 = vld [vmem:[#allocation11 + $0x140] sm:$0xff]
    %v1814 = vld [vmem:[#allocation11 + $0x148] sm:$0xff]
    %v1815 = vld [vmem:[#allocation11 + $0x150] sm:$0xff]
    %v1816 = vld [vmem:[#allocation11 + $0x158] sm:$0xff]
    %v1817 = vld [vmem:[#allocation11 + $0x160] sm:$0xff]
    %v1818 = vld [vmem:[#allocation11 + $0x168] sm:$0xff]
    %v1819 = vld [vmem:[#allocation11 + $0x170] sm:$0xff]
    %v1820 = vld [vmem:[#allocation11 + $0x178] sm:$0xff]
    %v1821 = vld [vmem:[#allocation11 + $0x180] sm:$0xff]
    %v1822 = vld [vmem:[#allocation11 + $0x188] sm:$0xff]
    %v1823 = vld [vmem:[#allocation11 + $0x190] sm:$0xff]
    %v1824 = vld [vmem:[#allocation11 + $0x198] sm:$0xff]
    %v1825 = vld [vmem:[#allocation11 + $0x1a0] sm:$0xff]
    %v1826 = vld [vmem:[#allocation11 + $0x1a8] sm:$0xff]
    %v1827 = vld [vmem:[#allocation11 + $0x1b0] sm:$0xff]
    %v1828 = vld [vmem:[#allocation11 + $0x1b8] sm:$0xff]
    %v1829 = vld [vmem:[#allocation11 + $0x1c0] sm:$0xff]
    %v1830 = vld [vmem:[#allocation11 + $0x1c8] sm:$0xff]
    %v1831 = vld [vmem:[#allocation11 + $0x1d0] sm:$0xff]
    %v1832 = vld [vmem:[#allocation11 + $0x1d8] sm:$0xff]
    %v1833 = vld [vmem:[#allocation11 + $0x1e0] sm:$0xff]
    %v1834 = vld [vmem:[#allocation11 + $0x1e8] sm:$0xff]
    %v1835 = vld [vmem:[#allocation11 + $0x1f0] sm:$0xff]
    %v1836 = vld [vmem:[#allocation11 + $0x1f8] sm:$0xff]
    %1837 = vmatprep.subr.mxu0 %v1774
    %1838 = vmatpush1.msra.mxu0 %v1773
    %1839 = vmatprep.subr.mxu0 %v1778
    %1840 = vmatpush1.msra.mxu0 %v1777
    %1841 = vmatprep.subr.mxu0 %v1782
    %1842 = vmatpush1.msra.mxu0 %v1781
    %1843 = vmatprep.subr.mxu0 %v1786
    %1844 = vmatpush1.msra.mxu0 %v1785
    %1845 = vmatprep.subr.mxu0 %v1790
    %1846 = vmatpush1.msra.mxu0 %v1789
    %1847 = vmatprep.subr.mxu0 %v1794
    %1848 = vmatpush1.msra.mxu0 %v1793
    %1849 = vmatprep.subr.mxu0 %v1798
    %1850 = vmatpush1.msra.mxu0 %v1797
    %1851 = vmatprep.subr.mxu0 %v1802
    %1852 = vmatpush1.msra.mxu0 %v1801
    %1853 = vmatprep.subr.mxu0 %v1806
    %1854 = vmatpush1.msra.mxu0 %v1805
    %1855 = vmatprep.subr.mxu0 %v1810
    %1856 = vmatpush1.msra.mxu0 %v1809
    %1857 = vmatprep.subr.mxu0 %v1814
    %1858 = vmatpush1.msra.mxu0 %v1813
    %1859 = vmatprep.subr.mxu0 %v1818
    %1860 = vmatpush1.msra.mxu0 %v1817
    %1861 = vmatprep.subr.mxu0 %v1822
    %1862 = vmatpush1.msra.mxu0 %v1821
    %1863 = vmatprep.subr.mxu0 %v1826
    %1864 = vmatpush1.msra.mxu0 %v1825
    %1865 = vmatprep.subr.mxu0 %v1830
    %1866 = vmatpush1.msra.mxu0 %v1829
    %1867 = vmatprep.subr.mxu0 %v1834
    %1868 = vmatpush1.msra.mxu0 %v1833
    %1869 = vmatprep.subr.mxu0 0.0
    %1870 = vmatpush1.msra.mxu0 0.0
    %1871 = vmatprep.subr.mxu0 0.0
    %1872 = vmatpush1.msra.mxu0 0.0
    %1873 = vmatprep.subr.mxu0 0.0
    %1874 = vmatpush1.msra.mxu0 0.0
    %1875 = vmatprep.subr.mxu0 0.0
    %1876 = vmatpush1.msra.mxu0 0.0
    %1877 = vmatprep.subr.mxu0 0.0
    %1878 = vmatpush1.msra.mxu0 0.0
    %1879 = vmatprep.subr.mxu0 0.0
    %1880 = vmatpush1.msra.mxu0 0.0
    %1881 = vmatprep.subr.mxu0 0.0
    %1882 = vmatpush1.msra.mxu0 0.0
    %1883 = vmatprep.subr.mxu0 0.0
    %1884 = vmatpush1.msra.mxu0 0.0
    %1885 = vmatprep.subr.mxu0 0.0
    %1886 = vmatpush1.msra.mxu0 0.0
    %1887 = vmatprep.subr.mxu0 0.0
    %1888 = vmatpush1.msra.mxu0 0.0
    %1889 = vmatprep.subr.mxu0 0.0
    %1890 = vmatpush1.msra.mxu0 0.0
    %1891 = vmatprep.subr.mxu0 0.0
    %1892 = vmatpush1.msra.mxu0 0.0
    %1893 = vmatprep.subr.mxu0 0.0
    %1894 = vmatpush1.msra.mxu0 0.0
    %1895 = vmatprep.subr.mxu0 0.0
    %1896 = vmatpush1.msra.mxu0 0.0
    %1897 = vmatprep.subr.mxu0 0.0
    %1898 = vmatpush1.msra.mxu0 0.0
    %1899 = vmatprep.subr.mxu0 0.0
    %1900 = vmatpush1.msra.mxu0 0.0
    %1901 = vmatprep.mubr.f32.mxu0 0.0
    %1902 = vmatmul.mubr.f32.gmra.mrb[0].mxu0 %v1771
    %v1903 = vpop.f32.mrb[0].mxu0
    %v1904 = vadd.f32 0.0, %v1903
    %v1905 = vpop.f32.mrb[0].mxu0
    %v1906 = vadd.f32 0.0, %v1905
    %1907 = vdwg.mxu0
    %1908 = vmatprep.subr.mxu0 %v1776
    %1909 = vmatpush1.msra.mxu0 %v1775
    %1910 = vmatprep.subr.mxu0 %v1780
    %1911 = vmatpush1.msra.mxu0 %v1779
    %1912 = vmatprep.subr.mxu0 %v1784
    %1913 = vmatpush1.msra.mxu0 %v1783
    %1914 = vmatprep.subr.mxu0 %v1788
    %1915 = vmatpush1.msra.mxu0 %v1787
    %1916 = vmatprep.subr.mxu0 %v1792
    %1917 = vmatpush1.msra.mxu0 %v1791
    %1918 = vmatprep.subr.mxu0 %v1796
    %1919 = vmatpush1.msra.mxu0 %v1795
    %1920 = vmatprep.subr.mxu0 %v1800
    %1921 = vmatpush1.msra.mxu0 %v1799
    %1922 = vmatprep.subr.mxu0 %v1804
    %1923 = vmatpush1.msra.mxu0 %v1803
    %1924 = vmatprep.subr.mxu0 %v1808
    %1925 = vmatpush1.msra.mxu0 %v1807
    %1926 = vmatprep.subr.mxu0 %v1812
    %1927 = vmatpush1.msra.mxu0 %v1811
    %1928 = vmatprep.subr.mxu0 %v1816
    %1929 = vmatpush1.msra.mxu0 %v1815
    %1930 = vmatprep.subr.mxu0 %v1820
    %1931 = vmatpush1.msra.mxu0 %v1819
    %1932 = vmatprep.subr.mxu0 %v1824
    %1933 = vmatpush1.msra.mxu0 %v1823
    %1934 = vmatprep.subr.mxu0 %v1828
    %1935 = vmatpush1.msra.mxu0 %v1827
    %1936 = vmatprep.subr.mxu0 %v1832
    %1937 = vmatpush1.msra.mxu0 %v1831
    %1938 = vmatprep.subr.mxu0 %v1836
    %1939 = vmatpush1.msra.mxu0 %v1835
    %1940 = vmatprep.subr.mxu0 0.0
    %1941 = vmatpush1.msra.mxu0 0.0
    %1942 = vmatprep.subr.mxu0 0.0
    %1943 = vmatpush1.msra.mxu0 0.0
    %1944 = vmatprep.subr.mxu0 0.0
    %1945 = vmatpush1.msra.mxu0 0.0
    %1946 = vmatprep.subr.mxu0 0.0
    %1947 = vmatpush1.msra.mxu0 0.0
    %1948 = vmatprep.subr.mxu0 0.0
    %1949 = vmatpush1.msra.mxu0 0.0
    %1950 = vmatprep.subr.mxu0 0.0
    %1951 = vmatpush1.msra.mxu0 0.0
    %1952 = vmatprep.subr.mxu0 0.0
    %1953 = vmatpush1.msra.mxu0 0.0
    %1954 = vmatprep.subr.mxu0 0.0
    %1955 = vmatpush1.msra.mxu0 0.0
    %1956 = vmatprep.subr.mxu0 0.0
    %1957 = vmatpush1.msra.mxu0 0.0
    %1958 = vmatprep.subr.mxu0 0.0
    %1959 = vmatpush1.msra.mxu0 0.0
    %1960 = vmatprep.subr.mxu0 0.0
    %1961 = vmatpush1.msra.mxu0 0.0
    %1962 = vmatprep.subr.mxu0 0.0
    %1963 = vmatpush1.msra.mxu0 0.0
    %1964 = vmatprep.subr.mxu0 0.0
    %1965 = vmatpush1.msra.mxu0 0.0
    %1966 = vmatprep.subr.mxu0 0.0
    %1967 = vmatpush1.msra.mxu0 0.0
    %1968 = vmatprep.subr.mxu0 0.0
    %1969 = vmatpush1.msra.mxu0 0.0
    %1970 = vmatprep.subr.mxu0 0.0
    %1971 = vmatpush1.msra.mxu0 0.0
    %1972 = vmatprep.mubr.f32.mxu0 0.0
    %1973 = vmatmul.mubr.f32.gmra.mrb[0].mxu0 %v1771
    %v1974 = vpop.f32.mrb[0].mxu0
    %v1975 = vadd.f32 0.0, %v1974
    %v1976 = vpop.f32.mrb[0].mxu0
    %v1977 = vadd.f32 0.0, %v1976
    %1978 = vdwg.mxu0
    %s1979 = scalar_lea.vmem [#allocation5], 224
    %v1980 = vld [vmem:[%s1979] sm:$0xff]
    %v1981 = vld [vmem:[%s1979 + $0x8] sm:$0xff]
    %v1982 = vld [vmem:[%s1979 + $0x10] sm:$0xff]
    %v1983 = vld [vmem:[%s1979 + $0x18] sm:$0xff]
    %v1984 = vadd.f32 %v1980, %v1904
    %v1985 = vadd.f32 %v1981, %v1906
    %v1986 = vadd.f32 %v1982, %v1975
    %v1987 = vadd.f32 %v1983, %v1977
    %v1988 = vmul.f32 %v1984, 0.5
    %v1989 = vtanh.pop %v1988
    %v1990 = vadd.f32 %v1989, 1.0
    %v1991 = vmul.f32 %v1990, 0.5
    %v1992 = vmul.f32 %v1985, 0.5
    %v1993 = vtanh.pop %v1992
    %v1994 = vadd.f32 %v1993, 1.0
    %v1995 = vmul.f32 %v1994, 0.5
    %v1996 = vtanh.pop %v1986
    %v1997 = vmul.f32 %v1987, 0.5
    %v1998 = vtanh.pop %v1997
    %v1999 = vadd.f32 %v1998, 1.0
    %v2000 = vmul.f32 %v1999, 0.5
    %v2001 = vmul.f32 %v1995, %v1772
    %v2002 = vmul.f32 %v1991, %v1996
    %v2003 = vadd.f32 %v2001, %v2002
    %v2004 = vtanh.pop %v2003
    %v2005 = vmul.f32 %v2000, %v2004
    %s2006 = scalar_lea.vmem [#allocation4], 56
    %2007 = vst [vmem:[%s2006] sm:$0xff] %v2005
    %2008 = vst [vmem:[#allocation2] sm:$0xff] %v2005
    %2009 = vst [vmem:[#allocation3] sm:$0xff] %v2003
    %v2010 = vld [vmem:[#allocation2] sm:$0xff]
    %v2011 = vld [vmem:[#allocation3] sm:$0xff]
    %v2012 = vld [vmem:[#allocation11] sm:$0xff]
    %v2013 = vld [vmem:[#allocation11 + $0x8] sm:$0xff]
    %v2014 = vld [vmem:[#allocation11 + $0x10] sm:$0xff]
    %v2015 = vld [vmem:[#allocation11 + $0x18] sm:$0xff]
    %v2016 = vld [vmem:[#allocation11 + $0x20] sm:$0xff]
    %v2017 = vld [vmem:[#allocation11 + $0x28] sm:$0xff]
    %v2018 = vld [vmem:[#allocation11 + $0x30] sm:$0xff]
    %v2019 = vld [vmem:[#allocation11 + $0x38] sm:$0xff]
    %v2020 = vld [vmem:[#allocation11 + $0x40] sm:$0xff]
    %v2021 = vld [vmem:[#allocation11 + $0x48] sm:$0xff]
    %v2022 = vld [vmem:[#allocation11 + $0x50] sm:$0xff]
    %v2023 = vld [vmem:[#allocation11 + $0x58] sm:$0xff]
    %v2024 = vld [vmem:[#allocation11 + $0x60] sm:$0xff]
    %v2025 = vld [vmem:[#allocation11 + $0x68] sm:$0xff]
    %v2026 = vld [vmem:[#allocation11 + $0x70] sm:$0xff]
    %v2027 = vld [vmem:[#allocation11 + $0x78] sm:$0xff]
    %v2028 = vld [vmem:[#allocation11 + $0x80] sm:$0xff]
    %v2029 = vld [vmem:[#allocation11 + $0x88] sm:$0xff]
    %v2030 = vld [vmem:[#allocation11 + $0x90] sm:$0xff]
    %v2031 = vld [vmem:[#allocation11 + $0x98] sm:$0xff]
    %v2032 = vld [vmem:[#allocation11 + $0xa0] sm:$0xff]
    %v2033 = vld [vmem:[#allocation11 + $0xa8] sm:$0xff]
    %v2034 = vld [vmem:[#allocation11 + $0xb0] sm:$0xff]
    %v2035 = vld [vmem:[#allocation11 + $0xb8] sm:$0xff]
    %v2036 = vld [vmem:[#allocation11 + $0xc0] sm:$0xff]
    %v2037 = vld [vmem:[#allocation11 + $0xc8] sm:$0xff]
    %v2038 = vld [vmem:[#allocation11 + $0xd0] sm:$0xff]
    %v2039 = vld [vmem:[#allocation11 + $0xd8] sm:$0xff]
    %v2040 = vld [vmem:[#allocation11 + $0xe0] sm:$0xff]
    %v2041 = vld [vmem:[#allocation11 + $0xe8] sm:$0xff]
    %v2042 = vld [vmem:[#allocation11 + $0xf0] sm:$0xff]
    %v2043 = vld [vmem:[#allocation11 + $0xf8] sm:$0xff]
    %v2044 = vld [vmem:[#allocation11 + $0x100] sm:$0xff]
    %v2045 = vld [vmem:[#allocation11 + $0x108] sm:$0xff]
    %v2046 = vld [vmem:[#allocation11 + $0x110] sm:$0xff]
    %v2047 = vld [vmem:[#allocation11 + $0x118] sm:$0xff]
    %v2048 = vld [vmem:[#allocation11 + $0x120] sm:$0xff]
    %v2049 = vld [vmem:[#allocation11 + $0x128] sm:$0xff]
    %v2050 = vld [vmem:[#allocation11 + $0x130] sm:$0xff]
    %v2051 = vld [vmem:[#allocation11 + $0x138] sm:$0xff]
    %v2052 = vld [vmem:[#allocation11 + $0x140] sm:$0xff]
    %v2053 = vld [vmem:[#allocation11 + $0x148] sm:$0xff]
    %v2054 = vld [vmem:[#allocation11 + $0x150] sm:$0xff]
    %v2055 = vld [vmem:[#allocation11 + $0x158] sm:$0xff]
    %v2056 = vld [vmem:[#allocation11 + $0x160] sm:$0xff]
    %v2057 = vld [vmem:[#allocation11 + $0x168] sm:$0xff]
    %v2058 = vld [vmem:[#allocation11 + $0x170] sm:$0xff]
    %v2059 = vld [vmem:[#allocation11 + $0x178] sm:$0xff]
    %v2060 = vld [vmem:[#allocation11 + $0x180] sm:$0xff]
    %v2061 = vld [vmem:[#allocation11 + $0x188] sm:$0xff]
    %v2062 = vld [vmem:[#allocation11 + $0x190] sm:$0xff]
    %v2063 = vld [vmem:[#allocation11 + $0x198] sm:$0xff]
    %v2064 = vld [vmem:[#allocation11 + $0x1a0] sm:$0xff]
    %v2065 = vld [vmem:[#allocation11 + $0x1a8] sm:$0xff]
    %v2066 = vld [vmem:[#allocation11 + $0x1b0] sm:$0xff]
    %v2067 = vld [vmem:[#allocation11 + $0x1b8] sm:$0xff]
    %v2068 = vld [vmem:[#allocation11 + $0x1c0] sm:$0xff]
    %v2069 = vld [vmem:[#allocation11 + $0x1c8] sm:$0xff]
    %v2070 = vld [vmem:[#allocation11 + $0x1d0] sm:$0xff]
    %v2071 = vld [vmem:[#allocation11 + $0x1d8] sm:$0xff]
    %v2072 = vld [vmem:[#allocation11 + $0x1e0] sm:$0xff]
    %v2073 = vld [vmem:[#allocation11 + $0x1e8] sm:$0xff]
    %v2074 = vld [vmem:[#allocation11 + $0x1f0] sm:$0xff]
    %v2075 = vld [vmem:[#allocation11 + $0x1f8] sm:$0xff]
    %2076 = vmatprep.subr.mxu0 %v2013
    %2077 = vmatpush1.msra.mxu0 %v2012
    %2078 = vmatprep.subr.mxu0 %v2017
    %2079 = vmatpush1.msra.mxu0 %v2016
    %2080 = vmatprep.subr.mxu0 %v2021
    %2081 = vmatpush1.msra.mxu0 %v2020
    %2082 = vmatprep.subr.mxu0 %v2025
    %2083 = vmatpush1.msra.mxu0 %v2024
    %2084 = vmatprep.subr.mxu0 %v2029
    %2085 = vmatpush1.msra.mxu0 %v2028
    %2086 = vmatprep.subr.mxu0 %v2033
    %2087 = vmatpush1.msra.mxu0 %v2032
    %2088 = vmatprep.subr.mxu0 %v2037
    %2089 = vmatpush1.msra.mxu0 %v2036
    %2090 = vmatprep.subr.mxu0 %v2041
    %2091 = vmatpush1.msra.mxu0 %v2040
    %2092 = vmatprep.subr.mxu0 %v2045
    %2093 = vmatpush1.msra.mxu0 %v2044
    %2094 = vmatprep.subr.mxu0 %v2049
    %2095 = vmatpush1.msra.mxu0 %v2048
    %2096 = vmatprep.subr.mxu0 %v2053
    %2097 = vmatpush1.msra.mxu0 %v2052
    %2098 = vmatprep.subr.mxu0 %v2057
    %2099 = vmatpush1.msra.mxu0 %v2056
    %2100 = vmatprep.subr.mxu0 %v2061
    %2101 = vmatpush1.msra.mxu0 %v2060
    %2102 = vmatprep.subr.mxu0 %v2065
    %2103 = vmatpush1.msra.mxu0 %v2064
    %2104 = vmatprep.subr.mxu0 %v2069
    %2105 = vmatpush1.msra.mxu0 %v2068
    %2106 = vmatprep.subr.mxu0 %v2073
    %2107 = vmatpush1.msra.mxu0 %v2072
    %2108 = vmatprep.subr.mxu0 0.0
    %2109 = vmatpush1.msra.mxu0 0.0
    %2110 = vmatprep.subr.mxu0 0.0
    %2111 = vmatpush1.msra.mxu0 0.0
    %2112 = vmatprep.subr.mxu0 0.0
    %2113 = vmatpush1.msra.mxu0 0.0
    %2114 = vmatprep.subr.mxu0 0.0
    %2115 = vmatpush1.msra.mxu0 0.0
    %2116 = vmatprep.subr.mxu0 0.0
    %2117 = vmatpush1.msra.mxu0 0.0
    %2118 = vmatprep.subr.mxu0 0.0
    %2119 = vmatpush1.msra.mxu0 0.0
    %2120 = vmatprep.subr.mxu0 0.0
    %2121 = vmatpush1.msra.mxu0 0.0
    %2122 = vmatprep.subr.mxu0 0.0
    %2123 = vmatpush1.msra.mxu0 0.0
    %2124 = vmatprep.subr.mxu0 0.0
    %2125 = vmatpush1.msra.mxu0 0.0
    %2126 = vmatprep.subr.mxu0 0.0
    %2127 = vmatpush1.msra.mxu0 0.0
    %2128 = vmatprep.subr.mxu0 0.0
    %2129 = vmatpush1.msra.mxu0 0.0
    %2130 = vmatprep.subr.mxu0 0.0
    %2131 = vmatpush1.msra.mxu0 0.0
    %2132 = vmatprep.subr.mxu0 0.0
    %2133 = vmatpush1.msra.mxu0 0.0
    %2134 = vmatprep.subr.mxu0 0.0
    %2135 = vmatpush1.msra.mxu0 0.0
    %2136 = vmatprep.subr.mxu0 0.0
    %2137 = vmatpush1.msra.mxu0 0.0
    %2138 = vmatprep.subr.mxu0 0.0
    %2139 = vmatpush1.msra.mxu0 0.0
    %2140 = vmatprep.mubr.f32.mxu0 0.0
    %2141 = vmatmul.mubr.f32.gmra.mrb[0].mxu0 %v2010
    %v2142 = vpop.f32.mrb[0].mxu0
    %v2143 = vadd.f32 0.0, %v2142
    %v2144 = vpop.f32.mrb[0].mxu0
    %v2145 = vadd.f32 0.0, %v2144
    %2146 = vdwg.mxu0
    %2147 = vmatprep.subr.mxu0 %v2015
    %2148 = vmatpush1.msra.mxu0 %v2014
    %2149 = vmatprep.subr.mxu0 %v2019
    %2150 = vmatpush1.msra.mxu0 %v2018
    %2151 = vmatprep.subr.mxu0 %v2023
    %2152 = vmatpush1.msra.mxu0 %v2022
    %2153 = vmatprep.subr.mxu0 %v2027
    %2154 = vmatpush1.msra.mxu0 %v2026
    %2155 = vmatprep.subr.mxu0 %v2031
    %2156 = vmatpush1.msra.mxu0 %v2030
    %2157 = vmatprep.subr.mxu0 %v2035
    %2158 = vmatpush1.msra.mxu0 %v2034
    %2159 = vmatprep.subr.mxu0 %v2039
    %2160 = vmatpush1.msra.mxu0 %v2038
    %2161 = vmatprep.subr.mxu0 %v2043
    %2162 = vmatpush1.msra.mxu0 %v2042
    %2163 = vmatprep.subr.mxu0 %v2047
    %2164 = vmatpush1.msra.mxu0 %v2046
    %2165 = vmatprep.subr.mxu0 %v2051
    %2166 = vmatpush1.msra.mxu0 %v2050
    %2167 = vmatprep.subr.mxu0 %v2055
    %2168 = vmatpush1.msra.mxu0 %v2054
    %2169 = vmatprep.subr.mxu0 %v2059
    %2170 = vmatpush1.msra.mxu0 %v2058
    %2171 = vmatprep.subr.mxu0 %v2063
    %2172 = vmatpush1.msra.mxu0 %v2062
    %2173 = vmatprep.subr.mxu0 %v2067
    %2174 = vmatpush1.msra.mxu0 %v2066
    %2175 = vmatprep.subr.mxu0 %v2071
    %2176 = vmatpush1.msra.mxu0 %v2070
    %2177 = vmatprep.subr.mxu0 %v2075
    %2178 = vmatpush1.msra.mxu0 %v2074
    %2179 = vmatprep.subr.mxu0 0.0
    %2180 = vmatpush1.msra.mxu0 0.0
    %2181 = vmatprep.subr.mxu0 0.0
    %2182 = vmatpush1.msra.mxu0 0.0
    %2183 = vmatprep.subr.mxu0 0.0
    %2184 = vmatpush1.msra.mxu0 0.0
    %2185 = vmatprep.subr.mxu0 0.0
    %2186 = vmatpush1.msra.mxu0 0.0
    %2187 = vmatprep.subr.mxu0 0.0
    %2188 = vmatpush1.msra.mxu0 0.0
    %2189 = vmatprep.subr.mxu0 0.0
    %2190 = vmatpush1.msra.mxu0 0.0
    %2191 = vmatprep.subr.mxu0 0.0
    %2192 = vmatpush1.msra.mxu0 0.0
    %2193 = vmatprep.subr.mxu0 0.0
    %2194 = vmatpush1.msra.mxu0 0.0
    %2195 = vmatprep.subr.mxu0 0.0
    %2196 = vmatpush1.msra.mxu0 0.0
    %2197 = vmatprep.subr.mxu0 0.0
    %2198 = vmatpush1.msra.mxu0 0.0
    %2199 = vmatprep.subr.mxu0 0.0
    %2200 = vmatpush1.msra.mxu0 0.0
    %2201 = vmatprep.subr.mxu0 0.0
    %2202 = vmatpush1.msra.mxu0 0.0
    %2203 = vmatprep.subr.mxu0 0.0
    %2204 = vmatpush1.msra.mxu0 0.0
    %2205 = vmatprep.subr.mxu0 0.0
    %2206 = vmatpush1.msra.mxu0 0.0
    %2207 = vmatprep.subr.mxu0 0.0
    %2208 = vmatpush1.msra.mxu0 0.0
    %2209 = vmatprep.subr.mxu0 0.0
    %2210 = vmatpush1.msra.mxu0 0.0
    %2211 = vmatprep.mubr.f32.mxu0 0.0
    %2212 = vmatmul.mubr.f32.gmra.mrb[0].mxu0 %v2010
    %v2213 = vpop.f32.mrb[0].mxu0
    %v2214 = vadd.f32 0.0, %v2213
    %v2215 = vpop.f32.mrb[0].mxu0
    %v2216 = vadd.f32 0.0, %v2215
    %2217 = vdwg.mxu0
    %s2218 = scalar_lea.vmem [#allocation5], 256
    %v2219 = vld [vmem:[%s2218] sm:$0xff]
    %v2220 = vld [vmem:[%s2218 + $0x8] sm:$0xff]
    %v2221 = vld [vmem:[%s2218 + $0x10] sm:$0xff]
    %v2222 = vld [vmem:[%s2218 + $0x18] sm:$0xff]
    %v2223 = vadd.f32 %v2219, %v2143
    %v2224 = vadd.f32 %v2220, %v2145
    %v2225 = vadd.f32 %v2221, %v2214
    %v2226 = vadd.f32 %v2222, %v2216
    %v2227 = vmul.f32 %v2223, 0.5
    %v2228 = vtanh.pop %v2227
    %v2229 = vadd.f32 %v2228, 1.0
    %v2230 = vmul.f32 %v2229, 0.5
    %v2231 = vmul.f32 %v2224, 0.5
    %v2232 = vtanh.pop %v2231
    %v2233 = vadd.f32 %v2232, 1.0
    %v2234 = vmul.f32 %v2233, 0.5
    %v2235 = vtanh.pop %v2225
    %v2236 = vmul.f32 %v2226, 0.5
    %v2237 = vtanh.pop %v2236
    %v2238 = vadd.f32 %v2237, 1.0
    %v2239 = vmul.f32 %v2238, 0.5
    %v2240 = vmul.f32 %v2234, %v2011
    %v2241 = vmul.f32 %v2230, %v2235
    %v2242 = vadd.f32 %v2240, %v2241
    %v2243 = vtanh.pop %v2242
    %v2244 = vmul.f32 %v2239, %v2243
    %s2245 = scalar_lea.vmem [#allocation4], 64
    %2246 = vst [vmem:[%s2245] sm:$0xff] %v2244
    %2247 = vst [vmem:[#allocation2] sm:$0xff] %v2244
    %2248 = vst [vmem:[#allocation3] sm:$0xff] %v2242
    %v2249 = vld [vmem:[#allocation2] sm:$0xff]
    %v2250 = vld [vmem:[#allocation3] sm:$0xff]
    %v2251 = vld [vmem:[#allocation11] sm:$0xff]
    %v2252 = vld [vmem:[#allocation11 + $0x8] sm:$0xff]
    %v2253 = vld [vmem:[#allocation11 + $0x10] sm:$0xff]
    %v2254 = vld [vmem:[#allocation11 + $0x18] sm:$0xff]
    %v2255 = vld [vmem:[#allocation11 + $0x20] sm:$0xff]
    %v2256 = vld [vmem:[#allocation11 + $0x28] sm:$0xff]
    %v2257 = vld [vmem:[#allocation11 + $0x30] sm:$0xff]
    %v2258 = vld [vmem:[#allocation11 + $0x38] sm:$0xff]
    %v2259 = vld [vmem:[#allocation11 + $0x40] sm:$0xff]
    %v2260 = vld [vmem:[#allocation11 + $0x48] sm:$0xff]
    %v2261 = vld [vmem:[#allocation11 + $0x50] sm:$0xff]
    %v2262 = vld [vmem:[#allocation11 + $0x58] sm:$0xff]
    %v2263 = vld [vmem:[#allocation11 + $0x60] sm:$0xff]
    %v2264 = vld [vmem:[#allocation11 + $0x68] sm:$0xff]
    %v2265 = vld [vmem:[#allocation11 + $0x70] sm:$0xff]
    %v2266 = vld [vmem:[#allocation11 + $0x78] sm:$0xff]
    %v2267 = vld [vmem:[#allocation11 + $0x80] sm:$0xff]
    %v2268 = vld [vmem:[#allocation11 + $0x88] sm:$0xff]
    %v2269 = vld [vmem:[#allocation11 + $0x90] sm:$0xff]
    %v2270 = vld [vmem:[#allocation11 + $0x98] sm:$0xff]
    %v2271 = vld [vmem:[#allocation11 + $0xa0] sm:$0xff]
    %v2272 = vld [vmem:[#allocation11 + $0xa8] sm:$0xff]
    %v2273 = vld [vmem:[#allocation11 + $0xb0] sm:$0xff]
    %v2274 = vld [vmem:[#allocation11 + $0xb8] sm:$0xff]
    %v2275 = vld [vmem:[#allocation11 + $0xc0] sm:$0xff]
    %v2276 = vld [vmem:[#allocation11 + $0xc8] sm:$0xff]
    %v2277 = vld [vmem:[#allocation11 + $0xd0] sm:$0xff]
    %v2278 = vld [vmem:[#allocation11 + $0xd8] sm:$0xff]
    %v2279 = vld [vmem:[#allocation11 + $0xe0] sm:$0xff]
    %v2280 = vld [vmem:[#allocation11 + $0xe8] sm:$0xff]
    %v2281 = vld [vmem:[#allocation11 + $0xf0] sm:$0xff]
    %v2282 = vld [vmem:[#allocation11 + $0xf8] sm:$0xff]
    %v2283 = vld [vmem:[#allocation11 + $0x100] sm:$0xff]
    %v2284 = vld [vmem:[#allocation11 + $0x108] sm:$0xff]
    %v2285 = vld [vmem:[#allocation11 + $0x110] sm:$0xff]
    %v2286 = vld [vmem:[#allocation11 + $0x118] sm:$0xff]
    %v2287 = vld [vmem:[#allocation11 + $0x120] sm:$0xff]
    %v2288 = vld [vmem:[#allocation11 + $0x128] sm:$0xff]
    %v2289 = vld [vmem:[#allocation11 + $0x130] sm:$0xff]
    %v2290 = vld [vmem:[#allocation11 + $0x138] sm:$0xff]
    %v2291 = vld [vmem:[#allocation11 + $0x140] sm:$0xff]
    %v2292 = vld [vmem:[#allocation11 + $0x148] sm:$0xff]
    %v2293 = vld [vmem:[#allocation11 + $0x150] sm:$0xff]
    %v2294 = vld [vmem:[#allocation11 + $0x158] sm:$0xff]
    %v2295 = vld [vmem:[#allocation11 + $0x160] sm:$0xff]
    %v2296 = vld [vmem:[#allocation11 + $0x168] sm:$0xff]
    %v2297 = vld [vmem:[#allocation11 + $0x170] sm:$0xff]
    %v2298 = vld [vmem:[#allocation11 + $0x178] sm:$0xff]
    %v2299 = vld [vmem:[#allocation11 + $0x180] sm:$0xff]
    %v2300 = vld [vmem:[#allocation11 + $0x188] sm:$0xff]
    %v2301 = vld [vmem:[#allocation11 + $0x190] sm:$0xff]
    %v2302 = vld [vmem:[#allocation11 + $0x198] sm:$0xff]
    %v2303 = vld [vmem:[#allocation11 + $0x1a0] sm:$0xff]
    %v2304 = vld [vmem:[#allocation11 + $0x1a8] sm:$0xff]
    %v2305 = vld [vmem:[#allocation11 + $0x1b0] sm:$0xff]
    %v2306 = vld [vmem:[#allocation11 + $0x1b8] sm:$0xff]
    %v2307 = vld [vmem:[#allocation11 + $0x1c0] sm:$0xff]
    %v2308 = vld [vmem:[#allocation11 + $0x1c8] sm:$0xff]
    %v2309 = vld [vmem:[#allocation11 + $0x1d0] sm:$0xff]
    %v2310 = vld [vmem:[#allocation11 + $0x1d8] sm:$0xff]
    %v2311 = vld [vmem:[#allocation11 + $0x1e0] sm:$0xff]
    %v2312 = vld [vmem:[#allocation11 + $0x1e8] sm:$0xff]
    %v2313 = vld [vmem:[#allocation11 + $0x1f0] sm:$0xff]
    %v2314 = vld [vmem:[#allocation11 + $0x1f8] sm:$0xff]
    %2315 = vmatprep.subr.mxu0 %v2252
    %2316 = vmatpush1.msra.mxu0 %v2251
    %2317 = vmatprep.subr.mxu0 %v2256
    %2318 = vmatpush1.msra.mxu0 %v2255
    %2319 = vmatprep.subr.mxu0 %v2260
    %2320 = vmatpush1.msra.mxu0 %v2259
    %2321 = vmatprep.subr.mxu0 %v2264
    %2322 = vmatpush1.msra.mxu0 %v2263
    %2323 = vmatprep.subr.mxu0 %v2268
    %2324 = vmatpush1.msra.mxu0 %v2267
    %2325 = vmatprep.subr.mxu0 %v2272
    %2326 = vmatpush1.msra.mxu0 %v2271
    %2327 = vmatprep.subr.mxu0 %v2276
    %2328 = vmatpush1.msra.mxu0 %v2275
    %2329 = vmatprep.subr.mxu0 %v2280
    %2330 = vmatpush1.msra.mxu0 %v2279
    %2331 = vmatprep.subr.mxu0 %v2284
    %2332 = vmatpush1.msra.mxu0 %v2283
    %2333 = vmatprep.subr.mxu0 %v2288
    %2334 = vmatpush1.msra.mxu0 %v2287
    %2335 = vmatprep.subr.mxu0 %v2292
    %2336 = vmatpush1.msra.mxu0 %v2291
    %2337 = vmatprep.subr.mxu0 %v2296
    %2338 = vmatpush1.msra.mxu0 %v2295
    %2339 = vmatprep.subr.mxu0 %v2300
    %2340 = vmatpush1.msra.mxu0 %v2299
    %2341 = vmatprep.subr.mxu0 %v2304
    %2342 = vmatpush1.msra.mxu0 %v2303
    %2343 = vmatprep.subr.mxu0 %v2308
    %2344 = vmatpush1.msra.mxu0 %v2307
    %2345 = vmatprep.subr.mxu0 %v2312
    %2346 = vmatpush1.msra.mxu0 %v2311
    %2347 = vmatprep.subr.mxu0 0.0
    %2348 = vmatpush1.msra.mxu0 0.0
    %2349 = vmatprep.subr.mxu0 0.0
    %2350 = vmatpush1.msra.mxu0 0.0
    %2351 = vmatprep.subr.mxu0 0.0
    %2352 = vmatpush1.msra.mxu0 0.0
    %2353 = vmatprep.subr.mxu0 0.0
    %2354 = vmatpush1.msra.mxu0 0.0
    %2355 = vmatprep.subr.mxu0 0.0
    %2356 = vmatpush1.msra.mxu0 0.0
    %2357 = vmatprep.subr.mxu0 0.0
    %2358 = vmatpush1.msra.mxu0 0.0
    %2359 = vmatprep.subr.mxu0 0.0
    %2360 = vmatpush1.msra.mxu0 0.0
    %2361 = vmatprep.subr.mxu0 0.0
    %2362 = vmatpush1.msra.mxu0 0.0
    %2363 = vmatprep.subr.mxu0 0.0
    %2364 = vmatpush1.msra.mxu0 0.0
    %2365 = vmatprep.subr.mxu0 0.0
    %2366 = vmatpush1.msra.mxu0 0.0
    %2367 = vmatprep.subr.mxu0 0.0
    %2368 = vmatpush1.msra.mxu0 0.0
    %2369 = vmatprep.subr.mxu0 0.0
    %2370 = vmatpush1.msra.mxu0 0.0
    %2371 = vmatprep.subr.mxu0 0.0
    %2372 = vmatpush1.msra.mxu0 0.0
    %2373 = vmatprep.subr.mxu0 0.0
    %2374 = vmatpush1.msra.mxu0 0.0
    %2375 = vmatprep.subr.mxu0 0.0
    %2376 = vmatpush1.msra.mxu0 0.0
    %2377 = vmatprep.subr.mxu0 0.0
    %2378 = vmatpush1.msra.mxu0 0.0
    %2379 = vmatprep.mubr.f32.mxu0 0.0
    %2380 = vmatmul.mubr.f32.gmra.mrb[0].mxu0 %v2249
    %v2381 = vpop.f32.mrb[0].mxu0
    %v2382 = vadd.f32 0.0, %v2381
    %v2383 = vpop.f32.mrb[0].mxu0
    %v2384 = vadd.f32 0.0, %v2383
    %2385 = vdwg.mxu0
    %2386 = vmatprep.subr.mxu0 %v2254
    %2387 = vmatpush1.msra.mxu0 %v2253
    %2388 = vmatprep.subr.mxu0 %v2258
    %2389 = vmatpush1.msra.mxu0 %v2257
    %2390 = vmatprep.subr.mxu0 %v2262
    %2391 = vmatpush1.msra.mxu0 %v2261
    %2392 = vmatprep.subr.mxu0 %v2266
    %2393 = vmatpush1.msra.mxu0 %v2265
    %2394 = vmatprep.subr.mxu0 %v2270
    %2395 = vmatpush1.msra.mxu0 %v2269
    %2396 = vmatprep.subr.mxu0 %v2274
    %2397 = vmatpush1.msra.mxu0 %v2273
    %2398 = vmatprep.subr.mxu0 %v2278
    %2399 = vmatpush1.msra.mxu0 %v2277
    %2400 = vmatprep.subr.mxu0 %v2282
    %2401 = vmatpush1.msra.mxu0 %v2281
    %2402 = vmatprep.subr.mxu0 %v2286
    %2403 = vmatpush1.msra.mxu0 %v2285
    %2404 = vmatprep.subr.mxu0 %v2290
    %2405 = vmatpush1.msra.mxu0 %v2289
    %2406 = vmatprep.subr.mxu0 %v2294
    %2407 = vmatpush1.msra.mxu0 %v2293
    %2408 = vmatprep.subr.mxu0 %v2298
    %2409 = vmatpush1.msra.mxu0 %v2297
    %2410 = vmatprep.subr.mxu0 %v2302
    %2411 = vmatpush1.msra.mxu0 %v2301
    %2412 = vmatprep.subr.mxu0 %v2306
    %2413 = vmatpush1.msra.mxu0 %v2305
    %2414 = vmatprep.subr.mxu0 %v2310
    %2415 = vmatpush1.msra.mxu0 %v2309
    %2416 = vmatprep.subr.mxu0 %v2314
    %2417 = vmatpush1.msra.mxu0 %v2313
    %2418 = vmatprep.subr.mxu0 0.0
    %2419 = vmatpush1.msra.mxu0 0.0
    %2420 = vmatprep.subr.mxu0 0.0
    %2421 = vmatpush1.msra.mxu0 0.0
    %2422 = vmatprep.subr.mxu0 0.0
    %2423 = vmatpush1.msra.mxu0 0.0
    %2424 = vmatprep.subr.mxu0 0.0
    %2425 = vmatpush1.msra.mxu0 0.0
    %2426 = vmatprep.subr.mxu0 0.0
    %2427 = vmatpush1.msra.mxu0 0.0
    %2428 = vmatprep.subr.mxu0 0.0
    %2429 = vmatpush1.msra.mxu0 0.0
    %2430 = vmatprep.subr.mxu0 0.0
    %2431 = vmatpush1.msra.mxu0 0.0
    %2432 = vmatprep.subr.mxu0 0.0
    %2433 = vmatpush1.msra.mxu0 0.0
    %2434 = vmatprep.subr.mxu0 0.0
    %2435 = vmatpush1.msra.mxu0 0.0
    %2436 = vmatprep.subr.mxu0 0.0
    %2437 = vmatpush1.msra.mxu0 0.0
    %2438 = vmatprep.subr.mxu0 0.0
    %2439 = vmatpush1.msra.mxu0 0.0
    %2440 = vmatprep.subr.mxu0 0.0
    %2441 = vmatpush1.msra.mxu0 0.0
    %2442 = vmatprep.subr.mxu0 0.0
    %2443 = vmatpush1.msra.mxu0 0.0
    %2444 = vmatprep.subr.mxu0 0.0
    %2445 = vmatpush1.msra.mxu0 0.0
    %2446 = vmatprep.subr.mxu0 0.0
    %2447 = vmatpush1.msra.mxu0 0.0
    %2448 = vmatprep.subr.mxu0 0.0
    %2449 = vmatpush1.msra.mxu0 0.0
    %2450 = vmatprep.mubr.f32.mxu0 0.0
    %2451 = vmatmul.mubr.f32.gmra.mrb[0].mxu0 %v2249
    %v2452 = vpop.f32.mrb[0].mxu0
    %v2453 = vadd.f32 0.0, %v2452
    %v2454 = vpop.f32.mrb[0].mxu0
    %v2455 = vadd.f32 0.0, %v2454
    %2456 = vdwg.mxu0
    %s2457 = scalar_lea.vmem [#allocation5], 288
    %v2458 = vld [vmem:[%s2457] sm:$0xff]
    %v2459 = vld [vmem:[%s2457 + $0x8] sm:$0xff]
    %v2460 = vld [vmem:[%s2457 + $0x10] sm:$0xff]
    %v2461 = vld [vmem:[%s2457 + $0x18] sm:$0xff]
    %v2462 = vadd.f32 %v2458, %v2382
    %v2463 = vadd.f32 %v2459, %v2384
    %v2464 = vadd.f32 %v2460, %v2453
    %v2465 = vadd.f32 %v2461, %v2455
    %v2466 = vmul.f32 %v2462, 0.5
    %v2467 = vtanh.pop %v2466
    %v2468 = vadd.f32 %v2467, 1.0
    %v2469 = vmul.f32 %v2468, 0.5
    %v2470 = vmul.f32 %v2463, 0.5
    %v2471 = vtanh.pop %v2470
    %v2472 = vadd.f32 %v2471, 1.0
    %v2473 = vmul.f32 %v2472, 0.5
    %v2474 = vtanh.pop %v2464
    %v2475 = vmul.f32 %v2465, 0.5
    %v2476 = vtanh.pop %v2475
    %v2477 = vadd.f32 %v2476, 1.0
    %v2478 = vmul.f32 %v2477, 0.5
    %v2479 = vmul.f32 %v2473, %v2250
    %v2480 = vmul.f32 %v2469, %v2474
    %v2481 = vadd.f32 %v2479, %v2480
    %v2482 = vtanh.pop %v2481
    %v2483 = vmul.f32 %v2478, %v2482
    %s2484 = scalar_lea.vmem [#allocation4], 72
    %2485 = vst [vmem:[%s2484] sm:$0xff] %v2483
    %2486 = vst [vmem:[#allocation2] sm:$0xff] %v2483
    %2487 = vst [vmem:[#allocation3] sm:$0xff] %v2481
    %v2488 = vld [vmem:[#allocation2] sm:$0xff]
    %v2489 = vld [vmem:[#allocation3] sm:$0xff]
    %v2490 = vld [vmem:[#allocation11] sm:$0xff]
    %v2491 = vld [vmem:[#allocation11 + $0x8] sm:$0xff]
    %v2492 = vld [vmem:[#allocation11 + $0x10] sm:$0xff]
    %v2493 = vld [vmem:[#allocation11 + $0x18] sm:$0xff]
    %v2494 = vld [vmem:[#allocation11 + $0x20] sm:$0xff]
    %v2495 = vld [vmem:[#allocation11 + $0x28] sm:$0xff]
    %v2496 = vld [vmem:[#allocation11 + $0x30] sm:$0xff]
    %v2497 = vld [vmem:[#allocation11 + $0x38] sm:$0xff]
    %v2498 = vld [vmem:[#allocation11 + $0x40] sm:$0xff]
    %v2499 = vld [vmem:[#allocation11 + $0x48] sm:$0xff]
    %v2500 = vld [vmem:[#allocation11 + $0x50] sm:$0xff]
    %v2501 = vld [vmem:[#allocation11 + $0x58] sm:$0xff]
    %v2502 = vld [vmem:[#allocation11 + $0x60] sm:$0xff]
    %v2503 = vld [vmem:[#allocation11 + $0x68] sm:$0xff]
    %v2504 = vld [vmem:[#allocation11 + $0x70] sm:$0xff]
    %v2505 = vld [vmem:[#allocation11 + $0x78] sm:$0xff]
    %v2506 = vld [vmem:[#allocation11 + $0x80] sm:$0xff]
    %v2507 = vld [vmem:[#allocation11 + $0x88] sm:$0xff]
    %v2508 = vld [vmem:[#allocation11 + $0x90] sm:$0xff]
    %v2509 = vld [vmem:[#allocation11 + $0x98] sm:$0xff]
    %v2510 = vld [vmem:[#allocation11 + $0xa0] sm:$0xff]
    %v2511 = vld [vmem:[#allocation11 + $0xa8] sm:$0xff]
    %v2512 = vld [vmem:[#allocation11 + $0xb0] sm:$0xff]
    %v2513 = vld [vmem:[#allocation11 + $0xb8] sm:$0xff]
    %v2514 = vld [vmem:[#allocation11 + $0xc0] sm:$0xff]
    %v2515 = vld [vmem:[#allocation11 + $0xc8] sm:$0xff]
    %v2516 = vld [vmem:[#allocation11 + $0xd0] sm:$0xff]
    %v2517 = vld [vmem:[#allocation11 + $0xd8] sm:$0xff]
    %v2518 = vld [vmem:[#allocation11 + $0xe0] sm:$0xff]
    %v2519 = vld [vmem:[#allocation11 + $0xe8] sm:$0xff]
    %v2520 = vld [vmem:[#allocation11 + $0xf0] sm:$0xff]
    %v2521 = vld [vmem:[#allocation11 + $0xf8] sm:$0xff]
    %v2522 = vld [vmem:[#allocation11 + $0x100] sm:$0xff]
    %v2523 = vld [vmem:[#allocation11 + $0x108] sm:$0xff]
    %v2524 = vld [vmem:[#allocation11 + $0x110] sm:$0xff]
    %v2525 = vld [vmem:[#allocation11 + $0x118] sm:$0xff]
    %v2526 = vld [vmem:[#allocation11 + $0x120] sm:$0xff]
    %v2527 = vld [vmem:[#allocation11 + $0x128] sm:$0xff]
    %v2528 = vld [vmem:[#allocation11 + $0x130] sm:$0xff]
    %v2529 = vld [vmem:[#allocation11 + $0x138] sm:$0xff]
    %v2530 = vld [vmem:[#allocation11 + $0x140] sm:$0xff]
    %v2531 = vld [vmem:[#allocation11 + $0x148] sm:$0xff]
    %v2532 = vld [vmem:[#allocation11 + $0x150] sm:$0xff]
    %v2533 = vld [vmem:[#allocation11 + $0x158] sm:$0xff]
    %v2534 = vld [vmem:[#allocation11 + $0x160] sm:$0xff]
    %v2535 = vld [vmem:[#allocation11 + $0x168] sm:$0xff]
    %v2536 = vld [vmem:[#allocation11 + $0x170] sm:$0xff]
    %v2537 = vld [vmem:[#allocation11 + $0x178] sm:$0xff]
    %v2538 = vld [vmem:[#allocation11 + $0x180] sm:$0xff]
    %v2539 = vld [vmem:[#allocation11 + $0x188] sm:$0xff]
    %v2540 = vld [vmem:[#allocation11 + $0x190] sm:$0xff]
    %v2541 = vld [vmem:[#allocation11 + $0x198] sm:$0xff]
    %v2542 = vld [vmem:[#allocation11 + $0x1a0] sm:$0xff]
    %v2543 = vld [vmem:[#allocation11 + $0x1a8] sm:$0xff]
    %v2544 = vld [vmem:[#allocation11 + $0x1b0] sm:$0xff]
    %v2545 = vld [vmem:[#allocation11 + $0x1b8] sm:$0xff]
    %v2546 = vld [vmem:[#allocation11 + $0x1c0] sm:$0xff]
    %v2547 = vld [vmem:[#allocation11 + $0x1c8] sm:$0xff]
    %v2548 = vld [vmem:[#allocation11 + $0x1d0] sm:$0xff]
    %v2549 = vld [vmem:[#allocation11 + $0x1d8] sm:$0xff]
    %v2550 = vld [vmem:[#allocation11 + $0x1e0] sm:$0xff]
    %v2551 = vld [vmem:[#allocation11 + $0x1e8] sm:$0xff]
    %v2552 = vld [vmem:[#allocation11 + $0x1f0] sm:$0xff]
    %v2553 = vld [vmem:[#allocation11 + $0x1f8] sm:$0xff]
    %2554 = vmatprep.subr.mxu0 %v2491
    %2555 = vmatpush1.msra.mxu0 %v2490
    %2556 = vmatprep.subr.mxu0 %v2495
    %2557 = vmatpush1.msra.mxu0 %v2494
    %2558 = vmatprep.subr.mxu0 %v2499
    %2559 = vmatpush1.msra.mxu0 %v2498
    %2560 = vmatprep.subr.mxu0 %v2503
    %2561 = vmatpush1.msra.mxu0 %v2502
    %2562 = vmatprep.subr.mxu0 %v2507
    %2563 = vmatpush1.msra.mxu0 %v2506
    %2564 = vmatprep.subr.mxu0 %v2511
    %2565 = vmatpush1.msra.mxu0 %v2510
    %2566 = vmatprep.subr.mxu0 %v2515
    %2567 = vmatpush1.msra.mxu0 %v2514
    %2568 = vmatprep.subr.mxu0 %v2519
    %2569 = vmatpush1.msra.mxu0 %v2518
    %2570 = vmatprep.subr.mxu0 %v2523
    %2571 = vmatpush1.msra.mxu0 %v2522
    %2572 = vmatprep.subr.mxu0 %v2527
    %2573 = vmatpush1.msra.mxu0 %v2526
    %2574 = vmatprep.subr.mxu0 %v2531
    %2575 = vmatpush1.msra.mxu0 %v2530
    %2576 = vmatprep.subr.mxu0 %v2535
    %2577 = vmatpush1.msra.mxu0 %v2534
    %2578 = vmatprep.subr.mxu0 %v2539
    %2579 = vmatpush1.msra.mxu0 %v2538
    %2580 = vmatprep.subr.mxu0 %v2543
    %2581 = vmatpush1.msra.mxu0 %v2542
    %2582 = vmatprep.subr.mxu0 %v2547
    %2583 = vmatpush1.msra.mxu0 %v2546
    %2584 = vmatprep.subr.mxu0 %v2551
    %2585 = vmatpush1.msra.mxu0 %v2550
    %2586 = vmatprep.subr.mxu0 0.0
    %2587 = vmatpush1.msra.mxu0 0.0
    %2588 = vmatprep.subr.mxu0 0.0
    %2589 = vmatpush1.msra.mxu0 0.0
    %2590 = vmatprep.subr.mxu0 0.0
    %2591 = vmatpush1.msra.mxu0 0.0
    %2592 = vmatprep.subr.mxu0 0.0
    %2593 = vmatpush1.msra.mxu0 0.0
    %2594 = vmatprep.subr.mxu0 0.0
    %2595 = vmatpush1.msra.mxu0 0.0
    %2596 = vmatprep.subr.mxu0 0.0
    %2597 = vmatpush1.msra.mxu0 0.0
    %2598 = vmatprep.subr.mxu0 0.0
    %2599 = vmatpush1.msra.mxu0 0.0
    %2600 = vmatprep.subr.mxu0 0.0
    %2601 = vmatpush1.msra.mxu0 0.0
    %2602 = vmatprep.subr.mxu0 0.0
    %2603 = vmatpush1.msra.mxu0 0.0
    %2604 = vmatprep.subr.mxu0 0.0
    %2605 = vmatpush1.msra.mxu0 0.0
    %2606 = vmatprep.subr.mxu0 0.0
    %2607 = vmatpush1.msra.mxu0 0.0
    %2608 = vmatprep.subr.mxu0 0.0
    %2609 = vmatpush1.msra.mxu0 0.0
    %2610 = vmatprep.subr.mxu0 0.0
    %2611 = vmatpush1.msra.mxu0 0.0
    %2612 = vmatprep.subr.mxu0 0.0
    %2613 = vmatpush1.msra.mxu0 0.0
    %2614 = vmatprep.subr.mxu0 0.0
    %2615 = vmatpush1.msra.mxu0 0.0
    %2616 = vmatprep.subr.mxu0 0.0
    %2617 = vmatpush1.msra.mxu0 0.0
    %2618 = vmatprep.mubr.f32.mxu0 0.0
    %2619 = vmatmul.mubr.f32.gmra.mrb[0].mxu0 %v2488
    %v2620 = vpop.f32.mrb[0].mxu0
    %v2621 = vadd.f32 0.0, %v2620
    %v2622 = vpop.f32.mrb[0].mxu0
    %v2623 = vadd.f32 0.0, %v2622
    %2624 = vdwg.mxu0
    %2625 = vmatprep.subr.mxu0 %v2493
    %2626 = vmatpush1.msra.mxu0 %v2492
    %2627 = vmatprep.subr.mxu0 %v2497
    %2628 = vmatpush1.msra.mxu0 %v2496
    %2629 = vmatprep.subr.mxu0 %v2501
    %2630 = vmatpush1.msra.mxu0 %v2500
    %2631 = vmatprep.subr.mxu0 %v2505
    %2632 = vmatpush1.msra.mxu0 %v2504
    %2633 = vmatprep.subr.mxu0 %v2509
    %2634 = vmatpush1.msra.mxu0 %v2508
    %2635 = vmatprep.subr.mxu0 %v2513
    %2636 = vmatpush1.msra.mxu0 %v2512
    %2637 = vmatprep.subr.mxu0 %v2517
    %2638 = vmatpush1.msra.mxu0 %v2516
    %2639 = vmatprep.subr.mxu0 %v2521
    %2640 = vmatpush1.msra.mxu0 %v2520
    %2641 = vmatprep.subr.mxu0 %v2525
    %2642 = vmatpush1.msra.mxu0 %v2524
    %2643 = vmatprep.subr.mxu0 %v2529
    %2644 = vmatpush1.msra.mxu0 %v2528
    %2645 = vmatprep.subr.mxu0 %v2533
    %2646 = vmatpush1.msra.mxu0 %v2532
    %2647 = vmatprep.subr.mxu0 %v2537
    %2648 = vmatpush1.msra.mxu0 %v2536
    %2649 = vmatprep.subr.mxu0 %v2541
    %2650 = vmatpush1.msra.mxu0 %v2540
    %2651 = vmatprep.subr.mxu0 %v2545
    %2652 = vmatpush1.msra.mxu0 %v2544
    %2653 = vmatprep.subr.mxu0 %v2549
    %2654 = vmatpush1.msra.mxu0 %v2548
    %2655 = vmatprep.subr.mxu0 %v2553
    %2656 = vmatpush1.msra.mxu0 %v2552
    %2657 = vmatprep.subr.mxu0 0.0
    %2658 = vmatpush1.msra.mxu0 0.0
    %2659 = vmatprep.subr.mxu0 0.0
    %2660 = vmatpush1.msra.mxu0 0.0
    %2661 = vmatprep.subr.mxu0 0.0
    %2662 = vmatpush1.msra.mxu0 0.0
    %2663 = vmatprep.subr.mxu0 0.0
    %2664 = vmatpush1.msra.mxu0 0.0
    %2665 = vmatprep.subr.mxu0 0.0
    %2666 = vmatpush1.msra.mxu0 0.0
    %2667 = vmatprep.subr.mxu0 0.0
    %2668 = vmatpush1.msra.mxu0 0.0
    %2669 = vmatprep.subr.mxu0 0.0
    %2670 = vmatpush1.msra.mxu0 0.0
    %2671 = vmatprep.subr.mxu0 0.0
    %2672 = vmatpush1.msra.mxu0 0.0
    %2673 = vmatprep.subr.mxu0 0.0
    %2674 = vmatpush1.msra.mxu0 0.0
    %2675 = vmatprep.subr.mxu0 0.0
    %2676 = vmatpush1.msra.mxu0 0.0
    %2677 = vmatprep.subr.mxu0 0.0
    %2678 = vmatpush1.msra.mxu0 0.0
    %2679 = vmatprep.subr.mxu0 0.0
    %2680 = vmatpush1.msra.mxu0 0.0
    %2681 = vmatprep.subr.mxu0 0.0
    %2682 = vmatpush1.msra.mxu0 0.0
    %2683 = vmatprep.subr.mxu0 0.0
    %2684 = vmatpush1.msra.mxu0 0.0
    %2685 = vmatprep.subr.mxu0 0.0
    %2686 = vmatpush1.msra.mxu0 0.0
    %2687 = vmatprep.subr.mxu0 0.0
    %2688 = vmatpush1.msra.mxu0 0.0
    %2689 = vmatprep.mubr.f32.mxu0 0.0
    %2690 = vmatmul.mubr.f32.gmra.mrb[0].mxu0 %v2488
    %v2691 = vpop.f32.mrb[0].mxu0
    %v2692 = vadd.f32 0.0, %v2691
    %v2693 = vpop.f32.mrb[0].mxu0
    %v2694 = vadd.f32 0.0, %v2693
    %2695 = vdwg.mxu0
    %s2696 = scalar_lea.vmem [#allocation5], 320
    %v2697 = vld [vmem:[%s2696] sm:$0xff]
    %v2698 = vld [vmem:[%s2696 + $0x8] sm:$0xff]
    %v2699 = vld [vmem:[%s2696 + $0x10] sm:$0xff]
    %v2700 = vld [vmem:[%s2696 + $0x18] sm:$0xff]
    %v2701 = vadd.f32 %v2697, %v2621
    %v2702 = vadd.f32 %v2698, %v2623
    %v2703 = vadd.f32 %v2699, %v2692
    %v2704 = vadd.f32 %v2700, %v2694
    %v2705 = vmul.f32 %v2701, 0.5
    %v2706 = vtanh.pop %v2705
    %v2707 = vadd.f32 %v2706, 1.0
    %v2708 = vmul.f32 %v2707, 0.5
    %v2709 = vmul.f32 %v2702, 0.5
    %v2710 = vtanh.pop %v2709
    %v2711 = vadd.f32 %v2710, 1.0
    %v2712 = vmul.f32 %v2711, 0.5
    %v2713 = vtanh.pop %v2703
    %v2714 = vmul.f32 %v2704, 0.5
    %v2715 = vtanh.pop %v2714
    %v2716 = vadd.f32 %v2715, 1.0
    %v2717 = vmul.f32 %v2716, 0.5
    %v2718 = vmul.f32 %v2712, %v2489
    %v2719 = vmul.f32 %v2708, %v2713
    %v2720 = vadd.f32 %v2718, %v2719
    %v2721 = vtanh.pop %v2720
    %v2722 = vmul.f32 %v2717, %v2721
    %s2723 = scalar_lea.vmem [#allocation4], 80
    %2724 = vst [vmem:[%s2723] sm:$0xff] %v2722
    %2725 = vst [vmem:[#allocation2] sm:$0xff] %v2722
    %2726 = vst [vmem:[#allocation3] sm:$0xff] %v2720
    %v2727 = vld [vmem:[#allocation2] sm:$0xff]
    %v2728 = vld [vmem:[#allocation3] sm:$0xff]
    %v2729 = vld [vmem:[#allocation11] sm:$0xff]
    %v2730 = vld [vmem:[#allocation11 + $0x8] sm:$0xff]
    %v2731 = vld [vmem:[#allocation11 + $0x10] sm:$0xff]
    %v2732 = vld [vmem:[#allocation11 + $0x18] sm:$0xff]
    %v2733 = vld [vmem:[#allocation11 + $0x20] sm:$0xff]
    %v2734 = vld [vmem:[#allocation11 + $0x28] sm:$0xff]
    %v2735 = vld [vmem:[#allocation11 + $0x30] sm:$0xff]
    %v2736 = vld [vmem:[#allocation11 + $0x38] sm:$0xff]
    %v2737 = vld [vmem:[#allocation11 + $0x40] sm:$0xff]
    %v2738 = vld [vmem:[#allocation11 + $0x48] sm:$0xff]
    %v2739 = vld [vmem:[#allocation11 + $0x50] sm:$0xff]
    %v2740 = vld [vmem:[#allocation11 + $0x58] sm:$0xff]
    %v2741 = vld [vmem:[#allocation11 + $0x60] sm:$0xff]
    %v2742 = vld [vmem:[#allocation11 + $0x68] sm:$0xff]
    %v2743 = vld [vmem:[#allocation11 + $0x70] sm:$0xff]
    %v2744 = vld [vmem:[#allocation11 + $0x78] sm:$0xff]
    %v2745 = vld [vmem:[#allocation11 + $0x80] sm:$0xff]
    %v2746 = vld [vmem:[#allocation11 + $0x88] sm:$0xff]
    %v2747 = vld [vmem:[#allocation11 + $0x90] sm:$0xff]
    %v2748 = vld [vmem:[#allocation11 + $0x98] sm:$0xff]
    %v2749 = vld [vmem:[#allocation11 + $0xa0] sm:$0xff]
    %v2750 = vld [vmem:[#allocation11 + $0xa8] sm:$0xff]
    %v2751 = vld [vmem:[#allocation11 + $0xb0] sm:$0xff]
    %v2752 = vld [vmem:[#allocation11 + $0xb8] sm:$0xff]
    %v2753 = vld [vmem:[#allocation11 + $0xc0] sm:$0xff]
    %v2754 = vld [vmem:[#allocation11 + $0xc8] sm:$0xff]
    %v2755 = vld [vmem:[#allocation11 + $0xd0] sm:$0xff]
    %v2756 = vld [vmem:[#allocation11 + $0xd8] sm:$0xff]
    %v2757 = vld [vmem:[#allocation11 + $0xe0] sm:$0xff]
    %v2758 = vld [vmem:[#allocation11 + $0xe8] sm:$0xff]
    %v2759 = vld [vmem:[#allocation11 + $0xf0] sm:$0xff]
    %v2760 = vld [vmem:[#allocation11 + $0xf8] sm:$0xff]
    %v2761 = vld [vmem:[#allocation11 + $0x100] sm:$0xff]
    %v2762 = vld [vmem:[#allocation11 + $0x108] sm:$0xff]
    %v2763 = vld [vmem:[#allocation11 + $0x110] sm:$0xff]
    %v2764 = vld [vmem:[#allocation11 + $0x118] sm:$0xff]
    %v2765 = vld [vmem:[#allocation11 + $0x120] sm:$0xff]
    %v2766 = vld [vmem:[#allocation11 + $0x128] sm:$0xff]
    %v2767 = vld [vmem:[#allocation11 + $0x130] sm:$0xff]
    %v2768 = vld [vmem:[#allocation11 + $0x138] sm:$0xff]
    %v2769 = vld [vmem:[#allocation11 + $0x140] sm:$0xff]
    %v2770 = vld [vmem:[#allocation11 + $0x148] sm:$0xff]
    %v2771 = vld [vmem:[#allocation11 + $0x150] sm:$0xff]
    %v2772 = vld [vmem:[#allocation11 + $0x158] sm:$0xff]
    %v2773 = vld [vmem:[#allocation11 + $0x160] sm:$0xff]
    %v2774 = vld [vmem:[#allocation11 + $0x168] sm:$0xff]
    %v2775 = vld [vmem:[#allocation11 + $0x170] sm:$0xff]
    %v2776 = vld [vmem:[#allocation11 + $0x178] sm:$0xff]
    %v2777 = vld [vmem:[#allocation11 + $0x180] sm:$0xff]
    %v2778 = vld [vmem:[#allocation11 + $0x188] sm:$0xff]
    %v2779 = vld [vmem:[#allocation11 + $0x190] sm:$0xff]
    %v2780 = vld [vmem:[#allocation11 + $0x198] sm:$0xff]
    %v2781 = vld [vmem:[#allocation11 + $0x1a0] sm:$0xff]
    %v2782 = vld [vmem:[#allocation11 + $0x1a8] sm:$0xff]
    %v2783 = vld [vmem:[#allocation11 + $0x1b0] sm:$0xff]
    %v2784 = vld [vmem:[#allocation11 + $0x1b8] sm:$0xff]
    %v2785 = vld [vmem:[#allocation11 + $0x1c0] sm:$0xff]
    %v2786 = vld [vmem:[#allocation11 + $0x1c8] sm:$0xff]
    %v2787 = vld [vmem:[#allocation11 + $0x1d0] sm:$0xff]
    %v2788 = vld [vmem:[#allocation11 + $0x1d8] sm:$0xff]
    %v2789 = vld [vmem:[#allocation11 + $0x1e0] sm:$0xff]
    %v2790 = vld [vmem:[#allocation11 + $0x1e8] sm:$0xff]
    %v2791 = vld [vmem:[#allocation11 + $0x1f0] sm:$0xff]
    %v2792 = vld [vmem:[#allocation11 + $0x1f8] sm:$0xff]
    %2793 = vmatprep.subr.mxu0 %v2730
    %2794 = vmatpush1.msra.mxu0 %v2729
    %2795 = vmatprep.subr.mxu0 %v2734
    %2796 = vmatpush1.msra.mxu0 %v2733
    %2797 = vmatprep.subr.mxu0 %v2738
    %2798 = vmatpush1.msra.mxu0 %v2737
    %2799 = vmatprep.subr.mxu0 %v2742
    %2800 = vmatpush1.msra.mxu0 %v2741
    %2801 = vmatprep.subr.mxu0 %v2746
    %2802 = vmatpush1.msra.mxu0 %v2745
    %2803 = vmatprep.subr.mxu0 %v2750
    %2804 = vmatpush1.msra.mxu0 %v2749
    %2805 = vmatprep.subr.mxu0 %v2754
    %2806 = vmatpush1.msra.mxu0 %v2753
    %2807 = vmatprep.subr.mxu0 %v2758
    %2808 = vmatpush1.msra.mxu0 %v2757
    %2809 = vmatprep.subr.mxu0 %v2762
    %2810 = vmatpush1.msra.mxu0 %v2761
    %2811 = vmatprep.subr.mxu0 %v2766
    %2812 = vmatpush1.msra.mxu0 %v2765
    %2813 = vmatprep.subr.mxu0 %v2770
    %2814 = vmatpush1.msra.mxu0 %v2769
    %2815 = vmatprep.subr.mxu0 %v2774
    %2816 = vmatpush1.msra.mxu0 %v2773
    %2817 = vmatprep.subr.mxu0 %v2778
    %2818 = vmatpush1.msra.mxu0 %v2777
    %2819 = vmatprep.subr.mxu0 %v2782
    %2820 = vmatpush1.msra.mxu0 %v2781
    %2821 = vmatprep.subr.mxu0 %v2786
    %2822 = vmatpush1.msra.mxu0 %v2785
    %2823 = vmatprep.subr.mxu0 %v2790
    %2824 = vmatpush1.msra.mxu0 %v2789
    %2825 = vmatprep.subr.mxu0 0.0
    %2826 = vmatpush1.msra.mxu0 0.0
    %2827 = vmatprep.subr.mxu0 0.0
    %2828 = vmatpush1.msra.mxu0 0.0
    %2829 = vmatprep.subr.mxu0 0.0
    %2830 = vmatpush1.msra.mxu0 0.0
    %2831 = vmatprep.subr.mxu0 0.0
    %2832 = vmatpush1.msra.mxu0 0.0
    %2833 = vmatprep.subr.mxu0 0.0
    %2834 = vmatpush1.msra.mxu0 0.0
    %2835 = vmatprep.subr.mxu0 0.0
    %2836 = vmatpush1.msra.mxu0 0.0
    %2837 = vmatprep.subr.mxu0 0.0
    %2838 = vmatpush1.msra.mxu0 0.0
    %2839 = vmatprep.subr.mxu0 0.0
    %2840 = vmatpush1.msra.mxu0 0.0
    %2841 = vmatprep.subr.mxu0 0.0
    %2842 = vmatpush1.msra.mxu0 0.0
    %2843 = vmatprep.subr.mxu0 0.0
    %2844 = vmatpush1.msra.mxu0 0.0
    %2845 = vmatprep.subr.mxu0 0.0
    %2846 = vmatpush1.msra.mxu0 0.0
    %2847 = vmatprep.subr.mxu0 0.0
    %2848 = vmatpush1.msra.mxu0 0.0
    %2849 = vmatprep.subr.mxu0 0.0
    %2850 = vmatpush1.msra.mxu0 0.0
    %2851 = vmatprep.subr.mxu0 0.0
    %2852 = vmatpush1.msra.mxu0 0.0
    %2853 = vmatprep.subr.mxu0 0.0
    %2854 = vmatpush1.msra.mxu0 0.0
    %2855 = vmatprep.subr.mxu0 0.0
    %2856 = vmatpush1.msra.mxu0 0.0
    %2857 = vmatprep.mubr.f32.mxu0 0.0
    %2858 = vmatmul.mubr.f32.gmra.mrb[0].mxu0 %v2727
    %v2859 = vpop.f32.mrb[0].mxu0
    %v2860 = vadd.f32 0.0, %v2859
    %v2861 = vpop.f32.mrb[0].mxu0
    %v2862 = vadd.f32 0.0, %v2861
    %2863 = vdwg.mxu0
    %2864 = vmatprep.subr.mxu0 %v2732
    %2865 = vmatpush1.msra.mxu0 %v2731
    %2866 = vmatprep.subr.mxu0 %v2736
    %2867 = vmatpush1.msra.mxu0 %v2735
    %2868 = vmatprep.subr.mxu0 %v2740
    %2869 = vmatpush1.msra.mxu0 %v2739
    %2870 = vmatprep.subr.mxu0 %v2744
    %2871 = vmatpush1.msra.mxu0 %v2743
    %2872 = vmatprep.subr.mxu0 %v2748
    %2873 = vmatpush1.msra.mxu0 %v2747
    %2874 = vmatprep.subr.mxu0 %v2752
    %2875 = vmatpush1.msra.mxu0 %v2751
    %2876 = vmatprep.subr.mxu0 %v2756
    %2877 = vmatpush1.msra.mxu0 %v2755
    %2878 = vmatprep.subr.mxu0 %v2760
    %2879 = vmatpush1.msra.mxu0 %v2759
    %2880 = vmatprep.subr.mxu0 %v2764
    %2881 = vmatpush1.msra.mxu0 %v2763
    %2882 = vmatprep.subr.mxu0 %v2768
    %2883 = vmatpush1.msra.mxu0 %v2767
    %2884 = vmatprep.subr.mxu0 %v2772
    %2885 = vmatpush1.msra.mxu0 %v2771
    %2886 = vmatprep.subr.mxu0 %v2776
    %2887 = vmatpush1.msra.mxu0 %v2775
    %2888 = vmatprep.subr.mxu0 %v2780
    %2889 = vmatpush1.msra.mxu0 %v2779
    %2890 = vmatprep.subr.mxu0 %v2784
    %2891 = vmatpush1.msra.mxu0 %v2783
    %2892 = vmatprep.subr.mxu0 %v2788
    %2893 = vmatpush1.msra.mxu0 %v2787
    %2894 = vmatprep.subr.mxu0 %v2792
    %2895 = vmatpush1.msra.mxu0 %v2791
    %2896 = vmatprep.subr.mxu0 0.0
    %2897 = vmatpush1.msra.mxu0 0.0
    %2898 = vmatprep.subr.mxu0 0.0
    %2899 = vmatpush1.msra.mxu0 0.0
    %2900 = vmatprep.subr.mxu0 0.0
    %2901 = vmatpush1.msra.mxu0 0.0
    %2902 = vmatprep.subr.mxu0 0.0
    %2903 = vmatpush1.msra.mxu0 0.0
    %2904 = vmatprep.subr.mxu0 0.0
    %2905 = vmatpush1.msra.mxu0 0.0
    %2906 = vmatprep.subr.mxu0 0.0
    %2907 = vmatpush1.msra.mxu0 0.0
    %2908 = vmatprep.subr.mxu0 0.0
    %2909 = vmatpush1.msra.mxu0 0.0
    %2910 = vmatprep.subr.mxu0 0.0
    %2911 = vmatpush1.msra.mxu0 0.0
    %2912 = vmatprep.subr.mxu0 0.0
    %2913 = vmatpush1.msra.mxu0 0.0
    %2914 = vmatprep.subr.mxu0 0.0
    %2915 = vmatpush1.msra.mxu0 0.0
    %2916 = vmatprep.subr.mxu0 0.0
    %2917 = vmatpush1.msra.mxu0 0.0
    %2918 = vmatprep.subr.mxu0 0.0
    %2919 = vmatpush1.msra.mxu0 0.0
    %2920 = vmatprep.subr.mxu0 0.0
    %2921 = vmatpush1.msra.mxu0 0.0
    %2922 = vmatprep.subr.mxu0 0.0
    %2923 = vmatpush1.msra.mxu0 0.0
    %2924 = vmatprep.subr.mxu0 0.0
    %2925 = vmatpush1.msra.mxu0 0.0
    %2926 = vmatprep.subr.mxu0 0.0
    %2927 = vmatpush1.msra.mxu0 0.0
    %2928 = vmatprep.mubr.f32.mxu0 0.0
    %2929 = vmatmul.mubr.f32.gmra.mrb[0].mxu0 %v2727
    %v2930 = vpop.f32.mrb[0].mxu0
    %v2931 = vadd.f32 0.0, %v2930
    %v2932 = vpop.f32.mrb[0].mxu0
    %v2933 = vadd.f32 0.0, %v2932
    %2934 = vdwg.mxu0
    %s2935 = scalar_lea.vmem [#allocation5], 352
    %v2936 = vld [vmem:[%s2935] sm:$0xff]
    %v2937 = vld [vmem:[%s2935 + $0x8] sm:$0xff]
    %v2938 = vld [vmem:[%s2935 + $0x10] sm:$0xff]
    %v2939 = vld [vmem:[%s2935 + $0x18] sm:$0xff]
    %v2940 = vadd.f32 %v2936, %v2860
    %v2941 = vadd.f32 %v2937, %v2862
    %v2942 = vadd.f32 %v2938, %v2931
    %v2943 = vadd.f32 %v2939, %v2933
    %v2944 = vmul.f32 %v2940, 0.5
    %v2945 = vtanh.pop %v2944
    %v2946 = vadd.f32 %v2945, 1.0
    %v2947 = vmul.f32 %v2946, 0.5
    %v2948 = vmul.f32 %v2941, 0.5
    %v2949 = vtanh.pop %v2948
    %v2950 = vadd.f32 %v2949, 1.0
    %v2951 = vmul.f32 %v2950, 0.5
    %v2952 = vtanh.pop %v2942
    %v2953 = vmul.f32 %v2943, 0.5
    %v2954 = vtanh.pop %v2953
    %v2955 = vadd.f32 %v2954, 1.0
    %v2956 = vmul.f32 %v2955, 0.5
    %v2957 = vmul.f32 %v2951, %v2728
    %v2958 = vmul.f32 %v2947, %v2952
    %v2959 = vadd.f32 %v2957, %v2958
    %v2960 = vtanh.pop %v2959
    %v2961 = vmul.f32 %v2956, %v2960
    %s2962 = scalar_lea.vmem [#allocation4], 88
    %2963 = vst [vmem:[%s2962] sm:$0xff] %v2961
    %2964 = vst [vmem:[#allocation2] sm:$0xff] %v2961
    %2965 = vst [vmem:[#allocation3] sm:$0xff] %v2959
    %v2966 = vld [vmem:[#allocation2] sm:$0xff]
    %v2967 = vld [vmem:[#allocation3] sm:$0xff]
    %v2968 = vld [vmem:[#allocation11] sm:$0xff]
    %v2969 = vld [vmem:[#allocation11 + $0x8] sm:$0xff]
    %v2970 = vld [vmem:[#allocation11 + $0x10] sm:$0xff]
    %v2971 = vld [vmem:[#allocation11 + $0x18] sm:$0xff]
    %v2972 = vld [vmem:[#allocation11 + $0x20] sm:$0xff]
    %v2973 = vld [vmem:[#allocation11 + $0x28] sm:$0xff]
    %v2974 = vld [vmem:[#allocation11 + $0x30] sm:$0xff]
    %v2975 = vld [vmem:[#allocation11 + $0x38] sm:$0xff]
    %v2976 = vld [vmem:[#allocation11 + $0x40] sm:$0xff]
    %v2977 = vld [vmem:[#allocation11 + $0x48] sm:$0xff]
    %v2978 = vld [vmem:[#allocation11 + $0x50] sm:$0xff]
    %v2979 = vld [vmem:[#allocation11 + $0x58] sm:$0xff]
    %v2980 = vld [vmem:[#allocation11 + $0x60] sm:$0xff]
    %v2981 = vld [vmem:[#allocation11 + $0x68] sm:$0xff]
    %v2982 = vld [vmem:[#allocation11 + $0x70] sm:$0xff]
    %v2983 = vld [vmem:[#allocation11 + $0x78] sm:$0xff]
    %v2984 = vld [vmem:[#allocation11 + $0x80] sm:$0xff]
    %v2985 = vld [vmem:[#allocation11 + $0x88] sm:$0xff]
    %v2986 = vld [vmem:[#allocation11 + $0x90] sm:$0xff]
    %v2987 = vld [vmem:[#allocation11 + $0x98] sm:$0xff]
    %v2988 = vld [vmem:[#allocation11 + $0xa0] sm:$0xff]
    %v2989 = vld [vmem:[#allocation11 + $0xa8] sm:$0xff]
    %v2990 = vld [vmem:[#allocation11 + $0xb0] sm:$0xff]
    %v2991 = vld [vmem:[#allocation11 + $0xb8] sm:$0xff]
    %v2992 = vld [vmem:[#allocation11 + $0xc0] sm:$0xff]
    %v2993 = vld [vmem:[#allocation11 + $0xc8] sm:$0xff]
    %v2994 = vld [vmem:[#allocation11 + $0xd0] sm:$0xff]
    %v2995 = vld [vmem:[#allocation11 + $0xd8] sm:$0xff]
    %v2996 = vld [vmem:[#allocation11 + $0xe0] sm:$0xff]
    %v2997 = vld [vmem:[#allocation11 + $0xe8] sm:$0xff]
    %v2998 = vld [vmem:[#allocation11 + $0xf0] sm:$0xff]
    %v2999 = vld [vmem:[#allocation11 + $0xf8] sm:$0xff]
    %v3000 = vld [vmem:[#allocation11 + $0x100] sm:$0xff]
    %v3001 = vld [vmem:[#allocation11 + $0x108] sm:$0xff]
    %v3002 = vld [vmem:[#allocation11 + $0x110] sm:$0xff]
    %v3003 = vld [vmem:[#allocation11 + $0x118] sm:$0xff]
    %v3004 = vld [vmem:[#allocation11 + $0x120] sm:$0xff]
    %v3005 = vld [vmem:[#allocation11 + $0x128] sm:$0xff]
    %v3006 = vld [vmem:[#allocation11 + $0x130] sm:$0xff]
    %v3007 = vld [vmem:[#allocation11 + $0x138] sm:$0xff]
    %v3008 = vld [vmem:[#allocation11 + $0x140] sm:$0xff]
    %v3009 = vld [vmem:[#allocation11 + $0x148] sm:$0xff]
    %v3010 = vld [vmem:[#allocation11 + $0x150] sm:$0xff]
    %v3011 = vld [vmem:[#allocation11 + $0x158] sm:$0xff]
    %v3012 = vld [vmem:[#allocation11 + $0x160] sm:$0xff]
    %v3013 = vld [vmem:[#allocation11 + $0x168] sm:$0xff]
    %v3014 = vld [vmem:[#allocation11 + $0x170] sm:$0xff]
    %v3015 = vld [vmem:[#allocation11 + $0x178] sm:$0xff]
    %v3016 = vld [vmem:[#allocation11 + $0x180] sm:$0xff]
    %v3017 = vld [vmem:[#allocation11 + $0x188] sm:$0xff]
    %v3018 = vld [vmem:[#allocation11 + $0x190] sm:$0xff]
    %v3019 = vld [vmem:[#allocation11 + $0x198] sm:$0xff]
    %v3020 = vld [vmem:[#allocation11 + $0x1a0] sm:$0xff]
    %v3021 = vld [vmem:[#allocation11 + $0x1a8] sm:$0xff]
    %v3022 = vld [vmem:[#allocation11 + $0x1b0] sm:$0xff]
    %v3023 = vld [vmem:[#allocation11 + $0x1b8] sm:$0xff]
    %v3024 = vld [vmem:[#allocation11 + $0x1c0] sm:$0xff]
    %v3025 = vld [vmem:[#allocation11 + $0x1c8] sm:$0xff]
    %v3026 = vld [vmem:[#allocation11 + $0x1d0] sm:$0xff]
    %v3027 = vld [vmem:[#allocation11 + $0x1d8] sm:$0xff]
    %v3028 = vld [vmem:[#allocation11 + $0x1e0] sm:$0xff]
    %v3029 = vld [vmem:[#allocation11 + $0x1e8] sm:$0xff]
    %v3030 = vld [vmem:[#allocation11 + $0x1f0] sm:$0xff]
    %v3031 = vld [vmem:[#allocation11 + $0x1f8] sm:$0xff]
    %3032 = vmatprep.subr.mxu0 %v2969
    %3033 = vmatpush1.msra.mxu0 %v2968
    %3034 = vmatprep.subr.mxu0 %v2973
    %3035 = vmatpush1.msra.mxu0 %v2972
    %3036 = vmatprep.subr.mxu0 %v2977
    %3037 = vmatpush1.msra.mxu0 %v2976
    %3038 = vmatprep.subr.mxu0 %v2981
    %3039 = vmatpush1.msra.mxu0 %v2980
    %3040 = vmatprep.subr.mxu0 %v2985
    %3041 = vmatpush1.msra.mxu0 %v2984
    %3042 = vmatprep.subr.mxu0 %v2989
    %3043 = vmatpush1.msra.mxu0 %v2988
    %3044 = vmatprep.subr.mxu0 %v2993
    %3045 = vmatpush1.msra.mxu0 %v2992
    %3046 = vmatprep.subr.mxu0 %v2997
    %3047 = vmatpush1.msra.mxu0 %v2996
    %3048 = vmatprep.subr.mxu0 %v3001
    %3049 = vmatpush1.msra.mxu0 %v3000
    %3050 = vmatprep.subr.mxu0 %v3005
    %3051 = vmatpush1.msra.mxu0 %v3004
    %3052 = vmatprep.subr.mxu0 %v3009
    %3053 = vmatpush1.msra.mxu0 %v3008
    %3054 = vmatprep.subr.mxu0 %v3013
    %3055 = vmatpush1.msra.mxu0 %v3012
    %3056 = vmatprep.subr.mxu0 %v3017
    %3057 = vmatpush1.msra.mxu0 %v3016
    %3058 = vmatprep.subr.mxu0 %v3021
    %3059 = vmatpush1.msra.mxu0 %v3020
    %3060 = vmatprep.subr.mxu0 %v3025
    %3061 = vmatpush1.msra.mxu0 %v3024
    %3062 = vmatprep.subr.mxu0 %v3029
    %3063 = vmatpush1.msra.mxu0 %v3028
    %3064 = vmatprep.subr.mxu0 0.0
    %3065 = vmatpush1.msra.mxu0 0.0
    %3066 = vmatprep.subr.mxu0 0.0
    %3067 = vmatpush1.msra.mxu0 0.0
    %3068 = vmatprep.subr.mxu0 0.0
    %3069 = vmatpush1.msra.mxu0 0.0
    %3070 = vmatprep.subr.mxu0 0.0
    %3071 = vmatpush1.msra.mxu0 0.0
    %3072 = vmatprep.subr.mxu0 0.0
    %3073 = vmatpush1.msra.mxu0 0.0
    %3074 = vmatprep.subr.mxu0 0.0
    %3075 = vmatpush1.msra.mxu0 0.0
    %3076 = vmatprep.subr.mxu0 0.0
    %3077 = vmatpush1.msra.mxu0 0.0
    %3078 = vmatprep.subr.mxu0 0.0
    %3079 = vmatpush1.msra.mxu0 0.0
    %3080 = vmatprep.subr.mxu0 0.0
    %3081 = vmatpush1.msra.mxu0 0.0
    %3082 = vmatprep.subr.mxu0 0.0
    %3083 = vmatpush1.msra.mxu0 0.0
    %3084 = vmatprep.subr.mxu0 0.0
    %3085 = vmatpush1.msra.mxu0 0.0
    %3086 = vmatprep.subr.mxu0 0.0
    %3087 = vmatpush1.msra.mxu0 0.0
    %3088 = vmatprep.subr.mxu0 0.0
    %3089 = vmatpush1.msra.mxu0 0.0
    %3090 = vmatprep.subr.mxu0 0.0
    %3091 = vmatpush1.msra.mxu0 0.0
    %3092 = vmatprep.subr.mxu0 0.0
    %3093 = vmatpush1.msra.mxu0 0.0
    %3094 = vmatprep.subr.mxu0 0.0
    %3095 = vmatpush1.msra.mxu0 0.0
    %3096 = vmatprep.mubr.f32.mxu0 0.0
    %3097 = vmatmul.mubr.f32.gmra.mrb[0].mxu0 %v2966
    %v3098 = vpop.f32.mrb[0].mxu0
    %v3099 = vadd.f32 0.0, %v3098
    %v3100 = vpop.f32.mrb[0].mxu0
    %v3101 = vadd.f32 0.0, %v3100
    %3102 = vdwg.mxu0
    %3103 = vmatprep.subr.mxu0 %v2971
    %3104 = vmatpush1.msra.mxu0 %v2970
    %3105 = vmatprep.subr.mxu0 %v2975
    %3106 = vmatpush1.msra.mxu0 %v2974
    %3107 = vmatprep.subr.mxu0 %v2979
    %3108 = vmatpush1.msra.mxu0 %v2978
    %3109 = vmatprep.subr.mxu0 %v2983
    %3110 = vmatpush1.msra.mxu0 %v2982
    %3111 = vmatprep.subr.mxu0 %v2987
    %3112 = vmatpush1.msra.mxu0 %v2986
    %3113 = vmatprep.subr.mxu0 %v2991
    %3114 = vmatpush1.msra.mxu0 %v2990
    %3115 = vmatprep.subr.mxu0 %v2995
    %3116 = vmatpush1.msra.mxu0 %v2994
    %3117 = vmatprep.subr.mxu0 %v2999
    %3118 = vmatpush1.msra.mxu0 %v2998
    %3119 = vmatprep.subr.mxu0 %v3003
    %3120 = vmatpush1.msra.mxu0 %v3002
    %3121 = vmatprep.subr.mxu0 %v3007
    %3122 = vmatpush1.msra.mxu0 %v3006
    %3123 = vmatprep.subr.mxu0 %v3011
    %3124 = vmatpush1.msra.mxu0 %v3010
    %3125 = vmatprep.subr.mxu0 %v3015
    %3126 = vmatpush1.msra.mxu0 %v3014
    %3127 = vmatprep.subr.mxu0 %v3019
    %3128 = vmatpush1.msra.mxu0 %v3018
    %3129 = vmatprep.subr.mxu0 %v3023
    %3130 = vmatpush1.msra.mxu0 %v3022
    %3131 = vmatprep.subr.mxu0 %v3027
    %3132 = vmatpush1.msra.mxu0 %v3026
    %3133 = vmatprep.subr.mxu0 %v3031
    %3134 = vmatpush1.msra.mxu0 %v3030
    %3135 = vmatprep.subr.mxu0 0.0
    %3136 = vmatpush1.msra.mxu0 0.0
    %3137 = vmatprep.subr.mxu0 0.0
    %3138 = vmatpush1.msra.mxu0 0.0
    %3139 = vmatprep.subr.mxu0 0.0
    %3140 = vmatpush1.msra.mxu0 0.0
    %3141 = vmatprep.subr.mxu0 0.0
    %3142 = vmatpush1.msra.mxu0 0.0
    %3143 = vmatprep.subr.mxu0 0.0
    %3144 = vmatpush1.msra.mxu0 0.0
    %3145 = vmatprep.subr.mxu0 0.0
    %3146 = vmatpush1.msra.mxu0 0.0
    %3147 = vmatprep.subr.mxu0 0.0
    %3148 = vmatpush1.msra.mxu0 0.0
    %3149 = vmatprep.subr.mxu0 0.0
    %3150 = vmatpush1.msra.mxu0 0.0
    %3151 = vmatprep.subr.mxu0 0.0
    %3152 = vmatpush1.msra.mxu0 0.0
    %3153 = vmatprep.subr.mxu0 0.0
    %3154 = vmatpush1.msra.mxu0 0.0
    %3155 = vmatprep.subr.mxu0 0.0
    %3156 = vmatpush1.msra.mxu0 0.0
    %3157 = vmatprep.subr.mxu0 0.0
    %3158 = vmatpush1.msra.mxu0 0.0
    %3159 = vmatprep.subr.mxu0 0.0
    %3160 = vmatpush1.msra.mxu0 0.0
    %3161 = vmatprep.subr.mxu0 0.0
    %3162 = vmatpush1.msra.mxu0 0.0
    %3163 = vmatprep.subr.mxu0 0.0
    %3164 = vmatpush1.msra.mxu0 0.0
    %3165 = vmatprep.subr.mxu0 0.0
    %3166 = vmatpush1.msra.mxu0 0.0
    %3167 = vmatprep.mubr.f32.mxu0 0.0
    %3168 = vmatmul.mubr.f32.gmra.mrb[0].mxu0 %v2966
    %v3169 = vpop.f32.mrb[0].mxu0
    %v3170 = vadd.f32 0.0, %v3169
    %v3171 = vpop.f32.mrb[0].mxu0
    %v3172 = vadd.f32 0.0, %v3171
    %3173 = vdwg.mxu0
    %s3174 = scalar_lea.vmem [#allocation5], 384
    %v3175 = vld [vmem:[%s3174] sm:$0xff]
    %v3176 = vld [vmem:[%s3174 + $0x8] sm:$0xff]
    %v3177 = vld [vmem:[%s3174 + $0x10] sm:$0xff]
    %v3178 = vld [vmem:[%s3174 + $0x18] sm:$0xff]
    %v3179 = vadd.f32 %v3175, %v3099
    %v3180 = vadd.f32 %v3176, %v3101
    %v3181 = vadd.f32 %v3177, %v3170
    %v3182 = vadd.f32 %v3178, %v3172
    %v3183 = vmul.f32 %v3179, 0.5
    %v3184 = vtanh.pop %v3183
    %v3185 = vadd.f32 %v3184, 1.0
    %v3186 = vmul.f32 %v3185, 0.5
    %v3187 = vmul.f32 %v3180, 0.5
    %v3188 = vtanh.pop %v3187
    %v3189 = vadd.f32 %v3188, 1.0
    %v3190 = vmul.f32 %v3189, 0.5
    %v3191 = vtanh.pop %v3181
    %v3192 = vmul.f32 %v3182, 0.5
    %v3193 = vtanh.pop %v3192
    %v3194 = vadd.f32 %v3193, 1.0
    %v3195 = vmul.f32 %v3194, 0.5
    %v3196 = vmul.f32 %v3190, %v2967
    %v3197 = vmul.f32 %v3186, %v3191
    %v3198 = vadd.f32 %v3196, %v3197
    %v3199 = vtanh.pop %v3198
    %v3200 = vmul.f32 %v3195, %v3199
    %s3201 = scalar_lea.vmem [#allocation4], 96
    %3202 = vst [vmem:[%s3201] sm:$0xff] %v3200
    %3203 = vst [vmem:[#allocation2] sm:$0xff] %v3200
    %3204 = vst [vmem:[#allocation3] sm:$0xff] %v3198
    %v3205 = vld [vmem:[#allocation2] sm:$0xff]
    %v3206 = vld [vmem:[#allocation3] sm:$0xff]
    %v3207 = vld [vmem:[#allocation11] sm:$0xff]
    %v3208 = vld [vmem:[#allocation11 + $0x8] sm:$0xff]
    %v3209 = vld [vmem:[#allocation11 + $0x10] sm:$0xff]
    %v3210 = vld [vmem:[#allocation11 + $0x18] sm:$0xff]
    %v3211 = vld [vmem:[#allocation11 + $0x20] sm:$0xff]
    %v3212 = vld [vmem:[#allocation11 + $0x28] sm:$0xff]
    %v3213 = vld [vmem:[#allocation11 + $0x30] sm:$0xff]
    %v3214 = vld [vmem:[#allocation11 + $0x38] sm:$0xff]
    %v3215 = vld [vmem:[#allocation11 + $0x40] sm:$0xff]
    %v3216 = vld [vmem:[#allocation11 + $0x48] sm:$0xff]
    %v3217 = vld [vmem:[#allocation11 + $0x50] sm:$0xff]
    %v3218 = vld [vmem:[#allocation11 + $0x58] sm:$0xff]
    %v3219 = vld [vmem:[#allocation11 + $0x60] sm:$0xff]
    %v3220 = vld [vmem:[#allocation11 + $0x68] sm:$0xff]
    %v3221 = vld [vmem:[#allocation11 + $0x70] sm:$0xff]
    %v3222 = vld [vmem:[#allocation11 + $0x78] sm:$0xff]
    %v3223 = vld [vmem:[#allocation11 + $0x80] sm:$0xff]
    %v3224 = vld [vmem:[#allocation11 + $0x88] sm:$0xff]
    %v3225 = vld [vmem:[#allocation11 + $0x90] sm:$0xff]
    %v3226 = vld [vmem:[#allocation11 + $0x98] sm:$0xff]
    %v3227 = vld [vmem:[#allocation11 + $0xa0] sm:$0xff]
    %v3228 = vld [vmem:[#allocation11 + $0xa8] sm:$0xff]
    %v3229 = vld [vmem:[#allocation11 + $0xb0] sm:$0xff]
    %v3230 = vld [vmem:[#allocation11 + $0xb8] sm:$0xff]
    %v3231 = vld [vmem:[#allocation11 + $0xc0] sm:$0xff]
    %v3232 = vld [vmem:[#allocation11 + $0xc8] sm:$0xff]
    %v3233 = vld [vmem:[#allocation11 + $0xd0] sm:$0xff]
    %v3234 = vld [vmem:[#allocation11 + $0xd8] sm:$0xff]
    %v3235 = vld [vmem:[#allocation11 + $0xe0] sm:$0xff]
    %v3236 = vld [vmem:[#allocation11 + $0xe8] sm:$0xff]
    %v3237 = vld [vmem:[#allocation11 + $0xf0] sm:$0xff]
    %v3238 = vld [vmem:[#allocation11 + $0xf8] sm:$0xff]
    %v3239 = vld [vmem:[#allocation11 + $0x100] sm:$0xff]
    %v3240 = vld [vmem:[#allocation11 + $0x108] sm:$0xff]
    %v3241 = vld [vmem:[#allocation11 + $0x110] sm:$0xff]
    %v3242 = vld [vmem:[#allocation11 + $0x118] sm:$0xff]
    %v3243 = vld [vmem:[#allocation11 + $0x120] sm:$0xff]
    %v3244 = vld [vmem:[#allocation11 + $0x128] sm:$0xff]
    %v3245 = vld [vmem:[#allocation11 + $0x130] sm:$0xff]
    %v3246 = vld [vmem:[#allocation11 + $0x138] sm:$0xff]
    %v3247 = vld [vmem:[#allocation11 + $0x140] sm:$0xff]
    %v3248 = vld [vmem:[#allocation11 + $0x148] sm:$0xff]
    %v3249 = vld [vmem:[#allocation11 + $0x150] sm:$0xff]
    %v3250 = vld [vmem:[#allocation11 + $0x158] sm:$0xff]
    %v3251 = vld [vmem:[#allocation11 + $0x160] sm:$0xff]
    %v3252 = vld [vmem:[#allocation11 + $0x168] sm:$0xff]
    %v3253 = vld [vmem:[#allocation11 + $0x170] sm:$0xff]
    %v3254 = vld [vmem:[#allocation11 + $0x178] sm:$0xff]
    %v3255 = vld [vmem:[#allocation11 + $0x180] sm:$0xff]
    %v3256 = vld [vmem:[#allocation11 + $0x188] sm:$0xff]
    %v3257 = vld [vmem:[#allocation11 + $0x190] sm:$0xff]
    %v3258 = vld [vmem:[#allocation11 + $0x198] sm:$0xff]
    %v3259 = vld [vmem:[#allocation11 + $0x1a0] sm:$0xff]
    %v3260 = vld [vmem:[#allocation11 + $0x1a8] sm:$0xff]
    %v3261 = vld [vmem:[#allocation11 + $0x1b0] sm:$0xff]
    %v3262 = vld [vmem:[#allocation11 + $0x1b8] sm:$0xff]
    %v3263 = vld [vmem:[#allocation11 + $0x1c0] sm:$0xff]
    %v3264 = vld [vmem:[#allocation11 + $0x1c8] sm:$0xff]
    %v3265 = vld [vmem:[#allocation11 + $0x1d0] sm:$0xff]
    %v3266 = vld [vmem:[#allocation11 + $0x1d8] sm:$0xff]
    %v3267 = vld [vmem:[#allocation11 + $0x1e0] sm:$0xff]
    %v3268 = vld [vmem:[#allocation11 + $0x1e8] sm:$0xff]
    %v3269 = vld [vmem:[#allocation11 + $0x1f0] sm:$0xff]
    %v3270 = vld [vmem:[#allocation11 + $0x1f8] sm:$0xff]
    %3271 = vmatprep.subr.mxu0 %v3208
    %3272 = vmatpush1.msra.mxu0 %v3207
    %3273 = vmatprep.subr.mxu0 %v3212
    %3274 = vmatpush1.msra.mxu0 %v3211
    %3275 = vmatprep.subr.mxu0 %v3216
    %3276 = vmatpush1.msra.mxu0 %v3215
    %3277 = vmatprep.subr.mxu0 %v3220
    %3278 = vmatpush1.msra.mxu0 %v3219
    %3279 = vmatprep.subr.mxu0 %v3224
    %3280 = vmatpush1.msra.mxu0 %v3223
    %3281 = vmatprep.subr.mxu0 %v3228
    %3282 = vmatpush1.msra.mxu0 %v3227
    %3283 = vmatprep.subr.mxu0 %v3232
    %3284 = vmatpush1.msra.mxu0 %v3231
    %3285 = vmatprep.subr.mxu0 %v3236
    %3286 = vmatpush1.msra.mxu0 %v3235
    %3287 = vmatprep.subr.mxu0 %v3240
    %3288 = vmatpush1.msra.mxu0 %v3239
    %3289 = vmatprep.subr.mxu0 %v3244
    %3290 = vmatpush1.msra.mxu0 %v3243
    %3291 = vmatprep.subr.mxu0 %v3248
    %3292 = vmatpush1.msra.mxu0 %v3247
    %3293 = vmatprep.subr.mxu0 %v3252
    %3294 = vmatpush1.msra.mxu0 %v3251
    %3295 = vmatprep.subr.mxu0 %v3256
    %3296 = vmatpush1.msra.mxu0 %v3255
    %3297 = vmatprep.subr.mxu0 %v3260
    %3298 = vmatpush1.msra.mxu0 %v3259
    %3299 = vmatprep.subr.mxu0 %v3264
    %3300 = vmatpush1.msra.mxu0 %v3263
    %3301 = vmatprep.subr.mxu0 %v3268
    %3302 = vmatpush1.msra.mxu0 %v3267
    %3303 = vmatprep.subr.mxu0 0.0
    %3304 = vmatpush1.msra.mxu0 0.0
    %3305 = vmatprep.subr.mxu0 0.0
    %3306 = vmatpush1.msra.mxu0 0.0
    %3307 = vmatprep.subr.mxu0 0.0
    %3308 = vmatpush1.msra.mxu0 0.0
    %3309 = vmatprep.subr.mxu0 0.0
    %3310 = vmatpush1.msra.mxu0 0.0
    %3311 = vmatprep.subr.mxu0 0.0
    %3312 = vmatpush1.msra.mxu0 0.0
    %3313 = vmatprep.subr.mxu0 0.0
    %3314 = vmatpush1.msra.mxu0 0.0
    %3315 = vmatprep.subr.mxu0 0.0
    %3316 = vmatpush1.msra.mxu0 0.0
    %3317 = vmatprep.subr.mxu0 0.0
    %3318 = vmatpush1.msra.mxu0 0.0
    %3319 = vmatprep.subr.mxu0 0.0
    %3320 = vmatpush1.msra.mxu0 0.0
    %3321 = vmatprep.subr.mxu0 0.0
    %3322 = vmatpush1.msra.mxu0 0.0
    %3323 = vmatprep.subr.mxu0 0.0
    %3324 = vmatpush1.msra.mxu0 0.0
    %3325 = vmatprep.subr.mxu0 0.0
    %3326 = vmatpush1.msra.mxu0 0.0
    %3327 = vmatprep.subr.mxu0 0.0
    %3328 = vmatpush1.msra.mxu0 0.0
    %3329 = vmatprep.subr.mxu0 0.0
    %3330 = vmatpush1.msra.mxu0 0.0
    %3331 = vmatprep.subr.mxu0 0.0
    %3332 = vmatpush1.msra.mxu0 0.0
    %3333 = vmatprep.subr.mxu0 0.0
    %3334 = vmatpush1.msra.mxu0 0.0
    %3335 = vmatprep.mubr.f32.mxu0 0.0
    %3336 = vmatmul.mubr.f32.gmra.mrb[0].mxu0 %v3205
    %v3337 = vpop.f32.mrb[0].mxu0
    %v3338 = vadd.f32 0.0, %v3337
    %v3339 = vpop.f32.mrb[0].mxu0
    %v3340 = vadd.f32 0.0, %v3339
    %3341 = vdwg.mxu0
    %3342 = vmatprep.subr.mxu0 %v3210
    %3343 = vmatpush1.msra.mxu0 %v3209
    %3344 = vmatprep.subr.mxu0 %v3214
    %3345 = vmatpush1.msra.mxu0 %v3213
    %3346 = vmatprep.subr.mxu0 %v3218
    %3347 = vmatpush1.msra.mxu0 %v3217
    %3348 = vmatprep.subr.mxu0 %v3222
    %3349 = vmatpush1.msra.mxu0 %v3221
    %3350 = vmatprep.subr.mxu0 %v3226
    %3351 = vmatpush1.msra.mxu0 %v3225
    %3352 = vmatprep.subr.mxu0 %v3230
    %3353 = vmatpush1.msra.mxu0 %v3229
    %3354 = vmatprep.subr.mxu0 %v3234
    %3355 = vmatpush1.msra.mxu0 %v3233
    %3356 = vmatprep.subr.mxu0 %v3238
    %3357 = vmatpush1.msra.mxu0 %v3237
    %3358 = vmatprep.subr.mxu0 %v3242
    %3359 = vmatpush1.msra.mxu0 %v3241
    %3360 = vmatprep.subr.mxu0 %v3246
    %3361 = vmatpush1.msra.mxu0 %v3245
    %3362 = vmatprep.subr.mxu0 %v3250
    %3363 = vmatpush1.msra.mxu0 %v3249
    %3364 = vmatprep.subr.mxu0 %v3254
    %3365 = vmatpush1.msra.mxu0 %v3253
    %3366 = vmatprep.subr.mxu0 %v3258
    %3367 = vmatpush1.msra.mxu0 %v3257
    %3368 = vmatprep.subr.mxu0 %v3262
    %3369 = vmatpush1.msra.mxu0 %v3261
    %3370 = vmatprep.subr.mxu0 %v3266
    %3371 = vmatpush1.msra.mxu0 %v3265
    %3372 = vmatprep.subr.mxu0 %v3270
    %3373 = vmatpush1.msra.mxu0 %v3269
    %3374 = vmatprep.subr.mxu0 0.0
    %3375 = vmatpush1.msra.mxu0 0.0
    %3376 = vmatprep.subr.mxu0 0.0
    %3377 = vmatpush1.msra.mxu0 0.0
    %3378 = vmatprep.subr.mxu0 0.0
    %3379 = vmatpush1.msra.mxu0 0.0
    %3380 = vmatprep.subr.mxu0 0.0
    %3381 = vmatpush1.msra.mxu0 0.0
    %3382 = vmatprep.subr.mxu0 0.0
    %3383 = vmatpush1.msra.mxu0 0.0
    %3384 = vmatprep.subr.mxu0 0.0
    %3385 = vmatpush1.msra.mxu0 0.0
    %3386 = vmatprep.subr.mxu0 0.0
    %3387 = vmatpush1.msra.mxu0 0.0
    %3388 = vmatprep.subr.mxu0 0.0
    %3389 = vmatpush1.msra.mxu0 0.0
    %3390 = vmatprep.subr.mxu0 0.0
    %3391 = vmatpush1.msra.mxu0 0.0
    %3392 = vmatprep.subr.mxu0 0.0
    %3393 = vmatpush1.msra.mxu0 0.0
    %3394 = vmatprep.subr.mxu0 0.0
    %3395 = vmatpush1.msra.mxu0 0.0
    %3396 = vmatprep.subr.mxu0 0.0
    %3397 = vmatpush1.msra.mxu0 0.0
    %3398 = vmatprep.subr.mxu0 0.0
    %3399 = vmatpush1.msra.mxu0 0.0
    %3400 = vmatprep.subr.mxu0 0.0
    %3401 = vmatpush1.msra.mxu0 0.0
    %3402 = vmatprep.subr.mxu0 0.0
    %3403 = vmatpush1.msra.mxu0 0.0
    %3404 = vmatprep.subr.mxu0 0.0
    %3405 = vmatpush1.msra.mxu0 0.0
    %3406 = vmatprep.mubr.f32.mxu0 0.0
    %3407 = vmatmul.mubr.f32.gmra.mrb[0].mxu0 %v3205
    %v3408 = vpop.f32.mrb[0].mxu0
    %v3409 = vadd.f32 0.0, %v3408
    %v3410 = vpop.f32.mrb[0].mxu0
    %v3411 = vadd.f32 0.0, %v3410
    %3412 = vdwg.mxu0
    %s3413 = scalar_lea.vmem [#allocation5], 416
    %v3414 = vld [vmem:[%s3413] sm:$0xff]
    %v3415 = vld [vmem:[%s3413 + $0x8] sm:$0xff]
    %v3416 = vld [vmem:[%s3413 + $0x10] sm:$0xff]
    %v3417 = vld [vmem:[%s3413 + $0x18] sm:$0xff]
    %v3418 = vadd.f32 %v3414, %v3338
    %v3419 = vadd.f32 %v3415, %v3340
    %v3420 = vadd.f32 %v3416, %v3409
    %v3421 = vadd.f32 %v3417, %v3411
    %v3422 = vmul.f32 %v3418, 0.5
    %v3423 = vtanh.pop %v3422
    %v3424 = vadd.f32 %v3423, 1.0
    %v3425 = vmul.f32 %v3424, 0.5
    %v3426 = vmul.f32 %v3419, 0.5
    %v3427 = vtanh.pop %v3426
    %v3428 = vadd.f32 %v3427, 1.0
    %v3429 = vmul.f32 %v3428, 0.5
    %v3430 = vtanh.pop %v3420
    %v3431 = vmul.f32 %v3421, 0.5
    %v3432 = vtanh.pop %v3431
    %v3433 = vadd.f32 %v3432, 1.0
    %v3434 = vmul.f32 %v3433, 0.5
    %v3435 = vmul.f32 %v3429, %v3206
    %v3436 = vmul.f32 %v3425, %v3430
    %v3437 = vadd.f32 %v3435, %v3436
    %v3438 = vtanh.pop %v3437
    %v3439 = vmul.f32 %v3434, %v3438
    %s3440 = scalar_lea.vmem [#allocation4], 104
    %3441 = vst [vmem:[%s3440] sm:$0xff] %v3439
    %3442 = vst [vmem:[#allocation2] sm:$0xff] %v3439
    %3443 = vst [vmem:[#allocation3] sm:$0xff] %v3437
    %v3444 = vld [vmem:[#allocation2] sm:$0xff]
    %v3445 = vld [vmem:[#allocation3] sm:$0xff]
    %v3446 = vld [vmem:[#allocation11] sm:$0xff]
    %v3447 = vld [vmem:[#allocation11 + $0x8] sm:$0xff]
    %v3448 = vld [vmem:[#allocation11 + $0x10] sm:$0xff]
    %v3449 = vld [vmem:[#allocation11 + $0x18] sm:$0xff]
    %v3450 = vld [vmem:[#allocation11 + $0x20] sm:$0xff]
    %v3451 = vld [vmem:[#allocation11 + $0x28] sm:$0xff]
    %v3452 = vld [vmem:[#allocation11 + $0x30] sm:$0xff]
    %v3453 = vld [vmem:[#allocation11 + $0x38] sm:$0xff]
    %v3454 = vld [vmem:[#allocation11 + $0x40] sm:$0xff]
    %v3455 = vld [vmem:[#allocation11 + $0x48] sm:$0xff]
    %v3456 = vld [vmem:[#allocation11 + $0x50] sm:$0xff]
    %v3457 = vld [vmem:[#allocation11 + $0x58] sm:$0xff]
    %v3458 = vld [vmem:[#allocation11 + $0x60] sm:$0xff]
    %v3459 = vld [vmem:[#allocation11 + $0x68] sm:$0xff]
    %v3460 = vld [vmem:[#allocation11 + $0x70] sm:$0xff]
    %v3461 = vld [vmem:[#allocation11 + $0x78] sm:$0xff]
    %v3462 = vld [vmem:[#allocation11 + $0x80] sm:$0xff]
    %v3463 = vld [vmem:[#allocation11 + $0x88] sm:$0xff]
    %v3464 = vld [vmem:[#allocation11 + $0x90] sm:$0xff]
    %v3465 = vld [vmem:[#allocation11 + $0x98] sm:$0xff]
    %v3466 = vld [vmem:[#allocation11 + $0xa0] sm:$0xff]
    %v3467 = vld [vmem:[#allocation11 + $0xa8] sm:$0xff]
    %v3468 = vld [vmem:[#allocation11 + $0xb0] sm:$0xff]
    %v3469 = vld [vmem:[#allocation11 + $0xb8] sm:$0xff]
    %v3470 = vld [vmem:[#allocation11 + $0xc0] sm:$0xff]
    %v3471 = vld [vmem:[#allocation11 + $0xc8] sm:$0xff]
    %v3472 = vld [vmem:[#allocation11 + $0xd0] sm:$0xff]
    %v3473 = vld [vmem:[#allocation11 + $0xd8] sm:$0xff]
    %v3474 = vld [vmem:[#allocation11 + $0xe0] sm:$0xff]
    %v3475 = vld [vmem:[#allocation11 + $0xe8] sm:$0xff]
    %v3476 = vld [vmem:[#allocation11 + $0xf0] sm:$0xff]
    %v3477 = vld [vmem:[#allocation11 + $0xf8] sm:$0xff]
    %v3478 = vld [vmem:[#allocation11 + $0x100] sm:$0xff]
    %v3479 = vld [vmem:[#allocation11 + $0x108] sm:$0xff]
    %v3480 = vld [vmem:[#allocation11 + $0x110] sm:$0xff]
    %v3481 = vld [vmem:[#allocation11 + $0x118] sm:$0xff]
    %v3482 = vld [vmem:[#allocation11 + $0x120] sm:$0xff]
    %v3483 = vld [vmem:[#allocation11 + $0x128] sm:$0xff]
    %v3484 = vld [vmem:[#allocation11 + $0x130] sm:$0xff]
    %v3485 = vld [vmem:[#allocation11 + $0x138] sm:$0xff]
    %v3486 = vld [vmem:[#allocation11 + $0x140] sm:$0xff]
    %v3487 = vld [vmem:[#allocation11 + $0x148] sm:$0xff]
    %v3488 = vld [vmem:[#allocation11 + $0x150] sm:$0xff]
    %v3489 = vld [vmem:[#allocation11 + $0x158] sm:$0xff]
    %v3490 = vld [vmem:[#allocation11 + $0x160] sm:$0xff]
    %v3491 = vld [vmem:[#allocation11 + $0x168] sm:$0xff]
    %v3492 = vld [vmem:[#allocation11 + $0x170] sm:$0xff]
    %v3493 = vld [vmem:[#allocation11 + $0x178] sm:$0xff]
    %v3494 = vld [vmem:[#allocation11 + $0x180] sm:$0xff]
    %v3495 = vld [vmem:[#allocation11 + $0x188] sm:$0xff]
    %v3496 = vld [vmem:[#allocation11 + $0x190] sm:$0xff]
    %v3497 = vld [vmem:[#allocation11 + $0x198] sm:$0xff]
    %v3498 = vld [vmem:[#allocation11 + $0x1a0] sm:$0xff]
    %v3499 = vld [vmem:[#allocation11 + $0x1a8] sm:$0xff]
    %v3500 = vld [vmem:[#allocation11 + $0x1b0] sm:$0xff]
    %v3501 = vld [vmem:[#allocation11 + $0x1b8] sm:$0xff]
    %v3502 = vld [vmem:[#allocation11 + $0x1c0] sm:$0xff]
    %v3503 = vld [vmem:[#allocation11 + $0x1c8] sm:$0xff]
    %v3504 = vld [vmem:[#allocation11 + $0x1d0] sm:$0xff]
    %v3505 = vld [vmem:[#allocation11 + $0x1d8] sm:$0xff]
    %v3506 = vld [vmem:[#allocation11 + $0x1e0] sm:$0xff]
    %v3507 = vld [vmem:[#allocation11 + $0x1e8] sm:$0xff]
    %v3508 = vld [vmem:[#allocation11 + $0x1f0] sm:$0xff]
    %v3509 = vld [vmem:[#allocation11 + $0x1f8] sm:$0xff]
    %3510 = vmatprep.subr.mxu0 %v3447
    %3511 = vmatpush1.msra.mxu0 %v3446
    %3512 = vmatprep.subr.mxu0 %v3451
    %3513 = vmatpush1.msra.mxu0 %v3450
    %3514 = vmatprep.subr.mxu0 %v3455
    %3515 = vmatpush1.msra.mxu0 %v3454
    %3516 = vmatprep.subr.mxu0 %v3459
    %3517 = vmatpush1.msra.mxu0 %v3458
    %3518 = vmatprep.subr.mxu0 %v3463
    %3519 = vmatpush1.msra.mxu0 %v3462
    %3520 = vmatprep.subr.mxu0 %v3467
    %3521 = vmatpush1.msra.mxu0 %v3466
    %3522 = vmatprep.subr.mxu0 %v3471
    %3523 = vmatpush1.msra.mxu0 %v3470
    %3524 = vmatprep.subr.mxu0 %v3475
    %3525 = vmatpush1.msra.mxu0 %v3474
    %3526 = vmatprep.subr.mxu0 %v3479
    %3527 = vmatpush1.msra.mxu0 %v3478
    %3528 = vmatprep.subr.mxu0 %v3483
    %3529 = vmatpush1.msra.mxu0 %v3482
    %3530 = vmatprep.subr.mxu0 %v3487
    %3531 = vmatpush1.msra.mxu0 %v3486
    %3532 = vmatprep.subr.mxu0 %v3491
    %3533 = vmatpush1.msra.mxu0 %v3490
    %3534 = vmatprep.subr.mxu0 %v3495
    %3535 = vmatpush1.msra.mxu0 %v3494
    %3536 = vmatprep.subr.mxu0 %v3499
    %3537 = vmatpush1.msra.mxu0 %v3498
    %3538 = vmatprep.subr.mxu0 %v3503
    %3539 = vmatpush1.msra.mxu0 %v3502
    %3540 = vmatprep.subr.mxu0 %v3507
    %3541 = vmatpush1.msra.mxu0 %v3506
    %3542 = vmatprep.subr.mxu0 0.0
    %3543 = vmatpush1.msra.mxu0 0.0
    %3544 = vmatprep.subr.mxu0 0.0
    %3545 = vmatpush1.msra.mxu0 0.0
    %3546 = vmatprep.subr.mxu0 0.0
    %3547 = vmatpush1.msra.mxu0 0.0
    %3548 = vmatprep.subr.mxu0 0.0
    %3549 = vmatpush1.msra.mxu0 0.0
    %3550 = vmatprep.subr.mxu0 0.0
    %3551 = vmatpush1.msra.mxu0 0.0
    %3552 = vmatprep.subr.mxu0 0.0
    %3553 = vmatpush1.msra.mxu0 0.0
    %3554 = vmatprep.subr.mxu0 0.0
    %3555 = vmatpush1.msra.mxu0 0.0
    %3556 = vmatprep.subr.mxu0 0.0
    %3557 = vmatpush1.msra.mxu0 0.0
    %3558 = vmatprep.subr.mxu0 0.0
    %3559 = vmatpush1.msra.mxu0 0.0
    %3560 = vmatprep.subr.mxu0 0.0
    %3561 = vmatpush1.msra.mxu0 0.0
    %3562 = vmatprep.subr.mxu0 0.0
    %3563 = vmatpush1.msra.mxu0 0.0
    %3564 = vmatprep.subr.mxu0 0.0
    %3565 = vmatpush1.msra.mxu0 0.0
    %3566 = vmatprep.subr.mxu0 0.0
    %3567 = vmatpush1.msra.mxu0 0.0
    %3568 = vmatprep.subr.mxu0 0.0
    %3569 = vmatpush1.msra.mxu0 0.0
    %3570 = vmatprep.subr.mxu0 0.0
    %3571 = vmatpush1.msra.mxu0 0.0
    %3572 = vmatprep.subr.mxu0 0.0
    %3573 = vmatpush1.msra.mxu0 0.0
    %3574 = vmatprep.mubr.f32.mxu0 0.0
    %3575 = vmatmul.mubr.f32.gmra.mrb[0].mxu0 %v3444
    %v3576 = vpop.f32.mrb[0].mxu0
    %v3577 = vadd.f32 0.0, %v3576
    %v3578 = vpop.f32.mrb[0].mxu0
    %v3579 = vadd.f32 0.0, %v3578
    %3580 = vdwg.mxu0
    %3581 = vmatprep.subr.mxu0 %v3449
    %3582 = vmatpush1.msra.mxu0 %v3448
    %3583 = vmatprep.subr.mxu0 %v3453
    %3584 = vmatpush1.msra.mxu0 %v3452
    %3585 = vmatprep.subr.mxu0 %v3457
    %3586 = vmatpush1.msra.mxu0 %v3456
    %3587 = vmatprep.subr.mxu0 %v3461
    %3588 = vmatpush1.msra.mxu0 %v3460
    %3589 = vmatprep.subr.mxu0 %v3465
    %3590 = vmatpush1.msra.mxu0 %v3464
    %3591 = vmatprep.subr.mxu0 %v3469
    %3592 = vmatpush1.msra.mxu0 %v3468
    %3593 = vmatprep.subr.mxu0 %v3473
    %3594 = vmatpush1.msra.mxu0 %v3472
    %3595 = vmatprep.subr.mxu0 %v3477
    %3596 = vmatpush1.msra.mxu0 %v3476
    %3597 = vmatprep.subr.mxu0 %v3481
    %3598 = vmatpush1.msra.mxu0 %v3480
    %3599 = vmatprep.subr.mxu0 %v3485
    %3600 = vmatpush1.msra.mxu0 %v3484
    %3601 = vmatprep.subr.mxu0 %v3489
    %3602 = vmatpush1.msra.mxu0 %v3488
    %3603 = vmatprep.subr.mxu0 %v3493
    %3604 = vmatpush1.msra.mxu0 %v3492
    %3605 = vmatprep.subr.mxu0 %v3497
    %3606 = vmatpush1.msra.mxu0 %v3496
    %3607 = vmatprep.subr.mxu0 %v3501
    %3608 = vmatpush1.msra.mxu0 %v3500
    %3609 = vmatprep.subr.mxu0 %v3505
    %3610 = vmatpush1.msra.mxu0 %v3504
    %3611 = vmatprep.subr.mxu0 %v3509
    %3612 = vmatpush1.msra.mxu0 %v3508
    %3613 = vmatprep.subr.mxu0 0.0
    %3614 = vmatpush1.msra.mxu0 0.0
    %3615 = vmatprep.subr.mxu0 0.0
    %3616 = vmatpush1.msra.mxu0 0.0
    %3617 = vmatprep.subr.mxu0 0.0
    %3618 = vmatpush1.msra.mxu0 0.0
    %3619 = vmatprep.subr.mxu0 0.0
    %3620 = vmatpush1.msra.mxu0 0.0
    %3621 = vmatprep.subr.mxu0 0.0
    %3622 = vmatpush1.msra.mxu0 0.0
    %3623 = vmatprep.subr.mxu0 0.0
    %3624 = vmatpush1.msra.mxu0 0.0
    %3625 = vmatprep.subr.mxu0 0.0
    %3626 = vmatpush1.msra.mxu0 0.0
    %3627 = vmatprep.subr.mxu0 0.0
    %3628 = vmatpush1.msra.mxu0 0.0
    %3629 = vmatprep.subr.mxu0 0.0
    %3630 = vmatpush1.msra.mxu0 0.0
    %3631 = vmatprep.subr.mxu0 0.0
    %3632 = vmatpush1.msra.mxu0 0.0
    %3633 = vmatprep.subr.mxu0 0.0
    %3634 = vmatpush1.msra.mxu0 0.0
    %3635 = vmatprep.subr.mxu0 0.0
    %3636 = vmatpush1.msra.mxu0 0.0
    %3637 = vmatprep.subr.mxu0 0.0
    %3638 = vmatpush1.msra.mxu0 0.0
    %3639 = vmatprep.subr.mxu0 0.0
    %3640 = vmatpush1.msra.mxu0 0.0
    %3641 = vmatprep.subr.mxu0 0.0
    %3642 = vmatpush1.msra.mxu0 0.0
    %3643 = vmatprep.subr.mxu0 0.0
    %3644 = vmatpush1.msra.mxu0 0.0
    %3645 = vmatprep.mubr.f32.mxu0 0.0
    %3646 = vmatmul.mubr.f32.gmra.mrb[0].mxu0 %v3444
    %v3647 = vpop.f32.mrb[0].mxu0
    %v3648 = vadd.f32 0.0, %v3647
    %v3649 = vpop.f32.mrb[0].mxu0
    %v3650 = vadd.f32 0.0, %v3649
    %3651 = vdwg.mxu0
    %s3652 = scalar_lea.vmem [#allocation5], 448
    %v3653 = vld [vmem:[%s3652] sm:$0xff]
    %v3654 = vld [vmem:[%s3652 + $0x8] sm:$0xff]
    %v3655 = vld [vmem:[%s3652 + $0x10] sm:$0xff]
    %v3656 = vld [vmem:[%s3652 + $0x18] sm:$0xff]
    %v3657 = vadd.f32 %v3653, %v3577
    %v3658 = vadd.f32 %v3654, %v3579
    %v3659 = vadd.f32 %v3655, %v3648
    %v3660 = vadd.f32 %v3656, %v3650
    %v3661 = vmul.f32 %v3657, 0.5
    %v3662 = vtanh.pop %v3661
    %v3663 = vadd.f32 %v3662, 1.0
    %v3664 = vmul.f32 %v3663, 0.5
    %v3665 = vmul.f32 %v3658, 0.5
    %v3666 = vtanh.pop %v3665
    %v3667 = vadd.f32 %v3666, 1.0
    %v3668 = vmul.f32 %v3667, 0.5
    %v3669 = vtanh.pop %v3659
    %v3670 = vmul.f32 %v3660, 0.5
    %v3671 = vtanh.pop %v3670
    %v3672 = vadd.f32 %v3671, 1.0
    %v3673 = vmul.f32 %v3672, 0.5
    %v3674 = vmul.f32 %v3668, %v3445
    %v3675 = vmul.f32 %v3664, %v3669
    %v3676 = vadd.f32 %v3674, %v3675
    %v3677 = vtanh.pop %v3676
    %v3678 = vmul.f32 %v3673, %v3677
    %s3679 = scalar_lea.vmem [#allocation4], 112
    %3680 = vst [vmem:[%s3679] sm:$0xff] %v3678
    %3681 = vst [vmem:[#allocation2] sm:$0xff] %v3678
    %3682 = vst [vmem:[#allocation3] sm:$0xff] %v3676
    %v3683 = vld [vmem:[#allocation2] sm:$0xff]
    %v3684 = vld [vmem:[#allocation3] sm:$0xff]
    %v3685 = vld [vmem:[#allocation11] sm:$0xff]
    %v3686 = vld [vmem:[#allocation11 + $0x8] sm:$0xff]
    %v3687 = vld [vmem:[#allocation11 + $0x10] sm:$0xff]
    %v3688 = vld [vmem:[#allocation11 + $0x18] sm:$0xff]
    %v3689 = vld [vmem:[#allocation11 + $0x20] sm:$0xff]
    %v3690 = vld [vmem:[#allocation11 + $0x28] sm:$0xff]
    %v3691 = vld [vmem:[#allocation11 + $0x30] sm:$0xff]
    %v3692 = vld [vmem:[#allocation11 + $0x38] sm:$0xff]
    %v3693 = vld [vmem:[#allocation11 + $0x40] sm:$0xff]
    %v3694 = vld [vmem:[#allocation11 + $0x48] sm:$0xff]
    %v3695 = vld [vmem:[#allocation11 + $0x50] sm:$0xff]
    %v3696 = vld [vmem:[#allocation11 + $0x58] sm:$0xff]
    %v3697 = vld [vmem:[#allocation11 + $0x60] sm:$0xff]
    %v3698 = vld [vmem:[#allocation11 + $0x68] sm:$0xff]
    %v3699 = vld [vmem:[#allocation11 + $0x70] sm:$0xff]
    %v3700 = vld [vmem:[#allocation11 + $0x78] sm:$0xff]
    %v3701 = vld [vmem:[#allocation11 + $0x80] sm:$0xff]
    %v3702 = vld [vmem:[#allocation11 + $0x88] sm:$0xff]
    %v3703 = vld [vmem:[#allocation11 + $0x90] sm:$0xff]
    %v3704 = vld [vmem:[#allocation11 + $0x98] sm:$0xff]
    %v3705 = vld [vmem:[#allocation11 + $0xa0] sm:$0xff]
    %v3706 = vld [vmem:[#allocation11 + $0xa8] sm:$0xff]
    %v3707 = vld [vmem:[#allocation11 + $0xb0] sm:$0xff]
    %v3708 = vld [vmem:[#allocation11 + $0xb8] sm:$0xff]
    %v3709 = vld [vmem:[#allocation11 + $0xc0] sm:$0xff]
    %v3710 = vld [vmem:[#allocation11 + $0xc8] sm:$0xff]
    %v3711 = vld [vmem:[#allocation11 + $0xd0] sm:$0xff]
    %v3712 = vld [vmem:[#allocation11 + $0xd8] sm:$0xff]
    %v3713 = vld [vmem:[#allocation11 + $0xe0] sm:$0xff]
    %v3714 = vld [vmem:[#allocation11 + $0xe8] sm:$0xff]
    %v3715 = vld [vmem:[#allocation11 + $0xf0] sm:$0xff]
    %v3716 = vld [vmem:[#allocation11 + $0xf8] sm:$0xff]
    %v3717 = vld [vmem:[#allocation11 + $0x100] sm:$0xff]
    %v3718 = vld [vmem:[#allocation11 + $0x108] sm:$0xff]
    %v3719 = vld [vmem:[#allocation11 + $0x110] sm:$0xff]
    %v3720 = vld [vmem:[#allocation11 + $0x118] sm:$0xff]
    %v3721 = vld [vmem:[#allocation11 + $0x120] sm:$0xff]
    %v3722 = vld [vmem:[#allocation11 + $0x128] sm:$0xff]
    %v3723 = vld [vmem:[#allocation11 + $0x130] sm:$0xff]
    %v3724 = vld [vmem:[#allocation11 + $0x138] sm:$0xff]
    %v3725 = vld [vmem:[#allocation11 + $0x140] sm:$0xff]
    %v3726 = vld [vmem:[#allocation11 + $0x148] sm:$0xff]
    %v3727 = vld [vmem:[#allocation11 + $0x150] sm:$0xff]
    %v3728 = vld [vmem:[#allocation11 + $0x158] sm:$0xff]
    %v3729 = vld [vmem:[#allocation11 + $0x160] sm:$0xff]
    %v3730 = vld [vmem:[#allocation11 + $0x168] sm:$0xff]
    %v3731 = vld [vmem:[#allocation11 + $0x170] sm:$0xff]
    %v3732 = vld [vmem:[#allocation11 + $0x178] sm:$0xff]
    %v3733 = vld [vmem:[#allocation11 + $0x180] sm:$0xff]
    %v3734 = vld [vmem:[#allocation11 + $0x188] sm:$0xff]
    %v3735 = vld [vmem:[#allocation11 + $0x190] sm:$0xff]
    %v3736 = vld [vmem:[#allocation11 + $0x198] sm:$0xff]
    %v3737 = vld [vmem:[#allocation11 + $0x1a0] sm:$0xff]
    %v3738 = vld [vmem:[#allocation11 + $0x1a8] sm:$0xff]
    %v3739 = vld [vmem:[#allocation11 + $0x1b0] sm:$0xff]
    %v3740 = vld [vmem:[#allocation11 + $0x1b8] sm:$0xff]
    %v3741 = vld [vmem:[#allocation11 + $0x1c0] sm:$0xff]
    %v3742 = vld [vmem:[#allocation11 + $0x1c8] sm:$0xff]
    %v3743 = vld [vmem:[#allocation11 + $0x1d0] sm:$0xff]
    %v3744 = vld [vmem:[#allocation11 + $0x1d8] sm:$0xff]
    %v3745 = vld [vmem:[#allocation11 + $0x1e0] sm:$0xff]
    %v3746 = vld [vmem:[#allocation11 + $0x1e8] sm:$0xff]
    %v3747 = vld [vmem:[#allocation11 + $0x1f0] sm:$0xff]
    %v3748 = vld [vmem:[#allocation11 + $0x1f8] sm:$0xff]
    %3749 = vmatprep.subr.mxu0 %v3686
    %3750 = vmatpush1.msra.mxu0 %v3685
    %3751 = vmatprep.subr.mxu0 %v3690
    %3752 = vmatpush1.msra.mxu0 %v3689
    %3753 = vmatprep.subr.mxu0 %v3694
    %3754 = vmatpush1.msra.mxu0 %v3693
    %3755 = vmatprep.subr.mxu0 %v3698
    %3756 = vmatpush1.msra.mxu0 %v3697
    %3757 = vmatprep.subr.mxu0 %v3702
    %3758 = vmatpush1.msra.mxu0 %v3701
    %3759 = vmatprep.subr.mxu0 %v3706
    %3760 = vmatpush1.msra.mxu0 %v3705
    %3761 = vmatprep.subr.mxu0 %v3710
    %3762 = vmatpush1.msra.mxu0 %v3709
    %3763 = vmatprep.subr.mxu0 %v3714
    %3764 = vmatpush1.msra.mxu0 %v3713
    %3765 = vmatprep.subr.mxu0 %v3718
    %3766 = vmatpush1.msra.mxu0 %v3717
    %3767 = vmatprep.subr.mxu0 %v3722
    %3768 = vmatpush1.msra.mxu0 %v3721
    %3769 = vmatprep.subr.mxu0 %v3726
    %3770 = vmatpush1.msra.mxu0 %v3725
    %3771 = vmatprep.subr.mxu0 %v3730
    %3772 = vmatpush1.msra.mxu0 %v3729
    %3773 = vmatprep.subr.mxu0 %v3734
    %3774 = vmatpush1.msra.mxu0 %v3733
    %3775 = vmatprep.subr.mxu0 %v3738
    %3776 = vmatpush1.msra.mxu0 %v3737
    %3777 = vmatprep.subr.mxu0 %v3742
    %3778 = vmatpush1.msra.mxu0 %v3741
    %3779 = vmatprep.subr.mxu0 %v3746
    %3780 = vmatpush1.msra.mxu0 %v3745
    %3781 = vmatprep.subr.mxu0 0.0
    %3782 = vmatpush1.msra.mxu0 0.0
    %3783 = vmatprep.subr.mxu0 0.0
    %3784 = vmatpush1.msra.mxu0 0.0
    %3785 = vmatprep.subr.mxu0 0.0
    %3786 = vmatpush1.msra.mxu0 0.0
    %3787 = vmatprep.subr.mxu0 0.0
    %3788 = vmatpush1.msra.mxu0 0.0
    %3789 = vmatprep.subr.mxu0 0.0
    %3790 = vmatpush1.msra.mxu0 0.0
    %3791 = vmatprep.subr.mxu0 0.0
    %3792 = vmatpush1.msra.mxu0 0.0
    %3793 = vmatprep.subr.mxu0 0.0
    %3794 = vmatpush1.msra.mxu0 0.0
    %3795 = vmatprep.subr.mxu0 0.0
    %3796 = vmatpush1.msra.mxu0 0.0
    %3797 = vmatprep.subr.mxu0 0.0
    %3798 = vmatpush1.msra.mxu0 0.0
    %3799 = vmatprep.subr.mxu0 0.0
    %3800 = vmatpush1.msra.mxu0 0.0
    %3801 = vmatprep.subr.mxu0 0.0
    %3802 = vmatpush1.msra.mxu0 0.0
    %3803 = vmatprep.subr.mxu0 0.0
    %3804 = vmatpush1.msra.mxu0 0.0
    %3805 = vmatprep.subr.mxu0 0.0
    %3806 = vmatpush1.msra.mxu0 0.0
    %3807 = vmatprep.subr.mxu0 0.0
    %3808 = vmatpush1.msra.mxu0 0.0
    %3809 = vmatprep.subr.mxu0 0.0
    %3810 = vmatpush1.msra.mxu0 0.0
    %3811 = vmatprep.subr.mxu0 0.0
    %3812 = vmatpush1.msra.mxu0 0.0
    %3813 = vmatprep.mubr.f32.mxu0 0.0
    %3814 = vmatmul.mubr.f32.gmra.mrb[0].mxu0 %v3683
    %v3815 = vpop.f32.mrb[0].mxu0
    %v3816 = vadd.f32 0.0, %v3815
    %v3817 = vpop.f32.mrb[0].mxu0
    %v3818 = vadd.f32 0.0, %v3817
    %3819 = vdwg.mxu0
    %3820 = vmatprep.subr.mxu0 %v3688
    %3821 = vmatpush1.msra.mxu0 %v3687
    %3822 = vmatprep.subr.mxu0 %v3692
    %3823 = vmatpush1.msra.mxu0 %v3691
    %3824 = vmatprep.subr.mxu0 %v3696
    %3825 = vmatpush1.msra.mxu0 %v3695
    %3826 = vmatprep.subr.mxu0 %v3700
    %3827 = vmatpush1.msra.mxu0 %v3699
    %3828 = vmatprep.subr.mxu0 %v3704
    %3829 = vmatpush1.msra.mxu0 %v3703
    %3830 = vmatprep.subr.mxu0 %v3708
    %3831 = vmatpush1.msra.mxu0 %v3707
    %3832 = vmatprep.subr.mxu0 %v3712
    %3833 = vmatpush1.msra.mxu0 %v3711
    %3834 = vmatprep.subr.mxu0 %v3716
    %3835 = vmatpush1.msra.mxu0 %v3715
    %3836 = vmatprep.subr.mxu0 %v3720
    %3837 = vmatpush1.msra.mxu0 %v3719
    %3838 = vmatprep.subr.mxu0 %v3724
    %3839 = vmatpush1.msra.mxu0 %v3723
    %3840 = vmatprep.subr.mxu0 %v3728
    %3841 = vmatpush1.msra.mxu0 %v3727
    %3842 = vmatprep.subr.mxu0 %v3732
    %3843 = vmatpush1.msra.mxu0 %v3731
    %3844 = vmatprep.subr.mxu0 %v3736
    %3845 = vmatpush1.msra.mxu0 %v3735
    %3846 = vmatprep.subr.mxu0 %v3740
    %3847 = vmatpush1.msra.mxu0 %v3739
    %3848 = vmatprep.subr.mxu0 %v3744
    %3849 = vmatpush1.msra.mxu0 %v3743
    %3850 = vmatprep.subr.mxu0 %v3748
    %3851 = vmatpush1.msra.mxu0 %v3747
    %3852 = vmatprep.subr.mxu0 0.0
    %3853 = vmatpush1.msra.mxu0 0.0
    %3854 = vmatprep.subr.mxu0 0.0
    %3855 = vmatpush1.msra.mxu0 0.0
    %3856 = vmatprep.subr.mxu0 0.0
    %3857 = vmatpush1.msra.mxu0 0.0
    %3858 = vmatprep.subr.mxu0 0.0
    %3859 = vmatpush1.msra.mxu0 0.0
    %3860 = vmatprep.subr.mxu0 0.0
    %3861 = vmatpush1.msra.mxu0 0.0
    %3862 = vmatprep.subr.mxu0 0.0
    %3863 = vmatpush1.msra.mxu0 0.0
    %3864 = vmatprep.subr.mxu0 0.0
    %3865 = vmatpush1.msra.mxu0 0.0
    %3866 = vmatprep.subr.mxu0 0.0
    %3867 = vmatpush1.msra.mxu0 0.0
    %3868 = vmatprep.subr.mxu0 0.0
    %3869 = vmatpush1.msra.mxu0 0.0
    %3870 = vmatprep.subr.mxu0 0.0
    %3871 = vmatpush1.msra.mxu0 0.0
    %3872 = vmatprep.subr.mxu0 0.0
    %3873 = vmatpush1.msra.mxu0 0.0
    %3874 = vmatprep.subr.mxu0 0.0
    %3875 = vmatpush1.msra.mxu0 0.0
    %3876 = vmatprep.subr.mxu0 0.0
    %3877 = vmatpush1.msra.mxu0 0.0
    %3878 = vmatprep.subr.mxu0 0.0
    %3879 = vmatpush1.msra.mxu0 0.0
    %3880 = vmatprep.subr.mxu0 0.0
    %3881 = vmatpush1.msra.mxu0 0.0
    %3882 = vmatprep.subr.mxu0 0.0
    %3883 = vmatpush1.msra.mxu0 0.0
    %3884 = vmatprep.mubr.f32.mxu0 0.0
    %3885 = vmatmul.mubr.f32.gmra.mrb[0].mxu0 %v3683
    %v3886 = vpop.f32.mrb[0].mxu0
    %v3887 = vadd.f32 0.0, %v3886
    %v3888 = vpop.f32.mrb[0].mxu0
    %v3889 = vadd.f32 0.0, %v3888
    %3890 = vdwg.mxu0
    %s3891 = scalar_lea.vmem [#allocation5], 480
    %v3892 = vld [vmem:[%s3891] sm:$0xff]
    %v3893 = vld [vmem:[%s3891 + $0x8] sm:$0xff]
    %v3894 = vld [vmem:[%s3891 + $0x10] sm:$0xff]
    %v3895 = vld [vmem:[%s3891 + $0x18] sm:$0xff]
    %v3896 = vadd.f32 %v3892, %v3816
    %v3897 = vadd.f32 %v3893, %v3818
    %v3898 = vadd.f32 %v3894, %v3887
    %v3899 = vadd.f32 %v3895, %v3889
    %v3900 = vmul.f32 %v3896, 0.5
    %v3901 = vtanh.pop %v3900
    %v3902 = vadd.f32 %v3901, 1.0
    %v3903 = vmul.f32 %v3902, 0.5
    %v3904 = vmul.f32 %v3897, 0.5
    %v3905 = vtanh.pop %v3904
    %v3906 = vadd.f32 %v3905, 1.0
    %v3907 = vmul.f32 %v3906, 0.5
    %v3908 = vtanh.pop %v3898
    %v3909 = vmul.f32 %v3899, 0.5
    %v3910 = vtanh.pop %v3909
    %v3911 = vadd.f32 %v3910, 1.0
    %v3912 = vmul.f32 %v3911, 0.5
    %v3913 = vmul.f32 %v3907, %v3684
    %v3914 = vmul.f32 %v3903, %v3908
    %v3915 = vadd.f32 %v3913, %v3914
    %v3916 = vtanh.pop %v3915
    %v3917 = vmul.f32 %v3912, %v3916
    %s3918 = scalar_lea.vmem [#allocation4], 120
    %3919 = vst [vmem:[%s3918] sm:$0xff] %v3917
    %3920 = vst [vmem:[#allocation2] sm:$0xff] %v3917
    %3921 = vst [vmem:[#allocation3] sm:$0xff] %v3915
    %v3922 = vld [vmem:[#allocation4] sm:$0xff]
    %v3923 = vld [vmem:[#allocation4 + $0x8] sm:$0xff]
    %v3924 = vld [vmem:[#allocation4 + $0x10] sm:$0xff]
    %v3925 = vld [vmem:[#allocation4 + $0x18] sm:$0xff]
    %v3926 = vld [vmem:[#allocation4 + $0x20] sm:$0xff]
    %v3927 = vld [vmem:[#allocation4 + $0x28] sm:$0xff]
    %v3928 = vld [vmem:[#allocation4 + $0x30] sm:$0xff]
    %v3929 = vld [vmem:[#allocation4 + $0x38] sm:$0xff]
    %v3930 = vld [vmem:[#allocation4 + $0x40] sm:$0xff]
    %v3931 = vld [vmem:[#allocation4 + $0x48] sm:$0xff]
    %v3932 = vld [vmem:[#allocation4 + $0x50] sm:$0xff]
    %v3933 = vld [vmem:[#allocation4 + $0x58] sm:$0xff]
    %v3934 = vld [vmem:[#allocation4 + $0x60] sm:$0xff]
    %v3935 = vld [vmem:[#allocation4 + $0x68] sm:$0xff]
    %v3936 = vld [vmem:[#allocation4 + $0x70] sm:$0xff]
    %v3937 = vld [vmem:[#allocation4 + $0x78] sm:$0xff]
    %vm3938 = vcmp.ge.f32.partialorder %v3922, 0.0
    %vm3939 = vcmp.ge.f32.partialorder %v3923, 0.0
    %vm3940 = vcmp.ge.f32.partialorder %v3924, 0.0
    %vm3941 = vcmp.ge.f32.partialorder %v3925, 0.0
    %vm3942 = vcmp.ge.f32.partialorder %v3926, 0.0
    %vm3943 = vcmp.ge.f32.partialorder %v3927, 0.0
    %vm3944 = vcmp.ge.f32.partialorder %v3928, 0.0
    %vm3945 = vcmp.ge.f32.partialorder %v3929, 0.0
    %vm3946 = vcmp.ge.f32.partialorder %v3930, 0.0
    %vm3947 = vcmp.ge.f32.partialorder %v3931, 0.0
    %vm3948 = vcmp.ge.f32.partialorder %v3932, 0.0
    %vm3949 = vcmp.ge.f32.partialorder %v3933, 0.0
    %vm3950 = vcmp.ge.f32.partialorder %v3934, 0.0
    %vm3951 = vcmp.ge.f32.partialorder %v3935, 0.0
    %vm3952 = vcmp.ge.f32.partialorder %v3936, 0.0
    %vm3953 = vcmp.ge.f32.partialorder %v3937, 0.0
    %v3954 = vmul.f32 %v3922, 0.01
    %v3955 = vmul.f32 %v3923, 0.01
    %v3956 = vmul.f32 %v3924, 0.01
    %v3957 = vmul.f32 %v3925, 0.01
    %v3958 = vmul.f32 %v3926, 0.01
    %v3959 = vmul.f32 %v3927, 0.01
    %v3960 = vmul.f32 %v3928, 0.01
    %v3961 = vmul.f32 %v3929, 0.01
    %v3962 = vmul.f32 %v3930, 0.01
    %v3963 = vmul.f32 %v3931, 0.01
    %v3964 = vmul.f32 %v3932, 0.01
    %v3965 = vmul.f32 %v3933, 0.01
    %v3966 = vmul.f32 %v3934, 0.01
    %v3967 = vmul.f32 %v3935, 0.01
    %v3968 = vmul.f32 %v3936, 0.01
    %v3969 = vmul.f32 %v3937, 0.01
    %v3970 = vsel %vm3938, %v3922, %v3954
    %v3971 = vsel %vm3939, %v3923, %v3955
    %v3972 = vsel %vm3940, %v3924, %v3956
    %v3973 = vsel %vm3941, %v3925, %v3957
    %v3974 = vsel %vm3942, %v3926, %v3958
    %v3975 = vsel %vm3943, %v3927, %v3959
    %v3976 = vsel %vm3944, %v3928, %v3960
    %v3977 = vsel %vm3945, %v3929, %v3961
    %v3978 = vsel %vm3946, %v3930, %v3962
    %v3979 = vsel %vm3947, %v3931, %v3963
    %v3980 = vsel %vm3948, %v3932, %v3964
    %v3981 = vsel %vm3949, %v3933, %v3965
    %v3982 = vsel %vm3950, %v3934, %v3966
    %v3983 = vsel %vm3951, %v3935, %v3967
    %v3984 = vsel %vm3952, %v3936, %v3968
    %v3985 = vsel %vm3953, %v3937, %v3969
    %v3986 = vld [vmem:[#allocation13] sm:$0xff]
    %v3987 = vld [vmem:[#allocation13 + $0x8] sm:$0xff]
    %v3988 = vld [vmem:[#allocation13 + $0x10] sm:$0xff]
    %v3989 = vld [vmem:[#allocation13 + $0x18] sm:$0xff]
    %v3990 = vld [vmem:[#allocation13 + $0x20] sm:$0xff]
    %v3991 = vld [vmem:[#allocation13 + $0x28] sm:$0xff]
    %v3992 = vld [vmem:[#allocation13 + $0x30] sm:$0xff]
    %v3993 = vld [vmem:[#allocation13 + $0x38] sm:$0xff]
    %v3994 = vld [vmem:[#allocation13 + $0x40] sm:$0xff]
    %v3995 = vld [vmem:[#allocation13 + $0x48] sm:$0xff]
    %v3996 = vld [vmem:[#allocation13 + $0x50] sm:$0xff]
    %v3997 = vld [vmem:[#allocation13 + $0x58] sm:$0xff]
    %v3998 = vld [vmem:[#allocation13 + $0x60] sm:$0xff]
    %v3999 = vld [vmem:[#allocation13 + $0x68] sm:$0xff]
    %v4000 = vld [vmem:[#allocation13 + $0x70] sm:$0xff]
    %v4001 = vld [vmem:[#allocation13 + $0x78] sm:$0xff]
    %v4002 = vld [vmem:[%s5] sm:$0x1]
    %v4004 = vlaneseq
    %v4005 = vshrl.u32 %v4004, 7
    %v4006 = vsub.s32 0, %v4005
    %v4007 = vrot.slane %v4002, %v4006
    %4009 = vmatprep.subr.mxu0 0.0
    %4010 = vmatpush1.msra.mxu0 %v3986
    %4011 = vmatprep.subr.mxu0 0.0
    %4012 = vmatpush1.msra.mxu0 %v3987
    %4013 = vmatprep.subr.mxu0 0.0
    %4014 = vmatpush1.msra.mxu0 %v3988
    %4015 = vmatprep.subr.mxu0 0.0
    %4016 = vmatpush1.msra.mxu0 %v3989
    %4017 = vmatprep.subr.mxu0 0.0
    %4018 = vmatpush1.msra.mxu0 %v3990
    %4019 = vmatprep.subr.mxu0 0.0
    %4020 = vmatpush1.msra.mxu0 %v3991
    %4021 = vmatprep.subr.mxu0 0.0
    %4022 = vmatpush1.msra.mxu0 %v3992
    %4023 = vmatprep.subr.mxu0 0.0
    %4024 = vmatpush1.msra.mxu0 %v3993
    %4025 = vmatprep.subr.mxu0 0.0
    %4026 = vmatpush1.msra.mxu0 %v3994
    %4027 = vmatprep.subr.mxu0 0.0
    %4028 = vmatpush1.msra.mxu0 %v3995
    %4029 = vmatprep.subr.mxu0 0.0
    %4030 = vmatpush1.msra.mxu0 %v3996
    %4031 = vmatprep.subr.mxu0 0.0
    %4032 = vmatpush1.msra.mxu0 %v3997
    %4033 = vmatprep.subr.mxu0 0.0
    %4034 = vmatpush1.msra.mxu0 %v3998
    %4035 = vmatprep.subr.mxu0 0.0
    %4036 = vmatpush1.msra.mxu0 %v3999
    %4037 = vmatprep.subr.mxu0 0.0
    %4038 = vmatpush1.msra.mxu0 %v4000
    %4039 = vmatprep.subr.mxu0 0.0
    %4040 = vmatpush1.msra.mxu0 %v4001
    %4041 = vmatprep.subr.mxu0 0.0
    %4042 = vmatpush1.msra.mxu0 0.0
    %4043 = vmatprep.subr.mxu0 0.0
    %4044 = vmatpush1.msra.mxu0 0.0
    %4045 = vmatprep.subr.mxu0 0.0
    %4046 = vmatpush1.msra.mxu0 0.0
    %4047 = vmatprep.subr.mxu0 0.0
    %4048 = vmatpush1.msra.mxu0 0.0
    %4049 = vmatprep.subr.mxu0 0.0
    %4050 = vmatpush1.msra.mxu0 0.0
    %4051 = vmatprep.subr.mxu0 0.0
    %4052 = vmatpush1.msra.mxu0 0.0
    %4053 = vmatprep.subr.mxu0 0.0
    %4054 = vmatpush1.msra.mxu0 0.0
    %4055 = vmatprep.subr.mxu0 0.0
    %4056 = vmatpush1.msra.mxu0 0.0
    %4057 = vmatprep.subr.mxu0 0.0
    %4058 = vmatpush1.msra.mxu0 0.0
    %4059 = vmatprep.subr.mxu0 0.0
    %4060 = vmatpush1.msra.mxu0 0.0
    %4061 = vmatprep.subr.mxu0 0.0
    %4062 = vmatpush1.msra.mxu0 0.0
    %4063 = vmatprep.subr.mxu0 0.0
    %4064 = vmatpush1.msra.mxu0 0.0
    %4065 = vmatprep.subr.mxu0 0.0
    %4066 = vmatpush1.msra.mxu0 0.0
    %4067 = vmatprep.subr.mxu0 0.0
    %4068 = vmatpush1.msra.mxu0 0.0
    %4069 = vmatprep.subr.mxu0 0.0
    %4070 = vmatpush1.msra.mxu0 0.0
    %4071 = vmatprep.subr.mxu0 0.0
    %4072 = vmatpush1.msra.mxu0 0.0
    %4073 = vmatprep.mubr.f32.mxu0 0.0
    %4074 = vmatmul.mubr.f32.gmra.mrb[0].mxu0 %v3970
    %v4075 = vpop.f32.mrb[0].mxu0
    %v4076 = vadd.f32 %v4007, %v4075
    %v4077 = vpop.f32.mrb[0].mxu0
    %4078 = vmatprep.mubr.f32.mxu0 0.0
    %4079 = vmatmul.mubr.f32.gmra.mrb[0].mxu0 %v3971
    %v4080 = vpop.f32.mrb[0].mxu0
    %v4081 = vadd.f32 %v4007, %v4080
    %v4082 = vpop.f32.mrb[0].mxu0
    %4083 = vmatprep.mubr.f32.mxu0 0.0
    %4084 = vmatmul.mubr.f32.gmra.mrb[0].mxu0 %v3972
    %v4085 = vpop.f32.mrb[0].mxu0
    %v4086 = vadd.f32 %v4007, %v4085
    %v4087 = vpop.f32.mrb[0].mxu0
    %4088 = vmatprep.mubr.f32.mxu0 0.0
    %4089 = vmatmul.mubr.f32.gmra.mrb[0].mxu0 %v3973
    %v4090 = vpop.f32.mrb[0].mxu0
    %v4091 = vadd.f32 %v4007, %v4090
    %v4092 = vpop.f32.mrb[0].mxu0
    %4093 = vmatprep.mubr.f32.mxu0 0.0
    %4094 = vmatmul.mubr.f32.gmra.mrb[0].mxu0 %v3974
    %v4095 = vpop.f32.mrb[0].mxu0
    %v4096 = vadd.f32 %v4007, %v4095
    %v4097 = vpop.f32.mrb[0].mxu0
    %4098 = vmatprep.mubr.f32.mxu0 0.0
    %4099 = vmatmul.mubr.f32.gmra.mrb[0].mxu0 %v3975
    %v4100 = vpop.f32.mrb[0].mxu0
    %v4101 = vadd.f32 %v4007, %v4100
    %v4102 = vpop.f32.mrb[0].mxu0
    %4103 = vmatprep.mubr.f32.mxu0 0.0
    %4104 = vmatmul.mubr.f32.gmra.mrb[0].mxu0 %v3976
    %v4105 = vpop.f32.mrb[0].mxu0
    %v4106 = vadd.f32 %v4007, %v4105
    %v4107 = vpop.f32.mrb[0].mxu0
    %4108 = vmatprep.mubr.f32.mxu0 0.0
    %4109 = vmatmul.mubr.f32.gmra.mrb[0].mxu0 %v3977
    %v4110 = vpop.f32.mrb[0].mxu0
    %v4111 = vadd.f32 %v4007, %v4110
    %v4112 = vpop.f32.mrb[0].mxu0
    %4113 = vmatprep.mubr.f32.mxu0 0.0
    %4114 = vmatmul.mubr.f32.gmra.mrb[0].mxu0 %v3978
    %v4115 = vpop.f32.mrb[0].mxu0
    %v4116 = vadd.f32 %v4007, %v4115
    %v4117 = vpop.f32.mrb[0].mxu0
    %4118 = vmatprep.mubr.f32.mxu0 0.0
    %4119 = vmatmul.mubr.f32.gmra.mrb[0].mxu0 %v3979
    %v4120 = vpop.f32.mrb[0].mxu0
    %v4121 = vadd.f32 %v4007, %v4120
    %v4122 = vpop.f32.mrb[0].mxu0
    %4123 = vmatprep.mubr.f32.mxu0 0.0
    %4124 = vmatmul.mubr.f32.gmra.mrb[0].mxu0 %v3980
    %v4125 = vpop.f32.mrb[0].mxu0
    %v4126 = vadd.f32 %v4007, %v4125
    %v4127 = vpop.f32.mrb[0].mxu0
    %4128 = vmatprep.mubr.f32.mxu0 0.0
    %4129 = vmatmul.mubr.f32.gmra.mrb[0].mxu0 %v3981
    %v4130 = vpop.f32.mrb[0].mxu0
    %v4131 = vadd.f32 %v4007, %v4130
    %v4132 = vpop.f32.mrb[0].mxu0
    %4133 = vmatprep.mubr.f32.mxu0 0.0
    %4134 = vmatmul.mubr.f32.gmra.mrb[0].mxu0 %v3982
    %v4135 = vpop.f32.mrb[0].mxu0
    %v4136 = vadd.f32 %v4007, %v4135
    %v4137 = vpop.f32.mrb[0].mxu0
    %4138 = vmatprep.mubr.f32.mxu0 0.0
    %4139 = vmatmul.mubr.f32.gmra.mrb[0].mxu0 %v3983
    %v4140 = vpop.f32.mrb[0].mxu0
    %v4141 = vadd.f32 %v4007, %v4140
    %v4142 = vpop.f32.mrb[0].mxu0
    %4143 = vmatprep.mubr.f32.mxu0 0.0
    %4144 = vmatmul.mubr.f32.gmra.mrb[0].mxu0 %v3984
    %v4145 = vpop.f32.mrb[0].mxu0
    %v4146 = vadd.f32 %v4007, %v4145
    %v4147 = vpop.f32.mrb[0].mxu0
    %4148 = vmatprep.mubr.f32.mxu0 0.0
    %4149 = vmatmul.mubr.f32.gmra.mrb[0].mxu0 %v3985
    %v4150 = vpop.f32.mrb[0].mxu0
    %v4151 = vadd.f32 %v4007, %v4150
    %v4152 = vpop.f32.mrb[0].mxu0
    %4153 = vdwg.mxu0
    %4154 = vst [vmem:[#allocation14] sm:$0xff] %v4076
    %4155 = vst [vmem:[#allocation14 + $0x8] sm:$0xff] %v4081
    %4156 = vst [vmem:[#allocation14 + $0x10] sm:$0xff] %v4086
    %4157 = vst [vmem:[#allocation14 + $0x18] sm:$0xff] %v4091
    %4158 = vst [vmem:[#allocation14 + $0x20] sm:$0xff] %v4096
    %4159 = vst [vmem:[#allocation14 + $0x28] sm:$0xff] %v4101
    %4160 = vst [vmem:[#allocation14 + $0x30] sm:$0xff] %v4106
    %4161 = vst [vmem:[#allocation14 + $0x38] sm:$0xff] %v4111
    %4162 = vst [vmem:[#allocation14 + $0x40] sm:$0xff] %v4116
    %4163 = vst [vmem:[#allocation14 + $0x48] sm:$0xff] %v4121
    %4164 = vst [vmem:[#allocation14 + $0x50] sm:$0xff] %v4126
    %4165 = vst [vmem:[#allocation14 + $0x58] sm:$0xff] %v4131
    %4166 = vst [vmem:[#allocation14 + $0x60] sm:$0xff] %v4136
    %4167 = vst [vmem:[#allocation14 + $0x68] sm:$0xff] %v4141
    %4168 = vst [vmem:[#allocation14 + $0x70] sm:$0xff] %v4146
    %4169 = vst [vmem:[#allocation14 + $0x78] sm:$0xff] %v4151
    // Predicated region
    $region50: #{tpu_custom_call.1} parent=1 // pred_check
      %p4170 = pneg %p92
    $region51: #{tpu_custom_call.1} parent=1 // pred_check_branch
      %4172 = sbr.rel (%p4170) target = $region53
    $region52: #{tpu_custom_call.1} parent=1 // pred_region
      %v4173 = vld [vmem:[#allocation2] sm:$0xff]
      %4174 = vst [vmem:[#allocation15] sm:$0xff] %v4173
      %v4175 = vld [vmem:[#allocation3] sm:$0xff]
      %4176 = vst [vmem:[#allocation17] sm:$0xff] %v4175
    $region53: #{tpu_custom_call.1} parent=1 // pred_fallthru
      _
    // Predicated region
    $region54: #{tpu_custom_call.1} parent=1 // pred_check
      _
    $region55: #{tpu_custom_call.1} parent=1 // pred_check_branch
      %4178 = sbr.rel (0) target = $region57
    $region56: #{tpu_custom_call.1} parent=1 // pred_region
      %s4180 = ssub.s32 2048, 2048
      %4181 = vsyncadd [#allocation7], %s4180
      %s4182 = sshll.u32 [#allocation14], 4
      %s4183 = int_to_ptr.vmem [resolvable:$true] %s4182
      %4188 = dma.vmem_to_hbm [thread:$0]  %s4183, 2048, %s6, [#allocation7], 128, 128, 8
    $region57: #{tpu_custom_call.1} parent=1 // pred_fallthru
      _
    // Predicated region
    $region58: #{tpu_custom_call.1} parent=1 // pred_check
      _
    $region59: #{tpu_custom_call.1} parent=1 // pred_check_branch
      %4190 = sbr.rel (0) target = $region61
    $region60: #{tpu_custom_call.1} parent=1 // pred_region
      %s4192 = ssub.s32 128, 128
      %4193 = vsyncadd [#allocation16], %s4192
      %s4195 = sshll.u32 [#allocation15], 4
      %s4196 = int_to_ptr.vmem [resolvable:$true] %s4195
      %4198 = dma.vmem_to_hbm [thread:$0]  %s4196, 128, %s7, [#allocation16]
    $region61: #{tpu_custom_call.1} parent=1 // pred_fallthru
      _
    // Predicated region
    $region62: #{tpu_custom_call.1} parent=1 // pred_check
      _
    $region63: #{tpu_custom_call.1} parent=1 // pred_check_branch
      %4200 = sbr.rel (0) target = $region65
    $region64: #{tpu_custom_call.1} parent=1 // pred_region
      %s4202 = ssub.s32 128, 128
      %4203 = vsyncadd [#allocation16], %s4202
      %s4205 = sshll.u32 [#allocation17], 4
      %s4206 = int_to_ptr.vmem [resolvable:$true] %s4205
      %4208 = dma.vmem_to_hbm [thread:$0]  %s4206, 128, %s8, [#allocation16]
    $region65: #{tpu_custom_call.1} parent=1 // pred_fallthru
      _
    // Predicated region
    $region66: #{tpu_custom_call.1} parent=1 // pred_check
      _
    $region67: #{tpu_custom_call.1} parent=1 // pred_check_branch
      %4210 = sbr.rel (0) target = $region69
    $region68: #{tpu_custom_call.1} parent=1 // pred_region
      %4211 = dma.done [#allocation7], 2048
    $region69: #{tpu_custom_call.1} parent=1 // pred_fallthru
      _
    // Predicated region
    $region70: #{tpu_custom_call.1} parent=1 // pred_check
      _
    $region71: #{tpu_custom_call.1} parent=1 // pred_check_branch
      %4213 = sbr.rel (0) target = $region73
    $region72: #{tpu_custom_call.1} parent=1 // pred_region
      %4214 = dma.done [#allocation16], 128
    $region73: #{tpu_custom_call.1} parent=1 // pred_fallthru
      _
    // Predicated region
    $region74: #{tpu_custom_call.1} parent=1 // pred_check
      _
    $region75: #{tpu_custom_call.1} parent=1 // pred_check_branch
      %4216 = sbr.rel (0) target = $region77
    $region76: #{tpu_custom_call.1} parent=1 // pred_region
      %4217 = dma.done [#allocation16], 128
    $region77: #{tpu_custom_call.1} parent=1 // pred_fallthru
      _
    %4218 = vsyncpa [#allocation6], 1
    %4219 = vsyncpa [#allocation9], 1
    %4220 = vsyncpa [#allocation12], 1
    %4221 = vsyncpa [#allocation7], 1
    %4222 = vsyncpa [#allocation16], 1

</llo_original>
